<compile_context>
chip_gen: v7x
topology: tpu7x:2x2x1
jax: 0.10.0
libtpu: 0.0.40
codegen_flags: <defaults>
</compile_context>

<pallas_src>
import functools

import jax
import jax.numpy as jnp
from jax import lax
from jax.experimental import pallas as pl
from jax.experimental.pallas import tpu as pltpu

ACT_DTYPE = jnp.bfloat16      # activations flowing between kernels
WGT_DTYPE = jnp.bfloat16      # matmul weights (MXU-native)


def _vmem_limit_bytes():
    # Generation-aware scoped-VMEM cap: ~3/4 of physical VMEM, capped at
    # 100 MiB.  v5e/v6e (128 MiB physical) -> 96 MiB; v7x (64 MiB) -> 48 MiB.
    try:
        cap = getattr(pltpu.get_tpu_info(), "vmem_capacity_bytes", None)
        if cap:
            return int(min(cap * 3 // 4, 100 * 1024 * 1024))
    except Exception:
        pass
    return 48 * 1024 * 1024   # safe on every generation


VMEM_LIMIT = _vmem_limit_bytes()


def _cparams(*sem):
    return pltpu.CompilerParams(dimension_semantics=sem,
                                vmem_limit_bytes=VMEM_LIMIT)


def _tile_rows(total, pref):
    # Full array if it fits one block, else `pref` rows (multiple of 8;
    # a partial tail block is fine on a non-contracted axis).
    return total if total <= pref else pref


def _divisor_tile(n, pref):
    # Largest multiple-of-8 tile <= pref dividing n exactly (used on axes that
    # carry in-kernel accumulators -> no partial/padded blocks allowed).
    if n <= pref:
        return n
    for t in range(pref, 7, -1):
        if n % t == 0 and t % 8 == 0:
            return t
    # TODO(synk): awkward N with no multiple-of-8 divisor <= pref falls back to
    # one full-N block; pad N upstream for very large point clouds.
    return n


def _query_tile(n):
    # Cap the (N, TQ) softmax live-intermediate footprint for big point clouds.
    return _divisor_tile(n, 256 if n <= 1024 else 128)


# ----------------------------------------------------------------------------
# Stem: bn1 + relu + conv2 + bn2 + relu (conv1 is done by XLA, see forward)
# ----------------------------------------------------------------------------

def _stem_kernel(h0_ref, sc1_ref, sh1_ref, w2_ref, sc2_ref, sh2_ref, o_ref):
    h = jnp.maximum(h0_ref[...] * sc1_ref[...] + sh1_ref[...], 0.0)
    h2 = jnp.dot(h.astype(WGT_DTYPE), w2_ref[...],
                 preferred_element_type=jnp.float32)
    o_ref[...] = jnp.maximum(h2 * sc2_ref[...] + sh2_ref[...],
                             0.0).astype(o_ref.dtype)


def stem(h0, p):
    M, c1 = h0.shape
    tm = _tile_rows(M, 1024)
    return pl.pallas_call(
        _stem_kernel,
        out_shape=jax.ShapeDtypeStruct((M, c1), ACT_DTYPE),
        grid=(pl.cdiv(M, tm),),
        in_specs=[
            pl.BlockSpec((tm, c1), lambda i: (i, 0)),
            pl.BlockSpec((1, c1), lambda i: (0, 0)),
            pl.BlockSpec((1, c1), lambda i: (0, 0)),
            pl.BlockSpec((c1, c1), lambda i: (0, 0)),
            pl.BlockSpec((1, c1), lambda i: (0, 0)),
            pl.BlockSpec((1, c1), lambda i: (0, 0)),
        ],
        out_specs=pl.BlockSpec((tm, c1), lambda i: (i, 0)),
        compiler_params=_cparams("parallel"),
    )(h0, *p["stem_bn1"], p["stem_w2"], *p["stem_bn2"])


# ----------------------------------------------------------------------------
# SA layer: grid = (batch, query blocks), VMEM accumulators over query blocks
# ----------------------------------------------------------------------------

def _sa_kernel(x_ref, wq_ref, wv_ref, bv_ref, wt_ref, sc_ref, sh_ref, o_ref,
               k_sc, num_sc, col_sc, *, tq):
    i = pl.program_id(1)

    @pl.when(i == 0)
    def _init():
        # q_conv and k_conv share weights (no bias) -> one projection.
        k_sc[...] = jnp.dot(x_ref[...], wq_ref[...],
                            preferred_element_type=jnp.float32).astype(k_sc.dtype)
        num_sc[...] = jnp.zeros_like(num_sc)
        col_sc[...] = jnp.zeros_like(col_sc)

    start = pl.multiple_of(i * tq, tq)
    x_blk = x_ref[pl.ds(start, tq), :]                           # (TQ, C) bf16
    q_blk = k_sc[pl.ds(start, tq), :]                            # (TQ, D) bf16
    v_blk = jnp.dot(x_blk, wv_ref[...],
                    preferred_element_type=jnp.float32) + bv_ref[...]  # (TQ, D)

    # energy^T[j, q] = k_j . q_q  -- contract feature dims, no transpose copy.
    energy_t = lax.dot_general(k_sc[...], q_blk, (((1,), (1,)), ((), ())),
                               preferred_element_type=jnp.float32)  # (N, TQ)
    # Softmax over keys j (axis 0) for every query column.  Max-subtract in
    # f32; the big (N,TQ) intermediates (exp / attn) live in bf16 to halve
    # spill traffic and use the bf16 EUP/VALU on v6e/v7x.
    m = jnp.max(energy_t, axis=0, keepdims=True)
    e = jnp.exp((energy_t - m).astype(ACT_DTYPE))                 # (N, TQ) bf16
    s = jnp.sum(e, axis=0, keepdims=True).astype(jnp.float32)     # (1, TQ)
    attn_t = e * pl.reciprocal(s, approx=True).astype(ACT_DTYPE)  # (N, TQ) bf16

    # accumulate column sums and un-normalized x_r over query blocks.
    col_sc[...] += jnp.sum(attn_t, axis=1,
                           keepdims=True).astype(jnp.float32)     # (N, 1)
    num_sc[...] += jnp.dot(attn_t, v_blk.astype(WGT_DTYPE),
                           preferred_element_type=jnp.float32)    # (N, D)

    @pl.when(i == pl.num_programs(1) - 1)
    def _finalize():
        x_r = num_sc[...] * pl.reciprocal(1e-9 + col_sc[...], approx=True)
        x_f32 = x_ref[...].astype(jnp.float32)
        t = jnp.dot((x_f32 - x_r).astype(WGT_DTYPE), wt_ref[...],
                    preferred_element_type=jnp.float32)
        t = jnp.maximum(t * sc_ref[...] + sh_ref[...], 0.0)       # trans bias folded in sh
        o_ref[...] = (x_f32 + t).astype(o_ref.dtype)


def sa_layer(x, p):
    B, N, C = x.shape
    D = p["wq"].shape[1]
    tq = _query_tile(N)
    return pl.pallas_call(
        functools.partial(_sa_kernel, tq=tq),
        out_shape=jax.ShapeDtypeStruct((B, N, C), x.dtype),
        grid=(B, N // tq),
        in_specs=[
            pl.BlockSpec((None, N, C), lambda b, i: (b, 0, 0)),
            pl.BlockSpec((C, D), lambda b, i: (0, 0)),
            pl.BlockSpec((C, D), lambda b, i: (0, 0)),
            pl.BlockSpec((1, D), lambda b, i: (0, 0)),
            pl.BlockSpec((D, C), lambda b, i: (0, 0)),
            pl.BlockSpec((1, C), lambda b, i: (0, 0)),
            pl.BlockSpec((1, C), lambda b, i: (0, 0)),
        ],
        out_specs=pl.BlockSpec((None, N, C), lambda b, i: (b, 0, 0)),
        scratch_shapes=[
            pltpu.VMEM((N, D), WGT_DTYPE),    # shared q/k projection
            pltpu.VMEM((N, D), jnp.float32),  # un-normalized x_r accumulator
            pltpu.VMEM((N, 1), jnp.float32),  # attention column sums
        ],
        compiler_params=_cparams("parallel", "arbitrary"),
    )(x, p["wq"], p["wv"], p["bv"], p["wt"], p["bn_scale"], p["bn_shift"])


# ----------------------------------------------------------------------------
# conv_fuse: 5-way concat as one K=640 dot + BN + LeakyReLU, with the global
# max / mean over xf folded in as output-resident accumulators.
# ----------------------------------------------------------------------------

def _fuse_kernel(x1_ref, x2_ref, x3_ref, x4_ref, x5_ref, w_ref, sc_ref, sh_ref,
                 o_ref, mx_ref, avg_ref, *, inv_n):
    n = pl.program_id(1)
    xcat = jnp.concatenate(
        [x1_ref[...], x2_ref[...], x3_ref[...], x4_ref[...], x5_ref[...]],
        axis=-1)                                               # (tm, 640) bf16
    y = jnp.dot(xcat, w_ref[...], preferred_element_type=jnp.float32)
    y = y * sc_ref[...] + sh_ref[...]
    y = jnp.where(y >= 0.0, y, 0.2 * y)                        # LeakyReLU(0.2)
    o_ref[...] = y.astype(o_ref.dtype)

    blk_max = jnp.max(y, axis=0, keepdims=True)                # (1, 1024)
    blk_sum = jnp.sum(y, axis=0, keepdims=True)                # (1, 1024)

    @pl.when(n == 0)
    def _():
        mx_ref[...] = blk_max
        avg_ref[...] = blk_sum

    @pl.when(n > 0)
    def _():
        mx_ref[...] = jnp.maximum(mx_ref[...], blk_max)
        avg_ref[...] = avg_ref[...] + blk_sum

    @pl.when(n == pl.num_programs(1) - 1)
    def _():
        avg_ref[...] = avg_ref[...] * inv_n                    # sum -> mean


def fuse(xs, p):
    B, N, C = xs[0].shape
    cout = p["fuse_w"].shape[1]
    tm = _divisor_tile(N, 512)
    x_spec = pl.BlockSpec((None, tm, C), lambda b, n: (b, n, 0))
    v_spec = pl.BlockSpec((1, cout), lambda b, n: (0, 0))
    # NOTE: pipeline_mode=pl.Buffered(3) on x_spec is a further knob if DMA is
    # still exposed after the larger tiles; left at the default depth here.
    xf, x_max, x_sum = pl.pallas_call(
        functools.partial(_fuse_kernel, inv_n=1.0 / N),
        out_shape=(jax.ShapeDtypeStruct((B, N, cout), ACT_DTYPE),
                   jax.ShapeDtypeStruct((B, 1, cout), jnp.float32),
                   jax.ShapeDtypeStruct((B, 1, cout), jnp.float32)),
        grid=(B, N // tm),
        in_specs=[x_spec] * 5 + [
            pl.BlockSpec((5 * C, cout), lambda b, n: (0, 0)),
            v_spec, v_spec],
        out_specs=(pl.BlockSpec((None, tm, cout), lambda b, n: (b, n, 0)),
                   pl.BlockSpec((None, 1, cout), lambda b, n: (b, 0, 0)),
                   pl.BlockSpec((None, 1, cout), lambda b, n: (b, 0, 0))),
        compiler_params=_cparams("parallel", "arbitrary"),
    )(*xs, p["fuse_w"], *p["fuse_bn"])
    return xf, x_max.reshape(B, cout), x_sum.reshape(B, cout)


# ----------------------------------------------------------------------------
# Head: convs1 (+ per-batch global bias) + bns1 + relu + convs2 + bns2 + relu
# ----------------------------------------------------------------------------

def _head_kernel(xf_ref, gb_ref, w1_ref, sc1_ref, w2_ref, sc2_ref, sh2_ref,
                 o_ref):
    h = jnp.dot(xf_ref[...], w1_ref[...], preferred_element_type=jnp.float32)
    # gb already contains (glob @ W1_glob + b1) * scale1 + shift1 for this batch.
    h = jnp.maximum(h * sc1_ref[...] + gb_ref[...], 0.0)
    # TODO(synk): nn.Dropout(0.5) is identity in eval mode; training dropout not implemented.
    h2 = jnp.dot(h.astype(WGT_DTYPE), w2_ref[...],
                 preferred_element_type=jnp.float32)
    o_ref[...] = jnp.maximum(h2 * sc2_ref[...] + sh2_ref[...],
                             0.0).astype(o_ref.dtype)


def head(xf, gb, p):
    B, N, C = xf.shape
    H = p["convs1_w_xf"].shape[1]
    cpad = p["convs2_w_pad"].shape[1]
    tn = _tile_rows(N, 512)
    gb3 = gb.reshape(B, 1, H).astype(jnp.float32)
    return pl.pallas_call(
        _head_kernel,
        out_shape=jax.ShapeDtypeStruct((B, N, cpad), ACT_DTYPE),  # bf16 writeback
        grid=(B, pl.cdiv(N, tn)),
        in_specs=[
            pl.BlockSpec((None, tn, C), lambda b, n: (b, n, 0)),
            pl.BlockSpec((None, 1, H), lambda b, n: (b, 0, 0)),
            pl.BlockSpec((C, H), lambda b, n: (0, 0)),
            pl.BlockSpec((1, H), lambda b, n: (0, 0)),
            pl.BlockSpec((H, cpad), lambda b, n: (0, 0)),
            pl.BlockSpec((1, cpad), lambda b, n: (0, 0)),
            pl.BlockSpec((1, cpad), lambda b, n: (0, 0)),
        ],
        out_specs=pl.BlockSpec((None, tn, cpad), lambda b, n: (b, n, 0)),
        compiler_params=_cparams("parallel", "parallel"),
    )(xf, gb3, p["convs1_w_xf"], p["bns1"][0],
      p["convs2_w_pad"], p["bns2_scale_pad"], p["bns2_shift_pad"])


# ----------------------------------------------------------------------------
# Parameter initialization (deterministic, synthetic; eval-mode BN folded)
# ----------------------------------------------------------------------------

def _fold_bn(gamma, beta, mean, var, eps=1e-5):
    scale = gamma / jnp.sqrt(var + eps)
    shift = beta - mean * scale
    return scale[None, :].astype(jnp.float32), shift[None, :].astype(jnp.float32)


def init_params(key, in_channel, out_channel):
    keys = iter(jax.random.split(key, 128))

    def nrm(shape, s=0.1, dtype=jnp.float32):
        return (s * jax.random.normal(next(keys), shape, jnp.float32)).astype(dtype)

    def w(cin, cout):  # (Cin, Cout) layout, bf16 for the MXU
        return nrm((cin, cout), dtype=WGT_DTYPE)

    def bn(c):
        gamma = 1.0 + nrm((c,))
        beta = nrm((c,))
        return _fold_bn(gamma, beta, jnp.zeros((c,), jnp.float32),
                        jnp.ones((c,), jnp.float32))

    p = {}
    # conv1 (K=in_channel, typically 3) is executed by XLA -> keep f32.
    p["stem_w1"] = nrm((in_channel, 128)); p["stem_bn1"] = bn(128)
    p["stem_w2"] = w(128, 128);            p["stem_bn2"] = bn(128)

    for i in range(1, 6):
        sc, sh = bn(128)
        bt = nrm((1, 128))  # trans_conv bias, folded into the BN shift
        p[f"sa{i}"] = dict(
            wq=w(128, 128),               # shared by q_conv and k_conv
            wv=w(128, 128), bv=nrm((1, 128)),
            wt=w(128, 128),
            bn_scale=sc, bn_shift=sh + bt * sc,
        )

    p["fuse_w"] = w(640, 1024)            # single K=640 MXU dot
    p["fuse_bn"] = bn(1024)

    p["label_w"] = nrm((16, 64))          # tiny -> plain JAX, keep f32
    p["label_bn"] = bn(64)

    # convs1 split: xf part (1024) stays in the kernel, global part (2112)
    # becomes a per-batch bias computed once in plain JAX.
    p["convs1_w_xf"] = w(1024, 512)
    p["convs1_w_glob"] = nrm((2112, 512))
    p["convs1_b"] = nrm((1, 512))
    p["bns1"] = bn(512)

    # convs2: pad output channels to a lane-dense width (128); padded columns
    # are exact zeros after relu and are sliced off in the wrapper.
    cpad = max(128, ((out_channel + 127) // 128) * 128)
    w2 = nrm((512, out_channel))
    b2 = nrm((1, out_channel))
    sc2, sh2 = bn(out_channel)
    sh2 = sh2 + b2 * sc2                  # fold conv bias into BN shift
    p["convs2_w_pad"] = (jnp.zeros((512, cpad), jnp.float32)
                         .at[:, :out_channel].set(w2).astype(WGT_DTYPE))
    p["bns2_scale_pad"] = jnp.ones((1, cpad), jnp.float32).at[:, :out_channel].set(sc2)
    p["bns2_shift_pad"] = jnp.zeros((1, cpad), jnp.float32).at[:, :out_channel].set(sh2)
    return p


# ----------------------------------------------------------------------------
# Full PCT forward
# ----------------------------------------------------------------------------

def pct_forward(params, x_ncw, cls_label, *, out_channel):
    B, cin, N = x_ncw.shape
    M = B * N

    # conv1 (K=in_channel, e.g. 3) is tiny: run it in XLA fused with the
    # NCW->NWC transpose instead of wasting an MXU pass inside the kernel.
    x_nwc = jnp.transpose(x_ncw, (0, 2, 1)).reshape(M, cin)
    h0 = (x_nwc @ params["stem_w1"]).astype(ACT_DTYPE)    # (M, 128)

    h = stem(h0, params).reshape(B, N, -1)                # (B, N, 128) bf16

    x1 = sa_layer(h, params["sa1"])
    x2 = sa_layer(x1, params["sa2"])
    x3 = sa_layer(x2, params["sa3"])
    x4 = sa_layer(x3, params["sa4"])
    x5 = sa_layer(x4, params["sa5"])

    # conv_fuse + global max / mean fused into one kernel (single HBM pass).
    xf, x_max, x_avg = fuse((x1, x2, x3, x4, x5), params)  # (B,N,1024), (B,1024)x2

    # Tiny label conv stays in plain JAX (too small to amortize a pallas_call).
    lf = cls_label.astype(jnp.float32) @ params["label_w"]
    sc_l, sh_l = params["label_bn"]
    lf = lf * sc_l + sh_l
    lf = jnp.where(lf >= 0.0, lf, 0.2 * lf)               # (B, 64)
    glob = jnp.concatenate([x_max, x_avg, lf], axis=-1)   # (B, 2112)

    # Per-batch bias for convs1 = BN1((glob @ W1_glob) + b1)-part, folded.
    sc1, sh1 = params["bns1"]
    gb = (glob @ params["convs1_w_glob"] + params["convs1_b"]) * sc1 + sh1

    out_pad = head(xf, gb, params)                        # (B, N, Cpad) bf16
    out = out_pad[:, :, :out_channel]
    return jnp.transpose(out, (0, 2, 1)).astype(jnp.float32)  # (B, out_ch, N)


# ----------------------------------------------------------------------------
# Main
# ----------------------------------------------------------------------------

if __name__ == "__main__":
    key = jax.random.PRNGKey(0)
    k_x, k_p = jax.random.split(key, 2)

    B, Cin, N, Cout = 2, 3, 16, 4
    x = jax.random.normal(k_x, (B, Cin, N), jnp.float32)                  # (B, in_channel, N)
    cls_label = jax.nn.one_hot(jnp.array([0, 1]), 16, dtype=jnp.float32)  # (B, 16)

    params = init_params(k_p, Cin, Cout)

    fwd = jax.jit(functools.partial(pct_forward, out_channel=Cout))
    out = fwd(params, x, cls_label)
    out = jax.block_until_ready(out)

    assert out.shape == (B, Cout, N), out.shape
    assert bool(jnp.all(jnp.isfinite(out)))
    print("KERNEL_OK")
</pallas_src>

<mosaic_0001>
module attributes {stable_mosaic.version = 11 : i64} {
  func.func @_sa_kernel(%arg0: i32, %arg1: i32, %arg2: memref<1x16x128xbf16, #tpu.memory_space<vmem>>, %arg3: memref<128x128xbf16, #tpu.memory_space<vmem>>, %arg4: memref<128x128xbf16, #tpu.memory_space<vmem>>, %arg5: memref<1x128xf32, #tpu.memory_space<vmem>>, %arg6: memref<128x128xbf16, #tpu.memory_space<vmem>>, %arg7: memref<1x128xf32, #tpu.memory_space<vmem>>, %arg8: memref<1x128xf32, #tpu.memory_space<vmem>>, %arg9: memref<1x16x128xbf16, #tpu.memory_space<vmem>>, %arg10: memref<16x128xbf16, #tpu.memory_space<vmem>>, %arg11: memref<16x128xf32, #tpu.memory_space<vmem>>, %arg12: memref<16x1xf32, #tpu.memory_space<vmem>>) attributes {dimension_semantics = [#tpu.dimension_semantics<parallel>, #tpu.dimension_semantics<arbitrary>], iteration_bounds = array<i64: 2, 1>, scalar_prefetch = 0 : i64, scratch_operands = 3 : i64, tpu.core_type = #tpu.core_type<tc>, window_params = [{transform_indices = @transform_0, window_bounds = array<i64: 1, 16, 128>}, {pipeline_mode = #tpu.pipeline_mode<synchronous>, transform_indices = @transform_1, window_bounds = array<i64: 128, 128>}, {pipeline_mode = #tpu.pipeline_mode<synchronous>, transform_indices = @transform_2, window_bounds = array<i64: 128, 128>}, {pipeline_mode = #tpu.pipeline_mode<synchronous>, transform_indices = @transform_3, window_bounds = array<i64: 1, 128>}, {pipeline_mode = #tpu.pipeline_mode<synchronous>, transform_indices = @transform_4, window_bounds = array<i64: 128, 128>}, {pipeline_mode = #tpu.pipeline_mode<synchronous>, transform_indices = @transform_5, window_bounds = array<i64: 1, 128>}, {pipeline_mode = #tpu.pipeline_mode<synchronous>, transform_indices = @transform_6, window_bounds = array<i64: 1, 128>}, {transform_indices = @transform_7, window_bounds = array<i64: 1, 16, 128>}]} {
    %c0_i32 = arith.constant 0 : i32
    %0 = arith.cmpi eq, %arg1, %c0_i32 : i32
    %1 = arith.extui %0 : i1 to i32
    %c0_i32_0 = arith.constant 0 : i32
    %2 = arith.cmpi ne, %1, %c0_i32_0 : i32
    scf.if %2 {
      %c0_24 = arith.constant 0 : index
      %c0_25 = arith.constant 0 : index
      %c0_26 = arith.constant 0 : index
      %48 = vector.load %arg2[%c0_24, %c0_25, %c0_26] : memref<1x16x128xbf16, #tpu.memory_space<vmem>>, vector<1x16x128xbf16>
      %49 = vector.shape_cast %48 : vector<1x16x128xbf16> to vector<16x128xbf16>
      %c0_27 = arith.constant 0 : index
      %c0_28 = arith.constant 0 : index
      %50 = vector.load %arg3[%c0_27, %c0_28] : memref<128x128xbf16, #tpu.memory_space<vmem>>, vector<128x128xbf16>
      %cst_29 = arith.constant dense<0.000000e+00> : vector<16x128xf32>
      %51 = tpu.matmul %49, %50, %cst_29 {dimension_numbers = #tpu.dot_dimension_numbers<[1], [0], [0], [1], [0, 0, 1, 1], [], []>} : vector<16x128xbf16>, vector<128x128xbf16>, vector<16x128xf32> -> vector<16x128xf32>
      %52 = arith.truncf %51 : vector<16x128xf32> to vector<16x128xbf16>
      %c0_30 = arith.constant 0 : index
      %c0_31 = arith.constant 0 : index
      %53 = vector.load %arg10[%c0_30, %c0_31] : memref<16x128xbf16, #tpu.memory_space<vmem>>, vector<16x128xbf16>
      tpu.vector_store %arg10[%c0_30, %c0_31], %52 {strides = array<i32>} : memref<16x128xbf16, #tpu.memory_space<vmem>>, vector<16x128xbf16>,
      %cst_32 = arith.constant 0.000000e+00 : f32
      %54 = vector.broadcast %cst_32 : f32 to vector<16x128xf32>
      %c0_33 = arith.constant 0 : index
      %c0_34 = arith.constant 0 : index
      %55 = vector.load %arg11[%c0_33, %c0_34] : memref<16x128xf32, #tpu.memory_space<vmem>>, vector<16x128xf32>
      tpu.vector_store %arg11[%c0_33, %c0_34], %54 {strides = array<i32>} : memref<16x128xf32, #tpu.memory_space<vmem>>, vector<16x128xf32>,
      %cst_35 = arith.constant 0.000000e+00 : f32
      %56 = vector.broadcast %cst_35 : f32 to vector<16x1xf32>
      %c0_36 = arith.constant 0 : index
      %c0_37 = arith.constant 0 : index
      %57 = vector.load %arg12[%c0_36, %c0_37] : memref<16x1xf32, #tpu.memory_space<vmem>>, vector<16x1xf32>
      tpu.vector_store %arg12[%c0_36, %c0_37], %56 {strides = array<i32>} : memref<16x1xf32, #tpu.memory_space<vmem>>, vector<16x1xf32>,
    } else {
    }
    %c16_i32 = arith.constant 16 : i32
    %3 = arith.muli %arg1, %c16_i32 : i32
    %4 = tpu.assume_multiple %3, 16 : i32
    %c0 = arith.constant 0 : index
    %5 = arith.index_cast %4 : i32 to index
    %c0_1 = arith.constant 0 : index
    %6 = vector.load %arg2[%c0, %5, %c0_1] : memref<1x16x128xbf16, #tpu.memory_space<vmem>>, vector<1x16x128xbf16>
    %7 = vector.shape_cast %6 : vector<1x16x128xbf16> to vector<16x128xbf16>
    %8 = arith.index_cast %4 : i32 to index
    %c0_2 = arith.constant 0 : index
    %9 = vector.load %arg10[%8, %c0_2] : memref<16x128xbf16, #tpu.memory_space<vmem>>, vector<16x128xbf16>
    %c0_3 = arith.constant 0 : index
    %c0_4 = arith.constant 0 : index
    %10 = vector.load %arg4[%c0_3, %c0_4] : memref<128x128xbf16, #tpu.memory_space<vmem>>, vector<128x128xbf16>
    %cst = arith.constant dense<0.000000e+00> : vector<16x128xf32>
    %11 = tpu.matmul %7, %10, %cst {dimension_numbers = #tpu.dot_dimension_numbers<[1], [0], [0], [1], [0, 0, 1, 1], [], []>} : vector<16x128xbf16>, vector<128x128xbf16>, vector<16x128xf32> -> vector<16x128xf32>
    %c0_5 = arith.constant 0 : index
    %c0_6 = arith.constant 0 : index
    %12 = vector.load %arg5[%c0_5, %c0_6] : memref<1x128xf32, #tpu.memory_space<vmem>>, vector<1x128xf32>
    %13 = vector.broadcast %12 : vector<1x128xf32> to vector<16x128xf32>
    %14 = arith.addf %11, %13 : vector<16x128xf32>
    %c0_7 = arith.constant 0 : index
    %c0_8 = arith.constant 0 : index
    %15 = vector.load %arg10[%c0_7, %c0_8] : memref<16x128xbf16, #tpu.memory_space<vmem>>, vector<16x128xbf16>
    %cst_9 = arith.constant dense<0.000000e+00> : vector<16x16xf32>
    %16 = tpu.matmul %15, %9, %cst_9 {dimension_numbers = #tpu.dot_dimension_numbers<[1], [1], [0], [0], [0, 0, 1, 0], [], []>} : vector<16x128xbf16>, vector<16x128xbf16>, vector<16x16xf32> -> vector<16x16xf32>
    %cst_10 = arith.constant dense<0xFF800000> : vector<16xf32>
    %17 = vector.multi_reduction <maximumf>, %16, %cst_10 [0] : vector<16x16xf32> to vector<16xf32>
    %18 = vector.shape_cast %17 : vector<16xf32> to vector<1x16xf32>
    %19 = vector.broadcast %18 : vector<1x16xf32> to vector<16x16xf32>
    %20 = arith.subf %16, %19 : vector<16x16xf32>
    %21 = arith.truncf %20 : vector<16x16xf32> to vector<16x16xbf16>
    %22 = math.exp %21 : vector<16x16xbf16>
    %23 = arith.extf %22 : vector<16x16xbf16> to vector<16x16xf32>
    %cst_11 = arith.constant dense<0.000000e+00> : vector<16xf32>
    %24 = vector.multi_reduction <add>, %23, %cst_11 [0] : vector<16x16xf32> to vector<16xf32>
    %25 = vector.shape_cast %24 : vector<16xf32> to vector<1x16xf32>
    %26 = arith.truncf %25 : vector<1x16xf32> to vector<1x16xbf16>
    %27 = arith.extf %26 : vector<1x16xbf16> to vector<1x16xf32>
    %28 = tpu.reciprocal %27 {approx = true} : vector<1x16xf32> -> vector<1x16xf32>
    %29 = arith.truncf %28 : vector<1x16xf32> to vector<1x16xbf16>
    %30 = vector.broadcast %29 : vector<1x16xbf16> to vector<16x16xbf16>
    %31 = arith.mulf %22, %30 : vector<16x16xbf16>
    %c0_12 = arith.constant 0 : index
    %c0_13 = arith.constant 0 : index
    %32 = vector.load %arg12[%c0_12, %c0_13] : memref<16x1xf32, #tpu.memory_space<vmem>>, vector<16x1xf32>
    %33 = arith.extf %31 : vector<16x16xbf16> to vector<16x16xf32>
    %cst_14 = arith.constant dense<0.000000e+00> : vector<16xf32>
    %34 = vector.multi_reduction <add>, %33, %cst_14 [1] : vector<16x16xf32> to vector<16xf32>
    %35 = vector.shape_cast %34 : vector<16xf32> to vector<16x1xf32>
    %36 = arith.truncf %35 : vector<16x1xf32> to vector<16x1xbf16>
    %37 = arith.extf %36 : vector<16x1xbf16> to vector<16x1xf32>
    %38 = arith.addf %32, %37 : vector<16x1xf32>
    %c0_15 = arith.constant 0 : index
    %c0_16 = arith.constant 0 : index
    %39 = vector.load %arg12[%c0_15, %c0_16] : memref<16x1xf32, #tpu.memory_space<vmem>>, vector<16x1xf32>
    tpu.vector_store %arg12[%c0_15, %c0_16], %38 {strides = array<i32>} : memref<16x1xf32, #tpu.memory_space<vmem>>, vector<16x1xf32>,
    %c0_17 = arith.constant 0 : index
    %c0_18 = arith.constant 0 : index
    %40 = vector.load %arg11[%c0_17, %c0_18] : memref<16x128xf32, #tpu.memory_space<vmem>>, vector<16x128xf32>
    %41 = arith.truncf %14 : vector<16x128xf32> to vector<16x128xbf16>
    %cst_19 = arith.constant dense<0.000000e+00> : vector<16x128xf32>
    %42 = tpu.matmul %31, %41, %cst_19 {dimension_numbers = #tpu.dot_dimension_numbers<[1], [0], [0], [1], [0, 0, 1, 1], [], []>} : vector<16x16xbf16>, vector<16x128xbf16>, vector<16x128xf32> -> vector<16x128xf32>
    %43 = arith.addf %40, %42 : vector<16x128xf32>
    %c0_20 = arith.constant 0 : index
    %c0_21 = arith.constant 0 : index
    %44 = vector.load %arg11[%c0_20, %c0_21] : memref<16x128xf32, #tpu.memory_space<vmem>>, vector<16x128xf32>
    tpu.vector_store %arg11[%c0_20, %c0_21], %43 {strides = array<i32>} : memref<16x128xf32, #tpu.memory_space<vmem>>, vector<16x128xf32>,
    %c0_i32_22 = arith.constant 0 : i32
    %45 = arith.cmpi eq, %arg1, %c0_i32_22 : i32
    %46 = arith.extui %45 : i1 to i32
    %c0_i32_23 = arith.constant 0 : i32
    %47 = arith.cmpi ne, %46, %c0_i32_23 : i32
    scf.if %47 {
      %c0_24 = arith.constant 0 : index
      %c0_25 = arith.constant 0 : index
      %48 = vector.load %arg11[%c0_24, %c0_25] : memref<16x128xf32, #tpu.memory_space<vmem>>, vector<16x128xf32>
      %c0_26 = arith.constant 0 : index
      %c0_27 = arith.constant 0 : index
      %49 = vector.load %arg12[%c0_26, %c0_27] : memref<16x1xf32, #tpu.memory_space<vmem>>, vector<16x1xf32>
      %cst_28 = arith.constant 9.99999971E-10 : f32
      %50 = vector.broadcast %cst_28 : f32 to vector<16x1xf32>
      %51 = arith.addf %50, %49 : vector<16x1xf32>
      %52 = tpu.reciprocal %51 {approx = true} : vector<16x1xf32> -> vector<16x1xf32>
      %53 = vector.broadcast %52 : vector<16x1xf32> to vector<16x128xf32>
      %54 = arith.mulf %48, %53 : vector<16x128xf32>
      %c0_29 = arith.constant 0 : index
      %c0_30 = arith.constant 0 : index
      %c0_31 = arith.constant 0 : index
      %55 = vector.load %arg2[%c0_29, %c0_30, %c0_31] : memref<1x16x128xbf16, #tpu.memory_space<vmem>>, vector<1x16x128xbf16>
      %56 = vector.shape_cast %55 : vector<1x16x128xbf16> to vector<16x128xbf16>
      %57 = arith.extf %56 : vector<16x128xbf16> to vector<16x128xf32>
      %58 = arith.subf %57, %54 : vector<16x128xf32>
      %59 = arith.truncf %58 : vector<16x128xf32> to vector<16x128xbf16>
      %c0_32 = arith.constant 0 : index
      %c0_33 = arith.constant 0 : index
      %60 = vector.load %arg6[%c0_32, %c0_33] : memref<128x128xbf16, #tpu.memory_space<vmem>>, vector<128x128xbf16>
      %cst_34 = arith.constant dense<0.000000e+00> : vector<16x128xf32>
      %61 = tpu.matmul %59, %60, %cst_34 {dimension_numbers = #tpu.dot_dimension_numbers<[1], [0], [0], [1], [0, 0, 1, 1], [], []>} : vector<16x128xbf16>, vector<128x128xbf16>, vector<16x128xf32> -> vector<16x128xf32>
      %c0_35 = arith.constant 0 : index
      %c0_36 = arith.constant 0 : index
      %62 = vector.load %arg7[%c0_35, %c0_36] : memref<1x128xf32, #tpu.memory_space<vmem>>, vector<1x128xf32>
      %63 = vector.broadcast %62 : vector<1x128xf32> to vector<16x128xf32>
      %64 = arith.mulf %61, %63 : vector<16x128xf32>
      %c0_37 = arith.constant 0 : index
      %c0_38 = arith.constant 0 : index
      %65 = vector.load %arg8[%c0_37, %c0_38] : memref<1x128xf32, #tpu.memory_space<vmem>>, vector<1x128xf32>
      %66 = vector.broadcast %65 : vector<1x128xf32> to vector<16x128xf32>
      %67 = arith.addf %64, %66 : vector<16x128xf32>
      %cst_39 = arith.constant 0.000000e+00 : f32
      %68 = vector.broadcast %cst_39 : f32 to vector<16x128xf32>
      %69 = arith.maximumf %67, %68 : vector<16x128xf32>
      %70 = arith.addf %57, %69 : vector<16x128xf32>
      %71 = arith.truncf %70 : vector<16x128xf32> to vector<16x128xbf16>
      %c0_40 = arith.constant 0 : index
      %c0_41 = arith.constant 0 : index
      %c0_42 = arith.constant 0 : index
      %72 = vector.load %arg9[%c0_40, %c0_41, %c0_42] : memref<1x16x128xbf16, #tpu.memory_space<vmem>>, vector<1x16x128xbf16>
      %73 = vector.shape_cast %72 : vector<1x16x128xbf16> to vector<16x128xbf16>
      %74 = vector.shape_cast %71 : vector<16x128xbf16> to vector<1x16x128xbf16>
      tpu.vector_store %arg9[%c0_40, %c0_41, %c0_42], %74 {strides = array<i32>} : memref<1x16x128xbf16, #tpu.memory_space<vmem>>, vector<1x16x128xbf16>,
    } else {
    }
    return
  }
  func.func @transform_0(%arg0: i32, %arg1: i32) -> (i32, i32, i32) {
    %c0_i32 = arith.constant 0 : i32
    %c0_i32_0 = arith.constant 0 : i32
    %c0_i32_1 = arith.constant 0 : i32
    return %arg0, %c0_i32, %c0_i32_0 : i32, i32, i32
  }
  func.func @transform_1(%arg0: i32, %arg1: i32) -> (i32, i32) {
    %c0_i32 = arith.constant 0 : i32
    %c0_i32_0 = arith.constant 0 : i32
    %c0_i32_1 = arith.constant 0 : i32
    return %c0_i32, %c0_i32_0 : i32, i32
  }
  func.func @transform_2(%arg0: i32, %arg1: i32) -> (i32, i32) {
    %c0_i32 = arith.constant 0 : i32
    %c0_i32_0 = arith.constant 0 : i32
    %c0_i32_1 = arith.constant 0 : i32
    return %c0_i32, %c0_i32_0 : i32, i32
  }
  func.func @transform_3(%arg0: i32, %arg1: i32) -> (i32, i32) {
    %c0_i32 = arith.constant 0 : i32
    %c0_i32_0 = arith.constant 0 : i32
    %c0_i32_1 = arith.constant 0 : i32
    return %c0_i32, %c0_i32_0 : i32, i32
  }
  func.func @transform_4(%arg0: i32, %arg1: i32) -> (i32, i32) {
    %c0_i32 = arith.constant 0 : i32
    %c0_i32_0 = arith.constant 0 : i32
    %c0_i32_1 = arith.constant 0 : i32
    return %c0_i32, %c0_i32_0 : i32, i32
  }
  func.func @transform_5(%arg0: i32, %arg1: i32) -> (i32, i32) {
    %c0_i32 = arith.constant 0 : i32
    %c0_i32_0 = arith.constant 0 : i32
    %c0_i32_1 = arith.constant 0 : i32
    return %c0_i32, %c0_i32_0 : i32, i32
  }
  func.func @transform_6(%arg0: i32, %arg1: i32) -> (i32, i32) {
    %c0_i32 = arith.constant 0 : i32
    %c0_i32_0 = arith.constant 0 : i32
    %c0_i32_1 = arith.constant 0 : i32
    return %c0_i32, %c0_i32_0 : i32, i32
  }
  func.func @transform_7(%arg0: i32, %arg1: i32) -> (i32, i32, i32) {
    %c0_i32 = arith.constant 0 : i32
    %c0_i32_0 = arith.constant 0 : i32
    %c0_i32_1 = arith.constant 0 : i32
    return %arg0, %c0_i32, %c0_i32_0 : i32, i32, i32
  }
}

module attributes {stable_mosaic.version = 11 : i64} {
  func.func @_stem_kernel(%arg0: i32, %arg1: memref<32x128xbf16, #tpu.memory_space<vmem>>, %arg2: memref<1x128xf32, #tpu.memory_space<vmem>>, %arg3: memref<1x128xf32, #tpu.memory_space<vmem>>, %arg4: memref<128x128xbf16, #tpu.memory_space<vmem>>, %arg5: memref<1x128xf32, #tpu.memory_space<vmem>>, %arg6: memref<1x128xf32, #tpu.memory_space<vmem>>, %arg7: memref<32x128xbf16, #tpu.memory_space<vmem>>) attributes {dimension_semantics = [#tpu.dimension_semantics<parallel>], iteration_bounds = array<i64: 1>, scalar_prefetch = 0 : i64, scratch_operands = 0 : i64, tpu.core_type = #tpu.core_type<tc>, window_params = [{transform_indices = @transform_0, window_bounds = array<i64: 32, 128>}, {pipeline_mode = #tpu.pipeline_mode<synchronous>, transform_indices = @transform_1, window_bounds = array<i64: 1, 128>}, {pipeline_mode = #tpu.pipeline_mode<synchronous>, transform_indices = @transform_2, window_bounds = array<i64: 1, 128>}, {pipeline_mode = #tpu.pipeline_mode<synchronous>, transform_indices = @transform_3, window_bounds = array<i64: 128, 128>}, {pipeline_mode = #tpu.pipeline_mode<synchronous>, transform_indices = @transform_4, window_bounds = array<i64: 1, 128>}, {pipeline_mode = #tpu.pipeline_mode<synchronous>, transform_indices = @transform_5, window_bounds = array<i64: 1, 128>}, {transform_indices = @transform_6, window_bounds = array<i64: 32, 128>}]} {
    %c0 = arith.constant 0 : index
    %c0_0 = arith.constant 0 : index
    %0 = vector.load %arg1[%c0, %c0_0] : memref<32x128xbf16, #tpu.memory_space<vmem>>, vector<32x128xbf16>
    %c0_1 = arith.constant 0 : index
    %c0_2 = arith.constant 0 : index
    %1 = vector.load %arg2[%c0_1, %c0_2] : memref<1x128xf32, #tpu.memory_space<vmem>>, vector<1x128xf32>
    %2 = arith.extf %0 : vector<32x128xbf16> to vector<32x128xf32>
    %3 = vector.broadcast %1 : vector<1x128xf32> to vector<32x128xf32>
    %4 = arith.mulf %2, %3 : vector<32x128xf32>
    %c0_3 = arith.constant 0 : index
    %c0_4 = arith.constant 0 : index
    %5 = vector.load %arg3[%c0_3, %c0_4] : memref<1x128xf32, #tpu.memory_space<vmem>>, vector<1x128xf32>
    %6 = vector.broadcast %5 : vector<1x128xf32> to vector<32x128xf32>
    %7 = arith.addf %4, %6 : vector<32x128xf32>
    %cst = arith.constant 0.000000e+00 : f32
    %8 = vector.broadcast %cst : f32 to vector<32x128xf32>
    %9 = arith.maximumf %7, %8 : vector<32x128xf32>
    %10 = arith.truncf %9 : vector<32x128xf32> to vector<32x128xbf16>
    %c0_5 = arith.constant 0 : index
    %c0_6 = arith.constant 0 : index
    %11 = vector.load %arg4[%c0_5, %c0_6] : memref<128x128xbf16, #tpu.memory_space<vmem>>, vector<128x128xbf16>
    %cst_7 = arith.constant dense<0.000000e+00> : vector<32x128xf32>
    %12 = tpu.matmul %10, %11, %cst_7 {dimension_numbers = #tpu.dot_dimension_numbers<[1], [0], [0], [1], [0, 0, 1, 1], [], []>} : vector<32x128xbf16>, vector<128x128xbf16>, vector<32x128xf32> -> vector<32x128xf32>
    %c0_8 = arith.constant 0 : index
    %c0_9 = arith.constant 0 : index
    %13 = vector.load %arg5[%c0_8, %c0_9] : memref<1x128xf32, #tpu.memory_space<vmem>>, vector<1x128xf32>
    %14 = vector.broadcast %13 : vector<1x128xf32> to vector<32x128xf32>
    %15 = arith.mulf %12, %14 : vector<32x128xf32>
    %c0_10 = arith.constant 0 : index
    %c0_11 = arith.constant 0 : index
    %16 = vector.load %arg6[%c0_10, %c0_11] : memref<1x128xf32, #tpu.memory_space<vmem>>, vector<1x128xf32>
    %17 = vector.broadcast %16 : vector<1x128xf32> to vector<32x128xf32>
    %18 = arith.addf %15, %17 : vector<32x128xf32>
    %cst_12 = arith.constant 0.000000e+00 : f32
    %19 = vector.broadcast %cst_12 : f32 to vector<32x128xf32>
    %20 = arith.maximumf %18, %19 : vector<32x128xf32>
    %21 = arith.truncf %20 : vector<32x128xf32> to vector<32x128xbf16>
    %c0_13 = arith.constant 0 : index
    %c0_14 = arith.constant 0 : index
    %22 = vector.load %arg7[%c0_13, %c0_14] : memref<32x128xbf16, #tpu.memory_space<vmem>>, vector<32x128xbf16>
    tpu.vector_store %arg7[%c0_13, %c0_14], %21 {strides = array<i32>} : memref<32x128xbf16, #tpu.memory_space<vmem>>, vector<32x128xbf16>,
    return
  }
  func.func @transform_0(%arg0: i32) -> (i32, i32) {
    %c0_i32 = arith.constant 0 : i32
    %c0_i32_0 = arith.constant 0 : i32
    return %arg0, %c0_i32 : i32, i32
  }
  func.func @transform_1(%arg0: i32) -> (i32, i32) {
    %c0_i32 = arith.constant 0 : i32
    %c0_i32_0 = arith.constant 0 : i32
    %c0_i32_1 = arith.constant 0 : i32
    return %c0_i32, %c0_i32_0 : i32, i32
  }
  func.func @transform_2(%arg0: i32) -> (i32, i32) {
    %c0_i32 = arith.constant 0 : i32
    %c0_i32_0 = arith.constant 0 : i32
    %c0_i32_1 = arith.constant 0 : i32
    return %c0_i32, %c0_i32_0 : i32, i32
  }
  func.func @transform_3(%arg0: i32) -> (i32, i32) {
    %c0_i32 = arith.constant 0 : i32
    %c0_i32_0 = arith.constant 0 : i32
    %c0_i32_1 = arith.constant 0 : i32
    return %c0_i32, %c0_i32_0 : i32, i32
  }
  func.func @transform_4(%arg0: i32) -> (i32, i32) {
    %c0_i32 = arith.constant 0 : i32
    %c0_i32_0 = arith.constant 0 : i32
    %c0_i32_1 = arith.constant 0 : i32
    return %c0_i32, %c0_i32_0 : i32, i32
  }
  func.func @transform_5(%arg0: i32) -> (i32, i32) {
    %c0_i32 = arith.constant 0 : i32
    %c0_i32_0 = arith.constant 0 : i32
    %c0_i32_1 = arith.constant 0 : i32
    return %c0_i32, %c0_i32_0 : i32, i32
  }
  func.func @transform_6(%arg0: i32) -> (i32, i32) {
    %c0_i32 = arith.constant 0 : i32
    %c0_i32_0 = arith.constant 0 : i32
    return %arg0, %c0_i32 : i32, i32
  }
}

module attributes {stable_mosaic.version = 11 : i64} {
  func.func @_fuse_kernel(%arg0: i32, %arg1: i32, %arg2: memref<1x16x128xbf16, #tpu.memory_space<vmem>>, %arg3: memref<1x16x128xbf16, #tpu.memory_space<vmem>>, %arg4: memref<1x16x128xbf16, #tpu.memory_space<vmem>>, %arg5: memref<1x16x128xbf16, #tpu.memory_space<vmem>>, %arg6: memref<1x16x128xbf16, #tpu.memory_space<vmem>>, %arg7: memref<640x1024xbf16, #tpu.memory_space<vmem>>, %arg8: memref<1x1024xf32, #tpu.memory_space<vmem>>, %arg9: memref<1x1024xf32, #tpu.memory_space<vmem>>, %arg10: memref<1x16x1024xbf16, #tpu.memory_space<vmem>>, %arg11: memref<1x1x1024xf32, #tpu.memory_space<vmem>>, %arg12: memref<1x1x1024xf32, #tpu.memory_space<vmem>>) attributes {dimension_semantics = [#tpu.dimension_semantics<parallel>, #tpu.dimension_semantics<arbitrary>], iteration_bounds = array<i64: 2, 1>, scalar_prefetch = 0 : i64, scratch_operands = 0 : i64, tpu.core_type = #tpu.core_type<tc>, window_params = [{transform_indices = @transform_0, window_bounds = array<i64: 1, 16, 128>}, {transform_indices = @transform_1, window_bounds = array<i64: 1, 16, 128>}, {transform_indices = @transform_2, window_bounds = array<i64: 1, 16, 128>}, {transform_indices = @transform_3, window_bounds = array<i64: 1, 16, 128>}, {transform_indices = @transform_4, window_bounds = array<i64: 1, 16, 128>}, {pipeline_mode = #tpu.pipeline_mode<synchronous>, transform_indices = @transform_5, window_bounds = array<i64: 640, 1024>}, {pipeline_mode = #tpu.pipeline_mode<synchronous>, transform_indices = @transform_6, window_bounds = array<i64: 1, 1024>}, {pipeline_mode = #tpu.pipeline_mode<synchronous>, transform_indices = @transform_7, window_bounds = array<i64: 1, 1024>}, {transform_indices = @transform_8, window_bounds = array<i64: 1, 16, 1024>}, {transform_indices = @transform_9, window_bounds = array<i64: 1, 1, 1024>}, {transform_indices = @transform_10, window_bounds = array<i64: 1, 1, 1024>}]} {
    %c0 = arith.constant 0 : index
    %c0_0 = arith.constant 0 : index
    %c0_1 = arith.constant 0 : index
    %0 = vector.load %arg2[%c0, %c0_0, %c0_1] : memref<1x16x128xbf16, #tpu.memory_space<vmem>>, vector<1x16x128xbf16>
    %1 = vector.shape_cast %0 : vector<1x16x128xbf16> to vector<16x128xbf16>
    %c0_2 = arith.constant 0 : index
    %c0_3 = arith.constant 0 : index
    %c0_4 = arith.constant 0 : index
    %2 = vector.load %arg3[%c0_2, %c0_3, %c0_4] : memref<1x16x128xbf16, #tpu.memory_space<vmem>>, vector<1x16x128xbf16>
    %3 = vector.shape_cast %2 : vector<1x16x128xbf16> to vector<16x128xbf16>
    %c0_5 = arith.constant 0 : index
    %c0_6 = arith.constant 0 : index
    %c0_7 = arith.constant 0 : index
    %4 = vector.load %arg4[%c0_5, %c0_6, %c0_7] : memref<1x16x128xbf16, #tpu.memory_space<vmem>>, vector<1x16x128xbf16>
    %5 = vector.shape_cast %4 : vector<1x16x128xbf16> to vector<16x128xbf16>
    %c0_8 = arith.constant 0 : index
    %c0_9 = arith.constant 0 : index
    %c0_10 = arith.constant 0 : index
    %6 = vector.load %arg5[%c0_8, %c0_9, %c0_10] : memref<1x16x128xbf16, #tpu.memory_space<vmem>>, vector<1x16x128xbf16>
    %7 = vector.shape_cast %6 : vector<1x16x128xbf16> to vector<16x128xbf16>
    %c0_11 = arith.constant 0 : index
    %c0_12 = arith.constant 0 : index
    %c0_13 = arith.constant 0 : index
    %8 = vector.load %arg6[%c0_11, %c0_12, %c0_13] : memref<1x16x128xbf16, #tpu.memory_space<vmem>>, vector<1x16x128xbf16>
    %9 = vector.shape_cast %8 : vector<1x16x128xbf16> to vector<16x128xbf16>
    %10 = tpu.concatenate %1, %3, %5, %7, %9 in 1 : vector<16x128xbf16>, vector<16x128xbf16>, vector<16x128xbf16>, vector<16x128xbf16>, vector<16x128xbf16> -> vector<16x640xbf16>
    %c0_14 = arith.constant 0 : index
    %c0_15 = arith.constant 0 : index
    %11 = vector.load %arg7[%c0_14, %c0_15] : memref<640x1024xbf16, #tpu.memory_space<vmem>>, vector<640x1024xbf16>
    %cst = arith.constant dense<0.000000e+00> : vector<16x1024xf32>
    %12 = tpu.matmul %10, %11, %cst {dimension_numbers = #tpu.dot_dimension_numbers<[1], [0], [0], [1], [0, 0, 1, 1], [], []>} : vector<16x640xbf16>, vector<640x1024xbf16>, vector<16x1024xf32> -> vector<16x1024xf32>
    %c0_16 = arith.constant 0 : index
    %c0_17 = arith.constant 0 : index
    %13 = vector.load %arg8[%c0_16, %c0_17] : memref<1x1024xf32, #tpu.memory_space<vmem>>, vector<1x1024xf32>
    %14 = vector.broadcast %13 : vector<1x1024xf32> to vector<16x1024xf32>
    %15 = arith.mulf %12, %14 : vector<16x1024xf32>
    %c0_18 = arith.constant 0 : index
    %c0_19 = arith.constant 0 : index
    %16 = vector.load %arg9[%c0_18, %c0_19] : memref<1x1024xf32, #tpu.memory_space<vmem>>, vector<1x1024xf32>
    %17 = vector.broadcast %16 : vector<1x1024xf32> to vector<16x1024xf32>
    %18 = arith.addf %15, %17 : vector<16x1024xf32>
    %cst_20 = arith.constant 0.000000e+00 : f32
    %19 = vector.broadcast %cst_20 : f32 to vector<16x1024xf32>
    %20 = arith.cmpf oge, %18, %19 : vector<16x1024xf32>
    %cst_21 = arith.constant 2.000000e-01 : f32
    %21 = vector.broadcast %cst_21 : f32 to vector<16x1024xf32>
    %22 = arith.mulf %21, %18 : vector<16x1024xf32>
    %23 = arith.select %20, %18, %22 : vector<16x1024xi1>, vector<16x1024xf32>
    %24 = arith.truncf %23 : vector<16x1024xf32> to vector<16x1024xbf16>
    %c0_22 = arith.constant 0 : index
    %c0_23 = arith.constant 0 : index
    %c0_24 = arith.constant 0 : index
    %25 = vector.load %arg10[%c0_22, %c0_23, %c0_24] : memref<1x16x1024xbf16, #tpu.memory_space<vmem>>, vector<1x16x1024xbf16>
    %26 = vector.shape_cast %25 : vector<1x16x1024xbf16> to vector<16x1024xbf16>
    %27 = vector.shape_cast %24 : vector<16x1024xbf16> to vector<1x16x1024xbf16>
    tpu.vector_store %arg10[%c0_22, %c0_23, %c0_24], %27 {strides = array<i32>} : memref<1x16x1024xbf16, #tpu.memory_space<vmem>>, vector<1x16x1024xbf16>,
    %cst_25 = arith.constant dense<0xFF800000> : vector<1024xf32>
    %28 = vector.multi_reduction <maximumf>, %23, %cst_25 [0] : vector<16x1024xf32> to vector<1024xf32>
    %29 = vector.shape_cast %28 : vector<1024xf32> to vector<1x1024xf32>
    %cst_26 = arith.constant dense<0.000000e+00> : vector<1024xf32>
    %30 = vector.multi_reduction <add>, %23, %cst_26 [0] : vector<16x1024xf32> to vector<1024xf32>
    %31 = vector.shape_cast %30 : vector<1024xf32> to vector<1x1024xf32>
    %c0_i32 = arith.constant 0 : i32
    %32 = arith.cmpi eq, %arg1, %c0_i32 : i32
    %33 = arith.extui %32 : i1 to i32
    %c0_i32_27 = arith.constant 0 : i32
    %34 = arith.cmpi ne, %33, %c0_i32_27 : i32
    scf.if %34 {
      %c0_32 = arith.constant 0 : index
      %c0_33 = arith.constant 0 : index
      %c0_34 = arith.constant 0 : index
      %41 = vector.load %arg11[%c0_32, %c0_33, %c0_34] : memref<1x1x1024xf32, #tpu.memory_space<vmem>>, vector<1x1x1024xf32>
      %42 = vector.shape_cast %41 : vector<1x1x1024xf32> to vector<1x1024xf32>
      %43 = vector.shape_cast %29 : vector<1x1024xf32> to vector<1x1x1024xf32>
      tpu.vector_store %arg11[%c0_32, %c0_33, %c0_34], %43 {strides = array<i32>} : memref<1x1x1024xf32, #tpu.memory_space<vmem>>, vector<1x1x1024xf32>,
      %c0_35 = arith.constant 0 : index
      %c0_36 = arith.constant 0 : index
      %c0_37 = arith.constant 0 : index
      %44 = vector.load %arg12[%c0_35, %c0_36, %c0_37] : memref<1x1x1024xf32, #tpu.memory_space<vmem>>, vector<1x1x1024xf32>
      %45 = vector.shape_cast %44 : vector<1x1x1024xf32> to vector<1x1024xf32>
      %46 = vector.shape_cast %31 : vector<1x1024xf32> to vector<1x1x1024xf32>
      tpu.vector_store %arg12[%c0_35, %c0_36, %c0_37], %46 {strides = array<i32>} : memref<1x1x1024xf32, #tpu.memory_space<vmem>>, vector<1x1x1024xf32>,
    } else {
    }
    %c0_i32_28 = arith.constant 0 : i32
    %35 = arith.cmpi sgt, %arg1, %c0_i32_28 : i32
    %36 = arith.extui %35 : i1 to i32
    %c0_i32_29 = arith.constant 0 : i32
    %37 = arith.cmpi ne, %36, %c0_i32_29 : i32
    scf.if %37 {
      %c0_32 = arith.constant 0 : index
      %c0_33 = arith.constant 0 : index
      %c0_34 = arith.constant 0 : index
      %41 = vector.load %arg11[%c0_32, %c0_33, %c0_34] : memref<1x1x1024xf32, #tpu.memory_space<vmem>>, vector<1x1x1024xf32>
      %42 = vector.shape_cast %41 : vector<1x1x1024xf32> to vector<1x1024xf32>
      %43 = arith.maximumf %42, %29 : vector<1x1024xf32>
      %c0_35 = arith.constant 0 : index
      %c0_36 = arith.constant 0 : index
      %c0_37 = arith.constant 0 : index
      %44 = vector.load %arg11[%c0_35, %c0_36, %c0_37] : memref<1x1x1024xf32, #tpu.memory_space<vmem>>, vector<1x1x1024xf32>
      %45 = vector.shape_cast %44 : vector<1x1x1024xf32> to vector<1x1024xf32>
      %46 = vector.shape_cast %43 : vector<1x1024xf32> to vector<1x1x1024xf32>
      tpu.vector_store %arg11[%c0_35, %c0_36, %c0_37], %46 {strides = array<i32>} : memref<1x1x1024xf32, #tpu.memory_space<vmem>>, vector<1x1x1024xf32>,
      %c0_38 = arith.constant 0 : index
      %c0_39 = arith.constant 0 : index
      %c0_40 = arith.constant 0 : index
      %47 = vector.load %arg12[%c0_38, %c0_39, %c0_40] : memref<1x1x1024xf32, #tpu.memory_space<vmem>>, vector<1x1x1024xf32>
      %48 = vector.shape_cast %47 : vector<1x1x1024xf32> to vector<1x1024xf32>
      %49 = arith.addf %48, %31 : vector<1x1024xf32>
      %c0_41 = arith.constant 0 : index
      %c0_42 = arith.constant 0 : index
      %c0_43 = arith.constant 0 : index
      %50 = vector.load %arg12[%c0_41, %c0_42, %c0_43] : memref<1x1x1024xf32, #tpu.memory_space<vmem>>, vector<1x1x1024xf32>
      %51 = vector.shape_cast %50 : vector<1x1x1024xf32> to vector<1x1024xf32>
      %52 = vector.shape_cast %49 : vector<1x1024xf32> to vector<1x1x1024xf32>
      tpu.vector_store %arg12[%c0_41, %c0_42, %c0_43], %52 {strides = array<i32>} : memref<1x1x1024xf32, #tpu.memory_space<vmem>>, vector<1x1x1024xf32>,
    } else {
    }
    %c0_i32_30 = arith.constant 0 : i32
    %38 = arith.cmpi eq, %arg1, %c0_i32_30 : i32
    %39 = arith.extui %38 : i1 to i32
    %c0_i32_31 = arith.constant 0 : i32
    %40 = arith.cmpi ne, %39, %c0_i32_31 : i32
    scf.if %40 {
      %c0_32 = arith.constant 0 : index
      %c0_33 = arith.constant 0 : index
      %c0_34 = arith.constant 0 : index
      %41 = vector.load %arg12[%c0_32, %c0_33, %c0_34] : memref<1x1x1024xf32, #tpu.memory_space<vmem>>, vector<1x1x1024xf32>
      %42 = vector.shape_cast %41 : vector<1x1x1024xf32> to vector<1x1024xf32>
      %cst_35 = arith.constant 6.250000e-02 : f32
      %43 = vector.broadcast %cst_35 : f32 to vector<1x1024xf32>
      %44 = arith.mulf %42, %43 : vector<1x1024xf32>
      %c0_36 = arith.constant 0 : index
      %c0_37 = arith.constant 0 : index
      %c0_38 = arith.constant 0 : index
      %45 = vector.load %arg12[%c0_36, %c0_37, %c0_38] : memref<1x1x1024xf32, #tpu.memory_space<vmem>>, vector<1x1x1024xf32>
      %46 = vector.shape_cast %45 : vector<1x1x1024xf32> to vector<1x1024xf32>
      %47 = vector.shape_cast %44 : vector<1x1024xf32> to vector<1x1x1024xf32>
      tpu.vector_store %arg12[%c0_36, %c0_37, %c0_38], %47 {strides = array<i32>} : memref<1x1x1024xf32, #tpu.memory_space<vmem>>, vector<1x1x1024xf32>,
    } else {
    }
    return
  }
  func.func @transform_0(%arg0: i32, %arg1: i32) -> (i32, i32, i32) {
    %c0_i32 = arith.constant 0 : i32
    %c0_i32_0 = arith.constant 0 : i32
    return %arg0, %arg1, %c0_i32 : i32, i32, i32
  }
  func.func @transform_1(%arg0: i32, %arg1: i32) -> (i32, i32, i32) {
    %c0_i32 = arith.constant 0 : i32
    %c0_i32_0 = arith.constant 0 : i32
    return %arg0, %arg1, %c0_i32 : i32, i32, i32
  }
  func.func @transform_2(%arg0: i32, %arg1: i32) -> (i32, i32, i32) {
    %c0_i32 = arith.constant 0 : i32
    %c0_i32_0 = arith.constant 0 : i32
    return %arg0, %arg1, %c0_i32 : i32, i32, i32
  }
  func.func @transform_3(%arg0: i32, %arg1: i32) -> (i32, i32, i32) {
    %c0_i32 = arith.constant 0 : i32
    %c0_i32_0 = arith.constant 0 : i32
    return %arg0, %arg1, %c0_i32 : i32, i32, i32
  }
  func.func @transform_4(%arg0: i32, %arg1: i32) -> (i32, i32, i32) {
    %c0_i32 = arith.constant 0 : i32
    %c0_i32_0 = arith.constant 0 : i32
    return %arg0, %arg1, %c0_i32 : i32, i32, i32
  }
  func.func @transform_5(%arg0: i32, %arg1: i32) -> (i32, i32) {
    %c0_i32 = arith.constant 0 : i32
    %c0_i32_0 = arith.constant 0 : i32
    %c0_i32_1 = arith.constant 0 : i32
    return %c0_i32, %c0_i32_0 : i32, i32
  }
  func.func @transform_6(%arg0: i32, %arg1: i32) -> (i32, i32) {
    %c0_i32 = arith.constant 0 : i32
    %c0_i32_0 = arith.constant 0 : i32
    %c0_i32_1 = arith.constant 0 : i32
    return %c0_i32, %c0_i32_0 : i32, i32
  }
  func.func @transform_7(%arg0: i32, %arg1: i32) -> (i32, i32) {
    %c0_i32 = arith.constant 0 : i32
    %c0_i32_0 = arith.constant 0 : i32
    %c0_i32_1 = arith.constant 0 : i32
    return %c0_i32, %c0_i32_0 : i32, i32
  }
  func.func @transform_8(%arg0: i32, %arg1: i32) -> (i32, i32, i32) {
    %c0_i32 = arith.constant 0 : i32
    %c0_i32_0 = arith.constant 0 : i32
    return %arg0, %arg1, %c0_i32 : i32, i32, i32
  }
  func.func @transform_9(%arg0: i32, %arg1: i32) -> (i32, i32, i32) {
    %c0_i32 = arith.constant 0 : i32
    %c0_i32_0 = arith.constant 0 : i32
    %c0_i32_1 = arith.constant 0 : i32
    return %arg0, %c0_i32, %c0_i32_0 : i32, i32, i32
  }
  func.func @transform_10(%arg0: i32, %arg1: i32) -> (i32, i32, i32) {
    %c0_i32 = arith.constant 0 : i32
    %c0_i32_0 = arith.constant 0 : i32
    %c0_i32_1 = arith.constant 0 : i32
    return %arg0, %c0_i32, %c0_i32_0 : i32, i32, i32
  }
}

module attributes {stable_mosaic.version = 11 : i64} {
  func.func @_head_kernel(%arg0: i32, %arg1: i32, %arg2: memref<1x16x1024xbf16, #tpu.memory_space<vmem>>, %arg3: memref<1x1x512xf32, #tpu.memory_space<vmem>>, %arg4: memref<1024x512xbf16, #tpu.memory_space<vmem>>, %arg5: memref<1x512xf32, #tpu.memory_space<vmem>>, %arg6: memref<512x128xbf16, #tpu.memory_space<vmem>>, %arg7: memref<1x128xf32, #tpu.memory_space<vmem>>, %arg8: memref<1x128xf32, #tpu.memory_space<vmem>>, %arg9: memref<1x16x128xbf16, #tpu.memory_space<vmem>>) attributes {dimension_semantics = [#tpu.dimension_semantics<parallel>, #tpu.dimension_semantics<parallel>], iteration_bounds = array<i64: 2, 1>, scalar_prefetch = 0 : i64, scratch_operands = 0 : i64, tpu.core_type = #tpu.core_type<tc>, window_params = [{transform_indices = @transform_0, window_bounds = array<i64: 1, 16, 1024>}, {transform_indices = @transform_1, window_bounds = array<i64: 1, 1, 512>}, {pipeline_mode = #tpu.pipeline_mode<synchronous>, transform_indices = @transform_2, window_bounds = array<i64: 1024, 512>}, {pipeline_mode = #tpu.pipeline_mode<synchronous>, transform_indices = @transform_3, window_bounds = array<i64: 1, 512>}, {pipeline_mode = #tpu.pipeline_mode<synchronous>, transform_indices = @transform_4, window_bounds = array<i64: 512, 128>}, {pipeline_mode = #tpu.pipeline_mode<synchronous>, transform_indices = @transform_5, window_bounds = array<i64: 1, 128>}, {pipeline_mode = #tpu.pipeline_mode<synchronous>, transform_indices = @transform_6, window_bounds = array<i64: 1, 128>}, {transform_indices = @transform_7, window_bounds = array<i64: 1, 16, 128>}]} {
    %c0 = arith.constant 0 : index
    %c0_0 = arith.constant 0 : index
    %c0_1 = arith.constant 0 : index
    %0 = vector.load %arg2[%c0, %c0_0, %c0_1] : memref<1x16x1024xbf16, #tpu.memory_space<vmem>>, vector<1x16x1024xbf16>
    %1 = vector.shape_cast %0 : vector<1x16x1024xbf16> to vector<16x1024xbf16>
    %c0_2 = arith.constant 0 : index
    %c0_3 = arith.constant 0 : index
    %2 = vector.load %arg4[%c0_2, %c0_3] : memref<1024x512xbf16, #tpu.memory_space<vmem>>, vector<1024x512xbf16>
    %cst = arith.constant dense<0.000000e+00> : vector<16x512xf32>
    %3 = tpu.matmul %1, %2, %cst {dimension_numbers = #tpu.dot_dimension_numbers<[1], [0], [0], [1], [0, 0, 1, 1], [], []>} : vector<16x1024xbf16>, vector<1024x512xbf16>, vector<16x512xf32> -> vector<16x512xf32>
    %c0_4 = arith.constant 0 : index
    %c0_5 = arith.constant 0 : index
    %4 = vector.load %arg5[%c0_4, %c0_5] : memref<1x512xf32, #tpu.memory_space<vmem>>, vector<1x512xf32>
    %5 = vector.broadcast %4 : vector<1x512xf32> to vector<16x512xf32>
    %6 = arith.mulf %3, %5 : vector<16x512xf32>
    %c0_6 = arith.constant 0 : index
    %c0_7 = arith.constant 0 : index
    %c0_8 = arith.constant 0 : index
    %7 = vector.load %arg3[%c0_6, %c0_7, %c0_8] : memref<1x1x512xf32, #tpu.memory_space<vmem>>, vector<1x1x512xf32>
    %8 = vector.shape_cast %7 : vector<1x1x512xf32> to vector<1x512xf32>
    %9 = vector.broadcast %8 : vector<1x512xf32> to vector<16x512xf32>
    %10 = arith.addf %6, %9 : vector<16x512xf32>
    %cst_9 = arith.constant 0.000000e+00 : f32
    %11 = vector.broadcast %cst_9 : f32 to vector<16x512xf32>
    %12 = arith.maximumf %10, %11 : vector<16x512xf32>
    %13 = arith.truncf %12 : vector<16x512xf32> to vector<16x512xbf16>
    %c0_10 = arith.constant 0 : index
    %c0_11 = arith.constant 0 : index
    %14 = vector.load %arg6[%c0_10, %c0_11] : memref<512x128xbf16, #tpu.memory_space<vmem>>, vector<512x128xbf16>
    %cst_12 = arith.constant dense<0.000000e+00> : vector<16x128xf32>
    %15 = tpu.matmul %13, %14, %cst_12 {dimension_numbers = #tpu.dot_dimension_numbers<[1], [0], [0], [1], [0, 0, 1, 1], [], []>} : vector<16x512xbf16>, vector<512x128xbf16>, vector<16x128xf32> -> vector<16x128xf32>
    %c0_13 = arith.constant 0 : index
    %c0_14 = arith.constant 0 : index
    %16 = vector.load %arg7[%c0_13, %c0_14] : memref<1x128xf32, #tpu.memory_space<vmem>>, vector<1x128xf32>
    %17 = vector.broadcast %16 : vector<1x128xf32> to vector<16x128xf32>
    %18 = arith.mulf %15, %17 : vector<16x128xf32>
    %c0_15 = arith.constant 0 : index
    %c0_16 = arith.constant 0 : index
    %19 = vector.load %arg8[%c0_15, %c0_16] : memref<1x128xf32, #tpu.memory_space<vmem>>, vector<1x128xf32>
    %20 = vector.broadcast %19 : vector<1x128xf32> to vector<16x128xf32>
    %21 = arith.addf %18, %20 : vector<16x128xf32>
    %cst_17 = arith.constant 0.000000e+00 : f32
    %22 = vector.broadcast %cst_17 : f32 to vector<16x128xf32>
    %23 = arith.maximumf %21, %22 : vector<16x128xf32>
    %24 = arith.truncf %23 : vector<16x128xf32> to vector<16x128xbf16>
    %c0_18 = arith.constant 0 : index
    %c0_19 = arith.constant 0 : index
    %c0_20 = arith.constant 0 : index
    %25 = vector.load %arg9[%c0_18, %c0_19, %c0_20] : memref<1x16x128xbf16, #tpu.memory_space<vmem>>, vector<1x16x128xbf16>
    %26 = vector.shape_cast %25 : vector<1x16x128xbf16> to vector<16x128xbf16>
    %27 = vector.shape_cast %24 : vector<16x128xbf16> to vector<1x16x128xbf16>
    tpu.vector_store %arg9[%c0_18, %c0_19, %c0_20], %27 {strides = array<i32>} : memref<1x16x128xbf16, #tpu.memory_space<vmem>>, vector<1x16x128xbf16>,
    return
  }
  func.func @transform_0(%arg0: i32, %arg1: i32) -> (i32, i32, i32) {
    %c0_i32 = arith.constant 0 : i32
    %c0_i32_0 = arith.constant 0 : i32
    return %arg0, %arg1, %c0_i32 : i32, i32, i32
  }
  func.func @transform_1(%arg0: i32, %arg1: i32) -> (i32, i32, i32) {
    %c0_i32 = arith.constant 0 : i32
    %c0_i32_0 = arith.constant 0 : i32
    %c0_i32_1 = arith.constant 0 : i32
    return %arg0, %c0_i32, %c0_i32_0 : i32, i32, i32
  }
  func.func @transform_2(%arg0: i32, %arg1: i32) -> (i32, i32) {
    %c0_i32 = arith.constant 0 : i32
    %c0_i32_0 = arith.constant 0 : i32
    %c0_i32_1 = arith.constant 0 : i32
    return %c0_i32, %c0_i32_0 : i32, i32
  }
  func.func @transform_3(%arg0: i32, %arg1: i32) -> (i32, i32) {
    %c0_i32 = arith.constant 0 : i32
    %c0_i32_0 = arith.constant 0 : i32
    %c0_i32_1 = arith.constant 0 : i32
    return %c0_i32, %c0_i32_0 : i32, i32
  }
  func.func @transform_4(%arg0: i32, %arg1: i32) -> (i32, i32) {
    %c0_i32 = arith.constant 0 : i32
    %c0_i32_0 = arith.constant 0 : i32
    %c0_i32_1 = arith.constant 0 : i32
    return %c0_i32, %c0_i32_0 : i32, i32
  }
  func.func @transform_5(%arg0: i32, %arg1: i32) -> (i32, i32) {
    %c0_i32 = arith.constant 0 : i32
    %c0_i32_0 = arith.constant 0 : i32
    %c0_i32_1 = arith.constant 0 : i32
    return %c0_i32, %c0_i32_0 : i32, i32
  }
  func.func @transform_6(%arg0: i32, %arg1: i32) -> (i32, i32) {
    %c0_i32 = arith.constant 0 : i32
    %c0_i32_0 = arith.constant 0 : i32
    %c0_i32_1 = arith.constant 0 : i32
    return %c0_i32, %c0_i32_0 : i32, i32
  }
  func.func @transform_7(%arg0: i32, %arg1: i32) -> (i32, i32, i32) {
    %c0_i32 = arith.constant 0 : i32
    %c0_i32_0 = arith.constant 0 : i32
    return %arg0, %arg1, %c0_i32 : i32, i32, i32
  }
}

</mosaic_0001>

<llo_original>
// kernel: pct_forward.8
$region0: #{pct_forward.8}
  #allocation0 [shape = 'u32[]', space=smem, size = 0x4, offset = 0x4, fixed_abs, tag = 'smem constant byte address 0x4 - core index']
  #allocation1 [shape = 'u32[144,128]{1,0:T(1,128)}', space=vmem, size = 0x12000, scoped, tag = 'internal scratch']
  %s0 = inlined_call_operand.vmem [shape: bf16[32,128], index: 0, kind: input, shape index: {}]
  %s1 = inlined_call_operand.hbm [shape: f32[1,128], index: 1, kind: input, shape index: {}]
  %s2 = inlined_call_operand.hbm [shape: f32[1,128], index: 2, kind: input, shape index: {}]
  %s3 = inlined_call_operand.hbm [shape: bf16[128,128], index: 3, kind: input, shape index: {}]
  %s4 = inlined_call_operand.hbm [shape: f32[1,128], index: 4, kind: input, shape index: {}]
  %s5 = inlined_call_operand.hbm [shape: f32[1,128], index: 5, kind: input, shape index: {}]
  %s6 = inlined_call_operand.vmem [shape: bf16[32,128], index: 6, kind: output, shape index: {}]
  %s7 = sld [smem:[#allocation0]]
  $region54: #{pct_forward.8} parent=0
    _
  %s9 = ssub.s32 1, %s7
  %s10 = scalar_select 0, %s9, %s7
  $region1: #{pct_forward.8} parent=0
    #allocation2 [shape = 'u8[512]{0}', space=vmem, size = 0x400, scoped, tag = 'input window, operand 1, single buffered']
    #allocation3 [shape = 's32[1]{0}', space=sflag, size = 0x4, scoped, tag = 'scoped memory for pct_forward.8']
    #allocation4 [shape = 'u8[512]{0}', space=vmem, size = 0x400, scoped, tag = 'input window, operand 2, single buffered']
    #allocation5 [shape = 's32[1]{0}', space=sflag, size = 0x4, scoped, tag = 'scoped memory for pct_forward.8']
    #allocation6 [shape = 'u8[32768]{0}', space=vmem, size = 0x8000, scoped, tag = 'input window, operand 3, single buffered']
    #allocation7 [shape = 'u8[512]{0}', space=vmem, size = 0x400, scoped, tag = 'input window, operand 4, single buffered']
    #allocation8 [shape = 's32[1]{0}', space=sflag, size = 0x4, scoped, tag = 'scoped memory for pct_forward.8']
    #allocation9 [shape = 'u8[512]{0}', space=vmem, size = 0x400, scoped, tag = 'input window, operand 5, single buffered']
    %11 = vsyncpa [#allocation3], 0
    %12 = vsyncpa [#allocation5], 0
    %13 = vsyncpa [#allocation8], 0
    // Predicated region
    $region2: #{pct_forward.8} parent=1 // pred_check
      _
    $region3: #{pct_forward.8} parent=1 // pred_check_branch
      %15 = sbr.rel (0) target = $region5
    $region4: #{pct_forward.8} parent=1 // pred_region
      _
    $region5: #{pct_forward.8} parent=1 // pred_fallthru
      _
    // Predicated region
    $region6: #{pct_forward.8} parent=1 // pred_check
      _
    $region7: #{pct_forward.8} parent=1 // pred_check_branch
      %17 = sbr.rel (0) target = $region9
    $region8: #{pct_forward.8} parent=1 // pred_region
      %s19 = ssub.s32 16, 16
      %20 = vsyncadd [#allocation3], %s19
      %s22 = sshll.u32 [#allocation2], 4
      %s23 = int_to_ptr.vmem [resolvable:$true] %s22
      %25 = dma.hbm_to_vmem [thread:$0]  %s1, 16, %s23, [#allocation3]
    $region9: #{pct_forward.8} parent=1 // pred_fallthru
      _
    // Predicated region
    $region10: #{pct_forward.8} parent=1 // pred_check
      _
    $region11: #{pct_forward.8} parent=1 // pred_check_branch
      %27 = sbr.rel (0) target = $region13
    $region12: #{pct_forward.8} parent=1 // pred_region
      %s29 = ssub.s32 16, 16
      %30 = vsyncadd [#allocation5], %s29
      %s32 = sshll.u32 [#allocation4], 4
      %s33 = int_to_ptr.vmem [resolvable:$true] %s32
      %35 = dma.hbm_to_vmem [thread:$0]  %s2, 16, %s33, [#allocation5]
    $region13: #{pct_forward.8} parent=1 // pred_fallthru
      _
    // Predicated region
    $region14: #{pct_forward.8} parent=1 // pred_check
      _
    $region15: #{pct_forward.8} parent=1 // pred_check_branch
      %37 = sbr.rel (0) target = $region17
    $region16: #{pct_forward.8} parent=1 // pred_region
      %s39 = ssub.s32 1024, 1024
      %40 = vsyncadd [#allocation5], %s39
      %s41 = sshll.u32 [#allocation6], 4
      %s42 = int_to_ptr.vmem [resolvable:$true] %s41
      %47 = dma.hbm_to_vmem [thread:$0]  %s3, 1024, %s42, [#allocation5], 64, 64, 4
    $region17: #{pct_forward.8} parent=1 // pred_fallthru
      _
    // Predicated region
    $region18: #{pct_forward.8} parent=1 // pred_check
      _
    $region19: #{pct_forward.8} parent=1 // pred_check_branch
      %49 = sbr.rel (0) target = $region21
    $region20: #{pct_forward.8} parent=1 // pred_region
      %s51 = ssub.s32 16, 16
      %52 = vsyncadd [#allocation8], %s51
      %s54 = sshll.u32 [#allocation7], 4
      %s55 = int_to_ptr.vmem [resolvable:$true] %s54
      %57 = dma.hbm_to_vmem [thread:$0]  %s4, 16, %s55, [#allocation8]
    $region21: #{pct_forward.8} parent=1 // pred_fallthru
      _
    // Predicated region
    $region22: #{pct_forward.8} parent=1 // pred_check
      _
    $region23: #{pct_forward.8} parent=1 // pred_check_branch
      %59 = sbr.rel (0) target = $region25
    $region24: #{pct_forward.8} parent=1 // pred_region
      %s61 = ssub.s32 16, 16
      %62 = vsyncadd [#allocation8], %s61
      %s64 = sshll.u32 [#allocation9], 4
      %s65 = int_to_ptr.vmem [resolvable:$true] %s64
      %67 = dma.hbm_to_vmem [thread:$0]  %s5, 16, %s65, [#allocation8]
    $region25: #{pct_forward.8} parent=1 // pred_fallthru
      _
    // Predicated region
    $region26: #{pct_forward.8} parent=1 // pred_check
      _
    $region27: #{pct_forward.8} parent=1 // pred_check_branch
      %69 = sbr.rel (0) target = $region29
    $region28: #{pct_forward.8} parent=1 // pred_region
      %70 = dma.done [#allocation3], 16
    $region29: #{pct_forward.8} parent=1 // pred_fallthru
      _
    // Predicated region
    $region30: #{pct_forward.8} parent=1 // pred_check
      _
    $region31: #{pct_forward.8} parent=1 // pred_check_branch
      %72 = sbr.rel (0) target = $region33
    $region32: #{pct_forward.8} parent=1 // pred_region
      %73 = dma.done [#allocation5], 16
    $region33: #{pct_forward.8} parent=1 // pred_fallthru
      _
    // Predicated region
    $region34: #{pct_forward.8} parent=1 // pred_check
      _
    $region35: #{pct_forward.8} parent=1 // pred_check_branch
      %75 = sbr.rel (0) target = $region37
    $region36: #{pct_forward.8} parent=1 // pred_region
      %76 = dma.done [#allocation5], 1024
    $region37: #{pct_forward.8} parent=1 // pred_fallthru
      _
    // Predicated region
    $region38: #{pct_forward.8} parent=1 // pred_check
      _
    $region39: #{pct_forward.8} parent=1 // pred_check_branch
      %78 = sbr.rel (0) target = $region41
    $region40: #{pct_forward.8} parent=1 // pred_region
      %79 = dma.done [#allocation8], 16
    $region41: #{pct_forward.8} parent=1 // pred_fallthru
      _
    // Predicated region
    $region42: #{pct_forward.8} parent=1 // pred_check
      _
    $region43: #{pct_forward.8} parent=1 // pred_check_branch
      %81 = sbr.rel (0) target = $region45
    $region44: #{pct_forward.8} parent=1 // pred_region
      %82 = dma.done [#allocation8], 16
    $region45: #{pct_forward.8} parent=1 // pred_fallthru
      _
    %v84 = vld [vmem:[%s0] sm:$0xf]
    %v85 = vld [vmem:[%s0 + $0x4] sm:$0xf]
    %v86 = vld [vmem:[%s0 + $0x8] sm:$0xf]
    %v87 = vld [vmem:[%s0 + $0xc] sm:$0xf]
    %v88 = vld [vmem:[#allocation2] sm:$0x1]
    %v89 = vunpack.c.l.bf16 %v84
    %v90 = vunpack.c.l.bf16 %v85
    %v91 = vunpack.c.l.bf16 %v86
    %v92 = vunpack.c.l.bf16 %v87
    %v94 = vlaneseq
    %v95 = vshrl.u32 %v94, 7
    %v96 = vsub.s32 0, %v95
    %v97 = vrot.slane %v88, %v96
    %v99 = vmul.f32 %v89, %v97
    %v100 = vmul.f32 %v90, %v97
    %v101 = vmul.f32 %v91, %v97
    %v102 = vmul.f32 %v92, %v97
    %v103 = vld [vmem:[#allocation4] sm:$0x1]
    %v105 = vlaneseq
    %v106 = vshrl.u32 %v105, 7
    %v107 = vsub.s32 0, %v106
    %v108 = vrot.slane %v103, %v107
    %v110 = vadd.f32 %v99, %v108
    %v111 = vadd.f32 %v100, %v108
    %v112 = vadd.f32 %v101, %v108
    %v113 = vadd.f32 %v102, %v108
    %v114 = vmax.f32 %v110, 0.0
    %v115 = vmax.f32 %v111, 0.0
    %v116 = vmax.f32 %v112, 0.0
    %v117 = vmax.f32 %v113, 0.0
    %v118 = vpack.c.bf16 %v115, %v114
    %v119 = vpack.c.bf16 %v117, %v116
    %v120 = vld [vmem:[#allocation6] sm:$0xf]
    %v121 = vld [vmem:[#allocation6 + $0x4] sm:$0xf]
    %v122 = vld [vmem:[#allocation6 + $0x8] sm:$0xf]
    %v123 = vld [vmem:[#allocation6 + $0xc] sm:$0xf]
    %v124 = vld [vmem:[#allocation6 + $0x10] sm:$0xf]
    %v125 = vld [vmem:[#allocation6 + $0x14] sm:$0xf]
    %v126 = vld [vmem:[#allocation6 + $0x18] sm:$0xf]
    %v127 = vld [vmem:[#allocation6 + $0x1c] sm:$0xf]
    %v128 = vld [vmem:[#allocation6 + $0x20] sm:$0xf]
    %v129 = vld [vmem:[#allocation6 + $0x24] sm:$0xf]
    %v130 = vld [vmem:[#allocation6 + $0x28] sm:$0xf]
    %v131 = vld [vmem:[#allocation6 + $0x2c] sm:$0xf]
    %v132 = vld [vmem:[#allocation6 + $0x30] sm:$0xf]
    %v133 = vld [vmem:[#allocation6 + $0x34] sm:$0xf]
    %v134 = vld [vmem:[#allocation6 + $0x38] sm:$0xf]
    %v135 = vld [vmem:[#allocation6 + $0x3c] sm:$0xf]
    %v152 = vunpack.c.l.b16 %v120
    %v153 = vunpack.c.l.b16 %v121
    %v154 = vunpack.c.l.b16 %v122
    %v155 = vunpack.c.l.b16 %v123
    %v156 = vunpack.c.l.b16 %v124
    %v157 = vunpack.c.l.b16 %v125
    %v158 = vunpack.c.l.b16 %v126
    %v159 = vunpack.c.l.b16 %v127
    %v160 = vunpack.c.l.b16 %v128
    %v161 = vunpack.c.l.b16 %v129
    %v162 = vunpack.c.l.b16 %v130
    %v163 = vunpack.c.l.b16 %v131
    %v164 = vunpack.c.l.b16 %v132
    %v165 = vunpack.c.l.b16 %v133
    %v166 = vunpack.c.l.b16 %v134
    %v167 = vunpack.c.l.b16 %v135
    %v168 = vpack.c.b16 %v153, %v152
    %v169 = vpack.c.b16 %v155, %v154
    %v170 = vpack.c.b16 %v157, %v156
    %v171 = vpack.c.b16 %v159, %v158
    %v172 = vpack.c.b16 %v161, %v160
    %v173 = vpack.c.b16 %v163, %v162
    %v174 = vpack.c.b16 %v165, %v164
    %v175 = vpack.c.b16 %v167, %v166
    %184 = vmatprep.subr.bf16.mxu0 0
    %185 = vmatpush1.bf16.msra.mxu0 %v168
    %186 = vmatprep.subr.bf16.mxu0 0
    %187 = vmatpush1.bf16.msra.mxu0 %v169
    %188 = vmatprep.subr.bf16.mxu0 0
    %189 = vmatpush1.bf16.msra.mxu0 %v170
    %190 = vmatprep.subr.bf16.mxu0 0
    %191 = vmatpush1.bf16.msra.mxu0 %v171
    %192 = vmatprep.subr.bf16.mxu0 0
    %193 = vmatpush1.bf16.msra.mxu0 %v172
    %194 = vmatprep.subr.bf16.mxu0 0
    %195 = vmatpush1.bf16.msra.mxu0 %v173
    %196 = vmatprep.subr.bf16.mxu0 0
    %197 = vmatpush1.bf16.msra.mxu0 %v174
    %198 = vmatprep.subr.bf16.mxu0 0
    %199 = vmatpush1.bf16.msra.mxu0 %v175
    %200 = vmatprep.subr.bf16.mxu0 0
    %201 = vmatpush1.bf16.msra.mxu0 0
    %202 = vmatprep.subr.bf16.mxu0 0
    %203 = vmatpush1.bf16.msra.mxu0 0
    %204 = vmatprep.subr.bf16.mxu0 0
    %205 = vmatpush1.bf16.msra.mxu0 0
    %206 = vmatprep.subr.bf16.mxu0 0
    %207 = vmatpush1.bf16.msra.mxu0 0
    %208 = vmatprep.subr.bf16.mxu0 0
    %209 = vmatpush1.bf16.msra.mxu0 0
    %210 = vmatprep.subr.bf16.mxu0 0
    %211 = vmatpush1.bf16.msra.mxu0 0
    %212 = vmatprep.subr.bf16.mxu0 0
    %213 = vmatpush1.bf16.msra.mxu0 0
    %214 = vmatprep.subr.bf16.mxu0 0
    %215 = vmatpush1.bf16.msra.mxu0 0
    %216 = vmatprep.mubr.bf16.mxu0 0
    %217 = vmatmul.mubr.bf16.gmra.mrb[0].mxu0 %v118
    %v218 = vpop.f32.mrb[0].mxu0
    %v219 = vadd.f32 0.0, %v218
    %v220 = vpop.f32.mrb[0].mxu0
    %v221 = vpop.f32.mrb[0].mxu0
    %v222 = vadd.f32 0.0, %v221
    %v223 = vpop.f32.mrb[0].mxu0
    %224 = vmatprep.mubr.bf16.mxu0 0
    %225 = vmatmul.mubr.bf16.gmra.mrb[0].mxu0 %v119
    %v226 = vpop.f32.mrb[0].mxu0
    %v227 = vadd.f32 0.0, %v226
    %v228 = vpop.f32.mrb[0].mxu0
    %v229 = vpop.f32.mrb[0].mxu0
    %v230 = vadd.f32 0.0, %v229
    %v231 = vpop.f32.mrb[0].mxu0
    %232 = vdwg.mxu0
    %v233 = vld [vmem:[#allocation7] sm:$0x1]
    %v235 = vlaneseq
    %v236 = vshrl.u32 %v235, 7
    %v237 = vsub.s32 0, %v236
    %v238 = vrot.slane %v233, %v237
    %v240 = vmul.f32 %v219, %v238
    %v241 = vmul.f32 %v222, %v238
    %v242 = vmul.f32 %v227, %v238
    %v243 = vmul.f32 %v230, %v238
    %v244 = vld [vmem:[#allocation9] sm:$0x1]
    %v246 = vlaneseq
    %v247 = vshrl.u32 %v246, 7
    %v248 = vsub.s32 0, %v247
    %v249 = vrot.slane %v244, %v248
    %v251 = vadd.f32 %v240, %v249
    %v252 = vadd.f32 %v241, %v249
    %v253 = vadd.f32 %v242, %v249
    %v254 = vadd.f32 %v243, %v249
    %v255 = vmax.f32 %v251, 0.0
    %v256 = vmax.f32 %v252, 0.0
    %v257 = vmax.f32 %v253, 0.0
    %v258 = vmax.f32 %v254, 0.0
    %v259 = vpack.c.bf16 %v256, %v255
    %v260 = vpack.c.bf16 %v258, %v257
    %v263 = vunpack.c.l.b16 %v259
    %v264 = vunpack.c.h.b16 %v259
    %v265 = vunpack.c.l.b16 %v260
    %v266 = vunpack.c.h.b16 %v260
    %v267 = vpack.c.b16 %v263, %v263
    %v268 = vpack.c.b16 %v264, %v264
    %v269 = vpack.c.b16 %v265, %v265
    %v270 = vpack.c.b16 %v266, %v266
    %275 = vst [vmem:[%s6] sm:$0xf] %v267
    %276 = vst [vmem:[%s6 + $0x4] sm:$0xf] %v268
    %277 = vst [vmem:[%s6 + $0x8] sm:$0xf] %v269
    %278 = vst [vmem:[%s6 + $0xc] sm:$0xf] %v270
    // Predicated region
    $region46: #{pct_forward.8} parent=1 // pred_check
      _
    $region47: #{pct_forward.8} parent=1 // pred_check_branch
      %280 = sbr.rel (0) target = $region49
    $region48: #{pct_forward.8} parent=1 // pred_region
      _
    $region49: #{pct_forward.8} parent=1 // pred_fallthru
      _
    // Predicated region
    $region50: #{pct_forward.8} parent=1 // pred_check
      _
    $region51: #{pct_forward.8} parent=1 // pred_check_branch
      %282 = sbr.rel (0) target = $region53
    $region52: #{pct_forward.8} parent=1 // pred_region
      _
    $region53: #{pct_forward.8} parent=1 // pred_fallthru
      _
    %283 = vsyncpa [#allocation3], 1
    %284 = vsyncpa [#allocation5], 1
    %285 = vsyncpa [#allocation8], 1

// kernel: pct_forward.9
$region0: #{pct_forward.9}
  #allocation0 [shape = 'u32[]', space=smem, size = 0x4, offset = 0x4, fixed_abs, tag = 'smem constant byte address 0x4 - core index']
  #allocation1 [shape = 'u32[144,128]{1,0:T(1,128)}', space=vmem, size = 0x12000, scoped, tag = 'internal scratch']
  #allocation2 [shape = 'bf16[16,128]{1,0:T(16,128)(2,1)}', space=vmem, size = 0x1000, scoped, tag = 'scratch operand']
  #allocation3 [shape = 'f32[16,128]{1,0:T(8,128)}', space=vmem, size = 0x2000, scoped, tag = 'scratch operand']
  #allocation4 [shape = 'f32[16,1]{1,0:T(8,128)}', space=vmem, size = 0x2000, scoped, tag = 'scratch operand']
  %s0 = inlined_call_operand.vmem [shape: bf16[2,16,128], index: 0, kind: input, shape index: {}]
  %s1 = inlined_call_operand.hbm [shape: bf16[128,128], index: 1, kind: input, shape index: {}]
  %s2 = inlined_call_operand.hbm [shape: bf16[128,128], index: 2, kind: input, shape index: {}]
  %s3 = inlined_call_operand.hbm [shape: f32[1,128], index: 3, kind: input, shape index: {}]
  %s4 = inlined_call_operand.hbm [shape: bf16[128,128], index: 4, kind: input, shape index: {}]
  %s5 = inlined_call_operand.hbm [shape: f32[1,128], index: 5, kind: input, shape index: {}]
  %s6 = inlined_call_operand.hbm [shape: f32[1,128], index: 6, kind: input, shape index: {}]
  %s7 = inlined_call_operand.vmem [shape: bf16[2,16,128], index: 7, kind: output, shape index: {}]
  %s8 = sld [smem:[#allocation0]]
  $region93: #{pct_forward.9} parent=0
    _
  %s10 = ssub.s32 1, %s8
  %s11 = scalar_select 0, %s10, %s8
  $region1: #{pct_forward.9} parent=0
    #allocation5 [shape = 'u8[32768]{0}', space=vmem, size = 0x8000, scoped, tag = 'input window, operand 1, single buffered']
    #allocation6 [shape = 's32[2]{0}', space=sflag, size = 0x8, scoped, tag = 'scoped memory for pct_forward.9']
    #allocation7 [shape = 'u8[32768]{0}', space=vmem, size = 0x8000, scoped, tag = 'input window, operand 2, single buffered']
    #allocation8 [shape = 's32[1]{0}', space=sflag, size = 0x4, scoped, tag = 'scoped memory for pct_forward.9']
    #allocation9 [shape = 'u8[512]{0}', space=vmem, size = 0x400, scoped, tag = 'input window, operand 3, single buffered']
    #allocation10 [shape = 'u8[32768]{0}', space=vmem, size = 0x8000, scoped, tag = 'input window, operand 4, single buffered']
    #allocation11 [shape = 's32[1]{0}', space=sflag, size = 0x4, scoped, tag = 'scoped memory for pct_forward.9']
    #allocation12 [shape = 'u8[512]{0}', space=vmem, size = 0x400, scoped, tag = 'input window, operand 5, single buffered']
    #allocation13 [shape = 'u8[512]{0}', space=vmem, size = 0x400, scoped, tag = 'input window, operand 6, single buffered']
    #allocation14 [shape = 's32[1]{0}', space=sflag, size = 0x4, scoped, tag = 'scoped memory for pct_forward.9']
    %12 = vsyncpa [#allocation6], 0
    %13 = vsyncpa [#allocation8], 0
    %14 = vsyncpa [#allocation11], 0
    %15 = vsyncpa [#allocation14], 0
    loop: start=0, step=1, limit=4
    $region2: #{pct_forward.9} parent=1 // loop_pre_header
      _
    $region3: #{pct_forward.9} parent=1 // loop_header
      %s17 = sphi 0, %s21
      %p18 = scmp.ge.s32.totalorder %s17, 4
      %s24 = sphi 0, %s36
      %s25 = sphi 0, %s32
      %s26 = sphi 0, %s24
      %s27 = sphi 0, %s25
      %s28 = sphi 0, %s26
      %s29 = sphi 0, %s27
      %s39 = sphi 0, %s41
      %s42 = sphi 0, %s39
      %s43 = sphi 0, %s42
      %s59 = sphi 0, %s43
      %s63 = sphi 0, %s63
      %s65 = sphi 0, %s63
      %s66 = sphi 0, %s65
      %s80 = sphi 0, %s66
      %s84 = sphi 0, %s84
      %s86 = sphi 0, %s84
      %s87 = sphi 0, %s86
      %s101 = sphi 0, %s87
      %s105 = sphi 0, %s105
      %s107 = sphi 0, %s105
      %s108 = sphi 0, %s107
      %s122 = sphi 0, %s108
      %s126 = sphi 0, %s126
      %s128 = sphi 0, %s126
      %s129 = sphi 0, %s128
      %s143 = sphi 0, %s129
      %s147 = sphi 0, %s147
      %s149 = sphi 0, %s147
      %s150 = sphi 0, %s149
      %s164 = sphi 0, %s150
      %s168 = sphi 0, %s168
      %s170 = sphi 0, %s168
      %s171 = sphi 0, %s170
      %s185 = sphi 0, %s171
      %s191 = sphi 0, %s193
      %s194 = sphi 0, %s191
      %s195 = sphi 0, %s194
      %s211 = sphi 0, %s195
    $region4: #{pct_forward.9} parent=1 // loop_header_branch
      %20 = sbr.rel (%p18) target = $region8
    $region5: #{pct_forward.9} parent=1 // loop_body
      %s22 = ssub.s32 %s17, 1
      %s23 = ssub.s32 %s17, 2
      %s30 = sadd.s32 1, %s25
      %p31 = scmp.ge.s32.totalorder %s30, 1
      %s32 = scalar_select %p31, 0, %s30
      %s33 = sadd.s32 1, %s24
      %s34 = scalar_select %p31, %s33, %s24
      %p35 = scmp.ge.s32.totalorder %s34, 2
      %s36 = scalar_select %p35, 0, %s34
      %s37 = ssub.s32 %s24, %s36
      %p38 = scmp.eq.s32.totalorder %s37, 0
      %s40 = sadd.s32 %s39, 1
      %s41 = scalar_select %p38, %s39, %s40
      %p44 = pneg %p38
      %p45 = scmp.eq.s32.totalorder %s17, 1
      %p46 = por %p44, %p45
      %p47 = scmp.ne.s32.totalorder %s39, %s42
      %p48 = scmp.eq.s32.totalorder %s17, 0
      %p49 = por %p47, %p48
      %p50 = scmp.ne.s32.totalorder %s39, %s42
      %p51 = scmp.eq.s32.totalorder %s22, 1
      %p52 = por %p50, %p51
      %p53 = scmp.ne.s32.totalorder %s42, %s43
      %p54 = scmp.eq.s32.totalorder %s22, 0
      %p55 = por %p53, %p54
      %p56 = scmp.ne.s32.totalorder %s42, %s43
      %p57 = scmp.eq.s32.totalorder %s23, 1
      %p58 = por %p56, %p57
      %p60 = scmp.ne.s32.totalorder %s43, %s59
      %p61 = scmp.eq.s32.totalorder %s23, 0
      %p62 = por %p60, %p61
      %s64 = sadd.s32 %s63, 1
      %p67 = scmp.eq.s32.totalorder %s17, 1
      %p68 = scmp.ne.s32.totalorder %s63, %s65
      %p69 = scmp.eq.s32.totalorder %s17, 0
      %p70 = por %p68, %p69
      %p71 = scmp.ne.s32.totalorder %s63, %s65
      %p72 = scmp.eq.s32.totalorder %s22, 1
      %p73 = por %p71, %p72
      %p74 = scmp.ne.s32.totalorder %s65, %s66
      %p75 = scmp.eq.s32.totalorder %s22, 0
      %p76 = por %p74, %p75
      %p77 = scmp.ne.s32.totalorder %s65, %s66
      %p78 = scmp.eq.s32.totalorder %s23, 1
      %p79 = por %p77, %p78
      %p81 = scmp.ne.s32.totalorder %s66, %s80
      %p82 = scmp.eq.s32.totalorder %s23, 0
      %p83 = por %p81, %p82
      %s85 = sadd.s32 %s84, 1
      %p88 = scmp.eq.s32.totalorder %s17, 1
      %p89 = scmp.ne.s32.totalorder %s84, %s86
      %p90 = scmp.eq.s32.totalorder %s17, 0
      %p91 = por %p89, %p90
      %p92 = scmp.ne.s32.totalorder %s84, %s86
      %p93 = scmp.eq.s32.totalorder %s22, 1
      %p94 = por %p92, %p93
      %p95 = scmp.ne.s32.totalorder %s86, %s87
      %p96 = scmp.eq.s32.totalorder %s22, 0
      %p97 = por %p95, %p96
      %p98 = scmp.ne.s32.totalorder %s86, %s87
      %p99 = scmp.eq.s32.totalorder %s23, 1
      %p100 = por %p98, %p99
      %p102 = scmp.ne.s32.totalorder %s87, %s101
      %p103 = scmp.eq.s32.totalorder %s23, 0
      %p104 = por %p102, %p103
      %s106 = sadd.s32 %s105, 1
      %p109 = scmp.eq.s32.totalorder %s17, 1
      %p110 = scmp.ne.s32.totalorder %s105, %s107
      %p111 = scmp.eq.s32.totalorder %s17, 0
      %p112 = por %p110, %p111
      %p113 = scmp.ne.s32.totalorder %s105, %s107
      %p114 = scmp.eq.s32.totalorder %s22, 1
      %p115 = por %p113, %p114
      %p116 = scmp.ne.s32.totalorder %s107, %s108
      %p117 = scmp.eq.s32.totalorder %s22, 0
      %p118 = por %p116, %p117
      %p119 = scmp.ne.s32.totalorder %s107, %s108
      %p120 = scmp.eq.s32.totalorder %s23, 1
      %p121 = por %p119, %p120
      %p123 = scmp.ne.s32.totalorder %s108, %s122
      %p124 = scmp.eq.s32.totalorder %s23, 0
      %p125 = por %p123, %p124
      %s127 = sadd.s32 %s126, 1
      %p130 = scmp.eq.s32.totalorder %s17, 1
      %p131 = scmp.ne.s32.totalorder %s126, %s128
      %p132 = scmp.eq.s32.totalorder %s17, 0
      %p133 = por %p131, %p132
      %p134 = scmp.ne.s32.totalorder %s126, %s128
      %p135 = scmp.eq.s32.totalorder %s22, 1
      %p136 = por %p134, %p135
      %p137 = scmp.ne.s32.totalorder %s128, %s129
      %p138 = scmp.eq.s32.totalorder %s22, 0
      %p139 = por %p137, %p138
      %p140 = scmp.ne.s32.totalorder %s128, %s129
      %p141 = scmp.eq.s32.totalorder %s23, 1
      %p142 = por %p140, %p141
      %p144 = scmp.ne.s32.totalorder %s129, %s143
      %p145 = scmp.eq.s32.totalorder %s23, 0
      %p146 = por %p144, %p145
      %s148 = sadd.s32 %s147, 1
      %p151 = scmp.eq.s32.totalorder %s17, 1
      %p152 = scmp.ne.s32.totalorder %s147, %s149
      %p153 = scmp.eq.s32.totalorder %s17, 0
      %p154 = por %p152, %p153
      %p155 = scmp.ne.s32.totalorder %s147, %s149
      %p156 = scmp.eq.s32.totalorder %s22, 1
      %p157 = por %p155, %p156
      %p158 = scmp.ne.s32.totalorder %s149, %s150
      %p159 = scmp.eq.s32.totalorder %s22, 0
      %p160 = por %p158, %p159
      %p161 = scmp.ne.s32.totalorder %s149, %s150
      %p162 = scmp.eq.s32.totalorder %s23, 1
      %p163 = por %p161, %p162
      %p165 = scmp.ne.s32.totalorder %s150, %s164
      %p166 = scmp.eq.s32.totalorder %s23, 0
      %p167 = por %p165, %p166
      %s169 = sadd.s32 %s168, 1
      %p172 = scmp.eq.s32.totalorder %s17, 1
      %p173 = scmp.ne.s32.totalorder %s168, %s170
      %p174 = scmp.eq.s32.totalorder %s17, 0
      %p175 = por %p173, %p174
      %p176 = scmp.ne.s32.totalorder %s168, %s170
      %p177 = scmp.eq.s32.totalorder %s22, 1
      %p178 = por %p176, %p177
      %p179 = scmp.ne.s32.totalorder %s170, %s171
      %p180 = scmp.eq.s32.totalorder %s22, 0
      %p181 = por %p179, %p180
      %p182 = scmp.ne.s32.totalorder %s170, %s171
      %p183 = scmp.eq.s32.totalorder %s23, 1
      %p184 = por %p182, %p183
      %p186 = scmp.ne.s32.totalorder %s171, %s185
      %p187 = scmp.eq.s32.totalorder %s23, 0
      %p188 = por %p186, %p187
      %s189 = ssub.s32 %s24, %s36
      %p190 = scmp.eq.s32.totalorder %s189, 0
      %s192 = sadd.s32 %s191, 1
      %s193 = scalar_select %p190, %s191, %s192
      %p196 = pneg %p190
      %p197 = scmp.eq.s32.totalorder %s17, 1
      %p198 = por %p196, %p197
      %p199 = scmp.ne.s32.totalorder %s191, %s194
      %p200 = scmp.eq.s32.totalorder %s17, 0
      %p201 = por %p199, %p200
      %p202 = scmp.ne.s32.totalorder %s191, %s194
      %p203 = scmp.eq.s32.totalorder %s22, 1
      %p204 = por %p202, %p203
      %p205 = scmp.ne.s32.totalorder %s194, %s195
      %p206 = scmp.eq.s32.totalorder %s22, 0
      %p207 = por %p205, %p206
      %p208 = scmp.ne.s32.totalorder %s194, %s195
      %p209 = scmp.eq.s32.totalorder %s23, 1
      %p210 = por %p208, %p209
      %p212 = scmp.ne.s32.totalorder %s195, %s211
      %p213 = scmp.eq.s32.totalorder %s23, 0
      %p214 = por %p212, %p213
      %p215 = scmp.le.s32.totalorder 1, %s17
      %p216 = scmp.lt.s32.totalorder %s17, 3
      %p217 = pnand %p215, %p216
      %p218 = pneg %p217
      // Predicated region
      $region9: #{pct_forward.9} parent=5 // pred_check
        _
      $region10: #{pct_forward.9} parent=5 // pred_check_branch
        %220 = sbr.rel (%p217) target = $region12
      $region11: #{pct_forward.9} parent=5 // pred_region
        %s221 = ssub.s32 %s17, 1
        // Predicated region
        $region13: #{pct_forward.9} parent=11 // pred_check
          %p222 = pneg %p76
        $region14: #{pct_forward.9} parent=11 // pred_check_branch
          %224 = sbr.rel (%p222) target = $region16
        $region15: #{pct_forward.9} parent=11 // pred_region
          %s226 = ssub.s32 1024, 1024
          %227 = vsyncadd [#allocation6], %s226
          %s228 = sshll.u32 [#allocation5], 4
          %s229 = int_to_ptr.vmem [resolvable:$true] %s228
          %234 = dma.hbm_to_vmem [thread:$0]  %s1, 1024, %s229, [#allocation6], 64, 64, 4
        $region16: #{pct_forward.9} parent=11 // pred_fallthru
          _
        // Predicated region
        $region17: #{pct_forward.9} parent=11 // pred_check
          %p235 = pneg %p97
        $region18: #{pct_forward.9} parent=11 // pred_check_branch
          %237 = sbr.rel (%p235) target = $region20
        $region19: #{pct_forward.9} parent=11 // pred_region
          %s239 = ssub.s32 1024, 1024
          %240 = vsyncadd [#allocation8], %s239
          %s241 = sshll.u32 [#allocation7], 4
          %s242 = int_to_ptr.vmem [resolvable:$true] %s241
          %247 = dma.hbm_to_vmem [thread:$0]  %s2, 1024, %s242, [#allocation8], 64, 64, 4
        $region20: #{pct_forward.9} parent=11 // pred_fallthru
          _
        // Predicated region
        $region21: #{pct_forward.9} parent=11 // pred_check
          %p248 = pneg %p118
        $region22: #{pct_forward.9} parent=11 // pred_check_branch
          %250 = sbr.rel (%p248) target = $region24
        $region23: #{pct_forward.9} parent=11 // pred_region
          %s252 = ssub.s32 16, 16
          %253 = vsyncadd [#allocation8], %s252
          %s255 = sshll.u32 [#allocation9], 4
          %s256 = int_to_ptr.vmem [resolvable:$true] %s255
          %258 = dma.hbm_to_vmem [thread:$0]  %s3, 16, %s256, [#allocation8]
        $region24: #{pct_forward.9} parent=11 // pred_fallthru
          _
        // Predicated region
        $region25: #{pct_forward.9} parent=11 // pred_check
          %p259 = pneg %p139
        $region26: #{pct_forward.9} parent=11 // pred_check_branch
          %261 = sbr.rel (%p259) target = $region28
        $region27: #{pct_forward.9} parent=11 // pred_region
          %s263 = ssub.s32 1024, 1024
          %264 = vsyncadd [#allocation11], %s263
          %s265 = sshll.u32 [#allocation10], 4
          %s266 = int_to_ptr.vmem [resolvable:$true] %s265
          %271 = dma.hbm_to_vmem [thread:$0]  %s4, 1024, %s266, [#allocation11], 64, 64, 4
        $region28: #{pct_forward.9} parent=11 // pred_fallthru
          _
        // Predicated region
        $region29: #{pct_forward.9} parent=11 // pred_check
          %p272 = pneg %p160
        $region30: #{pct_forward.9} parent=11 // pred_check_branch
          %274 = sbr.rel (%p272) target = $region32
        $region31: #{pct_forward.9} parent=11 // pred_region
          %s276 = ssub.s32 16, 16
          %277 = vsyncadd [#allocation11], %s276
          %s279 = sshll.u32 [#allocation12], 4
          %s280 = int_to_ptr.vmem [resolvable:$true] %s279
          %282 = dma.hbm_to_vmem [thread:$0]  %s5, 16, %s280, [#allocation11]
        $region32: #{pct_forward.9} parent=11 // pred_fallthru
          _
        // Predicated region
        $region33: #{pct_forward.9} parent=11 // pred_check
          %p283 = pneg %p181
        $region34: #{pct_forward.9} parent=11 // pred_check_branch
          %285 = sbr.rel (%p283) target = $region36
        $region35: #{pct_forward.9} parent=11 // pred_region
          %s287 = ssub.s32 16, 16
          %288 = vsyncadd [#allocation14], %s287
          %s290 = sshll.u32 [#allocation13], 4
          %s291 = int_to_ptr.vmem [resolvable:$true] %s290
          %293 = dma.hbm_to_vmem [thread:$0]  %s6, 16, %s291, [#allocation14]
        $region36: #{pct_forward.9} parent=11 // pred_fallthru
          _
      $region12: #{pct_forward.9} parent=5 // pred_fallthru
        _
      %p294 = scmp.lt.s32.totalorder %s17, 2
      // Predicated region
      $region37: #{pct_forward.9} parent=5 // pred_check
        %p295 = pneg %p294
      $region38: #{pct_forward.9} parent=5 // pred_check_branch
        %297 = sbr.rel (%p295) target = $region40
      $region39: #{pct_forward.9} parent=5 // pred_region
        // Predicated region
        $region41: #{pct_forward.9} parent=39 // pred_check
          %p298 = pneg %p49
        $region42: #{pct_forward.9} parent=39 // pred_check_branch
          %300 = sbr.rel (%p298) target = $region44
        $region43: #{pct_forward.9} parent=39 // pred_region
          %p301 = scmp.lt.s32.totalorder %s24, 1
          %s302 = scalar_select %p301, %s24, 1
          %s303 = smul.addr %s302, 2
          %s304 = smul.addr %s303, 4
          %s305 = scalar_lea.vmem %s0, %s304
        $region44: #{pct_forward.9} parent=39 // pred_fallthru
          _
      $region40: #{pct_forward.9} parent=5 // pred_fallthru
        _
      %p306 = scmp.le.s32.totalorder 1, %s17
      %p307 = scmp.lt.s32.totalorder %s17, 3
      %p308 = pnand %p306, %p307
      %p309 = pneg %p308
      // Predicated region
      $region45: #{pct_forward.9} parent=5 // pred_check
        _
      $region46: #{pct_forward.9} parent=5 // pred_check_branch
        %311 = sbr.rel (%p308) target = $region48
      $region47: #{pct_forward.9} parent=5 // pred_region
        %s312 = ssub.s32 %s17, 1
        // Predicated region
        $region49: #{pct_forward.9} parent=47 // pred_check
          %p313 = pneg %p76
        $region50: #{pct_forward.9} parent=47 // pred_check_branch
          %315 = sbr.rel (%p313) target = $region52
        $region51: #{pct_forward.9} parent=47 // pred_region
          %316 = dma.done [#allocation6], 1024
        $region52: #{pct_forward.9} parent=47 // pred_fallthru
          _
        // Predicated region
        $region53: #{pct_forward.9} parent=47 // pred_check
          %p317 = pneg %p97
        $region54: #{pct_forward.9} parent=47 // pred_check_branch
          %319 = sbr.rel (%p317) target = $region56
        $region55: #{pct_forward.9} parent=47 // pred_region
          %320 = dma.done [#allocation8], 1024
        $region56: #{pct_forward.9} parent=47 // pred_fallthru
          _
        // Predicated region
        $region57: #{pct_forward.9} parent=47 // pred_check
          %p321 = pneg %p118
        $region58: #{pct_forward.9} parent=47 // pred_check_branch
          %323 = sbr.rel (%p321) target = $region60
        $region59: #{pct_forward.9} parent=47 // pred_region
          %324 = dma.done [#allocation8], 16
        $region60: #{pct_forward.9} parent=47 // pred_fallthru
          _
        // Predicated region
        $region61: #{pct_forward.9} parent=47 // pred_check
          %p325 = pneg %p139
        $region62: #{pct_forward.9} parent=47 // pred_check_branch
          %327 = sbr.rel (%p325) target = $region64
        $region63: #{pct_forward.9} parent=47 // pred_region
          %328 = dma.done [#allocation11], 1024
        $region64: #{pct_forward.9} parent=47 // pred_fallthru
          _
        // Predicated region
        $region65: #{pct_forward.9} parent=47 // pred_check
          %p329 = pneg %p160
        $region66: #{pct_forward.9} parent=47 // pred_check_branch
          %331 = sbr.rel (%p329) target = $region68
        $region67: #{pct_forward.9} parent=47 // pred_region
          %332 = dma.done [#allocation11], 16
        $region68: #{pct_forward.9} parent=47 // pred_fallthru
          _
        // Predicated region
        $region69: #{pct_forward.9} parent=47 // pred_check
          %p333 = pneg %p181
        $region70: #{pct_forward.9} parent=47 // pred_check_branch
          %335 = sbr.rel (%p333) target = $region72
        $region71: #{pct_forward.9} parent=47 // pred_region
          %336 = dma.done [#allocation14], 16
        $region72: #{pct_forward.9} parent=47 // pred_fallthru
          _
        %p337 = scmp.lt.s32.totalorder %s26, 1
        %s338 = scalar_select %p337, %s26, 1
        %s339 = smul.addr %s338, 2
        %s340 = smul.addr %s339, 4
        %s341 = scalar_lea.vmem %s0, %s340
        %p342 = pneg %p55
        %p343 = pneg %p52
        %p344 = pneg %p76
        %p345 = pneg %p73
        %p346 = pneg %p97
        %p347 = pneg %p94
        %p348 = pneg %p118
        %p349 = pneg %p115
        %p350 = pneg %p139
        %p351 = pneg %p136
        %p352 = pneg %p160
        %p353 = pneg %p157
        %p354 = pneg %p181
        %p355 = pneg %p178
        %p356 = pneg %p207
        %p357 = pneg %p204
        %p358 = scmp.lt.s32.totalorder %s26, 1
        %s359 = scalar_select %p358, %s26, 1
        %s360 = smul.addr %s359, 2
        %s361 = smul.addr %s360, 4
        %s362 = scalar_lea.vmem %s7, %s361
        %p363 = scmp.lt.s32.totalorder %s26, 1
        %s364 = scalar_select %p363, %s26, 1
        %s365 = smul.addr %s364, 2
        %s366 = smul.addr %s365, 4
        %s367 = scalar_lea.vmem %s0, %s366
        %p368 = scmp.lt.s32.totalorder %s26, 1
        %s369 = scalar_select %p368, %s26, 1
        %s370 = smul.addr %s369, 2
        %s371 = smul.addr %s370, 4
        %s372 = scalar_lea.vmem %s7, %s371
        %p374 = scmp.eq.s32.totalorder %s27, 0
        // Predicated region
        $region73: #{pct_forward.9} parent=47 // pred_check
          %p375 = pneg %p374
        $region74: #{pct_forward.9} parent=47 // pred_check_branch
          %377 = sbr.rel (%p375) target = $region76
        $region75: #{pct_forward.9} parent=47 // pred_region
          %v378 = vld [vmem:[%s367] sm:$0xf]
          %v379 = vld [vmem:[%s367 + $0x4] sm:$0xf]
          %v380 = vld [vmem:[#allocation5] sm:$0xf]
          %v381 = vld [vmem:[#allocation5 + $0x4] sm:$0xf]
          %v382 = vld [vmem:[#allocation5 + $0x8] sm:$0xf]
          %v383 = vld [vmem:[#allocation5 + $0xc] sm:$0xf]
          %v384 = vld [vmem:[#allocation5 + $0x10] sm:$0xf]
          %v385 = vld [vmem:[#allocation5 + $0x14] sm:$0xf]
          %v386 = vld [vmem:[#allocation5 + $0x18] sm:$0xf]
          %v387 = vld [vmem:[#allocation5 + $0x1c] sm:$0xf]
          %v388 = vld [vmem:[#allocation5 + $0x20] sm:$0xf]
          %v389 = vld [vmem:[#allocation5 + $0x24] sm:$0xf]
          %v390 = vld [vmem:[#allocation5 + $0x28] sm:$0xf]
          %v391 = vld [vmem:[#allocation5 + $0x2c] sm:$0xf]
          %v392 = vld [vmem:[#allocation5 + $0x30] sm:$0xf]
          %v393 = vld [vmem:[#allocation5 + $0x34] sm:$0xf]
          %v394 = vld [vmem:[#allocation5 + $0x38] sm:$0xf]
          %v395 = vld [vmem:[#allocation5 + $0x3c] sm:$0xf]
          %v398 = vunpack.c.l.b16 %v378
          %v399 = vunpack.c.l.b16 %v379
          %v400 = vpack.c.b16 %v399, %v398
          %v418 = vunpack.c.l.b16 %v380
          %v419 = vunpack.c.l.b16 %v381
          %v420 = vunpack.c.l.b16 %v382
          %v421 = vunpack.c.l.b16 %v383
          %v422 = vunpack.c.l.b16 %v384
          %v423 = vunpack.c.l.b16 %v385
          %v424 = vunpack.c.l.b16 %v386
          %v425 = vunpack.c.l.b16 %v387
          %v426 = vunpack.c.l.b16 %v388
          %v427 = vunpack.c.l.b16 %v389
          %v428 = vunpack.c.l.b16 %v390
          %v429 = vunpack.c.l.b16 %v391
          %v430 = vunpack.c.l.b16 %v392
          %v431 = vunpack.c.l.b16 %v393
          %v432 = vunpack.c.l.b16 %v394
          %v433 = vunpack.c.l.b16 %v395
          %v434 = vpack.c.b16 %v419, %v418
          %v435 = vpack.c.b16 %v421, %v420
          %v436 = vpack.c.b16 %v423, %v422
          %v437 = vpack.c.b16 %v425, %v424
          %v438 = vpack.c.b16 %v427, %v426
          %v439 = vpack.c.b16 %v429, %v428
          %v440 = vpack.c.b16 %v431, %v430
          %v441 = vpack.c.b16 %v433, %v432
          %450 = vmatprep.subr.bf16.mxu0 0
          %451 = vmatpush1.bf16.msra.mxu0 %v434
          %452 = vmatprep.subr.bf16.mxu0 0
          %453 = vmatpush1.bf16.msra.mxu0 %v435
          %454 = vmatprep.subr.bf16.mxu0 0
          %455 = vmatpush1.bf16.msra.mxu0 %v436
          %456 = vmatprep.subr.bf16.mxu0 0
          %457 = vmatpush1.bf16.msra.mxu0 %v437
          %458 = vmatprep.subr.bf16.mxu0 0
          %459 = vmatpush1.bf16.msra.mxu0 %v438
          %460 = vmatprep.subr.bf16.mxu0 0
          %461 = vmatpush1.bf16.msra.mxu0 %v439
          %462 = vmatprep.subr.bf16.mxu0 0
          %463 = vmatpush1.bf16.msra.mxu0 %v440
          %464 = vmatprep.subr.bf16.mxu0 0
          %465 = vmatpush1.bf16.msra.mxu0 %v441
          %466 = vmatprep.subr.bf16.mxu0 0
          %467 = vmatpush1.bf16.msra.mxu0 0
          %468 = vmatprep.subr.bf16.mxu0 0
          %469 = vmatpush1.bf16.msra.mxu0 0
          %470 = vmatprep.subr.bf16.mxu0 0
          %471 = vmatpush1.bf16.msra.mxu0 0
          %472 = vmatprep.subr.bf16.mxu0 0
          %473 = vmatpush1.bf16.msra.mxu0 0
          %474 = vmatprep.subr.bf16.mxu0 0
          %475 = vmatpush1.bf16.msra.mxu0 0
          %476 = vmatprep.subr.bf16.mxu0 0
          %477 = vmatpush1.bf16.msra.mxu0 0
          %478 = vmatprep.subr.bf16.mxu0 0
          %479 = vmatpush1.bf16.msra.mxu0 0
          %480 = vmatprep.subr.bf16.mxu0 0
          %481 = vmatpush1.bf16.msra.mxu0 0
          %482 = vmatprep.mubr.bf16.mxu0 0
          %483 = vmatmul.mubr.bf16.gmra.mrb[0].mxu0 %v400
          %v484 = vpop.f32.mrb[0].mxu0
          %v485 = vadd.f32 0.0, %v484
          %v486 = vpop.f32.mrb[0].mxu0
          %v487 = vpop.f32.mrb[0].mxu0
          %v488 = vadd.f32 0.0, %v487
          %v489 = vpop.f32.mrb[0].mxu0
          %490 = vdwg.mxu0
          %v491 = vpack.c.bf16 %v488, %v485
          %492 = vst [vmem:[#allocation2] sm:$0xff] %v491
          %493 = vst [vmem:[#allocation3] sm:$0xff] 0.0
          %494 = vst [vmem:[#allocation3 + $0x8] sm:$0xff] 0.0
          %vm495 = vcmask 7168
          %496 = vst.msk [vmem:[#allocation4] sm:$0xff] %vm495, 0.0
          %497 = vst.msk [vmem:[#allocation4 + $0x8] sm:$0xff] %vm495, 0.0
        $region76: #{pct_forward.9} parent=47 // pred_fallthru
          _
        %s498 = smul.u32 %s27, 16
        %s499 = sshra.s32 %s498, 3
        %s500 = sand.u32 %s498, 7
        %s501 = smul.addr %s499, 4
        %s502 = scalar_lea.vmem %s367, %s501
        %v503 = vld [vmem:[%s502] sm:$0xf]
        %v504 = vld [vmem:[%s502 + $0x4] sm:$0xf]
        %s505 = sshra.s32 %s498, 4
        %s506 = sand.u32 %s498, 15
        %s507 = smul.addr %s505, 8
        %s508 = scalar_lea.vmem [#allocation2], %s507
        %v509 = vld [vmem:[%s508] sm:$0xff]
        %v510 = vld [vmem:[#allocation7] sm:$0xf]
        %v511 = vld [vmem:[#allocation7 + $0x4] sm:$0xf]
        %v512 = vld [vmem:[#allocation7 + $0x8] sm:$0xf]
        %v513 = vld [vmem:[#allocation7 + $0xc] sm:$0xf]
        %v514 = vld [vmem:[#allocation7 + $0x10] sm:$0xf]
        %v515 = vld [vmem:[#allocation7 + $0x14] sm:$0xf]
        %v516 = vld [vmem:[#allocation7 + $0x18] sm:$0xf]
        %v517 = vld [vmem:[#allocation7 + $0x1c] sm:$0xf]
        %v518 = vld [vmem:[#allocation7 + $0x20] sm:$0xf]
        %v519 = vld [vmem:[#allocation7 + $0x24] sm:$0xf]
        %v520 = vld [vmem:[#allocation7 + $0x28] sm:$0xf]
        %v521 = vld [vmem:[#allocation7 + $0x2c] sm:$0xf]
        %v522 = vld [vmem:[#allocation7 + $0x30] sm:$0xf]
        %v523 = vld [vmem:[#allocation7 + $0x34] sm:$0xf]
        %v524 = vld [vmem:[#allocation7 + $0x38] sm:$0xf]
        %v525 = vld [vmem:[#allocation7 + $0x3c] sm:$0xf]
        %v526 = vld [vmem:[#allocation9] sm:$0x1]
        %v528 = vlaneseq
        %v529 = vshrl.u32 %v528, 7
        %v530 = vsub.s32 0, %v529
        %v531 = vrot.slane %v526, %v530
        %v535 = vunpack.c.l.b16 %v503
        %v536 = vunpack.c.l.b16 %v504
        %v537 = vpack.c.b16 %v536, %v535
        %v555 = vunpack.c.l.b16 %v510
        %v556 = vunpack.c.l.b16 %v511
        %v557 = vunpack.c.l.b16 %v512
        %v558 = vunpack.c.l.b16 %v513
        %v559 = vunpack.c.l.b16 %v514
        %v560 = vunpack.c.l.b16 %v515
        %v561 = vunpack.c.l.b16 %v516
        %v562 = vunpack.c.l.b16 %v517
        %v563 = vunpack.c.l.b16 %v518
        %v564 = vunpack.c.l.b16 %v519
        %v565 = vunpack.c.l.b16 %v520
        %v566 = vunpack.c.l.b16 %v521
        %v567 = vunpack.c.l.b16 %v522
        %v568 = vunpack.c.l.b16 %v523
        %v569 = vunpack.c.l.b16 %v524
        %v570 = vunpack.c.l.b16 %v525
        %v571 = vpack.c.b16 %v556, %v555
        %v572 = vpack.c.b16 %v558, %v557
        %v573 = vpack.c.b16 %v560, %v559
        %v574 = vpack.c.b16 %v562, %v561
        %v575 = vpack.c.b16 %v564, %v563
        %v576 = vpack.c.b16 %v566, %v565
        %v577 = vpack.c.b16 %v568, %v567
        %v578 = vpack.c.b16 %v570, %v569
        %587 = vmatprep.subr.bf16.mxu0 0
        %588 = vmatpush1.bf16.msra.mxu0 %v571
        %589 = vmatprep.subr.bf16.mxu0 0
        %590 = vmatpush1.bf16.msra.mxu0 %v572
        %591 = vmatprep.subr.bf16.mxu0 0
        %592 = vmatpush1.bf16.msra.mxu0 %v573
        %593 = vmatprep.subr.bf16.mxu0 0
        %594 = vmatpush1.bf16.msra.mxu0 %v574
        %595 = vmatprep.subr.bf16.mxu0 0
        %596 = vmatpush1.bf16.msra.mxu0 %v575
        %597 = vmatprep.subr.bf16.mxu0 0
        %598 = vmatpush1.bf16.msra.mxu0 %v576
        %599 = vmatprep.subr.bf16.mxu0 0
        %600 = vmatpush1.bf16.msra.mxu0 %v577
        %601 = vmatprep.subr.bf16.mxu0 0
        %602 = vmatpush1.bf16.msra.mxu0 %v578
        %603 = vmatprep.subr.bf16.mxu0 0
        %604 = vmatpush1.bf16.msra.mxu0 0
        %605 = vmatprep.subr.bf16.mxu0 0
        %606 = vmatpush1.bf16.msra.mxu0 0
        %607 = vmatprep.subr.bf16.mxu0 0
        %608 = vmatpush1.bf16.msra.mxu0 0
        %609 = vmatprep.subr.bf16.mxu0 0
        %610 = vmatpush1.bf16.msra.mxu0 0
        %611 = vmatprep.subr.bf16.mxu0 0
        %612 = vmatpush1.bf16.msra.mxu0 0
        %613 = vmatprep.subr.bf16.mxu0 0
        %614 = vmatpush1.bf16.msra.mxu0 0
        %615 = vmatprep.subr.bf16.mxu0 0
        %616 = vmatpush1.bf16.msra.mxu0 0
        %617 = vmatprep.subr.bf16.mxu0 0
        %618 = vmatpush1.bf16.msra.mxu0 0
        %619 = vmatprep.mubr.bf16.mxu0 0
        %620 = vmatmul.mubr.bf16.gmra.mrb[0].mxu0 %v537
        %v621 = vpop.f32.mrb[0].mxu0
        %v622 = vadd.f32 %v531, %v621
        %v623 = vpop.f32.mrb[0].mxu0
        %v624 = vpop.f32.mrb[0].mxu0
        %v625 = vadd.f32 %v531, %v624
        %v626 = vpop.f32.mrb[0].mxu0
        %627 = vdwg.mxu0
        %v628 = vld [vmem:[#allocation2] sm:$0xff]
        %629 = vmatprep.subr.bf16.mxu0 0
        %630 = vmatpush1.bf16.xpose.msra.mxu0 %v509
        %631 = vmatprep.subr.bf16.mxu0 0
        %632 = vmatpush1.bf16.xpose.msra.mxu0 0
        %633 = vmatprep.subr.bf16.mxu0 0
        %634 = vmatpush1.bf16.xpose.msra.mxu0 0
        %635 = vmatprep.subr.bf16.mxu0 0
        %636 = vmatpush1.bf16.xpose.msra.mxu0 0
        %637 = vmatprep.subr.bf16.mxu0 0
        %638 = vmatpush1.bf16.xpose.msra.mxu0 0
        %639 = vmatprep.subr.bf16.mxu0 0
        %640 = vmatpush1.bf16.xpose.msra.mxu0 0
        %641 = vmatprep.subr.bf16.mxu0 0
        %642 = vmatpush1.bf16.xpose.msra.mxu0 0
        %643 = vmatprep.subr.bf16.mxu0 0
        %644 = vmatpush1.bf16.xpose.msra.mxu0 0
        %645 = vmatprep.subr.bf16.mxu0 0
        %646 = vmatpush1.bf16.xpose.msra.mxu0 0
        %647 = vmatprep.subr.bf16.mxu0 0
        %648 = vmatpush1.bf16.xpose.msra.mxu0 0
        %649 = vmatprep.subr.bf16.mxu0 0
        %650 = vmatpush1.bf16.xpose.msra.mxu0 0
        %651 = vmatprep.subr.bf16.mxu0 0
        %652 = vmatpush1.bf16.xpose.msra.mxu0 0
        %653 = vmatprep.subr.bf16.mxu0 0
        %654 = vmatpush1.bf16.xpose.msra.mxu0 0
        %655 = vmatprep.subr.bf16.mxu0 0
        %656 = vmatpush1.bf16.xpose.msra.mxu0 0
        %657 = vmatprep.subr.bf16.mxu0 0
        %658 = vmatpush1.bf16.xpose.msra.mxu0 0
        %659 = vmatprep.subr.bf16.mxu0 0
        %660 = vmatpush1.bf16.xpose.msra.mxu0 0
        %661 = vmatprep.mubr.bf16.mxu0 0
        %662 = vmatmul.mubr.bf16.gmra.mrb[0].mxu0 %v628
        %v663 = vpop.f32.mrb[0].mxu0
        %v664 = vadd.f32 0.0, %v663
        %v665 = vpop.f32.mrb[0].mxu0
        %v666 = vpop.f32.mrb[0].mxu0
        %v667 = vadd.f32 0.0, %v666
        %v668 = vpop.f32.mrb[0].mxu0
        %669 = vdwg.mxu0
        %vm670 = vcmask 130048
        %v671 = vsel %vm670, %v664, -inf
        %v672 = vsel %vm670, %v667, -inf
        %v673 = vmax.f32 %v671, %v672
        %v674 = vrot.slane %v673, 4
        %v675 = vmax.f32 %v673, %v674
        %v676 = vrot.slane %v675, 2
        %v677 = vmax.f32 %v675, %v676
        %v678 = vrot.slane %v677, 1
        %v679 = vmax.f32 %v677, %v678
        %v680 = vsub.f32 %v664, %v679
        %v681 = vsub.f32 %v667, %v679
        %v682 = vpack.c.bf16 %v681, %v680
        %v684 = vmul.bf16 %v682, 1069105081
        %v685 = vpow.bf16.pop %v684
        %v686 = vunpack.c.l.bf16 %v685
        %v687 = vunpack.c.h.bf16 %v685
        %v688 = vsel %vm670, %v686, 0.0
        %v689 = vsel %vm670, %v687, 0.0
        %v690 = vadd.f32 %v688, %v689
        %v691 = vrot.slane %v690, 4
        %v692 = vadd.f32 %v690, %v691
        %v693 = vrot.slane %v692, 2
        %v694 = vadd.f32 %v692, %v693
        %v695 = vrot.slane %v694, 1
        %v696 = vadd.f32 %v694, %v695
        %v697 = vpack.c.bf16 %v696, %v696
        %v698 = vunpack.c.l.bf16 %v697
        %v699 = vrcp.pop %v698
        %v700 = vpack.c.bf16 %v699, %v699
        %v701 = vmul.bf16 %v685, %v700
        %v702 = vld [vmem:[#allocation4] sm:$0xff]
        %v703 = vld [vmem:[#allocation4 + $0x8] sm:$0xff]
        %v704 = vunpack.c.l.bf16 %v701
        %v705 = vunpack.c.h.bf16 %v701
        %v706 = vsel %vm670, %v704, 0.0
        %707 = vadd.xlane.f32.xlu0 %v706
        %v708 = vpop.xlane.xlu0 %707
        %v709 = vsel %vm670, %v705, 0.0
        %710 = vadd.xlane.f32.xlu0 %v709
        %v711 = vpop.xlane.xlu0 %710
        %v712 = vpack.c.bf16 %v711, %v708
        %v713 = vunpack.c.l.bf16 %v712
        %v714 = vunpack.c.h.bf16 %v712
        %v715 = vadd.f32 %v702, %v713
        %v716 = vadd.f32 %v703, %v714
        %vm717 = vcmask 7168
        %718 = vst.msk [vmem:[#allocation4] sm:$0xff] %vm717, %v715
        %719 = vst.msk [vmem:[#allocation4 + $0x8] sm:$0xff] %vm717, %v716
        %v720 = vld [vmem:[#allocation3] sm:$0xff]
        %v721 = vld [vmem:[#allocation3 + $0x8] sm:$0xff]
        %v722 = vpack.c.bf16 %v625, %v622
        %v724 = vsel %vm670, %v701, 0
        %726 = vmatprep.subr.bf16.mxu0 0
        %727 = vmatpush1.bf16.msra.mxu0 %v722
        %728 = vmatprep.subr.bf16.mxu0 0
        %729 = vmatpush1.bf16.msra.mxu0 0
        %730 = vmatprep.subr.bf16.mxu0 0
        %731 = vmatpush1.bf16.msra.mxu0 0
        %732 = vmatprep.subr.bf16.mxu0 0
        %733 = vmatpush1.bf16.msra.mxu0 0
        %734 = vmatprep.subr.bf16.mxu0 0
        %735 = vmatpush1.bf16.msra.mxu0 0
        %736 = vmatprep.subr.bf16.mxu0 0
        %737 = vmatpush1.bf16.msra.mxu0 0
        %738 = vmatprep.subr.bf16.mxu0 0
        %739 = vmatpush1.bf16.msra.mxu0 0
        %740 = vmatprep.subr.bf16.mxu0 0
        %741 = vmatpush1.bf16.msra.mxu0 0
        %742 = vmatprep.subr.bf16.mxu0 0
        %743 = vmatpush1.bf16.msra.mxu0 0
        %744 = vmatprep.subr.bf16.mxu0 0
        %745 = vmatpush1.bf16.msra.mxu0 0
        %746 = vmatprep.subr.bf16.mxu0 0
        %747 = vmatpush1.bf16.msra.mxu0 0
        %748 = vmatprep.subr.bf16.mxu0 0
        %749 = vmatpush1.bf16.msra.mxu0 0
        %750 = vmatprep.subr.bf16.mxu0 0
        %751 = vmatpush1.bf16.msra.mxu0 0
        %752 = vmatprep.subr.bf16.mxu0 0
        %753 = vmatpush1.bf16.msra.mxu0 0
        %754 = vmatprep.subr.bf16.mxu0 0
        %755 = vmatpush1.bf16.msra.mxu0 0
        %756 = vmatprep.subr.bf16.mxu0 0
        %757 = vmatpush1.bf16.msra.mxu0 0
        %758 = vmatprep.mubr.bf16.mxu0 0
        %759 = vmatmul.mubr.bf16.gmra.mrb[0].mxu0 %v724
        %v760 = vpop.f32.mrb[0].mxu0
        %v761 = vadd.f32 0.0, %v760
        %v762 = vpop.f32.mrb[0].mxu0
        %v763 = vpop.f32.mrb[0].mxu0
        %v764 = vadd.f32 0.0, %v763
        %v765 = vpop.f32.mrb[0].mxu0
        %766 = vdwg.mxu0
        %v767 = vadd.f32 %v720, %v761
        %v768 = vadd.f32 %v721, %v764
        %769 = vst [vmem:[#allocation3] sm:$0xff] %v767
        %770 = vst [vmem:[#allocation3 + $0x8] sm:$0xff] %v768
        // Predicated region
        $region77: #{pct_forward.9} parent=47 // pred_check
          %p771 = pneg %p374
        $region78: #{pct_forward.9} parent=47 // pred_check_branch
          %773 = sbr.rel (%p771) target = $region80
        $region79: #{pct_forward.9} parent=47 // pred_region
          %v774 = vld [vmem:[#allocation3] sm:$0xff]
          %v775 = vld [vmem:[#allocation3 + $0x8] sm:$0xff]
          %v776 = vld [vmem:[#allocation4] sm:$0xff]
          %v777 = vld [vmem:[#allocation4 + $0x8] sm:$0xff]
          %v778 = vadd.f32 %v776, 1e-09
          %v779 = vadd.f32 %v777, 1e-09
          %v780 = vrcp.pop %v778
          %v781 = vrcp.pop %v779
          %783 = vset.pattern.permute.xlu0 0
          %784 = vperm.xlu0 %783, %v780
          %v785 = vpop.permute.xlu0 %784
          %788 = vset.pattern.permute.xlu0 0
          %789 = vperm.xlu0 %788, %v781
          %v790 = vpop.permute.xlu0 %789
          %v792 = vmul.f32 %v774, %v785
          %v793 = vmul.f32 %v775, %v790
          %v794 = vld [vmem:[%s367] sm:$0xf]
          %v795 = vld [vmem:[%s367 + $0x4] sm:$0xf]
          %v796 = vunpack.c.l.bf16 %v794
          %v797 = vunpack.c.l.bf16 %v795
          %v798 = vsub.f32 %v796, %v792
          %v799 = vsub.f32 %v797, %v793
          %v800 = vpack.c.bf16 %v799, %v798
          %v801 = vld [vmem:[#allocation10] sm:$0xf]
          %v802 = vld [vmem:[#allocation10 + $0x4] sm:$0xf]
          %v803 = vld [vmem:[#allocation10 + $0x8] sm:$0xf]
          %v804 = vld [vmem:[#allocation10 + $0xc] sm:$0xf]
          %v805 = vld [vmem:[#allocation10 + $0x10] sm:$0xf]
          %v806 = vld [vmem:[#allocation10 + $0x14] sm:$0xf]
          %v807 = vld [vmem:[#allocation10 + $0x18] sm:$0xf]
          %v808 = vld [vmem:[#allocation10 + $0x1c] sm:$0xf]
          %v809 = vld [vmem:[#allocation10 + $0x20] sm:$0xf]
          %v810 = vld [vmem:[#allocation10 + $0x24] sm:$0xf]
          %v811 = vld [vmem:[#allocation10 + $0x28] sm:$0xf]
          %v812 = vld [vmem:[#allocation10 + $0x2c] sm:$0xf]
          %v813 = vld [vmem:[#allocation10 + $0x30] sm:$0xf]
          %v814 = vld [vmem:[#allocation10 + $0x34] sm:$0xf]
          %v815 = vld [vmem:[#allocation10 + $0x38] sm:$0xf]
          %v816 = vld [vmem:[#allocation10 + $0x3c] sm:$0xf]
          %v833 = vunpack.c.l.b16 %v801
          %v834 = vunpack.c.l.b16 %v802
          %v835 = vunpack.c.l.b16 %v803
          %v836 = vunpack.c.l.b16 %v804
          %v837 = vunpack.c.l.b16 %v805
          %v838 = vunpack.c.l.b16 %v806
          %v839 = vunpack.c.l.b16 %v807
          %v840 = vunpack.c.l.b16 %v808
          %v841 = vunpack.c.l.b16 %v809
          %v842 = vunpack.c.l.b16 %v810
          %v843 = vunpack.c.l.b16 %v811
          %v844 = vunpack.c.l.b16 %v812
          %v845 = vunpack.c.l.b16 %v813
          %v846 = vunpack.c.l.b16 %v814
          %v847 = vunpack.c.l.b16 %v815
          %v848 = vunpack.c.l.b16 %v816
          %v849 = vpack.c.b16 %v834, %v833
          %v850 = vpack.c.b16 %v836, %v835
          %v851 = vpack.c.b16 %v838, %v837
          %v852 = vpack.c.b16 %v840, %v839
          %v853 = vpack.c.b16 %v842, %v841
          %v854 = vpack.c.b16 %v844, %v843
          %v855 = vpack.c.b16 %v846, %v845
          %v856 = vpack.c.b16 %v848, %v847
          %865 = vmatprep.subr.bf16.mxu0 0
          %866 = vmatpush1.bf16.msra.mxu0 %v849
          %867 = vmatprep.subr.bf16.mxu0 0
          %868 = vmatpush1.bf16.msra.mxu0 %v850
          %869 = vmatprep.subr.bf16.mxu0 0
          %870 = vmatpush1.bf16.msra.mxu0 %v851
          %871 = vmatprep.subr.bf16.mxu0 0
          %872 = vmatpush1.bf16.msra.mxu0 %v852
          %873 = vmatprep.subr.bf16.mxu0 0
          %874 = vmatpush1.bf16.msra.mxu0 %v853
          %875 = vmatprep.subr.bf16.mxu0 0
          %876 = vmatpush1.bf16.msra.mxu0 %v854
          %877 = vmatprep.subr.bf16.mxu0 0
          %878 = vmatpush1.bf16.msra.mxu0 %v855
          %879 = vmatprep.subr.bf16.mxu0 0
          %880 = vmatpush1.bf16.msra.mxu0 %v856
          %881 = vmatprep.subr.bf16.mxu0 0
          %882 = vmatpush1.bf16.msra.mxu0 0
          %883 = vmatprep.subr.bf16.mxu0 0
          %884 = vmatpush1.bf16.msra.mxu0 0
          %885 = vmatprep.subr.bf16.mxu0 0
          %886 = vmatpush1.bf16.msra.mxu0 0
          %887 = vmatprep.subr.bf16.mxu0 0
          %888 = vmatpush1.bf16.msra.mxu0 0
          %889 = vmatprep.subr.bf16.mxu0 0
          %890 = vmatpush1.bf16.msra.mxu0 0
          %891 = vmatprep.subr.bf16.mxu0 0
          %892 = vmatpush1.bf16.msra.mxu0 0
          %893 = vmatprep.subr.bf16.mxu0 0
          %894 = vmatpush1.bf16.msra.mxu0 0
          %895 = vmatprep.subr.bf16.mxu0 0
          %896 = vmatpush1.bf16.msra.mxu0 0
          %897 = vmatprep.mubr.bf16.mxu0 0
          %898 = vmatmul.mubr.bf16.gmra.mrb[0].mxu0 %v800
          %v899 = vpop.f32.mrb[0].mxu0
          %v900 = vadd.f32 0.0, %v899
          %v901 = vpop.f32.mrb[0].mxu0
          %v902 = vpop.f32.mrb[0].mxu0
          %v903 = vadd.f32 0.0, %v902
          %v904 = vpop.f32.mrb[0].mxu0
          %905 = vdwg.mxu0
          %v906 = vld [vmem:[#allocation12] sm:$0x1]
          %v908 = vlaneseq
          %v909 = vshrl.u32 %v908, 7
          %v910 = vsub.s32 0, %v909
          %v911 = vrot.slane %v906, %v910
          %v913 = vmul.f32 %v900, %v911
          %v914 = vmul.f32 %v903, %v911
          %v915 = vld [vmem:[#allocation13] sm:$0x1]
          %v917 = vlaneseq
          %v918 = vshrl.u32 %v917, 7
          %v919 = vsub.s32 0, %v918
          %v920 = vrot.slane %v915, %v919
          %v922 = vadd.f32 %v913, %v920
          %v923 = vadd.f32 %v914, %v920
          %v924 = vmax.f32 %v922, 0.0
          %v925 = vmax.f32 %v923, 0.0
          %v926 = vadd.f32 %v796, %v924
          %v927 = vadd.f32 %v797, %v925
          %v928 = vpack.c.bf16 %v927, %v926
          %v930 = vunpack.c.l.b16 %v928
          %v931 = vunpack.c.h.b16 %v928
          %v932 = vpack.c.b16 %v930, %v930
          %v933 = vpack.c.b16 %v931, %v931
          %936 = vst [vmem:[%s372] sm:$0xf] %v932
          %937 = vst [vmem:[%s372 + $0x4] sm:$0xf] %v933
        $region80: #{pct_forward.9} parent=47 // pred_fallthru
          _
        %p938 = scmp.lt.s32.totalorder %s26, 1
        %s939 = scalar_select %p938, %s26, 1
        %s940 = smul.addr %s939, 2
        %s941 = smul.addr %s940, 4
        %s942 = scalar_lea.vmem %s7, %s941
        // Predicated region
        $region81: #{pct_forward.9} parent=47 // pred_check
          %p943 = pneg %p204
        $region82: #{pct_forward.9} parent=47 // pred_check_branch
          %945 = sbr.rel (%p943) target = $region84
        $region83: #{pct_forward.9} parent=47 // pred_region
          _
        $region84: #{pct_forward.9} parent=47 // pred_fallthru
          _
      $region48: #{pct_forward.9} parent=5 // pred_fallthru
        _
      %p946 = scmp.le.s32.totalorder 2, %s17
      // Predicated region
      $region85: #{pct_forward.9} parent=5 // pred_check
        %p947 = pneg %p946
      $region86: #{pct_forward.9} parent=5 // pred_check_branch
        %949 = sbr.rel (%p947) target = $region88
      $region87: #{pct_forward.9} parent=5 // pred_region
        %s950 = ssub.s32 %s17, 2
        // Predicated region
        $region89: #{pct_forward.9} parent=87 // pred_check
          %p951 = pneg %p210
        $region90: #{pct_forward.9} parent=87 // pred_check_branch
          %953 = sbr.rel (%p951) target = $region92
        $region91: #{pct_forward.9} parent=87 // pred_region
          %p954 = scmp.lt.s32.totalorder %s28, 1
          %s955 = scalar_select %p954, %s28, 1
          %s956 = smul.addr %s955, 2
          %s957 = smul.addr %s956, 4
          %s958 = scalar_lea.vmem %s7, %s957
        $region92: #{pct_forward.9} parent=87 // pred_fallthru
          _
      $region88: #{pct_forward.9} parent=5 // pred_fallthru
        _
    $region6: #{pct_forward.9} parent=1 // loop_footer
      %s21 = sadd.s32 1, %s17
    $region7: #{pct_forward.9} parent=1 // loop_footer_branch
      %16 = sbr.rel target = $region3
    $region8: #{pct_forward.9} parent=1 // loop_exit
      _
    %959 = vsyncpa [#allocation6], 1
    %s960 = scalar_lea.sflag [#allocation6], 1
    %961 = vsyncpa %s960, 1
    %962 = vsyncpa [#allocation8], 1
    %963 = vsyncpa [#allocation11], 1
    %964 = vsyncpa [#allocation14], 1

// kernel: pct_forward.14
$region0: #{pct_forward.14}
  #allocation0 [shape = 'u32[]', space=smem, size = 0x4, offset = 0x4, fixed_abs, tag = 'smem constant byte address 0x4 - core index']
  #allocation1 [shape = 'u32[144,128]{1,0:T(1,128)}', space=vmem, size = 0x12000, scoped, tag = 'internal scratch']
  %s0 = inlined_call_operand.vmem [shape: bf16[2,16,128], index: 0, kind: input, shape index: {}]
  %s1 = inlined_call_operand.vmem [shape: bf16[2,16,128], index: 1, kind: input, shape index: {}]
  %s2 = inlined_call_operand.vmem [shape: bf16[2,16,128], index: 2, kind: input, shape index: {}]
  %s3 = inlined_call_operand.vmem [shape: bf16[2,16,128], index: 3, kind: input, shape index: {}]
  %s4 = inlined_call_operand.vmem [shape: bf16[2,16,128], index: 4, kind: input, shape index: {}]
  %s5 = inlined_call_operand.hbm [shape: bf16[640,1024], index: 5, kind: input, shape index: {}]
  %s6 = inlined_call_operand.hbm [shape: f32[1,1024], index: 6, kind: input, shape index: {}]
  %s7 = inlined_call_operand.hbm [shape: f32[1,1024], index: 7, kind: input, shape index: {}]
  %s8 = inlined_call_operand.vmem [shape: bf16[2,16,1024], index: 8, kind: output, shape index: {0}]
  %s9 = inlined_call_operand.vmem [shape: f32[2,1,1024], index: 9, kind: output, shape index: {1}]
  %s10 = inlined_call_operand.vmem [shape: f32[2,1,1024], index: 10, kind: output, shape index: {2}]
  %11 = xla_tuple %s8, %s9, %s10
  %s12 = sld [smem:[#allocation0]]
  $region105: #{pct_forward.14} parent=0
    _
  %s14 = ssub.s32 1, %s12
  %s15 = scalar_select 0, %s14, %s12
  $region1: #{pct_forward.14} parent=0
    #allocation2 [shape = 'u8[1310720]{0}', space=vmem, size = 0x140000, scoped, tag = 'input window, operand 5, single buffered']
    #allocation3 [shape = 's32[2]{0}', space=sflag, size = 0x8, scoped, tag = 'scoped memory for pct_forward.14']
    #allocation4 [shape = 'u8[4096]{0}', space=vmem, size = 0x1000, scoped, tag = 'input window, operand 6, single buffered']
    #allocation5 [shape = 's32[1]{0}', space=sflag, size = 0x4, scoped, tag = 'scoped memory for pct_forward.14']
    #allocation6 [shape = 'u8[4096]{0}', space=vmem, size = 0x1000, scoped, tag = 'input window, operand 7, single buffered']
    %16 = vsyncpa [#allocation3], 0
    %17 = vsyncpa [#allocation5], 0
    loop: start=0, step=1, limit=4
    $region2: #{pct_forward.14} parent=1 // loop_pre_header
      _
    $region3: #{pct_forward.14} parent=1 // loop_header
      %s19 = sphi 0, %s23
      %p20 = scmp.ge.s32.totalorder %s19, 4
      %s26 = sphi 0, %s38
      %s27 = sphi 0, %s34
      %s28 = sphi 0, %s26
      %s29 = sphi 0, %s27
      %s30 = sphi 0, %s28
      %s31 = sphi 0, %s29
      %s43 = sphi 0, %s45
      %s46 = sphi 0, %s43
      %s47 = sphi 0, %s46
      %s63 = sphi 0, %s47
      %s71 = sphi 0, %s73
      %s74 = sphi 0, %s71
      %s75 = sphi 0, %s74
      %s91 = sphi 0, %s75
      %s99 = sphi 0, %s101
      %s102 = sphi 0, %s99
      %s103 = sphi 0, %s102
      %s119 = sphi 0, %s103
      %s127 = sphi 0, %s129
      %s130 = sphi 0, %s127
      %s131 = sphi 0, %s130
      %s147 = sphi 0, %s131
      %s155 = sphi 0, %s157
      %s158 = sphi 0, %s155
      %s159 = sphi 0, %s158
      %s175 = sphi 0, %s159
      %s179 = sphi 0, %s179
      %s181 = sphi 0, %s179
      %s182 = sphi 0, %s181
      %s196 = sphi 0, %s182
      %s200 = sphi 0, %s200
      %s202 = sphi 0, %s200
      %s203 = sphi 0, %s202
      %s217 = sphi 0, %s203
      %s221 = sphi 0, %s221
      %s223 = sphi 0, %s221
      %s224 = sphi 0, %s223
      %s238 = sphi 0, %s224
      %s246 = sphi 0, %s248
      %s249 = sphi 0, %s246
      %s250 = sphi 0, %s249
      %s266 = sphi 0, %s250
      %s272 = sphi 0, %s274
      %s275 = sphi 0, %s272
      %s276 = sphi 0, %s275
      %s292 = sphi 0, %s276
      %s298 = sphi 0, %s300
      %s301 = sphi 0, %s298
      %s302 = sphi 0, %s301
      %s318 = sphi 0, %s302
    $region4: #{pct_forward.14} parent=1 // loop_header_branch
      %22 = sbr.rel (%p20) target = $region8
    $region5: #{pct_forward.14} parent=1 // loop_body
      %s24 = ssub.s32 %s19, 1
      %s25 = ssub.s32 %s19, 2
      %s32 = sadd.s32 1, %s27
      %p33 = scmp.ge.s32.totalorder %s32, 1
      %s34 = scalar_select %p33, 0, %s32
      %s35 = sadd.s32 1, %s26
      %s36 = scalar_select %p33, %s35, %s26
      %p37 = scmp.ge.s32.totalorder %s36, 2
      %s38 = scalar_select %p37, 0, %s36
      %s39 = ssub.s32 %s26, %s38
      %s40 = ssub.s32 %s27, %s34
      %s41 = sor.u32 %s39, %s40
      %p42 = scmp.eq.s32.totalorder %s41, 0
      %s44 = sadd.s32 %s43, 1
      %s45 = scalar_select %p42, %s43, %s44
      %p48 = pneg %p42
      %p49 = scmp.eq.s32.totalorder %s19, 1
      %p50 = por %p48, %p49
      %p51 = scmp.ne.s32.totalorder %s43, %s46
      %p52 = scmp.eq.s32.totalorder %s19, 0
      %p53 = por %p51, %p52
      %p54 = scmp.ne.s32.totalorder %s43, %s46
      %p55 = scmp.eq.s32.totalorder %s24, 1
      %p56 = por %p54, %p55
      %p57 = scmp.ne.s32.totalorder %s46, %s47
      %p58 = scmp.eq.s32.totalorder %s24, 0
      %p59 = por %p57, %p58
      %p60 = scmp.ne.s32.totalorder %s46, %s47
      %p61 = scmp.eq.s32.totalorder %s25, 1
      %p62 = por %p60, %p61
      %p64 = scmp.ne.s32.totalorder %s47, %s63
      %p65 = scmp.eq.s32.totalorder %s25, 0
      %p66 = por %p64, %p65
      %s67 = ssub.s32 %s26, %s38
      %s68 = ssub.s32 %s27, %s34
      %s69 = sor.u32 %s67, %s68
      %p70 = scmp.eq.s32.totalorder %s69, 0
      %s72 = sadd.s32 %s71, 1
      %s73 = scalar_select %p70, %s71, %s72
      %p76 = pneg %p70
      %p77 = scmp.eq.s32.totalorder %s19, 1
      %p78 = por %p76, %p77
      %p79 = scmp.ne.s32.totalorder %s71, %s74
      %p80 = scmp.eq.s32.totalorder %s19, 0
      %p81 = por %p79, %p80
      %p82 = scmp.ne.s32.totalorder %s71, %s74
      %p83 = scmp.eq.s32.totalorder %s24, 1
      %p84 = por %p82, %p83
      %p85 = scmp.ne.s32.totalorder %s74, %s75
      %p86 = scmp.eq.s32.totalorder %s24, 0
      %p87 = por %p85, %p86
      %p88 = scmp.ne.s32.totalorder %s74, %s75
      %p89 = scmp.eq.s32.totalorder %s25, 1
      %p90 = por %p88, %p89
      %p92 = scmp.ne.s32.totalorder %s75, %s91
      %p93 = scmp.eq.s32.totalorder %s25, 0
      %p94 = por %p92, %p93
      %s95 = ssub.s32 %s26, %s38
      %s96 = ssub.s32 %s27, %s34
      %s97 = sor.u32 %s95, %s96
      %p98 = scmp.eq.s32.totalorder %s97, 0
      %s100 = sadd.s32 %s99, 1
      %s101 = scalar_select %p98, %s99, %s100
      %p104 = pneg %p98
      %p105 = scmp.eq.s32.totalorder %s19, 1
      %p106 = por %p104, %p105
      %p107 = scmp.ne.s32.totalorder %s99, %s102
      %p108 = scmp.eq.s32.totalorder %s19, 0
      %p109 = por %p107, %p108
      %p110 = scmp.ne.s32.totalorder %s99, %s102
      %p111 = scmp.eq.s32.totalorder %s24, 1
      %p112 = por %p110, %p111
      %p113 = scmp.ne.s32.totalorder %s102, %s103
      %p114 = scmp.eq.s32.totalorder %s24, 0
      %p115 = por %p113, %p114
      %p116 = scmp.ne.s32.totalorder %s102, %s103
      %p117 = scmp.eq.s32.totalorder %s25, 1
      %p118 = por %p116, %p117
      %p120 = scmp.ne.s32.totalorder %s103, %s119
      %p121 = scmp.eq.s32.totalorder %s25, 0
      %p122 = por %p120, %p121
      %s123 = ssub.s32 %s26, %s38
      %s124 = ssub.s32 %s27, %s34
      %s125 = sor.u32 %s123, %s124
      %p126 = scmp.eq.s32.totalorder %s125, 0
      %s128 = sadd.s32 %s127, 1
      %s129 = scalar_select %p126, %s127, %s128
      %p132 = pneg %p126
      %p133 = scmp.eq.s32.totalorder %s19, 1
      %p134 = por %p132, %p133
      %p135 = scmp.ne.s32.totalorder %s127, %s130
      %p136 = scmp.eq.s32.totalorder %s19, 0
      %p137 = por %p135, %p136
      %p138 = scmp.ne.s32.totalorder %s127, %s130
      %p139 = scmp.eq.s32.totalorder %s24, 1
      %p140 = por %p138, %p139
      %p141 = scmp.ne.s32.totalorder %s130, %s131
      %p142 = scmp.eq.s32.totalorder %s24, 0
      %p143 = por %p141, %p142
      %p144 = scmp.ne.s32.totalorder %s130, %s131
      %p145 = scmp.eq.s32.totalorder %s25, 1
      %p146 = por %p144, %p145
      %p148 = scmp.ne.s32.totalorder %s131, %s147
      %p149 = scmp.eq.s32.totalorder %s25, 0
      %p150 = por %p148, %p149
      %s151 = ssub.s32 %s26, %s38
      %s152 = ssub.s32 %s27, %s34
      %s153 = sor.u32 %s151, %s152
      %p154 = scmp.eq.s32.totalorder %s153, 0
      %s156 = sadd.s32 %s155, 1
      %s157 = scalar_select %p154, %s155, %s156
      %p160 = pneg %p154
      %p161 = scmp.eq.s32.totalorder %s19, 1
      %p162 = por %p160, %p161
      %p163 = scmp.ne.s32.totalorder %s155, %s158
      %p164 = scmp.eq.s32.totalorder %s19, 0
      %p165 = por %p163, %p164
      %p166 = scmp.ne.s32.totalorder %s155, %s158
      %p167 = scmp.eq.s32.totalorder %s24, 1
      %p168 = por %p166, %p167
      %p169 = scmp.ne.s32.totalorder %s158, %s159
      %p170 = scmp.eq.s32.totalorder %s24, 0
      %p171 = por %p169, %p170
      %p172 = scmp.ne.s32.totalorder %s158, %s159
      %p173 = scmp.eq.s32.totalorder %s25, 1
      %p174 = por %p172, %p173
      %p176 = scmp.ne.s32.totalorder %s159, %s175
      %p177 = scmp.eq.s32.totalorder %s25, 0
      %p178 = por %p176, %p177
      %s180 = sadd.s32 %s179, 1
      %p183 = scmp.eq.s32.totalorder %s19, 1
      %p184 = scmp.ne.s32.totalorder %s179, %s181
      %p185 = scmp.eq.s32.totalorder %s19, 0
      %p186 = por %p184, %p185
      %p187 = scmp.ne.s32.totalorder %s179, %s181
      %p188 = scmp.eq.s32.totalorder %s24, 1
      %p189 = por %p187, %p188
      %p190 = scmp.ne.s32.totalorder %s181, %s182
      %p191 = scmp.eq.s32.totalorder %s24, 0
      %p192 = por %p190, %p191
      %p193 = scmp.ne.s32.totalorder %s181, %s182
      %p194 = scmp.eq.s32.totalorder %s25, 1
      %p195 = por %p193, %p194
      %p197 = scmp.ne.s32.totalorder %s182, %s196
      %p198 = scmp.eq.s32.totalorder %s25, 0
      %p199 = por %p197, %p198
      %s201 = sadd.s32 %s200, 1
      %p204 = scmp.eq.s32.totalorder %s19, 1
      %p205 = scmp.ne.s32.totalorder %s200, %s202
      %p206 = scmp.eq.s32.totalorder %s19, 0
      %p207 = por %p205, %p206
      %p208 = scmp.ne.s32.totalorder %s200, %s202
      %p209 = scmp.eq.s32.totalorder %s24, 1
      %p210 = por %p208, %p209
      %p211 = scmp.ne.s32.totalorder %s202, %s203
      %p212 = scmp.eq.s32.totalorder %s24, 0
      %p213 = por %p211, %p212
      %p214 = scmp.ne.s32.totalorder %s202, %s203
      %p215 = scmp.eq.s32.totalorder %s25, 1
      %p216 = por %p214, %p215
      %p218 = scmp.ne.s32.totalorder %s203, %s217
      %p219 = scmp.eq.s32.totalorder %s25, 0
      %p220 = por %p218, %p219
      %s222 = sadd.s32 %s221, 1
      %p225 = scmp.eq.s32.totalorder %s19, 1
      %p226 = scmp.ne.s32.totalorder %s221, %s223
      %p227 = scmp.eq.s32.totalorder %s19, 0
      %p228 = por %p226, %p227
      %p229 = scmp.ne.s32.totalorder %s221, %s223
      %p230 = scmp.eq.s32.totalorder %s24, 1
      %p231 = por %p229, %p230
      %p232 = scmp.ne.s32.totalorder %s223, %s224
      %p233 = scmp.eq.s32.totalorder %s24, 0
      %p234 = por %p232, %p233
      %p235 = scmp.ne.s32.totalorder %s223, %s224
      %p236 = scmp.eq.s32.totalorder %s25, 1
      %p237 = por %p235, %p236
      %p239 = scmp.ne.s32.totalorder %s224, %s238
      %p240 = scmp.eq.s32.totalorder %s25, 0
      %p241 = por %p239, %p240
      %s242 = ssub.s32 %s26, %s38
      %s243 = ssub.s32 %s27, %s34
      %s244 = sor.u32 %s242, %s243
      %p245 = scmp.eq.s32.totalorder %s244, 0
      %s247 = sadd.s32 %s246, 1
      %s248 = scalar_select %p245, %s246, %s247
      %p251 = pneg %p245
      %p252 = scmp.eq.s32.totalorder %s19, 1
      %p253 = por %p251, %p252
      %p254 = scmp.ne.s32.totalorder %s246, %s249
      %p255 = scmp.eq.s32.totalorder %s19, 0
      %p256 = por %p254, %p255
      %p257 = scmp.ne.s32.totalorder %s246, %s249
      %p258 = scmp.eq.s32.totalorder %s24, 1
      %p259 = por %p257, %p258
      %p260 = scmp.ne.s32.totalorder %s249, %s250
      %p261 = scmp.eq.s32.totalorder %s24, 0
      %p262 = por %p260, %p261
      %p263 = scmp.ne.s32.totalorder %s249, %s250
      %p264 = scmp.eq.s32.totalorder %s25, 1
      %p265 = por %p263, %p264
      %p267 = scmp.ne.s32.totalorder %s250, %s266
      %p268 = scmp.eq.s32.totalorder %s25, 0
      %p269 = por %p267, %p268
      %s270 = ssub.s32 %s26, %s38
      %p271 = scmp.eq.s32.totalorder %s270, 0
      %s273 = sadd.s32 %s272, 1
      %s274 = scalar_select %p271, %s272, %s273
      %p277 = pneg %p271
      %p278 = scmp.eq.s32.totalorder %s19, 1
      %p279 = por %p277, %p278
      %p280 = scmp.ne.s32.totalorder %s272, %s275
      %p281 = scmp.eq.s32.totalorder %s19, 0
      %p282 = por %p280, %p281
      %p283 = scmp.ne.s32.totalorder %s272, %s275
      %p284 = scmp.eq.s32.totalorder %s24, 1
      %p285 = por %p283, %p284
      %p286 = scmp.ne.s32.totalorder %s275, %s276
      %p287 = scmp.eq.s32.totalorder %s24, 0
      %p288 = por %p286, %p287
      %p289 = scmp.ne.s32.totalorder %s275, %s276
      %p290 = scmp.eq.s32.totalorder %s25, 1
      %p291 = por %p289, %p290
      %p293 = scmp.ne.s32.totalorder %s276, %s292
      %p294 = scmp.eq.s32.totalorder %s25, 0
      %p295 = por %p293, %p294
      %s296 = ssub.s32 %s26, %s38
      %p297 = scmp.eq.s32.totalorder %s296, 0
      %s299 = sadd.s32 %s298, 1
      %s300 = scalar_select %p297, %s298, %s299
      %p303 = pneg %p297
      %p304 = scmp.eq.s32.totalorder %s19, 1
      %p305 = por %p303, %p304
      %p306 = scmp.ne.s32.totalorder %s298, %s301
      %p307 = scmp.eq.s32.totalorder %s19, 0
      %p308 = por %p306, %p307
      %p309 = scmp.ne.s32.totalorder %s298, %s301
      %p310 = scmp.eq.s32.totalorder %s24, 1
      %p311 = por %p309, %p310
      %p312 = scmp.ne.s32.totalorder %s301, %s302
      %p313 = scmp.eq.s32.totalorder %s24, 0
      %p314 = por %p312, %p313
      %p315 = scmp.ne.s32.totalorder %s301, %s302
      %p316 = scmp.eq.s32.totalorder %s25, 1
      %p317 = por %p315, %p316
      %p319 = scmp.ne.s32.totalorder %s302, %s318
      %p320 = scmp.eq.s32.totalorder %s25, 0
      %p321 = por %p319, %p320
      %p322 = scmp.le.s32.totalorder 1, %s19
      %p323 = scmp.lt.s32.totalorder %s19, 3
      %p324 = pnand %p322, %p323
      %p325 = pneg %p324
      // Predicated region
      $region9: #{pct_forward.14} parent=5 // pred_check
        _
      $region10: #{pct_forward.14} parent=5 // pred_check_branch
        %327 = sbr.rel (%p324) target = $region12
      $region11: #{pct_forward.14} parent=5 // pred_region
        %s328 = ssub.s32 %s19, 1
        // Predicated region
        $region13: #{pct_forward.14} parent=11 // pred_check
          %p329 = pneg %p192
        $region14: #{pct_forward.14} parent=11 // pred_check_branch
          %331 = sbr.rel (%p329) target = $region16
        $region15: #{pct_forward.14} parent=11 // pred_region
          %s333 = ssub.s32 40960, 40960
          %334 = vsyncadd [#allocation3], %s333
          %s335 = sshll.u32 [#allocation2], 4
          %s336 = int_to_ptr.vmem [resolvable:$true] %s335
          %341 = dma.hbm_to_vmem [thread:$0]  %s5, 40960, %s336, [#allocation3], 512, 512, 32
        $region16: #{pct_forward.14} parent=11 // pred_fallthru
          _
        // Predicated region
        $region17: #{pct_forward.14} parent=11 // pred_check
          %p342 = pneg %p213
        $region18: #{pct_forward.14} parent=11 // pred_check_branch
          %344 = sbr.rel (%p342) target = $region20
        $region19: #{pct_forward.14} parent=11 // pred_region
          %s346 = ssub.s32 128, 128
          %347 = vsyncadd [#allocation5], %s346
          %s349 = sshll.u32 [#allocation4], 4
          %s350 = int_to_ptr.vmem [resolvable:$true] %s349
          %352 = dma.hbm_to_vmem [thread:$0]  %s6, 128, %s350, [#allocation5]
        $region20: #{pct_forward.14} parent=11 // pred_fallthru
          _
        // Predicated region
        $region21: #{pct_forward.14} parent=11 // pred_check
          %p353 = pneg %p234
        $region22: #{pct_forward.14} parent=11 // pred_check_branch
          %355 = sbr.rel (%p353) target = $region24
        $region23: #{pct_forward.14} parent=11 // pred_region
          %s357 = ssub.s32 128, 128
          %358 = vsyncadd [#allocation5], %s357
          %s360 = sshll.u32 [#allocation6], 4
          %s361 = int_to_ptr.vmem [resolvable:$true] %s360
          %363 = dma.hbm_to_vmem [thread:$0]  %s7, 128, %s361, [#allocation5]
        $region24: #{pct_forward.14} parent=11 // pred_fallthru
          _
      $region12: #{pct_forward.14} parent=5 // pred_fallthru
        _
      %p364 = scmp.lt.s32.totalorder %s19, 2
      // Predicated region
      $region25: #{pct_forward.14} parent=5 // pred_check
        %p365 = pneg %p364
      $region26: #{pct_forward.14} parent=5 // pred_check_branch
        %367 = sbr.rel (%p365) target = $region28
      $region27: #{pct_forward.14} parent=5 // pred_region
        // Predicated region
        $region29: #{pct_forward.14} parent=27 // pred_check
          %p368 = pneg %p53
        $region30: #{pct_forward.14} parent=27 // pred_check_branch
          %370 = sbr.rel (%p368) target = $region32
        $region31: #{pct_forward.14} parent=27 // pred_region
          %s371 = smul.u32 2, %s27
          %p372 = scmp.lt.s32.totalorder %s26, 1
          %s373 = scalar_select %p372, %s26, 1
          %p374 = scmp.lt.s32.totalorder %s371, 1
          %s375 = scalar_select %p374, %s371, 1
          %s376 = smul.addr %s373, 2
          %s377 = sadd.s32 %s375, %s376
          %s378 = smul.addr %s377, 4
          %s379 = scalar_lea.vmem %s0, %s378
          %s380 = smul.u32 2, %s27
        $region32: #{pct_forward.14} parent=27 // pred_fallthru
          _
        // Predicated region
        $region33: #{pct_forward.14} parent=27 // pred_check
          %p381 = pneg %p81
        $region34: #{pct_forward.14} parent=27 // pred_check_branch
          %383 = sbr.rel (%p381) target = $region36
        $region35: #{pct_forward.14} parent=27 // pred_region
          %s384 = smul.u32 2, %s27
          %p385 = scmp.lt.s32.totalorder %s26, 1
          %s386 = scalar_select %p385, %s26, 1
          %p387 = scmp.lt.s32.totalorder %s384, 1
          %s388 = scalar_select %p387, %s384, 1
          %s389 = smul.addr %s386, 2
          %s390 = sadd.s32 %s388, %s389
          %s391 = smul.addr %s390, 4
          %s392 = scalar_lea.vmem %s1, %s391
          %s393 = smul.u32 2, %s27
        $region36: #{pct_forward.14} parent=27 // pred_fallthru
          _
        // Predicated region
        $region37: #{pct_forward.14} parent=27 // pred_check
          %p394 = pneg %p109
        $region38: #{pct_forward.14} parent=27 // pred_check_branch
          %396 = sbr.rel (%p394) target = $region40
        $region39: #{pct_forward.14} parent=27 // pred_region
          %s397 = smul.u32 2, %s27
          %p398 = scmp.lt.s32.totalorder %s26, 1
          %s399 = scalar_select %p398, %s26, 1
          %p400 = scmp.lt.s32.totalorder %s397, 1
          %s401 = scalar_select %p400, %s397, 1
          %s402 = smul.addr %s399, 2
          %s403 = sadd.s32 %s401, %s402
          %s404 = smul.addr %s403, 4
          %s405 = scalar_lea.vmem %s2, %s404
          %s406 = smul.u32 2, %s27
        $region40: #{pct_forward.14} parent=27 // pred_fallthru
          _
        // Predicated region
        $region41: #{pct_forward.14} parent=27 // pred_check
          %p407 = pneg %p137
        $region42: #{pct_forward.14} parent=27 // pred_check_branch
          %409 = sbr.rel (%p407) target = $region44
        $region43: #{pct_forward.14} parent=27 // pred_region
          %s410 = smul.u32 2, %s27
          %p411 = scmp.lt.s32.totalorder %s26, 1
          %s412 = scalar_select %p411, %s26, 1
          %p413 = scmp.lt.s32.totalorder %s410, 1
          %s414 = scalar_select %p413, %s410, 1
          %s415 = smul.addr %s412, 2
          %s416 = sadd.s32 %s414, %s415
          %s417 = smul.addr %s416, 4
          %s418 = scalar_lea.vmem %s3, %s417
          %s419 = smul.u32 2, %s27
        $region44: #{pct_forward.14} parent=27 // pred_fallthru
          _
        // Predicated region
        $region45: #{pct_forward.14} parent=27 // pred_check
          %p420 = pneg %p165
        $region46: #{pct_forward.14} parent=27 // pred_check_branch
          %422 = sbr.rel (%p420) target = $region48
        $region47: #{pct_forward.14} parent=27 // pred_region
          %s423 = smul.u32 2, %s27
          %p424 = scmp.lt.s32.totalorder %s26, 1
          %s425 = scalar_select %p424, %s26, 1
          %p426 = scmp.lt.s32.totalorder %s423, 1
          %s427 = scalar_select %p426, %s423, 1
          %s428 = smul.addr %s425, 2
          %s429 = sadd.s32 %s427, %s428
          %s430 = smul.addr %s429, 4
          %s431 = scalar_lea.vmem %s4, %s430
          %s432 = smul.u32 2, %s27
        $region48: #{pct_forward.14} parent=27 // pred_fallthru
          _
      $region28: #{pct_forward.14} parent=5 // pred_fallthru
        _
      %p433 = scmp.le.s32.totalorder 1, %s19
      %p434 = scmp.lt.s32.totalorder %s19, 3
      %p435 = pnand %p433, %p434
      %p436 = pneg %p435
      // Predicated region
      $region49: #{pct_forward.14} parent=5 // pred_check
        _
      $region50: #{pct_forward.14} parent=5 // pred_check_branch
        %438 = sbr.rel (%p435) target = $region52
      $region51: #{pct_forward.14} parent=5 // pred_region
        %s439 = ssub.s32 %s19, 1
        // Predicated region
        $region53: #{pct_forward.14} parent=51 // pred_check
          %p440 = pneg %p192
        $region54: #{pct_forward.14} parent=51 // pred_check_branch
          %442 = sbr.rel (%p440) target = $region56
        $region55: #{pct_forward.14} parent=51 // pred_region
          %443 = dma.done [#allocation3], 40960
        $region56: #{pct_forward.14} parent=51 // pred_fallthru
          _
        // Predicated region
        $region57: #{pct_forward.14} parent=51 // pred_check
          %p444 = pneg %p213
        $region58: #{pct_forward.14} parent=51 // pred_check_branch
          %446 = sbr.rel (%p444) target = $region60
        $region59: #{pct_forward.14} parent=51 // pred_region
          %447 = dma.done [#allocation5], 128
        $region60: #{pct_forward.14} parent=51 // pred_fallthru
          _
        // Predicated region
        $region61: #{pct_forward.14} parent=51 // pred_check
          %p448 = pneg %p234
        $region62: #{pct_forward.14} parent=51 // pred_check_branch
          %450 = sbr.rel (%p448) target = $region64
        $region63: #{pct_forward.14} parent=51 // pred_region
          %451 = dma.done [#allocation5], 128
        $region64: #{pct_forward.14} parent=51 // pred_fallthru
          _
        %s452 = smul.u32 2, %s29
        %p453 = scmp.lt.s32.totalorder %s28, 1
        %s454 = scalar_select %p453, %s28, 1
        %p455 = scmp.lt.s32.totalorder %s452, 1
        %s456 = scalar_select %p455, %s452, 1
        %s457 = smul.addr %s454, 2
        %s458 = sadd.s32 %s456, %s457
        %s459 = smul.addr %s458, 4
        %s460 = scalar_lea.vmem %s0, %s459
        %p461 = pneg %p59
        %p462 = pneg %p56
        %s463 = smul.u32 2, %s29
        %p464 = scmp.lt.s32.totalorder %s28, 1
        %s465 = scalar_select %p464, %s28, 1
        %p466 = scmp.lt.s32.totalorder %s463, 1
        %s467 = scalar_select %p466, %s463, 1
        %s468 = smul.addr %s465, 2
        %s469 = sadd.s32 %s467, %s468
        %s470 = smul.addr %s469, 4
        %s471 = scalar_lea.vmem %s1, %s470
        %p472 = pneg %p87
        %p473 = pneg %p84
        %s474 = smul.u32 2, %s29
        %p475 = scmp.lt.s32.totalorder %s28, 1
        %s476 = scalar_select %p475, %s28, 1
        %p477 = scmp.lt.s32.totalorder %s474, 1
        %s478 = scalar_select %p477, %s474, 1
        %s479 = smul.addr %s476, 2
        %s480 = sadd.s32 %s478, %s479
        %s481 = smul.addr %s480, 4
        %s482 = scalar_lea.vmem %s2, %s481
        %p483 = pneg %p115
        %p484 = pneg %p112
        %s485 = smul.u32 2, %s29
        %p486 = scmp.lt.s32.totalorder %s28, 1
        %s487 = scalar_select %p486, %s28, 1
        %p488 = scmp.lt.s32.totalorder %s485, 1
        %s489 = scalar_select %p488, %s485, 1
        %s490 = smul.addr %s487, 2
        %s491 = sadd.s32 %s489, %s490
        %s492 = smul.addr %s491, 4
        %s493 = scalar_lea.vmem %s3, %s492
        %p494 = pneg %p143
        %p495 = pneg %p140
        %s496 = smul.u32 2, %s29
        %p497 = scmp.lt.s32.totalorder %s28, 1
        %s498 = scalar_select %p497, %s28, 1
        %p499 = scmp.lt.s32.totalorder %s496, 1
        %s500 = scalar_select %p499, %s496, 1
        %s501 = smul.addr %s498, 2
        %s502 = sadd.s32 %s500, %s501
        %s503 = smul.addr %s502, 4
        %s504 = scalar_lea.vmem %s4, %s503
        %p505 = pneg %p171
        %p506 = pneg %p168
        %p507 = pneg %p192
        %p508 = pneg %p189
        %p509 = pneg %p213
        %p510 = pneg %p210
        %p511 = pneg %p234
        %p512 = pneg %p231
        %p513 = pneg %p262
        %p514 = pneg %p259
        %s515 = smul.u32 2, %s29
        %p516 = scmp.lt.s32.totalorder %s28, 1
        %s517 = scalar_select %p516, %s28, 1
        %p518 = scmp.lt.s32.totalorder %s515, 1
        %s519 = scalar_select %p518, %s515, 1
        %s520 = smul.addr %s519, 8
        %s521 = smul.addr %s517, 16
        %s522 = sadd.s32 %s520, %s521
        %s523 = smul.addr %s522, 4
        %s524 = scalar_lea.vmem %s8, %s523
        %p525 = pneg %p288
        %p526 = pneg %p285
        %p527 = scmp.lt.s32.totalorder %s28, 1
        %s528 = scalar_select %p527, %s28, 1
        %s529 = smul.addr %s528, 8
        %s530 = scalar_lea.vmem %s9, %s529
        %p531 = pneg %p314
        %p532 = pneg %p311
        %p533 = scmp.lt.s32.totalorder %s28, 1
        %s534 = scalar_select %p533, %s28, 1
        %s535 = smul.addr %s534, 8
        %s536 = scalar_lea.vmem %s10, %s535
        %s537 = smul.u32 2, %s29
        %p538 = scmp.lt.s32.totalorder %s28, 1
        %s539 = scalar_select %p538, %s28, 1
        %p540 = scmp.lt.s32.totalorder %s537, 1
        %s541 = scalar_select %p540, %s537, 1
        %s542 = smul.addr %s539, 2
        %s543 = sadd.s32 %s541, %s542
        %s544 = smul.addr %s543, 4
        %s545 = scalar_lea.vmem %s0, %s544
        %s546 = smul.u32 2, %s29
        %s547 = smul.u32 2, %s29
        %p548 = scmp.lt.s32.totalorder %s28, 1
        %s549 = scalar_select %p548, %s28, 1
        %p550 = scmp.lt.s32.totalorder %s547, 1
        %s551 = scalar_select %p550, %s547, 1
        %s552 = smul.addr %s549, 2
        %s553 = sadd.s32 %s551, %s552
        %s554 = smul.addr %s553, 4
        %s555 = scalar_lea.vmem %s1, %s554
        %s556 = smul.u32 2, %s29
        %s557 = smul.u32 2, %s29
        %p558 = scmp.lt.s32.totalorder %s28, 1
        %s559 = scalar_select %p558, %s28, 1
        %p560 = scmp.lt.s32.totalorder %s557, 1
        %s561 = scalar_select %p560, %s557, 1
        %s562 = smul.addr %s559, 2
        %s563 = sadd.s32 %s561, %s562
        %s564 = smul.addr %s563, 4
        %s565 = scalar_lea.vmem %s2, %s564
        %s566 = smul.u32 2, %s29
        %s567 = smul.u32 2, %s29
        %p568 = scmp.lt.s32.totalorder %s28, 1
        %s569 = scalar_select %p568, %s28, 1
        %p570 = scmp.lt.s32.totalorder %s567, 1
        %s571 = scalar_select %p570, %s567, 1
        %s572 = smul.addr %s569, 2
        %s573 = sadd.s32 %s571, %s572
        %s574 = smul.addr %s573, 4
        %s575 = scalar_lea.vmem %s3, %s574
        %s576 = smul.u32 2, %s29
        %s577 = smul.u32 2, %s29
        %p578 = scmp.lt.s32.totalorder %s28, 1
        %s579 = scalar_select %p578, %s28, 1
        %p580 = scmp.lt.s32.totalorder %s577, 1
        %s581 = scalar_select %p580, %s577, 1
        %s582 = smul.addr %s579, 2
        %s583 = sadd.s32 %s581, %s582
        %s584 = smul.addr %s583, 4
        %s585 = scalar_lea.vmem %s4, %s584
        %s586 = smul.u32 2, %s29
        %s587 = smul.u32 2, %s29
        %p588 = scmp.lt.s32.totalorder %s28, 1
        %s589 = scalar_select %p588, %s28, 1
        %p590 = scmp.lt.s32.totalorder %s587, 1
        %s591 = scalar_select %p590, %s587, 1
        %s592 = smul.addr %s591, 8
        %s593 = smul.addr %s589, 16
        %s594 = sadd.s32 %s592, %s593
        %s595 = smul.addr %s594, 4
        %s596 = scalar_lea.vmem %s8, %s595
        %s597 = smul.u32 2, %s29
        %p598 = scmp.lt.s32.totalorder %s28, 1
        %s599 = scalar_select %p598, %s28, 1
        %s600 = smul.addr %s599, 8
        %s601 = scalar_lea.vmem %s9, %s600
        %p602 = scmp.lt.s32.totalorder %s28, 1
        %s603 = scalar_select %p602, %s28, 1
        %s604 = smul.addr %s603, 8
        %s605 = scalar_lea.vmem %s10, %s604
        %v607 = vld [vmem:[%s545] sm:$0xf]
        %v608 = vld [vmem:[%s545 + $0x4] sm:$0xf]
        %v609 = vld [vmem:[%s555] sm:$0xf]
        %v610 = vld [vmem:[%s555 + $0x4] sm:$0xf]
        %v611 = vld [vmem:[%s565] sm:$0xf]
        %v612 = vld [vmem:[%s565 + $0x4] sm:$0xf]
        %v613 = vld [vmem:[%s575] sm:$0xf]
        %v614 = vld [vmem:[%s575 + $0x4] sm:$0xf]
        %v615 = vld [vmem:[%s585] sm:$0xf]
        %v616 = vld [vmem:[%s585 + $0x4] sm:$0xf]
        %v619 = vunpack.c.l.b16 %v607
        %v620 = vunpack.c.l.b16 %v608
        %v621 = vpack.c.b16 %v620, %v619
        %v625 = vunpack.c.l.b16 %v609
        %v626 = vunpack.c.l.b16 %v610
        %v627 = vpack.c.b16 %v626, %v625
        %v631 = vunpack.c.l.b16 %v611
        %v632 = vunpack.c.l.b16 %v612
        %v633 = vpack.c.b16 %v632, %v631
        %v637 = vunpack.c.l.b16 %v613
        %v638 = vunpack.c.l.b16 %v614
        %v639 = vpack.c.b16 %v638, %v637
        %v643 = vunpack.c.l.b16 %v615
        %v644 = vunpack.c.l.b16 %v616
        %v645 = vpack.c.b16 %v644, %v643
        %v647 = vld [vmem:[#allocation2] sm:$0xff]
        %v648 = vld [vmem:[#allocation2 + $0x8] sm:$0xff]
        %v649 = vld [vmem:[#allocation2 + $0x10] sm:$0xff]
        %v650 = vld [vmem:[#allocation2 + $0x18] sm:$0xff]
        %v651 = vld [vmem:[#allocation2 + $0x20] sm:$0xff]
        %v652 = vld [vmem:[#allocation2 + $0x28] sm:$0xff]
        %v653 = vld [vmem:[#allocation2 + $0x30] sm:$0xff]
        %v654 = vld [vmem:[#allocation2 + $0x38] sm:$0xff]
        %v655 = vld [vmem:[#allocation2 + $0x40] sm:$0xff]
        %v656 = vld [vmem:[#allocation2 + $0x48] sm:$0xff]
        %v657 = vld [vmem:[#allocation2 + $0x50] sm:$0xff]
        %v658 = vld [vmem:[#allocation2 + $0x58] sm:$0xff]
        %v659 = vld [vmem:[#allocation2 + $0x60] sm:$0xff]
        %v660 = vld [vmem:[#allocation2 + $0x68] sm:$0xff]
        %v661 = vld [vmem:[#allocation2 + $0x70] sm:$0xff]
        %v662 = vld [vmem:[#allocation2 + $0x78] sm:$0xff]
        %v663 = vld [vmem:[#allocation2 + $0x80] sm:$0xff]
        %v664 = vld [vmem:[#allocation2 + $0x88] sm:$0xff]
        %v665 = vld [vmem:[#allocation2 + $0x90] sm:$0xff]
        %v666 = vld [vmem:[#allocation2 + $0x98] sm:$0xff]
        %v667 = vld [vmem:[#allocation2 + $0xa0] sm:$0xff]
        %v668 = vld [vmem:[#allocation2 + $0xa8] sm:$0xff]
        %v669 = vld [vmem:[#allocation2 + $0xb0] sm:$0xff]
        %v670 = vld [vmem:[#allocation2 + $0xb8] sm:$0xff]
        %v671 = vld [vmem:[#allocation2 + $0xc0] sm:$0xff]
        %v672 = vld [vmem:[#allocation2 + $0xc8] sm:$0xff]
        %v673 = vld [vmem:[#allocation2 + $0xd0] sm:$0xff]
        %v674 = vld [vmem:[#allocation2 + $0xd8] sm:$0xff]
        %v675 = vld [vmem:[#allocation2 + $0xe0] sm:$0xff]
        %v676 = vld [vmem:[#allocation2 + $0xe8] sm:$0xff]
        %v677 = vld [vmem:[#allocation2 + $0xf0] sm:$0xff]
        %v678 = vld [vmem:[#allocation2 + $0xf8] sm:$0xff]
        %v679 = vld [vmem:[#allocation2 + $0x100] sm:$0xff]
        %v680 = vld [vmem:[#allocation2 + $0x108] sm:$0xff]
        %v681 = vld [vmem:[#allocation2 + $0x110] sm:$0xff]
        %v682 = vld [vmem:[#allocation2 + $0x118] sm:$0xff]
        %v683 = vld [vmem:[#allocation2 + $0x120] sm:$0xff]
        %v684 = vld [vmem:[#allocation2 + $0x128] sm:$0xff]
        %v685 = vld [vmem:[#allocation2 + $0x130] sm:$0xff]
        %v686 = vld [vmem:[#allocation2 + $0x138] sm:$0xff]
        %v687 = vld [vmem:[#allocation2 + $0x140] sm:$0xff]
        %v688 = vld [vmem:[#allocation2 + $0x148] sm:$0xff]
        %v689 = vld [vmem:[#allocation2 + $0x150] sm:$0xff]
        %v690 = vld [vmem:[#allocation2 + $0x158] sm:$0xff]
        %v691 = vld [vmem:[#allocation2 + $0x160] sm:$0xff]
        %v692 = vld [vmem:[#allocation2 + $0x168] sm:$0xff]
        %v693 = vld [vmem:[#allocation2 + $0x170] sm:$0xff]
        %v694 = vld [vmem:[#allocation2 + $0x178] sm:$0xff]
        %v695 = vld [vmem:[#allocation2 + $0x180] sm:$0xff]
        %v696 = vld [vmem:[#allocation2 + $0x188] sm:$0xff]
        %v697 = vld [vmem:[#allocation2 + $0x190] sm:$0xff]
        %v698 = vld [vmem:[#allocation2 + $0x198] sm:$0xff]
        %v699 = vld [vmem:[#allocation2 + $0x1a0] sm:$0xff]
        %v700 = vld [vmem:[#allocation2 + $0x1a8] sm:$0xff]
        %v701 = vld [vmem:[#allocation2 + $0x1b0] sm:$0xff]
        %v702 = vld [vmem:[#allocation2 + $0x1b8] sm:$0xff]
        %v703 = vld [vmem:[#allocation2 + $0x1c0] sm:$0xff]
        %v704 = vld [vmem:[#allocation2 + $0x1c8] sm:$0xff]
        %v705 = vld [vmem:[#allocation2 + $0x1d0] sm:$0xff]
        %v706 = vld [vmem:[#allocation2 + $0x1d8] sm:$0xff]
        %v707 = vld [vmem:[#allocation2 + $0x1e0] sm:$0xff]
        %v708 = vld [vmem:[#allocation2 + $0x1e8] sm:$0xff]
        %v709 = vld [vmem:[#allocation2 + $0x1f0] sm:$0xff]
        %v710 = vld [vmem:[#allocation2 + $0x1f8] sm:$0xff]
        %v711 = vld [vmem:[#allocation2 + $0x200] sm:$0xff]
        %v712 = vld [vmem:[#allocation2 + $0x208] sm:$0xff]
        %v713 = vld [vmem:[#allocation2 + $0x210] sm:$0xff]
        %v714 = vld [vmem:[#allocation2 + $0x218] sm:$0xff]
        %v715 = vld [vmem:[#allocation2 + $0x220] sm:$0xff]
        %v716 = vld [vmem:[#allocation2 + $0x228] sm:$0xff]
        %v717 = vld [vmem:[#allocation2 + $0x230] sm:$0xff]
        %v718 = vld [vmem:[#allocation2 + $0x238] sm:$0xff]
        %v719 = vld [vmem:[#allocation2 + $0x240] sm:$0xff]
        %v720 = vld [vmem:[#allocation2 + $0x248] sm:$0xff]
        %v721 = vld [vmem:[#allocation2 + $0x250] sm:$0xff]
        %v722 = vld [vmem:[#allocation2 + $0x258] sm:$0xff]
        %v723 = vld [vmem:[#allocation2 + $0x260] sm:$0xff]
        %v724 = vld [vmem:[#allocation2 + $0x268] sm:$0xff]
        %v725 = vld [vmem:[#allocation2 + $0x270] sm:$0xff]
        %v726 = vld [vmem:[#allocation2 + $0x278] sm:$0xff]
        %v727 = vld [vmem:[#allocation2 + $0x280] sm:$0xff]
        %v728 = vld [vmem:[#allocation2 + $0x288] sm:$0xff]
        %v729 = vld [vmem:[#allocation2 + $0x290] sm:$0xff]
        %v730 = vld [vmem:[#allocation2 + $0x298] sm:$0xff]
        %v731 = vld [vmem:[#allocation2 + $0x2a0] sm:$0xff]
        %v732 = vld [vmem:[#allocation2 + $0x2a8] sm:$0xff]
        %v733 = vld [vmem:[#allocation2 + $0x2b0] sm:$0xff]
        %v734 = vld [vmem:[#allocation2 + $0x2b8] sm:$0xff]
        %v735 = vld [vmem:[#allocation2 + $0x2c0] sm:$0xff]
        %v736 = vld [vmem:[#allocation2 + $0x2c8] sm:$0xff]
        %v737 = vld [vmem:[#allocation2 + $0x2d0] sm:$0xff]
        %v738 = vld [vmem:[#allocation2 + $0x2d8] sm:$0xff]
        %v739 = vld [vmem:[#allocation2 + $0x2e0] sm:$0xff]
        %v740 = vld [vmem:[#allocation2 + $0x2e8] sm:$0xff]
        %v741 = vld [vmem:[#allocation2 + $0x2f0] sm:$0xff]
        %v742 = vld [vmem:[#allocation2 + $0x2f8] sm:$0xff]
        %v743 = vld [vmem:[#allocation2 + $0x300] sm:$0xff]
        %v744 = vld [vmem:[#allocation2 + $0x308] sm:$0xff]
        %v745 = vld [vmem:[#allocation2 + $0x310] sm:$0xff]
        %v746 = vld [vmem:[#allocation2 + $0x318] sm:$0xff]
        %v747 = vld [vmem:[#allocation2 + $0x320] sm:$0xff]
        %v748 = vld [vmem:[#allocation2 + $0x328] sm:$0xff]
        %v749 = vld [vmem:[#allocation2 + $0x330] sm:$0xff]
        %v750 = vld [vmem:[#allocation2 + $0x338] sm:$0xff]
        %v751 = vld [vmem:[#allocation2 + $0x340] sm:$0xff]
        %v752 = vld [vmem:[#allocation2 + $0x348] sm:$0xff]
        %v753 = vld [vmem:[#allocation2 + $0x350] sm:$0xff]
        %v754 = vld [vmem:[#allocation2 + $0x358] sm:$0xff]
        %v755 = vld [vmem:[#allocation2 + $0x360] sm:$0xff]
        %v756 = vld [vmem:[#allocation2 + $0x368] sm:$0xff]
        %v757 = vld [vmem:[#allocation2 + $0x370] sm:$0xff]
        %v758 = vld [vmem:[#allocation2 + $0x378] sm:$0xff]
        %v759 = vld [vmem:[#allocation2 + $0x380] sm:$0xff]
        %v760 = vld [vmem:[#allocation2 + $0x388] sm:$0xff]
        %v761 = vld [vmem:[#allocation2 + $0x390] sm:$0xff]
        %v762 = vld [vmem:[#allocation2 + $0x398] sm:$0xff]
        %v763 = vld [vmem:[#allocation2 + $0x3a0] sm:$0xff]
        %v764 = vld [vmem:[#allocation2 + $0x3a8] sm:$0xff]
        %v765 = vld [vmem:[#allocation2 + $0x3b0] sm:$0xff]
        %v766 = vld [vmem:[#allocation2 + $0x3b8] sm:$0xff]
        %v767 = vld [vmem:[#allocation2 + $0x3c0] sm:$0xff]
        %v768 = vld [vmem:[#allocation2 + $0x3c8] sm:$0xff]
        %v769 = vld [vmem:[#allocation2 + $0x3d0] sm:$0xff]
        %v770 = vld [vmem:[#allocation2 + $0x3d8] sm:$0xff]
        %v771 = vld [vmem:[#allocation2 + $0x3e0] sm:$0xff]
        %v772 = vld [vmem:[#allocation2 + $0x3e8] sm:$0xff]
        %v773 = vld [vmem:[#allocation2 + $0x3f0] sm:$0xff]
        %v774 = vld [vmem:[#allocation2 + $0x3f8] sm:$0xff]
        %v775 = vld [vmem:[#allocation2 + $0x400] sm:$0xff]
        %v776 = vld [vmem:[#allocation2 + $0x408] sm:$0xff]
        %v777 = vld [vmem:[#allocation2 + $0x410] sm:$0xff]
        %v778 = vld [vmem:[#allocation2 + $0x418] sm:$0xff]
        %v779 = vld [vmem:[#allocation2 + $0x420] sm:$0xff]
        %v780 = vld [vmem:[#allocation2 + $0x428] sm:$0xff]
        %v781 = vld [vmem:[#allocation2 + $0x430] sm:$0xff]
        %v782 = vld [vmem:[#allocation2 + $0x438] sm:$0xff]
        %v783 = vld [vmem:[#allocation2 + $0x440] sm:$0xff]
        %v784 = vld [vmem:[#allocation2 + $0x448] sm:$0xff]
        %v785 = vld [vmem:[#allocation2 + $0x450] sm:$0xff]
        %v786 = vld [vmem:[#allocation2 + $0x458] sm:$0xff]
        %v787 = vld [vmem:[#allocation2 + $0x460] sm:$0xff]
        %v788 = vld [vmem:[#allocation2 + $0x468] sm:$0xff]
        %v789 = vld [vmem:[#allocation2 + $0x470] sm:$0xff]
        %v790 = vld [vmem:[#allocation2 + $0x478] sm:$0xff]
        %v791 = vld [vmem:[#allocation2 + $0x480] sm:$0xff]
        %v792 = vld [vmem:[#allocation2 + $0x488] sm:$0xff]
        %v793 = vld [vmem:[#allocation2 + $0x490] sm:$0xff]
        %v794 = vld [vmem:[#allocation2 + $0x498] sm:$0xff]
        %v795 = vld [vmem:[#allocation2 + $0x4a0] sm:$0xff]
        %v796 = vld [vmem:[#allocation2 + $0x4a8] sm:$0xff]
        %v797 = vld [vmem:[#allocation2 + $0x4b0] sm:$0xff]
        %v798 = vld [vmem:[#allocation2 + $0x4b8] sm:$0xff]
        %v799 = vld [vmem:[#allocation2 + $0x4c0] sm:$0xff]
        %v800 = vld [vmem:[#allocation2 + $0x4c8] sm:$0xff]
        %v801 = vld [vmem:[#allocation2 + $0x4d0] sm:$0xff]
        %v802 = vld [vmem:[#allocation2 + $0x4d8] sm:$0xff]
        %v803 = vld [vmem:[#allocation2 + $0x4e0] sm:$0xff]
        %v804 = vld [vmem:[#allocation2 + $0x4e8] sm:$0xff]
        %v805 = vld [vmem:[#allocation2 + $0x4f0] sm:$0xff]
        %v806 = vld [vmem:[#allocation2 + $0x4f8] sm:$0xff]
        %v807 = vld [vmem:[#allocation2 + $0x500] sm:$0xff]
        %v808 = vld [vmem:[#allocation2 + $0x508] sm:$0xff]
        %v809 = vld [vmem:[#allocation2 + $0x510] sm:$0xff]
        %v810 = vld [vmem:[#allocation2 + $0x518] sm:$0xff]
        %v811 = vld [vmem:[#allocation2 + $0x520] sm:$0xff]
        %v812 = vld [vmem:[#allocation2 + $0x528] sm:$0xff]
        %v813 = vld [vmem:[#allocation2 + $0x530] sm:$0xff]
        %v814 = vld [vmem:[#allocation2 + $0x538] sm:$0xff]
        %v815 = vld [vmem:[#allocation2 + $0x540] sm:$0xff]
        %v816 = vld [vmem:[#allocation2 + $0x548] sm:$0xff]
        %v817 = vld [vmem:[#allocation2 + $0x550] sm:$0xff]
        %v818 = vld [vmem:[#allocation2 + $0x558] sm:$0xff]
        %v819 = vld [vmem:[#allocation2 + $0x560] sm:$0xff]
        %v820 = vld [vmem:[#allocation2 + $0x568] sm:$0xff]
        %v821 = vld [vmem:[#allocation2 + $0x570] sm:$0xff]
        %v822 = vld [vmem:[#allocation2 + $0x578] sm:$0xff]
        %v823 = vld [vmem:[#allocation2 + $0x580] sm:$0xff]
        %v824 = vld [vmem:[#allocation2 + $0x588] sm:$0xff]
        %v825 = vld [vmem:[#allocation2 + $0x590] sm:$0xff]
        %v826 = vld [vmem:[#allocation2 + $0x598] sm:$0xff]
        %v827 = vld [vmem:[#allocation2 + $0x5a0] sm:$0xff]
        %v828 = vld [vmem:[#allocation2 + $0x5a8] sm:$0xff]
        %v829 = vld [vmem:[#allocation2 + $0x5b0] sm:$0xff]
        %v830 = vld [vmem:[#allocation2 + $0x5b8] sm:$0xff]
        %v831 = vld [vmem:[#allocation2 + $0x5c0] sm:$0xff]
        %v832 = vld [vmem:[#allocation2 + $0x5c8] sm:$0xff]
        %v833 = vld [vmem:[#allocation2 + $0x5d0] sm:$0xff]
        %v834 = vld [vmem:[#allocation2 + $0x5d8] sm:$0xff]
        %v835 = vld [vmem:[#allocation2 + $0x5e0] sm:$0xff]
        %v836 = vld [vmem:[#allocation2 + $0x5e8] sm:$0xff]
        %v837 = vld [vmem:[#allocation2 + $0x5f0] sm:$0xff]
        %v838 = vld [vmem:[#allocation2 + $0x5f8] sm:$0xff]
        %v839 = vld [vmem:[#allocation2 + $0x600] sm:$0xff]
        %v840 = vld [vmem:[#allocation2 + $0x608] sm:$0xff]
        %v841 = vld [vmem:[#allocation2 + $0x610] sm:$0xff]
        %v842 = vld [vmem:[#allocation2 + $0x618] sm:$0xff]
        %v843 = vld [vmem:[#allocation2 + $0x620] sm:$0xff]
        %v844 = vld [vmem:[#allocation2 + $0x628] sm:$0xff]
        %v845 = vld [vmem:[#allocation2 + $0x630] sm:$0xff]
        %v846 = vld [vmem:[#allocation2 + $0x638] sm:$0xff]
        %v847 = vld [vmem:[#allocation2 + $0x640] sm:$0xff]
        %v848 = vld [vmem:[#allocation2 + $0x648] sm:$0xff]
        %v849 = vld [vmem:[#allocation2 + $0x650] sm:$0xff]
        %v850 = vld [vmem:[#allocation2 + $0x658] sm:$0xff]
        %v851 = vld [vmem:[#allocation2 + $0x660] sm:$0xff]
        %v852 = vld [vmem:[#allocation2 + $0x668] sm:$0xff]
        %v853 = vld [vmem:[#allocation2 + $0x670] sm:$0xff]
        %v854 = vld [vmem:[#allocation2 + $0x678] sm:$0xff]
        %v855 = vld [vmem:[#allocation2 + $0x680] sm:$0xff]
        %v856 = vld [vmem:[#allocation2 + $0x688] sm:$0xff]
        %v857 = vld [vmem:[#allocation2 + $0x690] sm:$0xff]
        %v858 = vld [vmem:[#allocation2 + $0x698] sm:$0xff]
        %v859 = vld [vmem:[#allocation2 + $0x6a0] sm:$0xff]
        %v860 = vld [vmem:[#allocation2 + $0x6a8] sm:$0xff]
        %v861 = vld [vmem:[#allocation2 + $0x6b0] sm:$0xff]
        %v862 = vld [vmem:[#allocation2 + $0x6b8] sm:$0xff]
        %v863 = vld [vmem:[#allocation2 + $0x6c0] sm:$0xff]
        %v864 = vld [vmem:[#allocation2 + $0x6c8] sm:$0xff]
        %v865 = vld [vmem:[#allocation2 + $0x6d0] sm:$0xff]
        %v866 = vld [vmem:[#allocation2 + $0x6d8] sm:$0xff]
        %v867 = vld [vmem:[#allocation2 + $0x6e0] sm:$0xff]
        %v868 = vld [vmem:[#allocation2 + $0x6e8] sm:$0xff]
        %v869 = vld [vmem:[#allocation2 + $0x6f0] sm:$0xff]
        %v870 = vld [vmem:[#allocation2 + $0x6f8] sm:$0xff]
        %v871 = vld [vmem:[#allocation2 + $0x700] sm:$0xff]
        %v872 = vld [vmem:[#allocation2 + $0x708] sm:$0xff]
        %v873 = vld [vmem:[#allocation2 + $0x710] sm:$0xff]
        %v874 = vld [vmem:[#allocation2 + $0x718] sm:$0xff]
        %v875 = vld [vmem:[#allocation2 + $0x720] sm:$0xff]
        %v876 = vld [vmem:[#allocation2 + $0x728] sm:$0xff]
        %v877 = vld [vmem:[#allocation2 + $0x730] sm:$0xff]
        %v878 = vld [vmem:[#allocation2 + $0x738] sm:$0xff]
        %v879 = vld [vmem:[#allocation2 + $0x740] sm:$0xff]
        %v880 = vld [vmem:[#allocation2 + $0x748] sm:$0xff]
        %v881 = vld [vmem:[#allocation2 + $0x750] sm:$0xff]
        %v882 = vld [vmem:[#allocation2 + $0x758] sm:$0xff]
        %v883 = vld [vmem:[#allocation2 + $0x760] sm:$0xff]
        %v884 = vld [vmem:[#allocation2 + $0x768] sm:$0xff]
        %v885 = vld [vmem:[#allocation2 + $0x770] sm:$0xff]
        %v886 = vld [vmem:[#allocation2 + $0x778] sm:$0xff]
        %v887 = vld [vmem:[#allocation2 + $0x780] sm:$0xff]
        %v888 = vld [vmem:[#allocation2 + $0x788] sm:$0xff]
        %v889 = vld [vmem:[#allocation2 + $0x790] sm:$0xff]
        %v890 = vld [vmem:[#allocation2 + $0x798] sm:$0xff]
        %v891 = vld [vmem:[#allocation2 + $0x7a0] sm:$0xff]
        %v892 = vld [vmem:[#allocation2 + $0x7a8] sm:$0xff]
        %v893 = vld [vmem:[#allocation2 + $0x7b0] sm:$0xff]
        %v894 = vld [vmem:[#allocation2 + $0x7b8] sm:$0xff]
        %v895 = vld [vmem:[#allocation2 + $0x7c0] sm:$0xff]
        %v896 = vld [vmem:[#allocation2 + $0x7c8] sm:$0xff]
        %v897 = vld [vmem:[#allocation2 + $0x7d0] sm:$0xff]
        %v898 = vld [vmem:[#allocation2 + $0x7d8] sm:$0xff]
        %v899 = vld [vmem:[#allocation2 + $0x7e0] sm:$0xff]
        %v900 = vld [vmem:[#allocation2 + $0x7e8] sm:$0xff]
        %v901 = vld [vmem:[#allocation2 + $0x7f0] sm:$0xff]
        %v902 = vld [vmem:[#allocation2 + $0x7f8] sm:$0xff]
        %v903 = vld [vmem:[#allocation2 + $0x800] sm:$0xff]
        %v904 = vld [vmem:[#allocation2 + $0x808] sm:$0xff]
        %v905 = vld [vmem:[#allocation2 + $0x810] sm:$0xff]
        %v906 = vld [vmem:[#allocation2 + $0x818] sm:$0xff]
        %v907 = vld [vmem:[#allocation2 + $0x820] sm:$0xff]
        %v908 = vld [vmem:[#allocation2 + $0x828] sm:$0xff]
        %v909 = vld [vmem:[#allocation2 + $0x830] sm:$0xff]
        %v910 = vld [vmem:[#allocation2 + $0x838] sm:$0xff]
        %v911 = vld [vmem:[#allocation2 + $0x840] sm:$0xff]
        %v912 = vld [vmem:[#allocation2 + $0x848] sm:$0xff]
        %v913 = vld [vmem:[#allocation2 + $0x850] sm:$0xff]
        %v914 = vld [vmem:[#allocation2 + $0x858] sm:$0xff]
        %v915 = vld [vmem:[#allocation2 + $0x860] sm:$0xff]
        %v916 = vld [vmem:[#allocation2 + $0x868] sm:$0xff]
        %v917 = vld [vmem:[#allocation2 + $0x870] sm:$0xff]
        %v918 = vld [vmem:[#allocation2 + $0x878] sm:$0xff]
        %v919 = vld [vmem:[#allocation2 + $0x880] sm:$0xff]
        %v920 = vld [vmem:[#allocation2 + $0x888] sm:$0xff]
        %v921 = vld [vmem:[#allocation2 + $0x890] sm:$0xff]
        %v922 = vld [vmem:[#allocation2 + $0x898] sm:$0xff]
        %v923 = vld [vmem:[#allocation2 + $0x8a0] sm:$0xff]
        %v924 = vld [vmem:[#allocation2 + $0x8a8] sm:$0xff]
        %v925 = vld [vmem:[#allocation2 + $0x8b0] sm:$0xff]
        %v926 = vld [vmem:[#allocation2 + $0x8b8] sm:$0xff]
        %v927 = vld [vmem:[#allocation2 + $0x8c0] sm:$0xff]
        %v928 = vld [vmem:[#allocation2 + $0x8c8] sm:$0xff]
        %v929 = vld [vmem:[#allocation2 + $0x8d0] sm:$0xff]
        %v930 = vld [vmem:[#allocation2 + $0x8d8] sm:$0xff]
        %v931 = vld [vmem:[#allocation2 + $0x8e0] sm:$0xff]
        %v932 = vld [vmem:[#allocation2 + $0x8e8] sm:$0xff]
        %v933 = vld [vmem:[#allocation2 + $0x8f0] sm:$0xff]
        %v934 = vld [vmem:[#allocation2 + $0x8f8] sm:$0xff]
        %v935 = vld [vmem:[#allocation2 + $0x900] sm:$0xff]
        %v936 = vld [vmem:[#allocation2 + $0x908] sm:$0xff]
        %v937 = vld [vmem:[#allocation2 + $0x910] sm:$0xff]
        %v938 = vld [vmem:[#allocation2 + $0x918] sm:$0xff]
        %v939 = vld [vmem:[#allocation2 + $0x920] sm:$0xff]
        %v940 = vld [vmem:[#allocation2 + $0x928] sm:$0xff]
        %v941 = vld [vmem:[#allocation2 + $0x930] sm:$0xff]
        %v942 = vld [vmem:[#allocation2 + $0x938] sm:$0xff]
        %v943 = vld [vmem:[#allocation2 + $0x940] sm:$0xff]
        %v944 = vld [vmem:[#allocation2 + $0x948] sm:$0xff]
        %v945 = vld [vmem:[#allocation2 + $0x950] sm:$0xff]
        %v946 = vld [vmem:[#allocation2 + $0x958] sm:$0xff]
        %v947 = vld [vmem:[#allocation2 + $0x960] sm:$0xff]
        %v948 = vld [vmem:[#allocation2 + $0x968] sm:$0xff]
        %v949 = vld [vmem:[#allocation2 + $0x970] sm:$0xff]
        %v950 = vld [vmem:[#allocation2 + $0x978] sm:$0xff]
        %v951 = vld [vmem:[#allocation2 + $0x980] sm:$0xff]
        %v952 = vld [vmem:[#allocation2 + $0x988] sm:$0xff]
        %v953 = vld [vmem:[#allocation2 + $0x990] sm:$0xff]
        %v954 = vld [vmem:[#allocation2 + $0x998] sm:$0xff]
        %v955 = vld [vmem:[#allocation2 + $0x9a0] sm:$0xff]
        %v956 = vld [vmem:[#allocation2 + $0x9a8] sm:$0xff]
        %v957 = vld [vmem:[#allocation2 + $0x9b0] sm:$0xff]
        %v958 = vld [vmem:[#allocation2 + $0x9b8] sm:$0xff]
        %v959 = vld [vmem:[#allocation2 + $0x9c0] sm:$0xff]
        %v960 = vld [vmem:[#allocation2 + $0x9c8] sm:$0xff]
        %v961 = vld [vmem:[#allocation2 + $0x9d0] sm:$0xff]
        %v962 = vld [vmem:[#allocation2 + $0x9d8] sm:$0xff]
        %v963 = vld [vmem:[#allocation2 + $0x9e0] sm:$0xff]
        %v964 = vld [vmem:[#allocation2 + $0x9e8] sm:$0xff]
        %v965 = vld [vmem:[#allocation2 + $0x9f0] sm:$0xff]
        %v966 = vld [vmem:[#allocation2 + $0x9f8] sm:$0xff]
        %v1287 = vunpack.c.l.b16 %v647
        %v1288 = vunpack.c.h.b16 %v647
        %v1289 = vunpack.c.l.b16 %v648
        %v1290 = vunpack.c.h.b16 %v648
        %v1291 = vunpack.c.l.b16 %v649
        %v1292 = vunpack.c.h.b16 %v649
        %v1293 = vunpack.c.l.b16 %v650
        %v1294 = vunpack.c.h.b16 %v650
        %v1295 = vunpack.c.l.b16 %v651
        %v1296 = vunpack.c.h.b16 %v651
        %v1297 = vunpack.c.l.b16 %v652
        %v1298 = vunpack.c.h.b16 %v652
        %v1299 = vunpack.c.l.b16 %v653
        %v1300 = vunpack.c.h.b16 %v653
        %v1301 = vunpack.c.l.b16 %v654
        %v1302 = vunpack.c.h.b16 %v654
        %v1303 = vunpack.c.l.b16 %v655
        %v1304 = vunpack.c.h.b16 %v655
        %v1305 = vunpack.c.l.b16 %v656
        %v1306 = vunpack.c.h.b16 %v656
        %v1307 = vunpack.c.l.b16 %v657
        %v1308 = vunpack.c.h.b16 %v657
        %v1309 = vunpack.c.l.b16 %v658
        %v1310 = vunpack.c.h.b16 %v658
        %v1311 = vunpack.c.l.b16 %v659
        %v1312 = vunpack.c.h.b16 %v659
        %v1313 = vunpack.c.l.b16 %v660
        %v1314 = vunpack.c.h.b16 %v660
        %v1315 = vunpack.c.l.b16 %v661
        %v1316 = vunpack.c.h.b16 %v661
        %v1317 = vunpack.c.l.b16 %v662
        %v1318 = vunpack.c.h.b16 %v662
        %v1319 = vunpack.c.l.b16 %v663
        %v1320 = vunpack.c.h.b16 %v663
        %v1321 = vunpack.c.l.b16 %v664
        %v1322 = vunpack.c.h.b16 %v664
        %v1323 = vunpack.c.l.b16 %v665
        %v1324 = vunpack.c.h.b16 %v665
        %v1325 = vunpack.c.l.b16 %v666
        %v1326 = vunpack.c.h.b16 %v666
        %v1327 = vunpack.c.l.b16 %v667
        %v1328 = vunpack.c.h.b16 %v667
        %v1329 = vunpack.c.l.b16 %v668
        %v1330 = vunpack.c.h.b16 %v668
        %v1331 = vunpack.c.l.b16 %v669
        %v1332 = vunpack.c.h.b16 %v669
        %v1333 = vunpack.c.l.b16 %v670
        %v1334 = vunpack.c.h.b16 %v670
        %v1335 = vunpack.c.l.b16 %v671
        %v1336 = vunpack.c.h.b16 %v671
        %v1337 = vunpack.c.l.b16 %v672
        %v1338 = vunpack.c.h.b16 %v672
        %v1339 = vunpack.c.l.b16 %v673
        %v1340 = vunpack.c.h.b16 %v673
        %v1341 = vunpack.c.l.b16 %v674
        %v1342 = vunpack.c.h.b16 %v674
        %v1343 = vunpack.c.l.b16 %v675
        %v1344 = vunpack.c.h.b16 %v675
        %v1345 = vunpack.c.l.b16 %v676
        %v1346 = vunpack.c.h.b16 %v676
        %v1347 = vunpack.c.l.b16 %v677
        %v1348 = vunpack.c.h.b16 %v677
        %v1349 = vunpack.c.l.b16 %v678
        %v1350 = vunpack.c.h.b16 %v678
        %v1351 = vunpack.c.l.b16 %v679
        %v1352 = vunpack.c.h.b16 %v679
        %v1353 = vunpack.c.l.b16 %v680
        %v1354 = vunpack.c.h.b16 %v680
        %v1355 = vunpack.c.l.b16 %v681
        %v1356 = vunpack.c.h.b16 %v681
        %v1357 = vunpack.c.l.b16 %v682
        %v1358 = vunpack.c.h.b16 %v682
        %v1359 = vunpack.c.l.b16 %v683
        %v1360 = vunpack.c.h.b16 %v683
        %v1361 = vunpack.c.l.b16 %v684
        %v1362 = vunpack.c.h.b16 %v684
        %v1363 = vunpack.c.l.b16 %v685
        %v1364 = vunpack.c.h.b16 %v685
        %v1365 = vunpack.c.l.b16 %v686
        %v1366 = vunpack.c.h.b16 %v686
        %v1367 = vunpack.c.l.b16 %v687
        %v1368 = vunpack.c.h.b16 %v687
        %v1369 = vunpack.c.l.b16 %v688
        %v1370 = vunpack.c.h.b16 %v688
        %v1371 = vunpack.c.l.b16 %v689
        %v1372 = vunpack.c.h.b16 %v689
        %v1373 = vunpack.c.l.b16 %v690
        %v1374 = vunpack.c.h.b16 %v690
        %v1375 = vunpack.c.l.b16 %v691
        %v1376 = vunpack.c.h.b16 %v691
        %v1377 = vunpack.c.l.b16 %v692
        %v1378 = vunpack.c.h.b16 %v692
        %v1379 = vunpack.c.l.b16 %v693
        %v1380 = vunpack.c.h.b16 %v693
        %v1381 = vunpack.c.l.b16 %v694
        %v1382 = vunpack.c.h.b16 %v694
        %v1383 = vunpack.c.l.b16 %v695
        %v1384 = vunpack.c.h.b16 %v695
        %v1385 = vunpack.c.l.b16 %v696
        %v1386 = vunpack.c.h.b16 %v696
        %v1387 = vunpack.c.l.b16 %v697
        %v1388 = vunpack.c.h.b16 %v697
        %v1389 = vunpack.c.l.b16 %v698
        %v1390 = vunpack.c.h.b16 %v698
        %v1391 = vunpack.c.l.b16 %v699
        %v1392 = vunpack.c.h.b16 %v699
        %v1393 = vunpack.c.l.b16 %v700
        %v1394 = vunpack.c.h.b16 %v700
        %v1395 = vunpack.c.l.b16 %v701
        %v1396 = vunpack.c.h.b16 %v701
        %v1397 = vunpack.c.l.b16 %v702
        %v1398 = vunpack.c.h.b16 %v702
        %v1399 = vunpack.c.l.b16 %v703
        %v1400 = vunpack.c.h.b16 %v703
        %v1401 = vunpack.c.l.b16 %v704
        %v1402 = vunpack.c.h.b16 %v704
        %v1403 = vunpack.c.l.b16 %v705
        %v1404 = vunpack.c.h.b16 %v705
        %v1405 = vunpack.c.l.b16 %v706
        %v1406 = vunpack.c.h.b16 %v706
        %v1407 = vunpack.c.l.b16 %v707
        %v1408 = vunpack.c.h.b16 %v707
        %v1409 = vunpack.c.l.b16 %v708
        %v1410 = vunpack.c.h.b16 %v708
        %v1411 = vunpack.c.l.b16 %v709
        %v1412 = vunpack.c.h.b16 %v709
        %v1413 = vunpack.c.l.b16 %v710
        %v1414 = vunpack.c.h.b16 %v710
        %v1415 = vunpack.c.l.b16 %v711
        %v1416 = vunpack.c.h.b16 %v711
        %v1417 = vunpack.c.l.b16 %v712
        %v1418 = vunpack.c.h.b16 %v712
        %v1419 = vunpack.c.l.b16 %v713
        %v1420 = vunpack.c.h.b16 %v713
        %v1421 = vunpack.c.l.b16 %v714
        %v1422 = vunpack.c.h.b16 %v714
        %v1423 = vunpack.c.l.b16 %v715
        %v1424 = vunpack.c.h.b16 %v715
        %v1425 = vunpack.c.l.b16 %v716
        %v1426 = vunpack.c.h.b16 %v716
        %v1427 = vunpack.c.l.b16 %v717
        %v1428 = vunpack.c.h.b16 %v717
        %v1429 = vunpack.c.l.b16 %v718
        %v1430 = vunpack.c.h.b16 %v718
        %v1431 = vunpack.c.l.b16 %v719
        %v1432 = vunpack.c.h.b16 %v719
        %v1433 = vunpack.c.l.b16 %v720
        %v1434 = vunpack.c.h.b16 %v720
        %v1435 = vunpack.c.l.b16 %v721
        %v1436 = vunpack.c.h.b16 %v721
        %v1437 = vunpack.c.l.b16 %v722
        %v1438 = vunpack.c.h.b16 %v722
        %v1439 = vunpack.c.l.b16 %v723
        %v1440 = vunpack.c.h.b16 %v723
        %v1441 = vunpack.c.l.b16 %v724
        %v1442 = vunpack.c.h.b16 %v724
        %v1443 = vunpack.c.l.b16 %v725
        %v1444 = vunpack.c.h.b16 %v725
        %v1445 = vunpack.c.l.b16 %v726
        %v1446 = vunpack.c.h.b16 %v726
        %v1447 = vunpack.c.l.b16 %v727
        %v1448 = vunpack.c.h.b16 %v727
        %v1449 = vunpack.c.l.b16 %v728
        %v1450 = vunpack.c.h.b16 %v728
        %v1451 = vunpack.c.l.b16 %v729
        %v1452 = vunpack.c.h.b16 %v729
        %v1453 = vunpack.c.l.b16 %v730
        %v1454 = vunpack.c.h.b16 %v730
        %v1455 = vunpack.c.l.b16 %v731
        %v1456 = vunpack.c.h.b16 %v731
        %v1457 = vunpack.c.l.b16 %v732
        %v1458 = vunpack.c.h.b16 %v732
        %v1459 = vunpack.c.l.b16 %v733
        %v1460 = vunpack.c.h.b16 %v733
        %v1461 = vunpack.c.l.b16 %v734
        %v1462 = vunpack.c.h.b16 %v734
        %v1463 = vunpack.c.l.b16 %v735
        %v1464 = vunpack.c.h.b16 %v735
        %v1465 = vunpack.c.l.b16 %v736
        %v1466 = vunpack.c.h.b16 %v736
        %v1467 = vunpack.c.l.b16 %v737
        %v1468 = vunpack.c.h.b16 %v737
        %v1469 = vunpack.c.l.b16 %v738
        %v1470 = vunpack.c.h.b16 %v738
        %v1471 = vunpack.c.l.b16 %v739
        %v1472 = vunpack.c.h.b16 %v739
        %v1473 = vunpack.c.l.b16 %v740
        %v1474 = vunpack.c.h.b16 %v740
        %v1475 = vunpack.c.l.b16 %v741
        %v1476 = vunpack.c.h.b16 %v741
        %v1477 = vunpack.c.l.b16 %v742
        %v1478 = vunpack.c.h.b16 %v742
        %v1479 = vunpack.c.l.b16 %v743
        %v1480 = vunpack.c.h.b16 %v743
        %v1481 = vunpack.c.l.b16 %v744
        %v1482 = vunpack.c.h.b16 %v744
        %v1483 = vunpack.c.l.b16 %v745
        %v1484 = vunpack.c.h.b16 %v745
        %v1485 = vunpack.c.l.b16 %v746
        %v1486 = vunpack.c.h.b16 %v746
        %v1487 = vunpack.c.l.b16 %v747
        %v1488 = vunpack.c.h.b16 %v747
        %v1489 = vunpack.c.l.b16 %v748
        %v1490 = vunpack.c.h.b16 %v748
        %v1491 = vunpack.c.l.b16 %v749
        %v1492 = vunpack.c.h.b16 %v749
        %v1493 = vunpack.c.l.b16 %v750
        %v1494 = vunpack.c.h.b16 %v750
        %v1495 = vunpack.c.l.b16 %v751
        %v1496 = vunpack.c.h.b16 %v751
        %v1497 = vunpack.c.l.b16 %v752
        %v1498 = vunpack.c.h.b16 %v752
        %v1499 = vunpack.c.l.b16 %v753
        %v1500 = vunpack.c.h.b16 %v753
        %v1501 = vunpack.c.l.b16 %v754
        %v1502 = vunpack.c.h.b16 %v754
        %v1503 = vunpack.c.l.b16 %v755
        %v1504 = vunpack.c.h.b16 %v755
        %v1505 = vunpack.c.l.b16 %v756
        %v1506 = vunpack.c.h.b16 %v756
        %v1507 = vunpack.c.l.b16 %v757
        %v1508 = vunpack.c.h.b16 %v757
        %v1509 = vunpack.c.l.b16 %v758
        %v1510 = vunpack.c.h.b16 %v758
        %v1511 = vunpack.c.l.b16 %v759
        %v1512 = vunpack.c.h.b16 %v759
        %v1513 = vunpack.c.l.b16 %v760
        %v1514 = vunpack.c.h.b16 %v760
        %v1515 = vunpack.c.l.b16 %v761
        %v1516 = vunpack.c.h.b16 %v761
        %v1517 = vunpack.c.l.b16 %v762
        %v1518 = vunpack.c.h.b16 %v762
        %v1519 = vunpack.c.l.b16 %v763
        %v1520 = vunpack.c.h.b16 %v763
        %v1521 = vunpack.c.l.b16 %v764
        %v1522 = vunpack.c.h.b16 %v764
        %v1523 = vunpack.c.l.b16 %v765
        %v1524 = vunpack.c.h.b16 %v765
        %v1525 = vunpack.c.l.b16 %v766
        %v1526 = vunpack.c.h.b16 %v766
        %v1527 = vunpack.c.l.b16 %v767
        %v1528 = vunpack.c.h.b16 %v767
        %v1529 = vunpack.c.l.b16 %v768
        %v1530 = vunpack.c.h.b16 %v768
        %v1531 = vunpack.c.l.b16 %v769
        %v1532 = vunpack.c.h.b16 %v769
        %v1533 = vunpack.c.l.b16 %v770
        %v1534 = vunpack.c.h.b16 %v770
        %v1535 = vunpack.c.l.b16 %v771
        %v1536 = vunpack.c.h.b16 %v771
        %v1537 = vunpack.c.l.b16 %v772
        %v1538 = vunpack.c.h.b16 %v772
        %v1539 = vunpack.c.l.b16 %v773
        %v1540 = vunpack.c.h.b16 %v773
        %v1541 = vunpack.c.l.b16 %v774
        %v1542 = vunpack.c.h.b16 %v774
        %v1543 = vunpack.c.l.b16 %v775
        %v1544 = vunpack.c.h.b16 %v775
        %v1545 = vunpack.c.l.b16 %v776
        %v1546 = vunpack.c.h.b16 %v776
        %v1547 = vunpack.c.l.b16 %v777
        %v1548 = vunpack.c.h.b16 %v777
        %v1549 = vunpack.c.l.b16 %v778
        %v1550 = vunpack.c.h.b16 %v778
        %v1551 = vunpack.c.l.b16 %v779
        %v1552 = vunpack.c.h.b16 %v779
        %v1553 = vunpack.c.l.b16 %v780
        %v1554 = vunpack.c.h.b16 %v780
        %v1555 = vunpack.c.l.b16 %v781
        %v1556 = vunpack.c.h.b16 %v781
        %v1557 = vunpack.c.l.b16 %v782
        %v1558 = vunpack.c.h.b16 %v782
        %v1559 = vunpack.c.l.b16 %v783
        %v1560 = vunpack.c.h.b16 %v783
        %v1561 = vunpack.c.l.b16 %v784
        %v1562 = vunpack.c.h.b16 %v784
        %v1563 = vunpack.c.l.b16 %v785
        %v1564 = vunpack.c.h.b16 %v785
        %v1565 = vunpack.c.l.b16 %v786
        %v1566 = vunpack.c.h.b16 %v786
        %v1567 = vunpack.c.l.b16 %v787
        %v1568 = vunpack.c.h.b16 %v787
        %v1569 = vunpack.c.l.b16 %v788
        %v1570 = vunpack.c.h.b16 %v788
        %v1571 = vunpack.c.l.b16 %v789
        %v1572 = vunpack.c.h.b16 %v789
        %v1573 = vunpack.c.l.b16 %v790
        %v1574 = vunpack.c.h.b16 %v790
        %v1575 = vunpack.c.l.b16 %v791
        %v1576 = vunpack.c.h.b16 %v791
        %v1577 = vunpack.c.l.b16 %v792
        %v1578 = vunpack.c.h.b16 %v792
        %v1579 = vunpack.c.l.b16 %v793
        %v1580 = vunpack.c.h.b16 %v793
        %v1581 = vunpack.c.l.b16 %v794
        %v1582 = vunpack.c.h.b16 %v794
        %v1583 = vunpack.c.l.b16 %v795
        %v1584 = vunpack.c.h.b16 %v795
        %v1585 = vunpack.c.l.b16 %v796
        %v1586 = vunpack.c.h.b16 %v796
        %v1587 = vunpack.c.l.b16 %v797
        %v1588 = vunpack.c.h.b16 %v797
        %v1589 = vunpack.c.l.b16 %v798
        %v1590 = vunpack.c.h.b16 %v798
        %v1591 = vunpack.c.l.b16 %v799
        %v1592 = vunpack.c.h.b16 %v799
        %v1593 = vunpack.c.l.b16 %v800
        %v1594 = vunpack.c.h.b16 %v800
        %v1595 = vunpack.c.l.b16 %v801
        %v1596 = vunpack.c.h.b16 %v801
        %v1597 = vunpack.c.l.b16 %v802
        %v1598 = vunpack.c.h.b16 %v802
        %v1599 = vunpack.c.l.b16 %v803
        %v1600 = vunpack.c.h.b16 %v803
        %v1601 = vunpack.c.l.b16 %v804
        %v1602 = vunpack.c.h.b16 %v804
        %v1603 = vunpack.c.l.b16 %v805
        %v1604 = vunpack.c.h.b16 %v805
        %v1605 = vunpack.c.l.b16 %v806
        %v1606 = vunpack.c.h.b16 %v806
        %v1607 = vunpack.c.l.b16 %v807
        %v1608 = vunpack.c.h.b16 %v807
        %v1609 = vunpack.c.l.b16 %v808
        %v1610 = vunpack.c.h.b16 %v808
        %v1611 = vunpack.c.l.b16 %v809
        %v1612 = vunpack.c.h.b16 %v809
        %v1613 = vunpack.c.l.b16 %v810
        %v1614 = vunpack.c.h.b16 %v810
        %v1615 = vunpack.c.l.b16 %v811
        %v1616 = vunpack.c.h.b16 %v811
        %v1617 = vunpack.c.l.b16 %v812
        %v1618 = vunpack.c.h.b16 %v812
        %v1619 = vunpack.c.l.b16 %v813
        %v1620 = vunpack.c.h.b16 %v813
        %v1621 = vunpack.c.l.b16 %v814
        %v1622 = vunpack.c.h.b16 %v814
        %v1623 = vunpack.c.l.b16 %v815
        %v1624 = vunpack.c.h.b16 %v815
        %v1625 = vunpack.c.l.b16 %v816
        %v1626 = vunpack.c.h.b16 %v816
        %v1627 = vunpack.c.l.b16 %v817
        %v1628 = vunpack.c.h.b16 %v817
        %v1629 = vunpack.c.l.b16 %v818
        %v1630 = vunpack.c.h.b16 %v818
        %v1631 = vunpack.c.l.b16 %v819
        %v1632 = vunpack.c.h.b16 %v819
        %v1633 = vunpack.c.l.b16 %v820
        %v1634 = vunpack.c.h.b16 %v820
        %v1635 = vunpack.c.l.b16 %v821
        %v1636 = vunpack.c.h.b16 %v821
        %v1637 = vunpack.c.l.b16 %v822
        %v1638 = vunpack.c.h.b16 %v822
        %v1639 = vunpack.c.l.b16 %v823
        %v1640 = vunpack.c.h.b16 %v823
        %v1641 = vunpack.c.l.b16 %v824
        %v1642 = vunpack.c.h.b16 %v824
        %v1643 = vunpack.c.l.b16 %v825
        %v1644 = vunpack.c.h.b16 %v825
        %v1645 = vunpack.c.l.b16 %v826
        %v1646 = vunpack.c.h.b16 %v826
        %v1647 = vunpack.c.l.b16 %v827
        %v1648 = vunpack.c.h.b16 %v827
        %v1649 = vunpack.c.l.b16 %v828
        %v1650 = vunpack.c.h.b16 %v828
        %v1651 = vunpack.c.l.b16 %v829
        %v1652 = vunpack.c.h.b16 %v829
        %v1653 = vunpack.c.l.b16 %v830
        %v1654 = vunpack.c.h.b16 %v830
        %v1655 = vunpack.c.l.b16 %v831
        %v1656 = vunpack.c.h.b16 %v831
        %v1657 = vunpack.c.l.b16 %v832
        %v1658 = vunpack.c.h.b16 %v832
        %v1659 = vunpack.c.l.b16 %v833
        %v1660 = vunpack.c.h.b16 %v833
        %v1661 = vunpack.c.l.b16 %v834
        %v1662 = vunpack.c.h.b16 %v834
        %v1663 = vunpack.c.l.b16 %v835
        %v1664 = vunpack.c.h.b16 %v835
        %v1665 = vunpack.c.l.b16 %v836
        %v1666 = vunpack.c.h.b16 %v836
        %v1667 = vunpack.c.l.b16 %v837
        %v1668 = vunpack.c.h.b16 %v837
        %v1669 = vunpack.c.l.b16 %v838
        %v1670 = vunpack.c.h.b16 %v838
        %v1671 = vunpack.c.l.b16 %v839
        %v1672 = vunpack.c.h.b16 %v839
        %v1673 = vunpack.c.l.b16 %v840
        %v1674 = vunpack.c.h.b16 %v840
        %v1675 = vunpack.c.l.b16 %v841
        %v1676 = vunpack.c.h.b16 %v841
        %v1677 = vunpack.c.l.b16 %v842
        %v1678 = vunpack.c.h.b16 %v842
        %v1679 = vunpack.c.l.b16 %v843
        %v1680 = vunpack.c.h.b16 %v843
        %v1681 = vunpack.c.l.b16 %v844
        %v1682 = vunpack.c.h.b16 %v844
        %v1683 = vunpack.c.l.b16 %v845
        %v1684 = vunpack.c.h.b16 %v845
        %v1685 = vunpack.c.l.b16 %v846
        %v1686 = vunpack.c.h.b16 %v846
        %v1687 = vunpack.c.l.b16 %v847
        %v1688 = vunpack.c.h.b16 %v847
        %v1689 = vunpack.c.l.b16 %v848
        %v1690 = vunpack.c.h.b16 %v848
        %v1691 = vunpack.c.l.b16 %v849
        %v1692 = vunpack.c.h.b16 %v849
        %v1693 = vunpack.c.l.b16 %v850
        %v1694 = vunpack.c.h.b16 %v850
        %v1695 = vunpack.c.l.b16 %v851
        %v1696 = vunpack.c.h.b16 %v851
        %v1697 = vunpack.c.l.b16 %v852
        %v1698 = vunpack.c.h.b16 %v852
        %v1699 = vunpack.c.l.b16 %v853
        %v1700 = vunpack.c.h.b16 %v853
        %v1701 = vunpack.c.l.b16 %v854
        %v1702 = vunpack.c.h.b16 %v854
        %v1703 = vunpack.c.l.b16 %v855
        %v1704 = vunpack.c.h.b16 %v855
        %v1705 = vunpack.c.l.b16 %v856
        %v1706 = vunpack.c.h.b16 %v856
        %v1707 = vunpack.c.l.b16 %v857
        %v1708 = vunpack.c.h.b16 %v857
        %v1709 = vunpack.c.l.b16 %v858
        %v1710 = vunpack.c.h.b16 %v858
        %v1711 = vunpack.c.l.b16 %v859
        %v1712 = vunpack.c.h.b16 %v859
        %v1713 = vunpack.c.l.b16 %v860
        %v1714 = vunpack.c.h.b16 %v860
        %v1715 = vunpack.c.l.b16 %v861
        %v1716 = vunpack.c.h.b16 %v861
        %v1717 = vunpack.c.l.b16 %v862
        %v1718 = vunpack.c.h.b16 %v862
        %v1719 = vunpack.c.l.b16 %v863
        %v1720 = vunpack.c.h.b16 %v863
        %v1721 = vunpack.c.l.b16 %v864
        %v1722 = vunpack.c.h.b16 %v864
        %v1723 = vunpack.c.l.b16 %v865
        %v1724 = vunpack.c.h.b16 %v865
        %v1725 = vunpack.c.l.b16 %v866
        %v1726 = vunpack.c.h.b16 %v866
        %v1727 = vunpack.c.l.b16 %v867
        %v1728 = vunpack.c.h.b16 %v867
        %v1729 = vunpack.c.l.b16 %v868
        %v1730 = vunpack.c.h.b16 %v868
        %v1731 = vunpack.c.l.b16 %v869
        %v1732 = vunpack.c.h.b16 %v869
        %v1733 = vunpack.c.l.b16 %v870
        %v1734 = vunpack.c.h.b16 %v870
        %v1735 = vunpack.c.l.b16 %v871
        %v1736 = vunpack.c.h.b16 %v871
        %v1737 = vunpack.c.l.b16 %v872
        %v1738 = vunpack.c.h.b16 %v872
        %v1739 = vunpack.c.l.b16 %v873
        %v1740 = vunpack.c.h.b16 %v873
        %v1741 = vunpack.c.l.b16 %v874
        %v1742 = vunpack.c.h.b16 %v874
        %v1743 = vunpack.c.l.b16 %v875
        %v1744 = vunpack.c.h.b16 %v875
        %v1745 = vunpack.c.l.b16 %v876
        %v1746 = vunpack.c.h.b16 %v876
        %v1747 = vunpack.c.l.b16 %v877
        %v1748 = vunpack.c.h.b16 %v877
        %v1749 = vunpack.c.l.b16 %v878
        %v1750 = vunpack.c.h.b16 %v878
        %v1751 = vunpack.c.l.b16 %v879
        %v1752 = vunpack.c.h.b16 %v879
        %v1753 = vunpack.c.l.b16 %v880
        %v1754 = vunpack.c.h.b16 %v880
        %v1755 = vunpack.c.l.b16 %v881
        %v1756 = vunpack.c.h.b16 %v881
        %v1757 = vunpack.c.l.b16 %v882
        %v1758 = vunpack.c.h.b16 %v882
        %v1759 = vunpack.c.l.b16 %v883
        %v1760 = vunpack.c.h.b16 %v883
        %v1761 = vunpack.c.l.b16 %v884
        %v1762 = vunpack.c.h.b16 %v884
        %v1763 = vunpack.c.l.b16 %v885
        %v1764 = vunpack.c.h.b16 %v885
        %v1765 = vunpack.c.l.b16 %v886
        %v1766 = vunpack.c.h.b16 %v886
        %v1767 = vunpack.c.l.b16 %v887
        %v1768 = vunpack.c.h.b16 %v887
        %v1769 = vunpack.c.l.b16 %v888
        %v1770 = vunpack.c.h.b16 %v888
        %v1771 = vunpack.c.l.b16 %v889
        %v1772 = vunpack.c.h.b16 %v889
        %v1773 = vunpack.c.l.b16 %v890
        %v1774 = vunpack.c.h.b16 %v890
        %v1775 = vunpack.c.l.b16 %v891
        %v1776 = vunpack.c.h.b16 %v891
        %v1777 = vunpack.c.l.b16 %v892
        %v1778 = vunpack.c.h.b16 %v892
        %v1779 = vunpack.c.l.b16 %v893
        %v1780 = vunpack.c.h.b16 %v893
        %v1781 = vunpack.c.l.b16 %v894
        %v1782 = vunpack.c.h.b16 %v894
        %v1783 = vunpack.c.l.b16 %v895
        %v1784 = vunpack.c.h.b16 %v895
        %v1785 = vunpack.c.l.b16 %v896
        %v1786 = vunpack.c.h.b16 %v896
        %v1787 = vunpack.c.l.b16 %v897
        %v1788 = vunpack.c.h.b16 %v897
        %v1789 = vunpack.c.l.b16 %v898
        %v1790 = vunpack.c.h.b16 %v898
        %v1791 = vunpack.c.l.b16 %v899
        %v1792 = vunpack.c.h.b16 %v899
        %v1793 = vunpack.c.l.b16 %v900
        %v1794 = vunpack.c.h.b16 %v900
        %v1795 = vunpack.c.l.b16 %v901
        %v1796 = vunpack.c.h.b16 %v901
        %v1797 = vunpack.c.l.b16 %v902
        %v1798 = vunpack.c.h.b16 %v902
        %v1799 = vunpack.c.l.b16 %v903
        %v1800 = vunpack.c.h.b16 %v903
        %v1801 = vunpack.c.l.b16 %v904
        %v1802 = vunpack.c.h.b16 %v904
        %v1803 = vunpack.c.l.b16 %v905
        %v1804 = vunpack.c.h.b16 %v905
        %v1805 = vunpack.c.l.b16 %v906
        %v1806 = vunpack.c.h.b16 %v906
        %v1807 = vunpack.c.l.b16 %v907
        %v1808 = vunpack.c.h.b16 %v907
        %v1809 = vunpack.c.l.b16 %v908
        %v1810 = vunpack.c.h.b16 %v908
        %v1811 = vunpack.c.l.b16 %v909
        %v1812 = vunpack.c.h.b16 %v909
        %v1813 = vunpack.c.l.b16 %v910
        %v1814 = vunpack.c.h.b16 %v910
        %v1815 = vunpack.c.l.b16 %v911
        %v1816 = vunpack.c.h.b16 %v911
        %v1817 = vunpack.c.l.b16 %v912
        %v1818 = vunpack.c.h.b16 %v912
        %v1819 = vunpack.c.l.b16 %v913
        %v1820 = vunpack.c.h.b16 %v913
        %v1821 = vunpack.c.l.b16 %v914
        %v1822 = vunpack.c.h.b16 %v914
        %v1823 = vunpack.c.l.b16 %v915
        %v1824 = vunpack.c.h.b16 %v915
        %v1825 = vunpack.c.l.b16 %v916
        %v1826 = vunpack.c.h.b16 %v916
        %v1827 = vunpack.c.l.b16 %v917
        %v1828 = vunpack.c.h.b16 %v917
        %v1829 = vunpack.c.l.b16 %v918
        %v1830 = vunpack.c.h.b16 %v918
        %v1831 = vunpack.c.l.b16 %v919
        %v1832 = vunpack.c.h.b16 %v919
        %v1833 = vunpack.c.l.b16 %v920
        %v1834 = vunpack.c.h.b16 %v920
        %v1835 = vunpack.c.l.b16 %v921
        %v1836 = vunpack.c.h.b16 %v921
        %v1837 = vunpack.c.l.b16 %v922
        %v1838 = vunpack.c.h.b16 %v922
        %v1839 = vunpack.c.l.b16 %v923
        %v1840 = vunpack.c.h.b16 %v923
        %v1841 = vunpack.c.l.b16 %v924
        %v1842 = vunpack.c.h.b16 %v924
        %v1843 = vunpack.c.l.b16 %v925
        %v1844 = vunpack.c.h.b16 %v925
        %v1845 = vunpack.c.l.b16 %v926
        %v1846 = vunpack.c.h.b16 %v926
        %v1847 = vunpack.c.l.b16 %v927
        %v1848 = vunpack.c.h.b16 %v927
        %v1849 = vunpack.c.l.b16 %v928
        %v1850 = vunpack.c.h.b16 %v928
        %v1851 = vunpack.c.l.b16 %v929
        %v1852 = vunpack.c.h.b16 %v929
        %v1853 = vunpack.c.l.b16 %v930
        %v1854 = vunpack.c.h.b16 %v930
        %v1855 = vunpack.c.l.b16 %v931
        %v1856 = vunpack.c.h.b16 %v931
        %v1857 = vunpack.c.l.b16 %v932
        %v1858 = vunpack.c.h.b16 %v932
        %v1859 = vunpack.c.l.b16 %v933
        %v1860 = vunpack.c.h.b16 %v933
        %v1861 = vunpack.c.l.b16 %v934
        %v1862 = vunpack.c.h.b16 %v934
        %v1863 = vunpack.c.l.b16 %v935
        %v1864 = vunpack.c.h.b16 %v935
        %v1865 = vunpack.c.l.b16 %v936
        %v1866 = vunpack.c.h.b16 %v936
        %v1867 = vunpack.c.l.b16 %v937
        %v1868 = vunpack.c.h.b16 %v937
        %v1869 = vunpack.c.l.b16 %v938
        %v1870 = vunpack.c.h.b16 %v938
        %v1871 = vunpack.c.l.b16 %v939
        %v1872 = vunpack.c.h.b16 %v939
        %v1873 = vunpack.c.l.b16 %v940
        %v1874 = vunpack.c.h.b16 %v940
        %v1875 = vunpack.c.l.b16 %v941
        %v1876 = vunpack.c.h.b16 %v941
        %v1877 = vunpack.c.l.b16 %v942
        %v1878 = vunpack.c.h.b16 %v942
        %v1879 = vunpack.c.l.b16 %v943
        %v1880 = vunpack.c.h.b16 %v943
        %v1881 = vunpack.c.l.b16 %v944
        %v1882 = vunpack.c.h.b16 %v944
        %v1883 = vunpack.c.l.b16 %v945
        %v1884 = vunpack.c.h.b16 %v945
        %v1885 = vunpack.c.l.b16 %v946
        %v1886 = vunpack.c.h.b16 %v946
        %v1887 = vunpack.c.l.b16 %v947
        %v1888 = vunpack.c.h.b16 %v947
        %v1889 = vunpack.c.l.b16 %v948
        %v1890 = vunpack.c.h.b16 %v948
        %v1891 = vunpack.c.l.b16 %v949
        %v1892 = vunpack.c.h.b16 %v949
        %v1893 = vunpack.c.l.b16 %v950
        %v1894 = vunpack.c.h.b16 %v950
        %v1895 = vunpack.c.l.b16 %v951
        %v1896 = vunpack.c.h.b16 %v951
        %v1897 = vunpack.c.l.b16 %v952
        %v1898 = vunpack.c.h.b16 %v952
        %v1899 = vunpack.c.l.b16 %v953
        %v1900 = vunpack.c.h.b16 %v953
        %v1901 = vunpack.c.l.b16 %v954
        %v1902 = vunpack.c.h.b16 %v954
        %v1903 = vunpack.c.l.b16 %v955
        %v1904 = vunpack.c.h.b16 %v955
        %v1905 = vunpack.c.l.b16 %v956
        %v1906 = vunpack.c.h.b16 %v956
        %v1907 = vunpack.c.l.b16 %v957
        %v1908 = vunpack.c.h.b16 %v957
        %v1909 = vunpack.c.l.b16 %v958
        %v1910 = vunpack.c.h.b16 %v958
        %v1911 = vunpack.c.l.b16 %v959
        %v1912 = vunpack.c.h.b16 %v959
        %v1913 = vunpack.c.l.b16 %v960
        %v1914 = vunpack.c.h.b16 %v960
        %v1915 = vunpack.c.l.b16 %v961
        %v1916 = vunpack.c.h.b16 %v961
        %v1917 = vunpack.c.l.b16 %v962
        %v1918 = vunpack.c.h.b16 %v962
        %v1919 = vunpack.c.l.b16 %v963
        %v1920 = vunpack.c.h.b16 %v963
        %v1921 = vunpack.c.l.b16 %v964
        %v1922 = vunpack.c.h.b16 %v964
        %v1923 = vunpack.c.l.b16 %v965
        %v1924 = vunpack.c.h.b16 %v965
        %v1925 = vunpack.c.l.b16 %v966
        %v1926 = vunpack.c.h.b16 %v966
        %v1927 = vpack.c.b16 %v1295, %v1287
        %v1928 = vpack.c.b16 %v1296, %v1288
        %v1929 = vpack.c.b16 %v1297, %v1289
        %v1930 = vpack.c.b16 %v1298, %v1290
        %v1931 = vpack.c.b16 %v1299, %v1291
        %v1932 = vpack.c.b16 %v1300, %v1292
        %v1933 = vpack.c.b16 %v1301, %v1293
        %v1934 = vpack.c.b16 %v1302, %v1294
        %v1935 = vpack.c.b16 %v1311, %v1303
        %v1936 = vpack.c.b16 %v1312, %v1304
        %v1937 = vpack.c.b16 %v1313, %v1305
        %v1938 = vpack.c.b16 %v1314, %v1306
        %v1939 = vpack.c.b16 %v1315, %v1307
        %v1940 = vpack.c.b16 %v1316, %v1308
        %v1941 = vpack.c.b16 %v1317, %v1309
        %v1942 = vpack.c.b16 %v1318, %v1310
        %v1943 = vpack.c.b16 %v1327, %v1319
        %v1944 = vpack.c.b16 %v1328, %v1320
        %v1945 = vpack.c.b16 %v1329, %v1321
        %v1946 = vpack.c.b16 %v1330, %v1322
        %v1947 = vpack.c.b16 %v1331, %v1323
        %v1948 = vpack.c.b16 %v1332, %v1324
        %v1949 = vpack.c.b16 %v1333, %v1325
        %v1950 = vpack.c.b16 %v1334, %v1326
        %v1951 = vpack.c.b16 %v1343, %v1335
        %v1952 = vpack.c.b16 %v1344, %v1336
        %v1953 = vpack.c.b16 %v1345, %v1337
        %v1954 = vpack.c.b16 %v1346, %v1338
        %v1955 = vpack.c.b16 %v1347, %v1339
        %v1956 = vpack.c.b16 %v1348, %v1340
        %v1957 = vpack.c.b16 %v1349, %v1341
        %v1958 = vpack.c.b16 %v1350, %v1342
        %v1959 = vpack.c.b16 %v1359, %v1351
        %v1960 = vpack.c.b16 %v1360, %v1352
        %v1961 = vpack.c.b16 %v1361, %v1353
        %v1962 = vpack.c.b16 %v1362, %v1354
        %v1963 = vpack.c.b16 %v1363, %v1355
        %v1964 = vpack.c.b16 %v1364, %v1356
        %v1965 = vpack.c.b16 %v1365, %v1357
        %v1966 = vpack.c.b16 %v1366, %v1358
        %v1967 = vpack.c.b16 %v1375, %v1367
        %v1968 = vpack.c.b16 %v1376, %v1368
        %v1969 = vpack.c.b16 %v1377, %v1369
        %v1970 = vpack.c.b16 %v1378, %v1370
        %v1971 = vpack.c.b16 %v1379, %v1371
        %v1972 = vpack.c.b16 %v1380, %v1372
        %v1973 = vpack.c.b16 %v1381, %v1373
        %v1974 = vpack.c.b16 %v1382, %v1374
        %v1975 = vpack.c.b16 %v1391, %v1383
        %v1976 = vpack.c.b16 %v1392, %v1384
        %v1977 = vpack.c.b16 %v1393, %v1385
        %v1978 = vpack.c.b16 %v1394, %v1386
        %v1979 = vpack.c.b16 %v1395, %v1387
        %v1980 = vpack.c.b16 %v1396, %v1388
        %v1981 = vpack.c.b16 %v1397, %v1389
        %v1982 = vpack.c.b16 %v1398, %v1390
        %v1983 = vpack.c.b16 %v1407, %v1399
        %v1984 = vpack.c.b16 %v1408, %v1400
        %v1985 = vpack.c.b16 %v1409, %v1401
        %v1986 = vpack.c.b16 %v1410, %v1402
        %v1987 = vpack.c.b16 %v1411, %v1403
        %v1988 = vpack.c.b16 %v1412, %v1404
        %v1989 = vpack.c.b16 %v1413, %v1405
        %v1990 = vpack.c.b16 %v1414, %v1406
        %v1991 = vpack.c.b16 %v1423, %v1415
        %v1992 = vpack.c.b16 %v1424, %v1416
        %v1993 = vpack.c.b16 %v1425, %v1417
        %v1994 = vpack.c.b16 %v1426, %v1418
        %v1995 = vpack.c.b16 %v1427, %v1419
        %v1996 = vpack.c.b16 %v1428, %v1420
        %v1997 = vpack.c.b16 %v1429, %v1421
        %v1998 = vpack.c.b16 %v1430, %v1422
        %v1999 = vpack.c.b16 %v1439, %v1431
        %v2000 = vpack.c.b16 %v1440, %v1432
        %v2001 = vpack.c.b16 %v1441, %v1433
        %v2002 = vpack.c.b16 %v1442, %v1434
        %v2003 = vpack.c.b16 %v1443, %v1435
        %v2004 = vpack.c.b16 %v1444, %v1436
        %v2005 = vpack.c.b16 %v1445, %v1437
        %v2006 = vpack.c.b16 %v1446, %v1438
        %v2007 = vpack.c.b16 %v1455, %v1447
        %v2008 = vpack.c.b16 %v1456, %v1448
        %v2009 = vpack.c.b16 %v1457, %v1449
        %v2010 = vpack.c.b16 %v1458, %v1450
        %v2011 = vpack.c.b16 %v1459, %v1451
        %v2012 = vpack.c.b16 %v1460, %v1452
        %v2013 = vpack.c.b16 %v1461, %v1453
        %v2014 = vpack.c.b16 %v1462, %v1454
        %v2015 = vpack.c.b16 %v1471, %v1463
        %v2016 = vpack.c.b16 %v1472, %v1464
        %v2017 = vpack.c.b16 %v1473, %v1465
        %v2018 = vpack.c.b16 %v1474, %v1466
        %v2019 = vpack.c.b16 %v1475, %v1467
        %v2020 = vpack.c.b16 %v1476, %v1468
        %v2021 = vpack.c.b16 %v1477, %v1469
        %v2022 = vpack.c.b16 %v1478, %v1470
        %v2023 = vpack.c.b16 %v1487, %v1479
        %v2024 = vpack.c.b16 %v1488, %v1480
        %v2025 = vpack.c.b16 %v1489, %v1481
        %v2026 = vpack.c.b16 %v1490, %v1482
        %v2027 = vpack.c.b16 %v1491, %v1483
        %v2028 = vpack.c.b16 %v1492, %v1484
        %v2029 = vpack.c.b16 %v1493, %v1485
        %v2030 = vpack.c.b16 %v1494, %v1486
        %v2031 = vpack.c.b16 %v1503, %v1495
        %v2032 = vpack.c.b16 %v1504, %v1496
        %v2033 = vpack.c.b16 %v1505, %v1497
        %v2034 = vpack.c.b16 %v1506, %v1498
        %v2035 = vpack.c.b16 %v1507, %v1499
        %v2036 = vpack.c.b16 %v1508, %v1500
        %v2037 = vpack.c.b16 %v1509, %v1501
        %v2038 = vpack.c.b16 %v1510, %v1502
        %v2039 = vpack.c.b16 %v1519, %v1511
        %v2040 = vpack.c.b16 %v1520, %v1512
        %v2041 = vpack.c.b16 %v1521, %v1513
        %v2042 = vpack.c.b16 %v1522, %v1514
        %v2043 = vpack.c.b16 %v1523, %v1515
        %v2044 = vpack.c.b16 %v1524, %v1516
        %v2045 = vpack.c.b16 %v1525, %v1517
        %v2046 = vpack.c.b16 %v1526, %v1518
        %v2047 = vpack.c.b16 %v1535, %v1527
        %v2048 = vpack.c.b16 %v1536, %v1528
        %v2049 = vpack.c.b16 %v1537, %v1529
        %v2050 = vpack.c.b16 %v1538, %v1530
        %v2051 = vpack.c.b16 %v1539, %v1531
        %v2052 = vpack.c.b16 %v1540, %v1532
        %v2053 = vpack.c.b16 %v1541, %v1533
        %v2054 = vpack.c.b16 %v1542, %v1534
        %v2055 = vpack.c.b16 %v1551, %v1543
        %v2056 = vpack.c.b16 %v1552, %v1544
        %v2057 = vpack.c.b16 %v1553, %v1545
        %v2058 = vpack.c.b16 %v1554, %v1546
        %v2059 = vpack.c.b16 %v1555, %v1547
        %v2060 = vpack.c.b16 %v1556, %v1548
        %v2061 = vpack.c.b16 %v1557, %v1549
        %v2062 = vpack.c.b16 %v1558, %v1550
        %v2063 = vpack.c.b16 %v1567, %v1559
        %v2064 = vpack.c.b16 %v1568, %v1560
        %v2065 = vpack.c.b16 %v1569, %v1561
        %v2066 = vpack.c.b16 %v1570, %v1562
        %v2067 = vpack.c.b16 %v1571, %v1563
        %v2068 = vpack.c.b16 %v1572, %v1564
        %v2069 = vpack.c.b16 %v1573, %v1565
        %v2070 = vpack.c.b16 %v1574, %v1566
        %v2071 = vpack.c.b16 %v1583, %v1575
        %v2072 = vpack.c.b16 %v1584, %v1576
        %v2073 = vpack.c.b16 %v1585, %v1577
        %v2074 = vpack.c.b16 %v1586, %v1578
        %v2075 = vpack.c.b16 %v1587, %v1579
        %v2076 = vpack.c.b16 %v1588, %v1580
        %v2077 = vpack.c.b16 %v1589, %v1581
        %v2078 = vpack.c.b16 %v1590, %v1582
        %v2079 = vpack.c.b16 %v1599, %v1591
        %v2080 = vpack.c.b16 %v1600, %v1592
        %v2081 = vpack.c.b16 %v1601, %v1593
        %v2082 = vpack.c.b16 %v1602, %v1594
        %v2083 = vpack.c.b16 %v1603, %v1595
        %v2084 = vpack.c.b16 %v1604, %v1596
        %v2085 = vpack.c.b16 %v1605, %v1597
        %v2086 = vpack.c.b16 %v1606, %v1598
        %v2087 = vpack.c.b16 %v1615, %v1607
        %v2088 = vpack.c.b16 %v1616, %v1608
        %v2089 = vpack.c.b16 %v1617, %v1609
        %v2090 = vpack.c.b16 %v1618, %v1610
        %v2091 = vpack.c.b16 %v1619, %v1611
        %v2092 = vpack.c.b16 %v1620, %v1612
        %v2093 = vpack.c.b16 %v1621, %v1613
        %v2094 = vpack.c.b16 %v1622, %v1614
        %v2095 = vpack.c.b16 %v1631, %v1623
        %v2096 = vpack.c.b16 %v1632, %v1624
        %v2097 = vpack.c.b16 %v1633, %v1625
        %v2098 = vpack.c.b16 %v1634, %v1626
        %v2099 = vpack.c.b16 %v1635, %v1627
        %v2100 = vpack.c.b16 %v1636, %v1628
        %v2101 = vpack.c.b16 %v1637, %v1629
        %v2102 = vpack.c.b16 %v1638, %v1630
        %v2103 = vpack.c.b16 %v1647, %v1639
        %v2104 = vpack.c.b16 %v1648, %v1640
        %v2105 = vpack.c.b16 %v1649, %v1641
        %v2106 = vpack.c.b16 %v1650, %v1642
        %v2107 = vpack.c.b16 %v1651, %v1643
        %v2108 = vpack.c.b16 %v1652, %v1644
        %v2109 = vpack.c.b16 %v1653, %v1645
        %v2110 = vpack.c.b16 %v1654, %v1646
        %v2111 = vpack.c.b16 %v1663, %v1655
        %v2112 = vpack.c.b16 %v1664, %v1656
        %v2113 = vpack.c.b16 %v1665, %v1657
        %v2114 = vpack.c.b16 %v1666, %v1658
        %v2115 = vpack.c.b16 %v1667, %v1659
        %v2116 = vpack.c.b16 %v1668, %v1660
        %v2117 = vpack.c.b16 %v1669, %v1661
        %v2118 = vpack.c.b16 %v1670, %v1662
        %v2119 = vpack.c.b16 %v1679, %v1671
        %v2120 = vpack.c.b16 %v1680, %v1672
        %v2121 = vpack.c.b16 %v1681, %v1673
        %v2122 = vpack.c.b16 %v1682, %v1674
        %v2123 = vpack.c.b16 %v1683, %v1675
        %v2124 = vpack.c.b16 %v1684, %v1676
        %v2125 = vpack.c.b16 %v1685, %v1677
        %v2126 = vpack.c.b16 %v1686, %v1678
        %v2127 = vpack.c.b16 %v1695, %v1687
        %v2128 = vpack.c.b16 %v1696, %v1688
        %v2129 = vpack.c.b16 %v1697, %v1689
        %v2130 = vpack.c.b16 %v1698, %v1690
        %v2131 = vpack.c.b16 %v1699, %v1691
        %v2132 = vpack.c.b16 %v1700, %v1692
        %v2133 = vpack.c.b16 %v1701, %v1693
        %v2134 = vpack.c.b16 %v1702, %v1694
        %v2135 = vpack.c.b16 %v1711, %v1703
        %v2136 = vpack.c.b16 %v1712, %v1704
        %v2137 = vpack.c.b16 %v1713, %v1705
        %v2138 = vpack.c.b16 %v1714, %v1706
        %v2139 = vpack.c.b16 %v1715, %v1707
        %v2140 = vpack.c.b16 %v1716, %v1708
        %v2141 = vpack.c.b16 %v1717, %v1709
        %v2142 = vpack.c.b16 %v1718, %v1710
        %v2143 = vpack.c.b16 %v1727, %v1719
        %v2144 = vpack.c.b16 %v1728, %v1720
        %v2145 = vpack.c.b16 %v1729, %v1721
        %v2146 = vpack.c.b16 %v1730, %v1722
        %v2147 = vpack.c.b16 %v1731, %v1723
        %v2148 = vpack.c.b16 %v1732, %v1724
        %v2149 = vpack.c.b16 %v1733, %v1725
        %v2150 = vpack.c.b16 %v1734, %v1726
        %v2151 = vpack.c.b16 %v1743, %v1735
        %v2152 = vpack.c.b16 %v1744, %v1736
        %v2153 = vpack.c.b16 %v1745, %v1737
        %v2154 = vpack.c.b16 %v1746, %v1738
        %v2155 = vpack.c.b16 %v1747, %v1739
        %v2156 = vpack.c.b16 %v1748, %v1740
        %v2157 = vpack.c.b16 %v1749, %v1741
        %v2158 = vpack.c.b16 %v1750, %v1742
        %v2159 = vpack.c.b16 %v1759, %v1751
        %v2160 = vpack.c.b16 %v1760, %v1752
        %v2161 = vpack.c.b16 %v1761, %v1753
        %v2162 = vpack.c.b16 %v1762, %v1754
        %v2163 = vpack.c.b16 %v1763, %v1755
        %v2164 = vpack.c.b16 %v1764, %v1756
        %v2165 = vpack.c.b16 %v1765, %v1757
        %v2166 = vpack.c.b16 %v1766, %v1758
        %v2167 = vpack.c.b16 %v1775, %v1767
        %v2168 = vpack.c.b16 %v1776, %v1768
        %v2169 = vpack.c.b16 %v1777, %v1769
        %v2170 = vpack.c.b16 %v1778, %v1770
        %v2171 = vpack.c.b16 %v1779, %v1771
        %v2172 = vpack.c.b16 %v1780, %v1772
        %v2173 = vpack.c.b16 %v1781, %v1773
        %v2174 = vpack.c.b16 %v1782, %v1774
        %v2175 = vpack.c.b16 %v1791, %v1783
        %v2176 = vpack.c.b16 %v1792, %v1784
        %v2177 = vpack.c.b16 %v1793, %v1785
        %v2178 = vpack.c.b16 %v1794, %v1786
        %v2179 = vpack.c.b16 %v1795, %v1787
        %v2180 = vpack.c.b16 %v1796, %v1788
        %v2181 = vpack.c.b16 %v1797, %v1789
        %v2182 = vpack.c.b16 %v1798, %v1790
        %v2183 = vpack.c.b16 %v1807, %v1799
        %v2184 = vpack.c.b16 %v1808, %v1800
        %v2185 = vpack.c.b16 %v1809, %v1801
        %v2186 = vpack.c.b16 %v1810, %v1802
        %v2187 = vpack.c.b16 %v1811, %v1803
        %v2188 = vpack.c.b16 %v1812, %v1804
        %v2189 = vpack.c.b16 %v1813, %v1805
        %v2190 = vpack.c.b16 %v1814, %v1806
        %v2191 = vpack.c.b16 %v1823, %v1815
        %v2192 = vpack.c.b16 %v1824, %v1816
        %v2193 = vpack.c.b16 %v1825, %v1817
        %v2194 = vpack.c.b16 %v1826, %v1818
        %v2195 = vpack.c.b16 %v1827, %v1819
        %v2196 = vpack.c.b16 %v1828, %v1820
        %v2197 = vpack.c.b16 %v1829, %v1821
        %v2198 = vpack.c.b16 %v1830, %v1822
        %v2199 = vpack.c.b16 %v1839, %v1831
        %v2200 = vpack.c.b16 %v1840, %v1832
        %v2201 = vpack.c.b16 %v1841, %v1833
        %v2202 = vpack.c.b16 %v1842, %v1834
        %v2203 = vpack.c.b16 %v1843, %v1835
        %v2204 = vpack.c.b16 %v1844, %v1836
        %v2205 = vpack.c.b16 %v1845, %v1837
        %v2206 = vpack.c.b16 %v1846, %v1838
        %v2207 = vpack.c.b16 %v1855, %v1847
        %v2208 = vpack.c.b16 %v1856, %v1848
        %v2209 = vpack.c.b16 %v1857, %v1849
        %v2210 = vpack.c.b16 %v1858, %v1850
        %v2211 = vpack.c.b16 %v1859, %v1851
        %v2212 = vpack.c.b16 %v1860, %v1852
        %v2213 = vpack.c.b16 %v1861, %v1853
        %v2214 = vpack.c.b16 %v1862, %v1854
        %v2215 = vpack.c.b16 %v1871, %v1863
        %v2216 = vpack.c.b16 %v1872, %v1864
        %v2217 = vpack.c.b16 %v1873, %v1865
        %v2218 = vpack.c.b16 %v1874, %v1866
        %v2219 = vpack.c.b16 %v1875, %v1867
        %v2220 = vpack.c.b16 %v1876, %v1868
        %v2221 = vpack.c.b16 %v1877, %v1869
        %v2222 = vpack.c.b16 %v1878, %v1870
        %v2223 = vpack.c.b16 %v1887, %v1879
        %v2224 = vpack.c.b16 %v1888, %v1880
        %v2225 = vpack.c.b16 %v1889, %v1881
        %v2226 = vpack.c.b16 %v1890, %v1882
        %v2227 = vpack.c.b16 %v1891, %v1883
        %v2228 = vpack.c.b16 %v1892, %v1884
        %v2229 = vpack.c.b16 %v1893, %v1885
        %v2230 = vpack.c.b16 %v1894, %v1886
        %v2231 = vpack.c.b16 %v1903, %v1895
        %v2232 = vpack.c.b16 %v1904, %v1896
        %v2233 = vpack.c.b16 %v1905, %v1897
        %v2234 = vpack.c.b16 %v1906, %v1898
        %v2235 = vpack.c.b16 %v1907, %v1899
        %v2236 = vpack.c.b16 %v1908, %v1900
        %v2237 = vpack.c.b16 %v1909, %v1901
        %v2238 = vpack.c.b16 %v1910, %v1902
        %v2239 = vpack.c.b16 %v1919, %v1911
        %v2240 = vpack.c.b16 %v1920, %v1912
        %v2241 = vpack.c.b16 %v1921, %v1913
        %v2242 = vpack.c.b16 %v1922, %v1914
        %v2243 = vpack.c.b16 %v1923, %v1915
        %v2244 = vpack.c.b16 %v1924, %v1916
        %v2245 = vpack.c.b16 %v1925, %v1917
        %v2246 = vpack.c.b16 %v1926, %v1918
        %2567 = vmatprep.subr.bf16.mxu0 %v1928
        %2568 = vmatpush1.bf16.msra.mxu0 %v1927
        %2569 = vmatprep.subr.bf16.mxu0 %v1936
        %2570 = vmatpush1.bf16.msra.mxu0 %v1935
        %2571 = vmatprep.subr.bf16.mxu0 %v1944
        %2572 = vmatpush1.bf16.msra.mxu0 %v1943
        %2573 = vmatprep.subr.bf16.mxu0 %v1952
        %2574 = vmatpush1.bf16.msra.mxu0 %v1951
        %2575 = vmatprep.subr.bf16.mxu0 %v1960
        %2576 = vmatpush1.bf16.msra.mxu0 %v1959
        %2577 = vmatprep.subr.bf16.mxu0 %v1968
        %2578 = vmatpush1.bf16.msra.mxu0 %v1967
        %2579 = vmatprep.subr.bf16.mxu0 %v1976
        %2580 = vmatpush1.bf16.msra.mxu0 %v1975
        %2581 = vmatprep.subr.bf16.mxu0 %v1984
        %2582 = vmatpush1.bf16.msra.mxu0 %v1983
        %2583 = vmatprep.subr.bf16.mxu0 %v1992
        %2584 = vmatpush1.bf16.msra.mxu0 %v1991
        %2585 = vmatprep.subr.bf16.mxu0 %v2000
        %2586 = vmatpush1.bf16.msra.mxu0 %v1999
        %2587 = vmatprep.subr.bf16.mxu0 %v2008
        %2588 = vmatpush1.bf16.msra.mxu0 %v2007
        %2589 = vmatprep.subr.bf16.mxu0 %v2016
        %2590 = vmatpush1.bf16.msra.mxu0 %v2015
        %2591 = vmatprep.subr.bf16.mxu0 %v2024
        %2592 = vmatpush1.bf16.msra.mxu0 %v2023
        %2593 = vmatprep.subr.bf16.mxu0 %v2032
        %2594 = vmatpush1.bf16.msra.mxu0 %v2031
        %2595 = vmatprep.subr.bf16.mxu0 %v2040
        %2596 = vmatpush1.bf16.msra.mxu0 %v2039
        %2597 = vmatprep.subr.bf16.mxu0 %v2048
        %2598 = vmatpush1.bf16.msra.mxu0 %v2047
        %2599 = vmatprep.mubr.bf16.mxu0 %v627
        %2600 = vmatmul.mubr.bf16.gmra.mrb[0].mxu0 %v621
        %v2601 = vpop.f32.mrb[0].mxu0
        %v2602 = vadd.f32 0.0, %v2601
        %v2603 = vpop.f32.mrb[0].mxu0
        %v2604 = vadd.f32 0.0, %v2603
        %v2605 = vpop.f32.mrb[0].mxu0
        %v2606 = vadd.f32 0.0, %v2605
        %v2607 = vpop.f32.mrb[0].mxu0
        %v2608 = vadd.f32 0.0, %v2607
        %2609 = vdwg.mxu0
        %2610 = vmatprep.subr.bf16.mxu0 %v2056
        %2611 = vmatpush1.bf16.msra.mxu0 %v2055
        %2612 = vmatprep.subr.bf16.mxu0 %v2064
        %2613 = vmatpush1.bf16.msra.mxu0 %v2063
        %2614 = vmatprep.subr.bf16.mxu0 %v2072
        %2615 = vmatpush1.bf16.msra.mxu0 %v2071
        %2616 = vmatprep.subr.bf16.mxu0 %v2080
        %2617 = vmatpush1.bf16.msra.mxu0 %v2079
        %2618 = vmatprep.subr.bf16.mxu0 %v2088
        %2619 = vmatpush1.bf16.msra.mxu0 %v2087
        %2620 = vmatprep.subr.bf16.mxu0 %v2096
        %2621 = vmatpush1.bf16.msra.mxu0 %v2095
        %2622 = vmatprep.subr.bf16.mxu0 %v2104
        %2623 = vmatpush1.bf16.msra.mxu0 %v2103
        %2624 = vmatprep.subr.bf16.mxu0 %v2112
        %2625 = vmatpush1.bf16.msra.mxu0 %v2111
        %2626 = vmatprep.subr.bf16.mxu0 %v2120
        %2627 = vmatpush1.bf16.msra.mxu0 %v2119
        %2628 = vmatprep.subr.bf16.mxu0 %v2128
        %2629 = vmatpush1.bf16.msra.mxu0 %v2127
        %2630 = vmatprep.subr.bf16.mxu0 %v2136
        %2631 = vmatpush1.bf16.msra.mxu0 %v2135
        %2632 = vmatprep.subr.bf16.mxu0 %v2144
        %2633 = vmatpush1.bf16.msra.mxu0 %v2143
        %2634 = vmatprep.subr.bf16.mxu0 %v2152
        %2635 = vmatpush1.bf16.msra.mxu0 %v2151
        %2636 = vmatprep.subr.bf16.mxu0 %v2160
        %2637 = vmatpush1.bf16.msra.mxu0 %v2159
        %2638 = vmatprep.subr.bf16.mxu0 %v2168
        %2639 = vmatpush1.bf16.msra.mxu0 %v2167
        %2640 = vmatprep.subr.bf16.mxu0 %v2176
        %2641 = vmatpush1.bf16.msra.mxu0 %v2175
        %2642 = vmatprep.mubr.bf16.mxu0 %v639
        %2643 = vmatmul.mubr.bf16.gmra.mrb[0].mxu0 %v633
        %v2644 = vpop.f32.mrb[0].mxu0
        %v2645 = vadd.f32 %v2602, %v2644
        %v2646 = vpop.f32.mrb[0].mxu0
        %v2647 = vadd.f32 %v2604, %v2646
        %v2648 = vpop.f32.mrb[0].mxu0
        %v2649 = vadd.f32 %v2606, %v2648
        %v2650 = vpop.f32.mrb[0].mxu0
        %v2651 = vadd.f32 %v2608, %v2650
        %2652 = vdwg.mxu0
        %2653 = vmatprep.subr.bf16.mxu0 %v2184
        %2654 = vmatpush1.bf16.msra.mxu0 %v2183
        %2655 = vmatprep.subr.bf16.mxu0 %v2192
        %2656 = vmatpush1.bf16.msra.mxu0 %v2191
        %2657 = vmatprep.subr.bf16.mxu0 %v2200
        %2658 = vmatpush1.bf16.msra.mxu0 %v2199
        %2659 = vmatprep.subr.bf16.mxu0 %v2208
        %2660 = vmatpush1.bf16.msra.mxu0 %v2207
        %2661 = vmatprep.subr.bf16.mxu0 %v2216
        %2662 = vmatpush1.bf16.msra.mxu0 %v2215
        %2663 = vmatprep.subr.bf16.mxu0 %v2224
        %2664 = vmatpush1.bf16.msra.mxu0 %v2223
        %2665 = vmatprep.subr.bf16.mxu0 %v2232
        %2666 = vmatpush1.bf16.msra.mxu0 %v2231
        %2667 = vmatprep.subr.bf16.mxu0 %v2240
        %2668 = vmatpush1.bf16.msra.mxu0 %v2239
        %2669 = vmatprep.subr.bf16.mxu0 0
        %2670 = vmatpush1.bf16.msra.mxu0 0
        %2671 = vmatprep.subr.bf16.mxu0 0
        %2672 = vmatpush1.bf16.msra.mxu0 0
        %2673 = vmatprep.subr.bf16.mxu0 0
        %2674 = vmatpush1.bf16.msra.mxu0 0
        %2675 = vmatprep.subr.bf16.mxu0 0
        %2676 = vmatpush1.bf16.msra.mxu0 0
        %2677 = vmatprep.subr.bf16.mxu0 0
        %2678 = vmatpush1.bf16.msra.mxu0 0
        %2679 = vmatprep.subr.bf16.mxu0 0
        %2680 = vmatpush1.bf16.msra.mxu0 0
        %2681 = vmatprep.subr.bf16.mxu0 0
        %2682 = vmatpush1.bf16.msra.mxu0 0
        %2683 = vmatprep.subr.bf16.mxu0 0
        %2684 = vmatpush1.bf16.msra.mxu0 0
        %2685 = vmatprep.mubr.bf16.mxu0 0
        %2686 = vmatmul.mubr.bf16.gmra.mrb[0].mxu0 %v645
        %v2687 = vpop.f32.mrb[0].mxu0
        %v2688 = vadd.f32 %v2645, %v2687
        %v2689 = vpop.f32.mrb[0].mxu0
        %v2690 = vadd.f32 %v2647, %v2689
        %v2691 = vpop.f32.mrb[0].mxu0
        %v2692 = vadd.f32 %v2649, %v2691
        %v2693 = vpop.f32.mrb[0].mxu0
        %v2694 = vadd.f32 %v2651, %v2693
        %2695 = vdwg.mxu0
        %2696 = vmatprep.subr.bf16.mxu0 %v1930
        %2697 = vmatpush1.bf16.msra.mxu0 %v1929
        %2698 = vmatprep.subr.bf16.mxu0 %v1938
        %2699 = vmatpush1.bf16.msra.mxu0 %v1937
        %2700 = vmatprep.subr.bf16.mxu0 %v1946
        %2701 = vmatpush1.bf16.msra.mxu0 %v1945
        %2702 = vmatprep.subr.bf16.mxu0 %v1954
        %2703 = vmatpush1.bf16.msra.mxu0 %v1953
        %2704 = vmatprep.subr.bf16.mxu0 %v1962
        %2705 = vmatpush1.bf16.msra.mxu0 %v1961
        %2706 = vmatprep.subr.bf16.mxu0 %v1970
        %2707 = vmatpush1.bf16.msra.mxu0 %v1969
        %2708 = vmatprep.subr.bf16.mxu0 %v1978
        %2709 = vmatpush1.bf16.msra.mxu0 %v1977
        %2710 = vmatprep.subr.bf16.mxu0 %v1986
        %2711 = vmatpush1.bf16.msra.mxu0 %v1985
        %2712 = vmatprep.subr.bf16.mxu0 %v1994
        %2713 = vmatpush1.bf16.msra.mxu0 %v1993
        %2714 = vmatprep.subr.bf16.mxu0 %v2002
        %2715 = vmatpush1.bf16.msra.mxu0 %v2001
        %2716 = vmatprep.subr.bf16.mxu0 %v2010
        %2717 = vmatpush1.bf16.msra.mxu0 %v2009
        %2718 = vmatprep.subr.bf16.mxu0 %v2018
        %2719 = vmatpush1.bf16.msra.mxu0 %v2017
        %2720 = vmatprep.subr.bf16.mxu0 %v2026
        %2721 = vmatpush1.bf16.msra.mxu0 %v2025
        %2722 = vmatprep.subr.bf16.mxu0 %v2034
        %2723 = vmatpush1.bf16.msra.mxu0 %v2033
        %2724 = vmatprep.subr.bf16.mxu0 %v2042
        %2725 = vmatpush1.bf16.msra.mxu0 %v2041
        %2726 = vmatprep.subr.bf16.mxu0 %v2050
        %2727 = vmatpush1.bf16.msra.mxu0 %v2049
        %2728 = vmatprep.mubr.bf16.mxu0 %v627
        %2729 = vmatmul.mubr.bf16.gmra.mrb[0].mxu0 %v621
        %v2730 = vpop.f32.mrb[0].mxu0
        %v2731 = vadd.f32 0.0, %v2730
        %v2732 = vpop.f32.mrb[0].mxu0
        %v2733 = vadd.f32 0.0, %v2732
        %v2734 = vpop.f32.mrb[0].mxu0
        %v2735 = vadd.f32 0.0, %v2734
        %v2736 = vpop.f32.mrb[0].mxu0
        %v2737 = vadd.f32 0.0, %v2736
        %2738 = vdwg.mxu0
        %2739 = vmatprep.subr.bf16.mxu0 %v2058
        %2740 = vmatpush1.bf16.msra.mxu0 %v2057
        %2741 = vmatprep.subr.bf16.mxu0 %v2066
        %2742 = vmatpush1.bf16.msra.mxu0 %v2065
        %2743 = vmatprep.subr.bf16.mxu0 %v2074
        %2744 = vmatpush1.bf16.msra.mxu0 %v2073
        %2745 = vmatprep.subr.bf16.mxu0 %v2082
        %2746 = vmatpush1.bf16.msra.mxu0 %v2081
        %2747 = vmatprep.subr.bf16.mxu0 %v2090
        %2748 = vmatpush1.bf16.msra.mxu0 %v2089
        %2749 = vmatprep.subr.bf16.mxu0 %v2098
        %2750 = vmatpush1.bf16.msra.mxu0 %v2097
        %2751 = vmatprep.subr.bf16.mxu0 %v2106
        %2752 = vmatpush1.bf16.msra.mxu0 %v2105
        %2753 = vmatprep.subr.bf16.mxu0 %v2114
        %2754 = vmatpush1.bf16.msra.mxu0 %v2113
        %2755 = vmatprep.subr.bf16.mxu0 %v2122
        %2756 = vmatpush1.bf16.msra.mxu0 %v2121
        %2757 = vmatprep.subr.bf16.mxu0 %v2130
        %2758 = vmatpush1.bf16.msra.mxu0 %v2129
        %2759 = vmatprep.subr.bf16.mxu0 %v2138
        %2760 = vmatpush1.bf16.msra.mxu0 %v2137
        %2761 = vmatprep.subr.bf16.mxu0 %v2146
        %2762 = vmatpush1.bf16.msra.mxu0 %v2145
        %2763 = vmatprep.subr.bf16.mxu0 %v2154
        %2764 = vmatpush1.bf16.msra.mxu0 %v2153
        %2765 = vmatprep.subr.bf16.mxu0 %v2162
        %2766 = vmatpush1.bf16.msra.mxu0 %v2161
        %2767 = vmatprep.subr.bf16.mxu0 %v2170
        %2768 = vmatpush1.bf16.msra.mxu0 %v2169
        %2769 = vmatprep.subr.bf16.mxu0 %v2178
        %2770 = vmatpush1.bf16.msra.mxu0 %v2177
        %2771 = vmatprep.mubr.bf16.mxu0 %v639
        %2772 = vmatmul.mubr.bf16.gmra.mrb[0].mxu0 %v633
        %v2773 = vpop.f32.mrb[0].mxu0
        %v2774 = vadd.f32 %v2731, %v2773
        %v2775 = vpop.f32.mrb[0].mxu0
        %v2776 = vadd.f32 %v2733, %v2775
        %v2777 = vpop.f32.mrb[0].mxu0
        %v2778 = vadd.f32 %v2735, %v2777
        %v2779 = vpop.f32.mrb[0].mxu0
        %v2780 = vadd.f32 %v2737, %v2779
        %2781 = vdwg.mxu0
        %2782 = vmatprep.subr.bf16.mxu0 %v2186
        %2783 = vmatpush1.bf16.msra.mxu0 %v2185
        %2784 = vmatprep.subr.bf16.mxu0 %v2194
        %2785 = vmatpush1.bf16.msra.mxu0 %v2193
        %2786 = vmatprep.subr.bf16.mxu0 %v2202
        %2787 = vmatpush1.bf16.msra.mxu0 %v2201
        %2788 = vmatprep.subr.bf16.mxu0 %v2210
        %2789 = vmatpush1.bf16.msra.mxu0 %v2209
        %2790 = vmatprep.subr.bf16.mxu0 %v2218
        %2791 = vmatpush1.bf16.msra.mxu0 %v2217
        %2792 = vmatprep.subr.bf16.mxu0 %v2226
        %2793 = vmatpush1.bf16.msra.mxu0 %v2225
        %2794 = vmatprep.subr.bf16.mxu0 %v2234
        %2795 = vmatpush1.bf16.msra.mxu0 %v2233
        %2796 = vmatprep.subr.bf16.mxu0 %v2242
        %2797 = vmatpush1.bf16.msra.mxu0 %v2241
        %2798 = vmatprep.subr.bf16.mxu0 0
        %2799 = vmatpush1.bf16.msra.mxu0 0
        %2800 = vmatprep.subr.bf16.mxu0 0
        %2801 = vmatpush1.bf16.msra.mxu0 0
        %2802 = vmatprep.subr.bf16.mxu0 0
        %2803 = vmatpush1.bf16.msra.mxu0 0
        %2804 = vmatprep.subr.bf16.mxu0 0
        %2805 = vmatpush1.bf16.msra.mxu0 0
        %2806 = vmatprep.subr.bf16.mxu0 0
        %2807 = vmatpush1.bf16.msra.mxu0 0
        %2808 = vmatprep.subr.bf16.mxu0 0
        %2809 = vmatpush1.bf16.msra.mxu0 0
        %2810 = vmatprep.subr.bf16.mxu0 0
        %2811 = vmatpush1.bf16.msra.mxu0 0
        %2812 = vmatprep.subr.bf16.mxu0 0
        %2813 = vmatpush1.bf16.msra.mxu0 0
        %2814 = vmatprep.mubr.bf16.mxu0 0
        %2815 = vmatmul.mubr.bf16.gmra.mrb[0].mxu0 %v645
        %v2816 = vpop.f32.mrb[0].mxu0
        %v2817 = vadd.f32 %v2774, %v2816
        %v2818 = vpop.f32.mrb[0].mxu0
        %v2819 = vadd.f32 %v2776, %v2818
        %v2820 = vpop.f32.mrb[0].mxu0
        %v2821 = vadd.f32 %v2778, %v2820
        %v2822 = vpop.f32.mrb[0].mxu0
        %v2823 = vadd.f32 %v2780, %v2822
        %2824 = vdwg.mxu0
        %2825 = vmatprep.subr.bf16.mxu0 %v1932
        %2826 = vmatpush1.bf16.msra.mxu0 %v1931
        %2827 = vmatprep.subr.bf16.mxu0 %v1940
        %2828 = vmatpush1.bf16.msra.mxu0 %v1939
        %2829 = vmatprep.subr.bf16.mxu0 %v1948
        %2830 = vmatpush1.bf16.msra.mxu0 %v1947
        %2831 = vmatprep.subr.bf16.mxu0 %v1956
        %2832 = vmatpush1.bf16.msra.mxu0 %v1955
        %2833 = vmatprep.subr.bf16.mxu0 %v1964
        %2834 = vmatpush1.bf16.msra.mxu0 %v1963
        %2835 = vmatprep.subr.bf16.mxu0 %v1972
        %2836 = vmatpush1.bf16.msra.mxu0 %v1971
        %2837 = vmatprep.subr.bf16.mxu0 %v1980
        %2838 = vmatpush1.bf16.msra.mxu0 %v1979
        %2839 = vmatprep.subr.bf16.mxu0 %v1988
        %2840 = vmatpush1.bf16.msra.mxu0 %v1987
        %2841 = vmatprep.subr.bf16.mxu0 %v1996
        %2842 = vmatpush1.bf16.msra.mxu0 %v1995
        %2843 = vmatprep.subr.bf16.mxu0 %v2004
        %2844 = vmatpush1.bf16.msra.mxu0 %v2003
        %2845 = vmatprep.subr.bf16.mxu0 %v2012
        %2846 = vmatpush1.bf16.msra.mxu0 %v2011
        %2847 = vmatprep.subr.bf16.mxu0 %v2020
        %2848 = vmatpush1.bf16.msra.mxu0 %v2019
        %2849 = vmatprep.subr.bf16.mxu0 %v2028
        %2850 = vmatpush1.bf16.msra.mxu0 %v2027
        %2851 = vmatprep.subr.bf16.mxu0 %v2036
        %2852 = vmatpush1.bf16.msra.mxu0 %v2035
        %2853 = vmatprep.subr.bf16.mxu0 %v2044
        %2854 = vmatpush1.bf16.msra.mxu0 %v2043
        %2855 = vmatprep.subr.bf16.mxu0 %v2052
        %2856 = vmatpush1.bf16.msra.mxu0 %v2051
        %2857 = vmatprep.mubr.bf16.mxu0 %v627
        %2858 = vmatmul.mubr.bf16.gmra.mrb[0].mxu0 %v621
        %v2859 = vpop.f32.mrb[0].mxu0
        %v2860 = vadd.f32 0.0, %v2859
        %v2861 = vpop.f32.mrb[0].mxu0
        %v2862 = vadd.f32 0.0, %v2861
        %v2863 = vpop.f32.mrb[0].mxu0
        %v2864 = vadd.f32 0.0, %v2863
        %v2865 = vpop.f32.mrb[0].mxu0
        %v2866 = vadd.f32 0.0, %v2865
        %2867 = vdwg.mxu0
        %2868 = vmatprep.subr.bf16.mxu0 %v2060
        %2869 = vmatpush1.bf16.msra.mxu0 %v2059
        %2870 = vmatprep.subr.bf16.mxu0 %v2068
        %2871 = vmatpush1.bf16.msra.mxu0 %v2067
        %2872 = vmatprep.subr.bf16.mxu0 %v2076
        %2873 = vmatpush1.bf16.msra.mxu0 %v2075
        %2874 = vmatprep.subr.bf16.mxu0 %v2084
        %2875 = vmatpush1.bf16.msra.mxu0 %v2083
        %2876 = vmatprep.subr.bf16.mxu0 %v2092
        %2877 = vmatpush1.bf16.msra.mxu0 %v2091
        %2878 = vmatprep.subr.bf16.mxu0 %v2100
        %2879 = vmatpush1.bf16.msra.mxu0 %v2099
        %2880 = vmatprep.subr.bf16.mxu0 %v2108
        %2881 = vmatpush1.bf16.msra.mxu0 %v2107
        %2882 = vmatprep.subr.bf16.mxu0 %v2116
        %2883 = vmatpush1.bf16.msra.mxu0 %v2115
        %2884 = vmatprep.subr.bf16.mxu0 %v2124
        %2885 = vmatpush1.bf16.msra.mxu0 %v2123
        %2886 = vmatprep.subr.bf16.mxu0 %v2132
        %2887 = vmatpush1.bf16.msra.mxu0 %v2131
        %2888 = vmatprep.subr.bf16.mxu0 %v2140
        %2889 = vmatpush1.bf16.msra.mxu0 %v2139
        %2890 = vmatprep.subr.bf16.mxu0 %v2148
        %2891 = vmatpush1.bf16.msra.mxu0 %v2147
        %2892 = vmatprep.subr.bf16.mxu0 %v2156
        %2893 = vmatpush1.bf16.msra.mxu0 %v2155
        %2894 = vmatprep.subr.bf16.mxu0 %v2164
        %2895 = vmatpush1.bf16.msra.mxu0 %v2163
        %2896 = vmatprep.subr.bf16.mxu0 %v2172
        %2897 = vmatpush1.bf16.msra.mxu0 %v2171
        %2898 = vmatprep.subr.bf16.mxu0 %v2180
        %2899 = vmatpush1.bf16.msra.mxu0 %v2179
        %2900 = vmatprep.mubr.bf16.mxu0 %v639
        %2901 = vmatmul.mubr.bf16.gmra.mrb[0].mxu0 %v633
        %v2902 = vpop.f32.mrb[0].mxu0
        %v2903 = vadd.f32 %v2860, %v2902
        %v2904 = vpop.f32.mrb[0].mxu0
        %v2905 = vadd.f32 %v2862, %v2904
        %v2906 = vpop.f32.mrb[0].mxu0
        %v2907 = vadd.f32 %v2864, %v2906
        %v2908 = vpop.f32.mrb[0].mxu0
        %v2909 = vadd.f32 %v2866, %v2908
        %2910 = vdwg.mxu0
        %2911 = vmatprep.subr.bf16.mxu0 %v2188
        %2912 = vmatpush1.bf16.msra.mxu0 %v2187
        %2913 = vmatprep.subr.bf16.mxu0 %v2196
        %2914 = vmatpush1.bf16.msra.mxu0 %v2195
        %2915 = vmatprep.subr.bf16.mxu0 %v2204
        %2916 = vmatpush1.bf16.msra.mxu0 %v2203
        %2917 = vmatprep.subr.bf16.mxu0 %v2212
        %2918 = vmatpush1.bf16.msra.mxu0 %v2211
        %2919 = vmatprep.subr.bf16.mxu0 %v2220
        %2920 = vmatpush1.bf16.msra.mxu0 %v2219
        %2921 = vmatprep.subr.bf16.mxu0 %v2228
        %2922 = vmatpush1.bf16.msra.mxu0 %v2227
        %2923 = vmatprep.subr.bf16.mxu0 %v2236
        %2924 = vmatpush1.bf16.msra.mxu0 %v2235
        %2925 = vmatprep.subr.bf16.mxu0 %v2244
        %2926 = vmatpush1.bf16.msra.mxu0 %v2243
        %2927 = vmatprep.subr.bf16.mxu0 0
        %2928 = vmatpush1.bf16.msra.mxu0 0
        %2929 = vmatprep.subr.bf16.mxu0 0
        %2930 = vmatpush1.bf16.msra.mxu0 0
        %2931 = vmatprep.subr.bf16.mxu0 0
        %2932 = vmatpush1.bf16.msra.mxu0 0
        %2933 = vmatprep.subr.bf16.mxu0 0
        %2934 = vmatpush1.bf16.msra.mxu0 0
        %2935 = vmatprep.subr.bf16.mxu0 0
        %2936 = vmatpush1.bf16.msra.mxu0 0
        %2937 = vmatprep.subr.bf16.mxu0 0
        %2938 = vmatpush1.bf16.msra.mxu0 0
        %2939 = vmatprep.subr.bf16.mxu0 0
        %2940 = vmatpush1.bf16.msra.mxu0 0
        %2941 = vmatprep.subr.bf16.mxu0 0
        %2942 = vmatpush1.bf16.msra.mxu0 0
        %2943 = vmatprep.mubr.bf16.mxu0 0
        %2944 = vmatmul.mubr.bf16.gmra.mrb[0].mxu0 %v645
        %v2945 = vpop.f32.mrb[0].mxu0
        %v2946 = vadd.f32 %v2903, %v2945
        %v2947 = vpop.f32.mrb[0].mxu0
        %v2948 = vadd.f32 %v2905, %v2947
        %v2949 = vpop.f32.mrb[0].mxu0
        %v2950 = vadd.f32 %v2907, %v2949
        %v2951 = vpop.f32.mrb[0].mxu0
        %v2952 = vadd.f32 %v2909, %v2951
        %2953 = vdwg.mxu0
        %2954 = vmatprep.subr.bf16.mxu0 %v1934
        %2955 = vmatpush1.bf16.msra.mxu0 %v1933
        %2956 = vmatprep.subr.bf16.mxu0 %v1942
        %2957 = vmatpush1.bf16.msra.mxu0 %v1941
        %2958 = vmatprep.subr.bf16.mxu0 %v1950
        %2959 = vmatpush1.bf16.msra.mxu0 %v1949
        %2960 = vmatprep.subr.bf16.mxu0 %v1958
        %2961 = vmatpush1.bf16.msra.mxu0 %v1957
        %2962 = vmatprep.subr.bf16.mxu0 %v1966
        %2963 = vmatpush1.bf16.msra.mxu0 %v1965
        %2964 = vmatprep.subr.bf16.mxu0 %v1974
        %2965 = vmatpush1.bf16.msra.mxu0 %v1973
        %2966 = vmatprep.subr.bf16.mxu0 %v1982
        %2967 = vmatpush1.bf16.msra.mxu0 %v1981
        %2968 = vmatprep.subr.bf16.mxu0 %v1990
        %2969 = vmatpush1.bf16.msra.mxu0 %v1989
        %2970 = vmatprep.subr.bf16.mxu0 %v1998
        %2971 = vmatpush1.bf16.msra.mxu0 %v1997
        %2972 = vmatprep.subr.bf16.mxu0 %v2006
        %2973 = vmatpush1.bf16.msra.mxu0 %v2005
        %2974 = vmatprep.subr.bf16.mxu0 %v2014
        %2975 = vmatpush1.bf16.msra.mxu0 %v2013
        %2976 = vmatprep.subr.bf16.mxu0 %v2022
        %2977 = vmatpush1.bf16.msra.mxu0 %v2021
        %2978 = vmatprep.subr.bf16.mxu0 %v2030
        %2979 = vmatpush1.bf16.msra.mxu0 %v2029
        %2980 = vmatprep.subr.bf16.mxu0 %v2038
        %2981 = vmatpush1.bf16.msra.mxu0 %v2037
        %2982 = vmatprep.subr.bf16.mxu0 %v2046
        %2983 = vmatpush1.bf16.msra.mxu0 %v2045
        %2984 = vmatprep.subr.bf16.mxu0 %v2054
        %2985 = vmatpush1.bf16.msra.mxu0 %v2053
        %2986 = vmatprep.mubr.bf16.mxu0 %v627
        %2987 = vmatmul.mubr.bf16.gmra.mrb[0].mxu0 %v621
        %v2988 = vpop.f32.mrb[0].mxu0
        %v2989 = vadd.f32 0.0, %v2988
        %v2990 = vpop.f32.mrb[0].mxu0
        %v2991 = vadd.f32 0.0, %v2990
        %v2992 = vpop.f32.mrb[0].mxu0
        %v2993 = vadd.f32 0.0, %v2992
        %v2994 = vpop.f32.mrb[0].mxu0
        %v2995 = vadd.f32 0.0, %v2994
        %2996 = vdwg.mxu0
        %2997 = vmatprep.subr.bf16.mxu0 %v2062
        %2998 = vmatpush1.bf16.msra.mxu0 %v2061
        %2999 = vmatprep.subr.bf16.mxu0 %v2070
        %3000 = vmatpush1.bf16.msra.mxu0 %v2069
        %3001 = vmatprep.subr.bf16.mxu0 %v2078
        %3002 = vmatpush1.bf16.msra.mxu0 %v2077
        %3003 = vmatprep.subr.bf16.mxu0 %v2086
        %3004 = vmatpush1.bf16.msra.mxu0 %v2085
        %3005 = vmatprep.subr.bf16.mxu0 %v2094
        %3006 = vmatpush1.bf16.msra.mxu0 %v2093
        %3007 = vmatprep.subr.bf16.mxu0 %v2102
        %3008 = vmatpush1.bf16.msra.mxu0 %v2101
        %3009 = vmatprep.subr.bf16.mxu0 %v2110
        %3010 = vmatpush1.bf16.msra.mxu0 %v2109
        %3011 = vmatprep.subr.bf16.mxu0 %v2118
        %3012 = vmatpush1.bf16.msra.mxu0 %v2117
        %3013 = vmatprep.subr.bf16.mxu0 %v2126
        %3014 = vmatpush1.bf16.msra.mxu0 %v2125
        %3015 = vmatprep.subr.bf16.mxu0 %v2134
        %3016 = vmatpush1.bf16.msra.mxu0 %v2133
        %3017 = vmatprep.subr.bf16.mxu0 %v2142
        %3018 = vmatpush1.bf16.msra.mxu0 %v2141
        %3019 = vmatprep.subr.bf16.mxu0 %v2150
        %3020 = vmatpush1.bf16.msra.mxu0 %v2149
        %3021 = vmatprep.subr.bf16.mxu0 %v2158
        %3022 = vmatpush1.bf16.msra.mxu0 %v2157
        %3023 = vmatprep.subr.bf16.mxu0 %v2166
        %3024 = vmatpush1.bf16.msra.mxu0 %v2165
        %3025 = vmatprep.subr.bf16.mxu0 %v2174
        %3026 = vmatpush1.bf16.msra.mxu0 %v2173
        %3027 = vmatprep.subr.bf16.mxu0 %v2182
        %3028 = vmatpush1.bf16.msra.mxu0 %v2181
        %3029 = vmatprep.mubr.bf16.mxu0 %v639
        %3030 = vmatmul.mubr.bf16.gmra.mrb[0].mxu0 %v633
        %v3031 = vpop.f32.mrb[0].mxu0
        %v3032 = vadd.f32 %v2989, %v3031
        %v3033 = vpop.f32.mrb[0].mxu0
        %v3034 = vadd.f32 %v2991, %v3033
        %v3035 = vpop.f32.mrb[0].mxu0
        %v3036 = vadd.f32 %v2993, %v3035
        %v3037 = vpop.f32.mrb[0].mxu0
        %v3038 = vadd.f32 %v2995, %v3037
        %3039 = vdwg.mxu0
        %3040 = vmatprep.subr.bf16.mxu0 %v2190
        %3041 = vmatpush1.bf16.msra.mxu0 %v2189
        %3042 = vmatprep.subr.bf16.mxu0 %v2198
        %3043 = vmatpush1.bf16.msra.mxu0 %v2197
        %3044 = vmatprep.subr.bf16.mxu0 %v2206
        %3045 = vmatpush1.bf16.msra.mxu0 %v2205
        %3046 = vmatprep.subr.bf16.mxu0 %v2214
        %3047 = vmatpush1.bf16.msra.mxu0 %v2213
        %3048 = vmatprep.subr.bf16.mxu0 %v2222
        %3049 = vmatpush1.bf16.msra.mxu0 %v2221
        %3050 = vmatprep.subr.bf16.mxu0 %v2230
        %3051 = vmatpush1.bf16.msra.mxu0 %v2229
        %3052 = vmatprep.subr.bf16.mxu0 %v2238
        %3053 = vmatpush1.bf16.msra.mxu0 %v2237
        %3054 = vmatprep.subr.bf16.mxu0 %v2246
        %3055 = vmatpush1.bf16.msra.mxu0 %v2245
        %3056 = vmatprep.subr.bf16.mxu0 0
        %3057 = vmatpush1.bf16.msra.mxu0 0
        %3058 = vmatprep.subr.bf16.mxu0 0
        %3059 = vmatpush1.bf16.msra.mxu0 0
        %3060 = vmatprep.subr.bf16.mxu0 0
        %3061 = vmatpush1.bf16.msra.mxu0 0
        %3062 = vmatprep.subr.bf16.mxu0 0
        %3063 = vmatpush1.bf16.msra.mxu0 0
        %3064 = vmatprep.subr.bf16.mxu0 0
        %3065 = vmatpush1.bf16.msra.mxu0 0
        %3066 = vmatprep.subr.bf16.mxu0 0
        %3067 = vmatpush1.bf16.msra.mxu0 0
        %3068 = vmatprep.subr.bf16.mxu0 0
        %3069 = vmatpush1.bf16.msra.mxu0 0
        %3070 = vmatprep.subr.bf16.mxu0 0
        %3071 = vmatpush1.bf16.msra.mxu0 0
        %3072 = vmatprep.mubr.bf16.mxu0 0
        %3073 = vmatmul.mubr.bf16.gmra.mrb[0].mxu0 %v645
        %v3074 = vpop.f32.mrb[0].mxu0
        %v3075 = vadd.f32 %v3032, %v3074
        %v3076 = vpop.f32.mrb[0].mxu0
        %v3077 = vadd.f32 %v3034, %v3076
        %v3078 = vpop.f32.mrb[0].mxu0
        %v3079 = vadd.f32 %v3036, %v3078
        %v3080 = vpop.f32.mrb[0].mxu0
        %v3081 = vadd.f32 %v3038, %v3080
        %3082 = vdwg.mxu0
        %v3083 = vld [vmem:[#allocation4] sm:$0xff]
        %v3085 = vlaneseq
        %v3086 = vshrl.u32 %v3085, 7
        %v3087 = vsub.s32 0, %v3086
        %v3088 = vrot.slane %v3083, %v3087
        %v3089 = vlaneseq
        %v3090 = vshrl.u32 %v3089, 7
        %v3091 = vsub.s32 1, %v3090
        %v3092 = vrot.slane %v3083, %v3091
        %v3093 = vlaneseq
        %v3094 = vshrl.u32 %v3093, 7
        %v3095 = vsub.s32 2, %v3094
        %v3096 = vrot.slane %v3083, %v3095
        %v3097 = vlaneseq
        %v3098 = vshrl.u32 %v3097, 7
        %v3099 = vsub.s32 3, %v3098
        %v3100 = vrot.slane %v3083, %v3099
        %v3101 = vlaneseq
        %v3102 = vshrl.u32 %v3101, 7
        %v3103 = vsub.s32 4, %v3102
        %v3104 = vrot.slane %v3083, %v3103
        %v3105 = vlaneseq
        %v3106 = vshrl.u32 %v3105, 7
        %v3107 = vsub.s32 5, %v3106
        %v3108 = vrot.slane %v3083, %v3107
        %v3109 = vlaneseq
        %v3110 = vshrl.u32 %v3109, 7
        %v3111 = vsub.s32 6, %v3110
        %v3112 = vrot.slane %v3083, %v3111
        %v3113 = vlaneseq
        %v3114 = vshrl.u32 %v3113, 7
        %v3115 = vsub.s32 7, %v3114
        %v3116 = vrot.slane %v3083, %v3115
        %v3125 = vmul.f32 %v2688, %v3088
        %v3126 = vmul.f32 %v2690, %v3092
        %v3127 = vmul.f32 %v2817, %v3096
        %v3128 = vmul.f32 %v2819, %v3100
        %v3129 = vmul.f32 %v2946, %v3104
        %v3130 = vmul.f32 %v2948, %v3108
        %v3131 = vmul.f32 %v3075, %v3112
        %v3132 = vmul.f32 %v3077, %v3116
        %v3133 = vmul.f32 %v2692, %v3088
        %v3134 = vmul.f32 %v2694, %v3092
        %v3135 = vmul.f32 %v2821, %v3096
        %v3136 = vmul.f32 %v2823, %v3100
        %v3137 = vmul.f32 %v2950, %v3104
        %v3138 = vmul.f32 %v2952, %v3108
        %v3139 = vmul.f32 %v3079, %v3112
        %v3140 = vmul.f32 %v3081, %v3116
        %v3141 = vld [vmem:[#allocation6] sm:$0xff]
        %v3143 = vlaneseq
        %v3144 = vshrl.u32 %v3143, 7
        %v3145 = vsub.s32 0, %v3144
        %v3146 = vrot.slane %v3141, %v3145
        %v3147 = vlaneseq
        %v3148 = vshrl.u32 %v3147, 7
        %v3149 = vsub.s32 1, %v3148
        %v3150 = vrot.slane %v3141, %v3149
        %v3151 = vlaneseq
        %v3152 = vshrl.u32 %v3151, 7
        %v3153 = vsub.s32 2, %v3152
        %v3154 = vrot.slane %v3141, %v3153
        %v3155 = vlaneseq
        %v3156 = vshrl.u32 %v3155, 7
        %v3157 = vsub.s32 3, %v3156
        %v3158 = vrot.slane %v3141, %v3157
        %v3159 = vlaneseq
        %v3160 = vshrl.u32 %v3159, 7
        %v3161 = vsub.s32 4, %v3160
        %v3162 = vrot.slane %v3141, %v3161
        %v3163 = vlaneseq
        %v3164 = vshrl.u32 %v3163, 7
        %v3165 = vsub.s32 5, %v3164
        %v3166 = vrot.slane %v3141, %v3165
        %v3167 = vlaneseq
        %v3168 = vshrl.u32 %v3167, 7
        %v3169 = vsub.s32 6, %v3168
        %v3170 = vrot.slane %v3141, %v3169
        %v3171 = vlaneseq
        %v3172 = vshrl.u32 %v3171, 7
        %v3173 = vsub.s32 7, %v3172
        %v3174 = vrot.slane %v3141, %v3173
        %v3183 = vadd.f32 %v3125, %v3146
        %v3184 = vadd.f32 %v3126, %v3150
        %v3185 = vadd.f32 %v3127, %v3154
        %v3186 = vadd.f32 %v3128, %v3158
        %v3187 = vadd.f32 %v3129, %v3162
        %v3188 = vadd.f32 %v3130, %v3166
        %v3189 = vadd.f32 %v3131, %v3170
        %v3190 = vadd.f32 %v3132, %v3174
        %v3191 = vadd.f32 %v3133, %v3146
        %v3192 = vadd.f32 %v3134, %v3150
        %v3193 = vadd.f32 %v3135, %v3154
        %v3194 = vadd.f32 %v3136, %v3158
        %v3195 = vadd.f32 %v3137, %v3162
        %v3196 = vadd.f32 %v3138, %v3166
        %v3197 = vadd.f32 %v3139, %v3170
        %v3198 = vadd.f32 %v3140, %v3174
        %vm3199 = vcmp.ge.f32.partialorder %v3183, 0.0
        %vm3200 = vcmp.ge.f32.partialorder %v3184, 0.0
        %vm3201 = vcmp.ge.f32.partialorder %v3185, 0.0
        %vm3202 = vcmp.ge.f32.partialorder %v3186, 0.0
        %vm3203 = vcmp.ge.f32.partialorder %v3187, 0.0
        %vm3204 = vcmp.ge.f32.partialorder %v3188, 0.0
        %vm3205 = vcmp.ge.f32.partialorder %v3189, 0.0
        %vm3206 = vcmp.ge.f32.partialorder %v3190, 0.0
        %vm3207 = vcmp.ge.f32.partialorder %v3191, 0.0
        %vm3208 = vcmp.ge.f32.partialorder %v3192, 0.0
        %vm3209 = vcmp.ge.f32.partialorder %v3193, 0.0
        %vm3210 = vcmp.ge.f32.partialorder %v3194, 0.0
        %vm3211 = vcmp.ge.f32.partialorder %v3195, 0.0
        %vm3212 = vcmp.ge.f32.partialorder %v3196, 0.0
        %vm3213 = vcmp.ge.f32.partialorder %v3197, 0.0
        %vm3214 = vcmp.ge.f32.partialorder %v3198, 0.0
        %v3215 = vmul.f32 %v3183, 0.2
        %v3216 = vmul.f32 %v3184, 0.2
        %v3217 = vmul.f32 %v3185, 0.2
        %v3218 = vmul.f32 %v3186, 0.2
        %v3219 = vmul.f32 %v3187, 0.2
        %v3220 = vmul.f32 %v3188, 0.2
        %v3221 = vmul.f32 %v3189, 0.2
        %v3222 = vmul.f32 %v3190, 0.2
        %v3223 = vmul.f32 %v3191, 0.2
        %v3224 = vmul.f32 %v3192, 0.2
        %v3225 = vmul.f32 %v3193, 0.2
        %v3226 = vmul.f32 %v3194, 0.2
        %v3227 = vmul.f32 %v3195, 0.2
        %v3228 = vmul.f32 %v3196, 0.2
        %v3229 = vmul.f32 %v3197, 0.2
        %v3230 = vmul.f32 %v3198, 0.2
        %v3231 = vsel %vm3199, %v3183, %v3215
        %v3232 = vsel %vm3200, %v3184, %v3216
        %v3233 = vsel %vm3201, %v3185, %v3217
        %v3234 = vsel %vm3202, %v3186, %v3218
        %v3235 = vsel %vm3203, %v3187, %v3219
        %v3236 = vsel %vm3204, %v3188, %v3220
        %v3237 = vsel %vm3205, %v3189, %v3221
        %v3238 = vsel %vm3206, %v3190, %v3222
        %v3239 = vsel %vm3207, %v3191, %v3223
        %v3240 = vsel %vm3208, %v3192, %v3224
        %v3241 = vsel %vm3209, %v3193, %v3225
        %v3242 = vsel %vm3210, %v3194, %v3226
        %v3243 = vsel %vm3211, %v3195, %v3227
        %v3244 = vsel %vm3212, %v3196, %v3228
        %v3245 = vsel %vm3213, %v3197, %v3229
        %v3246 = vsel %vm3214, %v3198, %v3230
        %v3247 = vpack.c.bf16 %v3239, %v3231
        %v3248 = vpack.c.bf16 %v3240, %v3232
        %v3249 = vpack.c.bf16 %v3241, %v3233
        %v3250 = vpack.c.bf16 %v3242, %v3234
        %v3251 = vpack.c.bf16 %v3243, %v3235
        %v3252 = vpack.c.bf16 %v3244, %v3236
        %v3253 = vpack.c.bf16 %v3245, %v3237
        %v3254 = vpack.c.bf16 %v3246, %v3238
        %v3263 = vunpack.c.l.b16 %v3247
        %v3264 = vunpack.c.l.b16 %v3248
        %v3265 = vunpack.c.l.b16 %v3249
        %v3266 = vunpack.c.l.b16 %v3250
        %v3267 = vunpack.c.l.b16 %v3251
        %v3268 = vunpack.c.l.b16 %v3252
        %v3269 = vunpack.c.l.b16 %v3253
        %v3270 = vunpack.c.l.b16 %v3254
        %v3271 = vunpack.c.h.b16 %v3247
        %v3272 = vunpack.c.h.b16 %v3248
        %v3273 = vunpack.c.h.b16 %v3249
        %v3274 = vunpack.c.h.b16 %v3250
        %v3275 = vunpack.c.h.b16 %v3251
        %v3276 = vunpack.c.h.b16 %v3252
        %v3277 = vunpack.c.h.b16 %v3253
        %v3278 = vunpack.c.h.b16 %v3254
        %v3279 = vpack.c.b16 %v3264, %v3263
        %v3280 = vpack.c.b16 %v3266, %v3265
        %v3281 = vpack.c.b16 %v3268, %v3267
        %v3282 = vpack.c.b16 %v3270, %v3269
        %v3283 = vpack.c.b16 %v3272, %v3271
        %v3284 = vpack.c.b16 %v3274, %v3273
        %v3285 = vpack.c.b16 %v3276, %v3275
        %v3286 = vpack.c.b16 %v3278, %v3277
        %3295 = vst [vmem:[%s596] sm:$0xff] %v3279
        %3296 = vst [vmem:[%s596 + $0x8] sm:$0xff] %v3280
        %3297 = vst [vmem:[%s596 + $0x10] sm:$0xff] %v3281
        %3298 = vst [vmem:[%s596 + $0x18] sm:$0xff] %v3282
        %3299 = vst [vmem:[%s596 + $0x20] sm:$0xff] %v3283
        %3300 = vst [vmem:[%s596 + $0x28] sm:$0xff] %v3284
        %3301 = vst [vmem:[%s596 + $0x30] sm:$0xff] %v3285
        %3302 = vst [vmem:[%s596 + $0x38] sm:$0xff] %v3286
        %v3303 = vmax.f32 %v3231, %v3239
        %v3304 = vrot.slane %v3303, 4
        %v3305 = vmax.f32 %v3303, %v3304
        %v3306 = vrot.slane %v3305, 2
        %v3307 = vmax.f32 %v3305, %v3306
        %v3308 = vrot.slane %v3307, 1
        %v3309 = vmax.f32 %v3307, %v3308
        %v3310 = vmax.f32 %v3232, %v3240
        %v3311 = vrot.slane %v3310, 4
        %v3312 = vmax.f32 %v3310, %v3311
        %v3313 = vrot.slane %v3312, 2
        %v3314 = vmax.f32 %v3312, %v3313
        %v3315 = vrot.slane %v3314, 1
        %v3316 = vmax.f32 %v3314, %v3315
        %v3317 = vmax.f32 %v3233, %v3241
        %v3318 = vrot.slane %v3317, 4
        %v3319 = vmax.f32 %v3317, %v3318
        %v3320 = vrot.slane %v3319, 2
        %v3321 = vmax.f32 %v3319, %v3320
        %v3322 = vrot.slane %v3321, 1
        %v3323 = vmax.f32 %v3321, %v3322
        %v3324 = vmax.f32 %v3234, %v3242
        %v3325 = vrot.slane %v3324, 4
        %v3326 = vmax.f32 %v3324, %v3325
        %v3327 = vrot.slane %v3326, 2
        %v3328 = vmax.f32 %v3326, %v3327
        %v3329 = vrot.slane %v3328, 1
        %v3330 = vmax.f32 %v3328, %v3329
        %v3331 = vmax.f32 %v3235, %v3243
        %v3332 = vrot.slane %v3331, 4
        %v3333 = vmax.f32 %v3331, %v3332
        %v3334 = vrot.slane %v3333, 2
        %v3335 = vmax.f32 %v3333, %v3334
        %v3336 = vrot.slane %v3335, 1
        %v3337 = vmax.f32 %v3335, %v3336
        %v3338 = vmax.f32 %v3236, %v3244
        %v3339 = vrot.slane %v3338, 4
        %v3340 = vmax.f32 %v3338, %v3339
        %v3341 = vrot.slane %v3340, 2
        %v3342 = vmax.f32 %v3340, %v3341
        %v3343 = vrot.slane %v3342, 1
        %v3344 = vmax.f32 %v3342, %v3343
        %v3345 = vmax.f32 %v3237, %v3245
        %v3346 = vrot.slane %v3345, 4
        %v3347 = vmax.f32 %v3345, %v3346
        %v3348 = vrot.slane %v3347, 2
        %v3349 = vmax.f32 %v3347, %v3348
        %v3350 = vrot.slane %v3349, 1
        %v3351 = vmax.f32 %v3349, %v3350
        %v3352 = vmax.f32 %v3238, %v3246
        %v3353 = vrot.slane %v3352, 4
        %v3354 = vmax.f32 %v3352, %v3353
        %v3355 = vrot.slane %v3354, 2
        %v3356 = vmax.f32 %v3354, %v3355
        %v3357 = vrot.slane %v3356, 1
        %v3358 = vmax.f32 %v3356, %v3357
        %v3359 = vadd.f32 %v3231, %v3239
        %v3360 = vrot.slane %v3359, 4
        %v3361 = vadd.f32 %v3359, %v3360
        %v3362 = vrot.slane %v3361, 2
        %v3363 = vadd.f32 %v3361, %v3362
        %v3364 = vrot.slane %v3363, 1
        %v3365 = vadd.f32 %v3363, %v3364
        %v3366 = vadd.f32 %v3232, %v3240
        %v3367 = vrot.slane %v3366, 4
        %v3368 = vadd.f32 %v3366, %v3367
        %v3369 = vrot.slane %v3368, 2
        %v3370 = vadd.f32 %v3368, %v3369
        %v3371 = vrot.slane %v3370, 1
        %v3372 = vadd.f32 %v3370, %v3371
        %v3373 = vadd.f32 %v3233, %v3241
        %v3374 = vrot.slane %v3373, 4
        %v3375 = vadd.f32 %v3373, %v3374
        %v3376 = vrot.slane %v3375, 2
        %v3377 = vadd.f32 %v3375, %v3376
        %v3378 = vrot.slane %v3377, 1
        %v3379 = vadd.f32 %v3377, %v3378
        %v3380 = vadd.f32 %v3234, %v3242
        %v3381 = vrot.slane %v3380, 4
        %v3382 = vadd.f32 %v3380, %v3381
        %v3383 = vrot.slane %v3382, 2
        %v3384 = vadd.f32 %v3382, %v3383
        %v3385 = vrot.slane %v3384, 1
        %v3386 = vadd.f32 %v3384, %v3385
        %v3387 = vadd.f32 %v3235, %v3243
        %v3388 = vrot.slane %v3387, 4
        %v3389 = vadd.f32 %v3387, %v3388
        %v3390 = vrot.slane %v3389, 2
        %v3391 = vadd.f32 %v3389, %v3390
        %v3392 = vrot.slane %v3391, 1
        %v3393 = vadd.f32 %v3391, %v3392
        %v3394 = vadd.f32 %v3236, %v3244
        %v3395 = vrot.slane %v3394, 4
        %v3396 = vadd.f32 %v3394, %v3395
        %v3397 = vrot.slane %v3396, 2
        %v3398 = vadd.f32 %v3396, %v3397
        %v3399 = vrot.slane %v3398, 1
        %v3400 = vadd.f32 %v3398, %v3399
        %v3401 = vadd.f32 %v3237, %v3245
        %v3402 = vrot.slane %v3401, 4
        %v3403 = vadd.f32 %v3401, %v3402
        %v3404 = vrot.slane %v3403, 2
        %v3405 = vadd.f32 %v3403, %v3404
        %v3406 = vrot.slane %v3405, 1
        %v3407 = vadd.f32 %v3405, %v3406
        %v3408 = vadd.f32 %v3238, %v3246
        %v3409 = vrot.slane %v3408, 4
        %v3410 = vadd.f32 %v3408, %v3409
        %v3411 = vrot.slane %v3410, 2
        %v3412 = vadd.f32 %v3410, %v3411
        %v3413 = vrot.slane %v3412, 1
        %v3414 = vadd.f32 %v3412, %v3413
        %p3415 = scmp.eq.s32.totalorder %s29, 0
        // Predicated region
        $region65: #{pct_forward.14} parent=51 // pred_check
          %p3416 = pneg %p3415
        $region66: #{pct_forward.14} parent=51 // pred_check_branch
          %3418 = sbr.rel (%p3416) target = $region68
        $region67: #{pct_forward.14} parent=51 // pred_region
          %v3427 = vcombine.low %v3309, %v3316
          %v3428 = vcombine.low %v3323, %v3330
          %v3429 = vcombine.low %v3337, %v3344
          %v3430 = vcombine.low %v3351, %v3358
          %v3432 = vunpack.c.l.s4 1966171168
          %v3433 = vunpack.c.0.s8 %v3432
          %v3434 = vlaneseq
          %v3435 = vshrl.u32 %v3434, 7
          %v3436 = vsub.s32 %v3433, %v3435
          %v3437 = vrot.slane %v3427, %v3436
          %v3439 = vunpack.c.l.s4 1966171168
          %v3440 = vunpack.c.0.s8 %v3439
          %v3441 = vlaneseq
          %v3442 = vshrl.u32 %v3441, 7
          %v3443 = vsub.s32 %v3440, %v3442
          %v3444 = vrot.slane %v3428, %v3443
          %v3446 = vunpack.c.l.s4 1966171168
          %v3447 = vunpack.c.0.s8 %v3446
          %v3448 = vlaneseq
          %v3449 = vshrl.u32 %v3448, 7
          %v3450 = vsub.s32 %v3447, %v3449
          %v3451 = vrot.slane %v3429, %v3450
          %v3453 = vunpack.c.l.s4 1966171168
          %v3454 = vunpack.c.0.s8 %v3453
          %v3455 = vlaneseq
          %v3456 = vshrl.u32 %v3455, 7
          %v3457 = vsub.s32 %v3454, %v3456
          %v3458 = vrot.slane %v3430, %v3457
          %v3459 = vcombine.low %v3437, %v3444
          %v3460 = vcombine.low %v3451, %v3458
          %v3462 = vunpack.c.l.s4 1966171168
          %v3463 = vunpack.c.0.s8 %v3462
          %v3464 = vlaneseq
          %v3465 = vshrl.u32 %v3464, 7
          %v3466 = vsub.s32 %v3463, %v3465
          %v3467 = vrot.slane %v3459, %v3466
          %v3469 = vunpack.c.l.s4 1966171168
          %v3470 = vunpack.c.0.s8 %v3469
          %v3471 = vlaneseq
          %v3472 = vshrl.u32 %v3471, 7
          %v3473 = vsub.s32 %v3470, %v3472
          %v3474 = vrot.slane %v3460, %v3473
          %v3475 = vcombine.low %v3467, %v3474
          %3477 = vst [vmem:[%s601] sm:$0xff] %v3475
          %v3486 = vcombine.low %v3365, %v3372
          %v3487 = vcombine.low %v3379, %v3386
          %v3488 = vcombine.low %v3393, %v3400
          %v3489 = vcombine.low %v3407, %v3414
          %v3491 = vunpack.c.l.s4 1966171168
          %v3492 = vunpack.c.0.s8 %v3491
          %v3493 = vlaneseq
          %v3494 = vshrl.u32 %v3493, 7
          %v3495 = vsub.s32 %v3492, %v3494
          %v3496 = vrot.slane %v3486, %v3495
          %v3498 = vunpack.c.l.s4 1966171168
          %v3499 = vunpack.c.0.s8 %v3498
          %v3500 = vlaneseq
          %v3501 = vshrl.u32 %v3500, 7
          %v3502 = vsub.s32 %v3499, %v3501
          %v3503 = vrot.slane %v3487, %v3502
          %v3505 = vunpack.c.l.s4 1966171168
          %v3506 = vunpack.c.0.s8 %v3505
          %v3507 = vlaneseq
          %v3508 = vshrl.u32 %v3507, 7
          %v3509 = vsub.s32 %v3506, %v3508
          %v3510 = vrot.slane %v3488, %v3509
          %v3512 = vunpack.c.l.s4 1966171168
          %v3513 = vunpack.c.0.s8 %v3512
          %v3514 = vlaneseq
          %v3515 = vshrl.u32 %v3514, 7
          %v3516 = vsub.s32 %v3513, %v3515
          %v3517 = vrot.slane %v3489, %v3516
          %v3518 = vcombine.low %v3496, %v3503
          %v3519 = vcombine.low %v3510, %v3517
          %v3521 = vunpack.c.l.s4 1966171168
          %v3522 = vunpack.c.0.s8 %v3521
          %v3523 = vlaneseq
          %v3524 = vshrl.u32 %v3523, 7
          %v3525 = vsub.s32 %v3522, %v3524
          %v3526 = vrot.slane %v3518, %v3525
          %v3528 = vunpack.c.l.s4 1966171168
          %v3529 = vunpack.c.0.s8 %v3528
          %v3530 = vlaneseq
          %v3531 = vshrl.u32 %v3530, 7
          %v3532 = vsub.s32 %v3529, %v3531
          %v3533 = vrot.slane %v3519, %v3532
          %v3534 = vcombine.low %v3526, %v3533
          %3536 = vst [vmem:[%s605] sm:$0xff] %v3534
        $region68: #{pct_forward.14} parent=51 // pred_fallthru
          _
        %p3537 = scmp.gt.s32.totalorder %s29, 0
        // Predicated region
        $region69: #{pct_forward.14} parent=51 // pred_check
          %p3538 = pneg %p3537
        $region70: #{pct_forward.14} parent=51 // pred_check_branch
          %3540 = sbr.rel (%p3538) target = $region72
        $region71: #{pct_forward.14} parent=51 // pred_region
          %v3541 = vld [vmem:[%s601] sm:$0xff]
          %v3550 = vcombine.low %v3309, %v3316
          %v3551 = vcombine.low %v3323, %v3330
          %v3552 = vcombine.low %v3337, %v3344
          %v3553 = vcombine.low %v3351, %v3358
          %v3555 = vunpack.c.l.s4 1966171168
          %v3556 = vunpack.c.0.s8 %v3555
          %v3557 = vlaneseq
          %v3558 = vshrl.u32 %v3557, 7
          %v3559 = vsub.s32 %v3556, %v3558
          %v3560 = vrot.slane %v3550, %v3559
          %v3562 = vunpack.c.l.s4 1966171168
          %v3563 = vunpack.c.0.s8 %v3562
          %v3564 = vlaneseq
          %v3565 = vshrl.u32 %v3564, 7
          %v3566 = vsub.s32 %v3563, %v3565
          %v3567 = vrot.slane %v3551, %v3566
          %v3569 = vunpack.c.l.s4 1966171168
          %v3570 = vunpack.c.0.s8 %v3569
          %v3571 = vlaneseq
          %v3572 = vshrl.u32 %v3571, 7
          %v3573 = vsub.s32 %v3570, %v3572
          %v3574 = vrot.slane %v3552, %v3573
          %v3576 = vunpack.c.l.s4 1966171168
          %v3577 = vunpack.c.0.s8 %v3576
          %v3578 = vlaneseq
          %v3579 = vshrl.u32 %v3578, 7
          %v3580 = vsub.s32 %v3577, %v3579
          %v3581 = vrot.slane %v3553, %v3580
          %v3582 = vcombine.low %v3560, %v3567
          %v3583 = vcombine.low %v3574, %v3581
          %v3585 = vunpack.c.l.s4 1966171168
          %v3586 = vunpack.c.0.s8 %v3585
          %v3587 = vlaneseq
          %v3588 = vshrl.u32 %v3587, 7
          %v3589 = vsub.s32 %v3586, %v3588
          %v3590 = vrot.slane %v3582, %v3589
          %v3592 = vunpack.c.l.s4 1966171168
          %v3593 = vunpack.c.0.s8 %v3592
          %v3594 = vlaneseq
          %v3595 = vshrl.u32 %v3594, 7
          %v3596 = vsub.s32 %v3593, %v3595
          %v3597 = vrot.slane %v3583, %v3596
          %v3598 = vcombine.low %v3590, %v3597
          %v3600 = vmax.f32 %v3541, %v3598
          %3601 = vst [vmem:[%s601] sm:$0xff] %v3600
          %v3602 = vld [vmem:[%s605] sm:$0xff]
          %v3611 = vcombine.low %v3365, %v3372
          %v3612 = vcombine.low %v3379, %v3386
          %v3613 = vcombine.low %v3393, %v3400
          %v3614 = vcombine.low %v3407, %v3414
          %v3616 = vunpack.c.l.s4 1966171168
          %v3617 = vunpack.c.0.s8 %v3616
          %v3618 = vlaneseq
          %v3619 = vshrl.u32 %v3618, 7
          %v3620 = vsub.s32 %v3617, %v3619
          %v3621 = vrot.slane %v3611, %v3620
          %v3623 = vunpack.c.l.s4 1966171168
          %v3624 = vunpack.c.0.s8 %v3623
          %v3625 = vlaneseq
          %v3626 = vshrl.u32 %v3625, 7
          %v3627 = vsub.s32 %v3624, %v3626
          %v3628 = vrot.slane %v3612, %v3627
          %v3630 = vunpack.c.l.s4 1966171168
          %v3631 = vunpack.c.0.s8 %v3630
          %v3632 = vlaneseq
          %v3633 = vshrl.u32 %v3632, 7
          %v3634 = vsub.s32 %v3631, %v3633
          %v3635 = vrot.slane %v3613, %v3634
          %v3637 = vunpack.c.l.s4 1966171168
          %v3638 = vunpack.c.0.s8 %v3637
          %v3639 = vlaneseq
          %v3640 = vshrl.u32 %v3639, 7
          %v3641 = vsub.s32 %v3638, %v3640
          %v3642 = vrot.slane %v3614, %v3641
          %v3643 = vcombine.low %v3621, %v3628
          %v3644 = vcombine.low %v3635, %v3642
          %v3646 = vunpack.c.l.s4 1966171168
          %v3647 = vunpack.c.0.s8 %v3646
          %v3648 = vlaneseq
          %v3649 = vshrl.u32 %v3648, 7
          %v3650 = vsub.s32 %v3647, %v3649
          %v3651 = vrot.slane %v3643, %v3650
          %v3653 = vunpack.c.l.s4 1966171168
          %v3654 = vunpack.c.0.s8 %v3653
          %v3655 = vlaneseq
          %v3656 = vshrl.u32 %v3655, 7
          %v3657 = vsub.s32 %v3654, %v3656
          %v3658 = vrot.slane %v3644, %v3657
          %v3659 = vcombine.low %v3651, %v3658
          %v3661 = vadd.f32 %v3602, %v3659
          %3662 = vst [vmem:[%s605] sm:$0xff] %v3661
        $region72: #{pct_forward.14} parent=51 // pred_fallthru
          _
        // Predicated region
        $region73: #{pct_forward.14} parent=51 // pred_check
          %p3663 = pneg %p3415
        $region74: #{pct_forward.14} parent=51 // pred_check_branch
          %3665 = sbr.rel (%p3663) target = $region76
        $region75: #{pct_forward.14} parent=51 // pred_region
          %v3666 = vld [vmem:[%s605] sm:$0xff]
          %v3667 = vmul.f32 %v3666, 0.0625
          %3668 = vst [vmem:[%s605] sm:$0xff] %v3667
        $region76: #{pct_forward.14} parent=51 // pred_fallthru
          _
        %s3669 = smul.u32 2, %s29
        %p3670 = scmp.lt.s32.totalorder %s28, 1
        %s3671 = scalar_select %p3670, %s28, 1
        %p3672 = scmp.lt.s32.totalorder %s3669, 1
        %s3673 = scalar_select %p3672, %s3669, 1
        %s3674 = smul.addr %s3673, 8
        %s3675 = smul.addr %s3671, 16
        %s3676 = sadd.s32 %s3674, %s3675
        %s3677 = smul.addr %s3676, 4
        %s3678 = scalar_lea.vmem %s8, %s3677
        %p3679 = scmp.lt.s32.totalorder %s28, 1
        %s3680 = scalar_select %p3679, %s28, 1
        %s3681 = smul.addr %s3680, 8
        %s3682 = scalar_lea.vmem %s9, %s3681
        %p3683 = scmp.lt.s32.totalorder %s28, 1
        %s3684 = scalar_select %p3683, %s28, 1
        %s3685 = smul.addr %s3684, 8
        %s3686 = scalar_lea.vmem %s10, %s3685
        // Predicated region
        $region77: #{pct_forward.14} parent=51 // pred_check
          %p3687 = pneg %p259
        $region78: #{pct_forward.14} parent=51 // pred_check_branch
          %3689 = sbr.rel (%p3687) target = $region80
        $region79: #{pct_forward.14} parent=51 // pred_region
          %s3690 = smul.u32 2, %s29
        $region80: #{pct_forward.14} parent=51 // pred_fallthru
          _
        // Predicated region
        $region81: #{pct_forward.14} parent=51 // pred_check
          %p3691 = pneg %p285
        $region82: #{pct_forward.14} parent=51 // pred_check_branch
          %3693 = sbr.rel (%p3691) target = $region84
        $region83: #{pct_forward.14} parent=51 // pred_region
          _
        $region84: #{pct_forward.14} parent=51 // pred_fallthru
          _
        // Predicated region
        $region85: #{pct_forward.14} parent=51 // pred_check
          %p3694 = pneg %p311
        $region86: #{pct_forward.14} parent=51 // pred_check_branch
          %3696 = sbr.rel (%p3694) target = $region88
        $region87: #{pct_forward.14} parent=51 // pred_region
          _
        $region88: #{pct_forward.14} parent=51 // pred_fallthru
          _
      $region52: #{pct_forward.14} parent=5 // pred_fallthru
        _
      %p3697 = scmp.le.s32.totalorder 2, %s19
      // Predicated region
      $region89: #{pct_forward.14} parent=5 // pred_check
        %p3698 = pneg %p3697
      $region90: #{pct_forward.14} parent=5 // pred_check_branch
        %3700 = sbr.rel (%p3698) target = $region92
      $region91: #{pct_forward.14} parent=5 // pred_region
        %s3701 = ssub.s32 %s19, 2
        // Predicated region
        $region93: #{pct_forward.14} parent=91 // pred_check
          %p3702 = pneg %p265
        $region94: #{pct_forward.14} parent=91 // pred_check_branch
          %3704 = sbr.rel (%p3702) target = $region96
        $region95: #{pct_forward.14} parent=91 // pred_region
          %s3705 = smul.u32 2, %s31
          %p3706 = scmp.lt.s32.totalorder %s30, 1
          %s3707 = scalar_select %p3706, %s30, 1
          %p3708 = scmp.lt.s32.totalorder %s3705, 1
          %s3709 = scalar_select %p3708, %s3705, 1
          %s3710 = smul.addr %s3709, 8
          %s3711 = smul.addr %s3707, 16
          %s3712 = sadd.s32 %s3710, %s3711
          %s3713 = smul.addr %s3712, 4
          %s3714 = scalar_lea.vmem %s8, %s3713
        $region96: #{pct_forward.14} parent=91 // pred_fallthru
          _
        // Predicated region
        $region97: #{pct_forward.14} parent=91 // pred_check
          %p3715 = pneg %p291
        $region98: #{pct_forward.14} parent=91 // pred_check_branch
          %3717 = sbr.rel (%p3715) target = $region100
        $region99: #{pct_forward.14} parent=91 // pred_region
          %p3718 = scmp.lt.s32.totalorder %s30, 1
          %s3719 = scalar_select %p3718, %s30, 1
          %s3720 = smul.addr %s3719, 8
          %s3721 = scalar_lea.vmem %s9, %s3720
        $region100: #{pct_forward.14} parent=91 // pred_fallthru
          _
        // Predicated region
        $region101: #{pct_forward.14} parent=91 // pred_check
          %p3722 = pneg %p317
        $region102: #{pct_forward.14} parent=91 // pred_check_branch
          %3724 = sbr.rel (%p3722) target = $region104
        $region103: #{pct_forward.14} parent=91 // pred_region
          %p3725 = scmp.lt.s32.totalorder %s30, 1
          %s3726 = scalar_select %p3725, %s30, 1
          %s3727 = smul.addr %s3726, 8
          %s3728 = scalar_lea.vmem %s10, %s3727
        $region104: #{pct_forward.14} parent=91 // pred_fallthru
          _
      $region92: #{pct_forward.14} parent=5 // pred_fallthru
        _
    $region6: #{pct_forward.14} parent=1 // loop_footer
      %s23 = sadd.s32 1, %s19
    $region7: #{pct_forward.14} parent=1 // loop_footer_branch
      %18 = sbr.rel target = $region3
    $region8: #{pct_forward.14} parent=1 // loop_exit
      _
    %3729 = vsyncpa [#allocation3], 1
    %s3730 = scalar_lea.sflag [#allocation3], 1
    %3731 = vsyncpa %s3730, 1
    %3732 = vsyncpa [#allocation5], 1

// kernel: pct_forward.15
$region0: #{pct_forward.15}
  #allocation0 [shape = 'u32[]', space=smem, size = 0x4, offset = 0x4, fixed_abs, tag = 'smem constant byte address 0x4 - core index']
  #allocation1 [shape = 'u32[144,128]{1,0:T(1,128)}', space=vmem, size = 0x12000, scoped, tag = 'internal scratch']
  %s0 = inlined_call_operand.vmem [shape: bf16[2,16,1024], index: 0, kind: input, shape index: {}]
  %s1 = inlined_call_operand.vmem [shape: f32[2,1,512], index: 1, kind: input, shape index: {}]
  %s2 = inlined_call_operand.vmem [shape: bf16[1024,512], index: 2, kind: input, shape index: {}]
  %s3 = inlined_call_operand.vmem [shape: f32[1,512], index: 3, kind: input, shape index: {}]
  %s4 = inlined_call_operand.vmem [shape: bf16[512,128], index: 4, kind: input, shape index: {}]
  %s5 = inlined_call_operand.vmem [shape: f32[1,128], index: 5, kind: input, shape index: {}]
  %s6 = inlined_call_operand.vmem [shape: f32[1,128], index: 6, kind: input, shape index: {}]
  %s7 = inlined_call_operand.vmem [shape: bf16[2,16,128], index: 7, kind: output, shape index: {}]
  %s8 = sld [smem:[#allocation0]]
  $region61: #{pct_forward.15} parent=0
    _
  %s10 = ssub.s32 1, %s8
  %s11 = scalar_select 0, %s10, %s8
  loop: start=0, step=1, limit=4
  $region2: #{pct_forward.15} parent=0 // loop_pre_header
    _
  $region3: #{pct_forward.15} parent=0 // loop_header
    %s13 = sphi 0, %s17
    %p14 = scmp.ge.s32.totalorder %s13, 4
    %s20 = sphi 0, %s32
    %s21 = sphi 0, %s28
    %s22 = sphi 0, %s20
    %s23 = sphi 0, %s21
    %s24 = sphi 0, %s22
    %s25 = sphi 0, %s23
    %s37 = sphi 0, %s39
    %s40 = sphi 0, %s37
    %s41 = sphi 0, %s40
    %s57 = sphi 0, %s41
    %s63 = sphi 0, %s65
    %s66 = sphi 0, %s63
    %s67 = sphi 0, %s66
    %s83 = sphi 0, %s67
    %s87 = sphi 0, %s87
    %s89 = sphi 0, %s87
    %s90 = sphi 0, %s89
    %s104 = sphi 0, %s90
    %s108 = sphi 0, %s108
    %s110 = sphi 0, %s108
    %s111 = sphi 0, %s110
    %s125 = sphi 0, %s111
    %s129 = sphi 0, %s129
    %s131 = sphi 0, %s129
    %s132 = sphi 0, %s131
    %s146 = sphi 0, %s132
    %s150 = sphi 0, %s150
    %s152 = sphi 0, %s150
    %s153 = sphi 0, %s152
    %s167 = sphi 0, %s153
    %s171 = sphi 0, %s171
    %s173 = sphi 0, %s171
    %s174 = sphi 0, %s173
    %s188 = sphi 0, %s174
    %s196 = sphi 0, %s198
    %s199 = sphi 0, %s196
    %s200 = sphi 0, %s199
    %s216 = sphi 0, %s200
  $region4: #{pct_forward.15} parent=0 // loop_header_branch
    %16 = sbr.rel (%p14) target = $region8
  $region5: #{pct_forward.15} parent=0 // loop_body
    %s18 = ssub.s32 %s13, 1
    %s19 = ssub.s32 %s13, 2
    %s26 = sadd.s32 1, %s21
    %p27 = scmp.ge.s32.totalorder %s26, 1
    %s28 = scalar_select %p27, 0, %s26
    %s29 = sadd.s32 1, %s20
    %s30 = scalar_select %p27, %s29, %s20
    %p31 = scmp.ge.s32.totalorder %s30, 2
    %s32 = scalar_select %p31, 0, %s30
    %s33 = ssub.s32 %s20, %s32
    %s34 = ssub.s32 %s21, %s28
    %s35 = sor.u32 %s33, %s34
    %p36 = scmp.eq.s32.totalorder %s35, 0
    %s38 = sadd.s32 %s37, 1
    %s39 = scalar_select %p36, %s37, %s38
    %p42 = pneg %p36
    %p43 = scmp.eq.s32.totalorder %s13, 1
    %p44 = por %p42, %p43
    %p45 = scmp.ne.s32.totalorder %s37, %s40
    %p46 = scmp.eq.s32.totalorder %s13, 0
    %p47 = por %p45, %p46
    %p48 = scmp.ne.s32.totalorder %s37, %s40
    %p49 = scmp.eq.s32.totalorder %s18, 1
    %p50 = por %p48, %p49
    %p51 = scmp.ne.s32.totalorder %s40, %s41
    %p52 = scmp.eq.s32.totalorder %s18, 0
    %p53 = por %p51, %p52
    %p54 = scmp.ne.s32.totalorder %s40, %s41
    %p55 = scmp.eq.s32.totalorder %s19, 1
    %p56 = por %p54, %p55
    %p58 = scmp.ne.s32.totalorder %s41, %s57
    %p59 = scmp.eq.s32.totalorder %s19, 0
    %p60 = por %p58, %p59
    %s61 = ssub.s32 %s20, %s32
    %p62 = scmp.eq.s32.totalorder %s61, 0
    %s64 = sadd.s32 %s63, 1
    %s65 = scalar_select %p62, %s63, %s64
    %p68 = pneg %p62
    %p69 = scmp.eq.s32.totalorder %s13, 1
    %p70 = por %p68, %p69
    %p71 = scmp.ne.s32.totalorder %s63, %s66
    %p72 = scmp.eq.s32.totalorder %s13, 0
    %p73 = por %p71, %p72
    %p74 = scmp.ne.s32.totalorder %s63, %s66
    %p75 = scmp.eq.s32.totalorder %s18, 1
    %p76 = por %p74, %p75
    %p77 = scmp.ne.s32.totalorder %s66, %s67
    %p78 = scmp.eq.s32.totalorder %s18, 0
    %p79 = por %p77, %p78
    %p80 = scmp.ne.s32.totalorder %s66, %s67
    %p81 = scmp.eq.s32.totalorder %s19, 1
    %p82 = por %p80, %p81
    %p84 = scmp.ne.s32.totalorder %s67, %s83
    %p85 = scmp.eq.s32.totalorder %s19, 0
    %p86 = por %p84, %p85
    %s88 = sadd.s32 %s87, 1
    %p91 = scmp.eq.s32.totalorder %s13, 1
    %p92 = scmp.ne.s32.totalorder %s87, %s89
    %p93 = scmp.eq.s32.totalorder %s13, 0
    %p94 = por %p92, %p93
    %p95 = scmp.ne.s32.totalorder %s87, %s89
    %p96 = scmp.eq.s32.totalorder %s18, 1
    %p97 = por %p95, %p96
    %p98 = scmp.ne.s32.totalorder %s89, %s90
    %p99 = scmp.eq.s32.totalorder %s18, 0
    %p100 = por %p98, %p99
    %p101 = scmp.ne.s32.totalorder %s89, %s90
    %p102 = scmp.eq.s32.totalorder %s19, 1
    %p103 = por %p101, %p102
    %p105 = scmp.ne.s32.totalorder %s90, %s104
    %p106 = scmp.eq.s32.totalorder %s19, 0
    %p107 = por %p105, %p106
    %s109 = sadd.s32 %s108, 1
    %p112 = scmp.eq.s32.totalorder %s13, 1
    %p113 = scmp.ne.s32.totalorder %s108, %s110
    %p114 = scmp.eq.s32.totalorder %s13, 0
    %p115 = por %p113, %p114
    %p116 = scmp.ne.s32.totalorder %s108, %s110
    %p117 = scmp.eq.s32.totalorder %s18, 1
    %p118 = por %p116, %p117
    %p119 = scmp.ne.s32.totalorder %s110, %s111
    %p120 = scmp.eq.s32.totalorder %s18, 0
    %p121 = por %p119, %p120
    %p122 = scmp.ne.s32.totalorder %s110, %s111
    %p123 = scmp.eq.s32.totalorder %s19, 1
    %p124 = por %p122, %p123
    %p126 = scmp.ne.s32.totalorder %s111, %s125
    %p127 = scmp.eq.s32.totalorder %s19, 0
    %p128 = por %p126, %p127
    %s130 = sadd.s32 %s129, 1
    %p133 = scmp.eq.s32.totalorder %s13, 1
    %p134 = scmp.ne.s32.totalorder %s129, %s131
    %p135 = scmp.eq.s32.totalorder %s13, 0
    %p136 = por %p134, %p135
    %p137 = scmp.ne.s32.totalorder %s129, %s131
    %p138 = scmp.eq.s32.totalorder %s18, 1
    %p139 = por %p137, %p138
    %p140 = scmp.ne.s32.totalorder %s131, %s132
    %p141 = scmp.eq.s32.totalorder %s18, 0
    %p142 = por %p140, %p141
    %p143 = scmp.ne.s32.totalorder %s131, %s132
    %p144 = scmp.eq.s32.totalorder %s19, 1
    %p145 = por %p143, %p144
    %p147 = scmp.ne.s32.totalorder %s132, %s146
    %p148 = scmp.eq.s32.totalorder %s19, 0
    %p149 = por %p147, %p148
    %s151 = sadd.s32 %s150, 1
    %p154 = scmp.eq.s32.totalorder %s13, 1
    %p155 = scmp.ne.s32.totalorder %s150, %s152
    %p156 = scmp.eq.s32.totalorder %s13, 0
    %p157 = por %p155, %p156
    %p158 = scmp.ne.s32.totalorder %s150, %s152
    %p159 = scmp.eq.s32.totalorder %s18, 1
    %p160 = por %p158, %p159
    %p161 = scmp.ne.s32.totalorder %s152, %s153
    %p162 = scmp.eq.s32.totalorder %s18, 0
    %p163 = por %p161, %p162
    %p164 = scmp.ne.s32.totalorder %s152, %s153
    %p165 = scmp.eq.s32.totalorder %s19, 1
    %p166 = por %p164, %p165
    %p168 = scmp.ne.s32.totalorder %s153, %s167
    %p169 = scmp.eq.s32.totalorder %s19, 0
    %p170 = por %p168, %p169
    %s172 = sadd.s32 %s171, 1
    %p175 = scmp.eq.s32.totalorder %s13, 1
    %p176 = scmp.ne.s32.totalorder %s171, %s173
    %p177 = scmp.eq.s32.totalorder %s13, 0
    %p178 = por %p176, %p177
    %p179 = scmp.ne.s32.totalorder %s171, %s173
    %p180 = scmp.eq.s32.totalorder %s18, 1
    %p181 = por %p179, %p180
    %p182 = scmp.ne.s32.totalorder %s173, %s174
    %p183 = scmp.eq.s32.totalorder %s18, 0
    %p184 = por %p182, %p183
    %p185 = scmp.ne.s32.totalorder %s173, %s174
    %p186 = scmp.eq.s32.totalorder %s19, 1
    %p187 = por %p185, %p186
    %p189 = scmp.ne.s32.totalorder %s174, %s188
    %p190 = scmp.eq.s32.totalorder %s19, 0
    %p191 = por %p189, %p190
    %s192 = ssub.s32 %s20, %s32
    %s193 = ssub.s32 %s21, %s28
    %s194 = sor.u32 %s192, %s193
    %p195 = scmp.eq.s32.totalorder %s194, 0
    %s197 = sadd.s32 %s196, 1
    %s198 = scalar_select %p195, %s196, %s197
    %p201 = pneg %p195
    %p202 = scmp.eq.s32.totalorder %s13, 1
    %p203 = por %p201, %p202
    %p204 = scmp.ne.s32.totalorder %s196, %s199
    %p205 = scmp.eq.s32.totalorder %s13, 0
    %p206 = por %p204, %p205
    %p207 = scmp.ne.s32.totalorder %s196, %s199
    %p208 = scmp.eq.s32.totalorder %s18, 1
    %p209 = por %p207, %p208
    %p210 = scmp.ne.s32.totalorder %s199, %s200
    %p211 = scmp.eq.s32.totalorder %s18, 0
    %p212 = por %p210, %p211
    %p213 = scmp.ne.s32.totalorder %s199, %s200
    %p214 = scmp.eq.s32.totalorder %s19, 1
    %p215 = por %p213, %p214
    %p217 = scmp.ne.s32.totalorder %s200, %s216
    %p218 = scmp.eq.s32.totalorder %s19, 0
    %p219 = por %p217, %p218
    %p220 = scmp.le.s32.totalorder 1, %s13
    %p221 = scmp.lt.s32.totalorder %s13, 3
    %p222 = pnand %p220, %p221
    %p223 = pneg %p222
    // Predicated region
    $region9: #{pct_forward.15} parent=5 // pred_check
      _
    $region10: #{pct_forward.15} parent=5 // pred_check_branch
      %225 = sbr.rel (%p222) target = $region12
    $region11: #{pct_forward.15} parent=5 // pred_region
      %s226 = ssub.s32 %s13, 1
      // Predicated region
      $region13: #{pct_forward.15} parent=11 // pred_check
        %p227 = pneg %p100
      $region14: #{pct_forward.15} parent=11 // pred_check_branch
        %229 = sbr.rel (%p227) target = $region16
      $region15: #{pct_forward.15} parent=11 // pred_region
        _
      $region16: #{pct_forward.15} parent=11 // pred_fallthru
        _
      // Predicated region
      $region17: #{pct_forward.15} parent=11 // pred_check
        %p230 = pneg %p121
      $region18: #{pct_forward.15} parent=11 // pred_check_branch
        %232 = sbr.rel (%p230) target = $region20
      $region19: #{pct_forward.15} parent=11 // pred_region
        _
      $region20: #{pct_forward.15} parent=11 // pred_fallthru
        _
      // Predicated region
      $region21: #{pct_forward.15} parent=11 // pred_check
        %p233 = pneg %p142
      $region22: #{pct_forward.15} parent=11 // pred_check_branch
        %235 = sbr.rel (%p233) target = $region24
      $region23: #{pct_forward.15} parent=11 // pred_region
        _
      $region24: #{pct_forward.15} parent=11 // pred_fallthru
        _
      // Predicated region
      $region25: #{pct_forward.15} parent=11 // pred_check
        %p236 = pneg %p163
      $region26: #{pct_forward.15} parent=11 // pred_check_branch
        %238 = sbr.rel (%p236) target = $region28
      $region27: #{pct_forward.15} parent=11 // pred_region
        _
      $region28: #{pct_forward.15} parent=11 // pred_fallthru
        _
      // Predicated region
      $region29: #{pct_forward.15} parent=11 // pred_check
        %p239 = pneg %p184
      $region30: #{pct_forward.15} parent=11 // pred_check_branch
        %241 = sbr.rel (%p239) target = $region32
      $region31: #{pct_forward.15} parent=11 // pred_region
        _
      $region32: #{pct_forward.15} parent=11 // pred_fallthru
        _
    $region12: #{pct_forward.15} parent=5 // pred_fallthru
      _
    %p242 = scmp.lt.s32.totalorder %s13, 2
    // Predicated region
    $region33: #{pct_forward.15} parent=5 // pred_check
      %p243 = pneg %p242
    $region34: #{pct_forward.15} parent=5 // pred_check_branch
      %245 = sbr.rel (%p243) target = $region36
    $region35: #{pct_forward.15} parent=5 // pred_region
      // Predicated region
      $region37: #{pct_forward.15} parent=35 // pred_check
        %p246 = pneg %p47
      $region38: #{pct_forward.15} parent=35 // pred_check_branch
        %248 = sbr.rel (%p246) target = $region40
      $region39: #{pct_forward.15} parent=35 // pred_region
        %s249 = smul.u32 2, %s21
        %p250 = scmp.lt.s32.totalorder %s20, 1
        %s251 = scalar_select %p250, %s20, 1
        %p252 = scmp.lt.s32.totalorder %s249, 1
        %s253 = scalar_select %p252, %s249, 1
        %s254 = smul.addr %s253, 8
        %s255 = smul.addr %s251, 16
        %s256 = sadd.s32 %s254, %s255
        %s257 = smul.addr %s256, 4
        %s258 = scalar_lea.vmem %s0, %s257
        %s259 = smul.u32 2, %s21
      $region40: #{pct_forward.15} parent=35 // pred_fallthru
        _
      // Predicated region
      $region41: #{pct_forward.15} parent=35 // pred_check
        %p260 = pneg %p73
      $region42: #{pct_forward.15} parent=35 // pred_check_branch
        %262 = sbr.rel (%p260) target = $region44
      $region43: #{pct_forward.15} parent=35 // pred_region
        %p263 = scmp.lt.s32.totalorder %s20, 1
        %s264 = scalar_select %p263, %s20, 1
        %s265 = smul.addr %s264, 4
        %s266 = scalar_lea.vmem %s1, %s265
      $region44: #{pct_forward.15} parent=35 // pred_fallthru
        _
    $region36: #{pct_forward.15} parent=5 // pred_fallthru
      _
    %p267 = scmp.le.s32.totalorder 1, %s13
    %p268 = scmp.lt.s32.totalorder %s13, 3
    %p269 = pnand %p267, %p268
    %p270 = pneg %p269
    // Predicated region
    $region45: #{pct_forward.15} parent=5 // pred_check
      _
    $region46: #{pct_forward.15} parent=5 // pred_check_branch
      %272 = sbr.rel (%p269) target = $region48
    $region47: #{pct_forward.15} parent=5 // pred_region
      %s273 = ssub.s32 %s13, 1
      %s274 = smul.u32 2, %s23
      %p275 = scmp.lt.s32.totalorder %s22, 1
      %s276 = scalar_select %p275, %s22, 1
      %p277 = scmp.lt.s32.totalorder %s274, 1
      %s278 = scalar_select %p277, %s274, 1
      %s279 = smul.addr %s278, 8
      %s280 = smul.addr %s276, 16
      %s281 = sadd.s32 %s279, %s280
      %s282 = smul.addr %s281, 4
      %s283 = scalar_lea.vmem %s0, %s282
      %p284 = pneg %p53
      %p285 = pneg %p50
      %p286 = scmp.lt.s32.totalorder %s22, 1
      %s287 = scalar_select %p286, %s22, 1
      %s288 = smul.addr %s287, 4
      %s289 = scalar_lea.vmem %s1, %s288
      %p290 = pneg %p79
      %p291 = pneg %p76
      %p292 = pneg %p100
      %p293 = pneg %p97
      %p294 = pneg %p121
      %p295 = pneg %p118
      %p296 = pneg %p142
      %p297 = pneg %p139
      %p298 = pneg %p163
      %p299 = pneg %p160
      %p300 = pneg %p184
      %p301 = pneg %p181
      %p302 = pneg %p212
      %p303 = pneg %p209
      %s304 = smul.u32 2, %s23
      %p305 = scmp.lt.s32.totalorder %s22, 1
      %s306 = scalar_select %p305, %s22, 1
      %p307 = scmp.lt.s32.totalorder %s304, 1
      %s308 = scalar_select %p307, %s304, 1
      %s309 = smul.addr %s306, 2
      %s310 = sadd.s32 %s308, %s309
      %s311 = smul.addr %s310, 4
      %s312 = scalar_lea.vmem %s7, %s311
      %s313 = smul.u32 2, %s23
      %p314 = scmp.lt.s32.totalorder %s22, 1
      %s315 = scalar_select %p314, %s22, 1
      %p316 = scmp.lt.s32.totalorder %s313, 1
      %s317 = scalar_select %p316, %s313, 1
      %s318 = smul.addr %s317, 8
      %s319 = smul.addr %s315, 16
      %s320 = sadd.s32 %s318, %s319
      %s321 = smul.addr %s320, 4
      %s322 = scalar_lea.vmem %s0, %s321
      %s323 = smul.u32 2, %s23
      %p324 = scmp.lt.s32.totalorder %s22, 1
      %s325 = scalar_select %p324, %s22, 1
      %s326 = smul.addr %s325, 4
      %s327 = scalar_lea.vmem %s1, %s326
      %s328 = smul.u32 2, %s23
      %p329 = scmp.lt.s32.totalorder %s22, 1
      %s330 = scalar_select %p329, %s22, 1
      %p331 = scmp.lt.s32.totalorder %s328, 1
      %s332 = scalar_select %p331, %s328, 1
      %s333 = smul.addr %s330, 2
      %s334 = sadd.s32 %s332, %s333
      %s335 = smul.addr %s334, 4
      %s336 = scalar_lea.vmem %s7, %s335
      %s337 = smul.u32 2, %s23
      %v339 = vld [vmem:[%s322] sm:$0xff]
      %v340 = vld [vmem:[%s322 + $0x8] sm:$0xff]
      %v341 = vld [vmem:[%s322 + $0x10] sm:$0xff]
      %v342 = vld [vmem:[%s322 + $0x18] sm:$0xff]
      %v343 = vld [vmem:[%s322 + $0x20] sm:$0xff]
      %v344 = vld [vmem:[%s322 + $0x28] sm:$0xff]
      %v345 = vld [vmem:[%s322 + $0x30] sm:$0xff]
      %v346 = vld [vmem:[%s322 + $0x38] sm:$0xff]
      %v347 = vld [vmem:[%s2] sm:$0xff]
      %v348 = vld [vmem:[%s2 + $0x8] sm:$0xff]
      %v349 = vld [vmem:[%s2 + $0x10] sm:$0xff]
      %v350 = vld [vmem:[%s2 + $0x18] sm:$0xff]
      %v351 = vld [vmem:[%s2 + $0x20] sm:$0xff]
      %v352 = vld [vmem:[%s2 + $0x28] sm:$0xff]
      %v353 = vld [vmem:[%s2 + $0x30] sm:$0xff]
      %v354 = vld [vmem:[%s2 + $0x38] sm:$0xff]
      %v355 = vld [vmem:[%s2 + $0x40] sm:$0xff]
      %v356 = vld [vmem:[%s2 + $0x48] sm:$0xff]
      %v357 = vld [vmem:[%s2 + $0x50] sm:$0xff]
      %v358 = vld [vmem:[%s2 + $0x58] sm:$0xff]
      %v359 = vld [vmem:[%s2 + $0x60] sm:$0xff]
      %v360 = vld [vmem:[%s2 + $0x68] sm:$0xff]
      %v361 = vld [vmem:[%s2 + $0x70] sm:$0xff]
      %v362 = vld [vmem:[%s2 + $0x78] sm:$0xff]
      %v363 = vld [vmem:[%s2 + $0x80] sm:$0xff]
      %v364 = vld [vmem:[%s2 + $0x88] sm:$0xff]
      %v365 = vld [vmem:[%s2 + $0x90] sm:$0xff]
      %v366 = vld [vmem:[%s2 + $0x98] sm:$0xff]
      %v367 = vld [vmem:[%s2 + $0xa0] sm:$0xff]
      %v368 = vld [vmem:[%s2 + $0xa8] sm:$0xff]
      %v369 = vld [vmem:[%s2 + $0xb0] sm:$0xff]
      %v370 = vld [vmem:[%s2 + $0xb8] sm:$0xff]
      %v371 = vld [vmem:[%s2 + $0xc0] sm:$0xff]
      %v372 = vld [vmem:[%s2 + $0xc8] sm:$0xff]
      %v373 = vld [vmem:[%s2 + $0xd0] sm:$0xff]
      %v374 = vld [vmem:[%s2 + $0xd8] sm:$0xff]
      %v375 = vld [vmem:[%s2 + $0xe0] sm:$0xff]
      %v376 = vld [vmem:[%s2 + $0xe8] sm:$0xff]
      %v377 = vld [vmem:[%s2 + $0xf0] sm:$0xff]
      %v378 = vld [vmem:[%s2 + $0xf8] sm:$0xff]
      %v379 = vld [vmem:[%s2 + $0x100] sm:$0xff]
      %v380 = vld [vmem:[%s2 + $0x108] sm:$0xff]
      %v381 = vld [vmem:[%s2 + $0x110] sm:$0xff]
      %v382 = vld [vmem:[%s2 + $0x118] sm:$0xff]
      %v383 = vld [vmem:[%s2 + $0x120] sm:$0xff]
      %v384 = vld [vmem:[%s2 + $0x128] sm:$0xff]
      %v385 = vld [vmem:[%s2 + $0x130] sm:$0xff]
      %v386 = vld [vmem:[%s2 + $0x138] sm:$0xff]
      %v387 = vld [vmem:[%s2 + $0x140] sm:$0xff]
      %v388 = vld [vmem:[%s2 + $0x148] sm:$0xff]
      %v389 = vld [vmem:[%s2 + $0x150] sm:$0xff]
      %v390 = vld [vmem:[%s2 + $0x158] sm:$0xff]
      %v391 = vld [vmem:[%s2 + $0x160] sm:$0xff]
      %v392 = vld [vmem:[%s2 + $0x168] sm:$0xff]
      %v393 = vld [vmem:[%s2 + $0x170] sm:$0xff]
      %v394 = vld [vmem:[%s2 + $0x178] sm:$0xff]
      %v395 = vld [vmem:[%s2 + $0x180] sm:$0xff]
      %v396 = vld [vmem:[%s2 + $0x188] sm:$0xff]
      %v397 = vld [vmem:[%s2 + $0x190] sm:$0xff]
      %v398 = vld [vmem:[%s2 + $0x198] sm:$0xff]
      %v399 = vld [vmem:[%s2 + $0x1a0] sm:$0xff]
      %v400 = vld [vmem:[%s2 + $0x1a8] sm:$0xff]
      %v401 = vld [vmem:[%s2 + $0x1b0] sm:$0xff]
      %v402 = vld [vmem:[%s2 + $0x1b8] sm:$0xff]
      %v403 = vld [vmem:[%s2 + $0x1c0] sm:$0xff]
      %v404 = vld [vmem:[%s2 + $0x1c8] sm:$0xff]
      %v405 = vld [vmem:[%s2 + $0x1d0] sm:$0xff]
      %v406 = vld [vmem:[%s2 + $0x1d8] sm:$0xff]
      %v407 = vld [vmem:[%s2 + $0x1e0] sm:$0xff]
      %v408 = vld [vmem:[%s2 + $0x1e8] sm:$0xff]
      %v409 = vld [vmem:[%s2 + $0x1f0] sm:$0xff]
      %v410 = vld [vmem:[%s2 + $0x1f8] sm:$0xff]
      %v411 = vld [vmem:[%s2 + $0x200] sm:$0xff]
      %v412 = vld [vmem:[%s2 + $0x208] sm:$0xff]
      %v413 = vld [vmem:[%s2 + $0x210] sm:$0xff]
      %v414 = vld [vmem:[%s2 + $0x218] sm:$0xff]
      %v415 = vld [vmem:[%s2 + $0x220] sm:$0xff]
      %v416 = vld [vmem:[%s2 + $0x228] sm:$0xff]
      %v417 = vld [vmem:[%s2 + $0x230] sm:$0xff]
      %v418 = vld [vmem:[%s2 + $0x238] sm:$0xff]
      %v419 = vld [vmem:[%s2 + $0x240] sm:$0xff]
      %v420 = vld [vmem:[%s2 + $0x248] sm:$0xff]
      %v421 = vld [vmem:[%s2 + $0x250] sm:$0xff]
      %v422 = vld [vmem:[%s2 + $0x258] sm:$0xff]
      %v423 = vld [vmem:[%s2 + $0x260] sm:$0xff]
      %v424 = vld [vmem:[%s2 + $0x268] sm:$0xff]
      %v425 = vld [vmem:[%s2 + $0x270] sm:$0xff]
      %v426 = vld [vmem:[%s2 + $0x278] sm:$0xff]
      %v427 = vld [vmem:[%s2 + $0x280] sm:$0xff]
      %v428 = vld [vmem:[%s2 + $0x288] sm:$0xff]
      %v429 = vld [vmem:[%s2 + $0x290] sm:$0xff]
      %v430 = vld [vmem:[%s2 + $0x298] sm:$0xff]
      %v431 = vld [vmem:[%s2 + $0x2a0] sm:$0xff]
      %v432 = vld [vmem:[%s2 + $0x2a8] sm:$0xff]
      %v433 = vld [vmem:[%s2 + $0x2b0] sm:$0xff]
      %v434 = vld [vmem:[%s2 + $0x2b8] sm:$0xff]
      %v435 = vld [vmem:[%s2 + $0x2c0] sm:$0xff]
      %v436 = vld [vmem:[%s2 + $0x2c8] sm:$0xff]
      %v437 = vld [vmem:[%s2 + $0x2d0] sm:$0xff]
      %v438 = vld [vmem:[%s2 + $0x2d8] sm:$0xff]
      %v439 = vld [vmem:[%s2 + $0x2e0] sm:$0xff]
      %v440 = vld [vmem:[%s2 + $0x2e8] sm:$0xff]
      %v441 = vld [vmem:[%s2 + $0x2f0] sm:$0xff]
      %v442 = vld [vmem:[%s2 + $0x2f8] sm:$0xff]
      %v443 = vld [vmem:[%s2 + $0x300] sm:$0xff]
      %v444 = vld [vmem:[%s2 + $0x308] sm:$0xff]
      %v445 = vld [vmem:[%s2 + $0x310] sm:$0xff]
      %v446 = vld [vmem:[%s2 + $0x318] sm:$0xff]
      %v447 = vld [vmem:[%s2 + $0x320] sm:$0xff]
      %v448 = vld [vmem:[%s2 + $0x328] sm:$0xff]
      %v449 = vld [vmem:[%s2 + $0x330] sm:$0xff]
      %v450 = vld [vmem:[%s2 + $0x338] sm:$0xff]
      %v451 = vld [vmem:[%s2 + $0x340] sm:$0xff]
      %v452 = vld [vmem:[%s2 + $0x348] sm:$0xff]
      %v453 = vld [vmem:[%s2 + $0x350] sm:$0xff]
      %v454 = vld [vmem:[%s2 + $0x358] sm:$0xff]
      %v455 = vld [vmem:[%s2 + $0x360] sm:$0xff]
      %v456 = vld [vmem:[%s2 + $0x368] sm:$0xff]
      %v457 = vld [vmem:[%s2 + $0x370] sm:$0xff]
      %v458 = vld [vmem:[%s2 + $0x378] sm:$0xff]
      %v459 = vld [vmem:[%s2 + $0x380] sm:$0xff]
      %v460 = vld [vmem:[%s2 + $0x388] sm:$0xff]
      %v461 = vld [vmem:[%s2 + $0x390] sm:$0xff]
      %v462 = vld [vmem:[%s2 + $0x398] sm:$0xff]
      %v463 = vld [vmem:[%s2 + $0x3a0] sm:$0xff]
      %v464 = vld [vmem:[%s2 + $0x3a8] sm:$0xff]
      %v465 = vld [vmem:[%s2 + $0x3b0] sm:$0xff]
      %v466 = vld [vmem:[%s2 + $0x3b8] sm:$0xff]
      %v467 = vld [vmem:[%s2 + $0x3c0] sm:$0xff]
      %v468 = vld [vmem:[%s2 + $0x3c8] sm:$0xff]
      %v469 = vld [vmem:[%s2 + $0x3d0] sm:$0xff]
      %v470 = vld [vmem:[%s2 + $0x3d8] sm:$0xff]
      %v471 = vld [vmem:[%s2 + $0x3e0] sm:$0xff]
      %v472 = vld [vmem:[%s2 + $0x3e8] sm:$0xff]
      %v473 = vld [vmem:[%s2 + $0x3f0] sm:$0xff]
      %v474 = vld [vmem:[%s2 + $0x3f8] sm:$0xff]
      %v475 = vld [vmem:[%s2 + $0x400] sm:$0xff]
      %v476 = vld [vmem:[%s2 + $0x408] sm:$0xff]
      %v477 = vld [vmem:[%s2 + $0x410] sm:$0xff]
      %v478 = vld [vmem:[%s2 + $0x418] sm:$0xff]
      %v479 = vld [vmem:[%s2 + $0x420] sm:$0xff]
      %v480 = vld [vmem:[%s2 + $0x428] sm:$0xff]
      %v481 = vld [vmem:[%s2 + $0x430] sm:$0xff]
      %v482 = vld [vmem:[%s2 + $0x438] sm:$0xff]
      %v483 = vld [vmem:[%s2 + $0x440] sm:$0xff]
      %v484 = vld [vmem:[%s2 + $0x448] sm:$0xff]
      %v485 = vld [vmem:[%s2 + $0x450] sm:$0xff]
      %v486 = vld [vmem:[%s2 + $0x458] sm:$0xff]
      %v487 = vld [vmem:[%s2 + $0x460] sm:$0xff]
      %v488 = vld [vmem:[%s2 + $0x468] sm:$0xff]
      %v489 = vld [vmem:[%s2 + $0x470] sm:$0xff]
      %v490 = vld [vmem:[%s2 + $0x478] sm:$0xff]
      %v491 = vld [vmem:[%s2 + $0x480] sm:$0xff]
      %v492 = vld [vmem:[%s2 + $0x488] sm:$0xff]
      %v493 = vld [vmem:[%s2 + $0x490] sm:$0xff]
      %v494 = vld [vmem:[%s2 + $0x498] sm:$0xff]
      %v495 = vld [vmem:[%s2 + $0x4a0] sm:$0xff]
      %v496 = vld [vmem:[%s2 + $0x4a8] sm:$0xff]
      %v497 = vld [vmem:[%s2 + $0x4b0] sm:$0xff]
      %v498 = vld [vmem:[%s2 + $0x4b8] sm:$0xff]
      %v499 = vld [vmem:[%s2 + $0x4c0] sm:$0xff]
      %v500 = vld [vmem:[%s2 + $0x4c8] sm:$0xff]
      %v501 = vld [vmem:[%s2 + $0x4d0] sm:$0xff]
      %v502 = vld [vmem:[%s2 + $0x4d8] sm:$0xff]
      %v503 = vld [vmem:[%s2 + $0x4e0] sm:$0xff]
      %v504 = vld [vmem:[%s2 + $0x4e8] sm:$0xff]
      %v505 = vld [vmem:[%s2 + $0x4f0] sm:$0xff]
      %v506 = vld [vmem:[%s2 + $0x4f8] sm:$0xff]
      %v507 = vld [vmem:[%s2 + $0x500] sm:$0xff]
      %v508 = vld [vmem:[%s2 + $0x508] sm:$0xff]
      %v509 = vld [vmem:[%s2 + $0x510] sm:$0xff]
      %v510 = vld [vmem:[%s2 + $0x518] sm:$0xff]
      %v511 = vld [vmem:[%s2 + $0x520] sm:$0xff]
      %v512 = vld [vmem:[%s2 + $0x528] sm:$0xff]
      %v513 = vld [vmem:[%s2 + $0x530] sm:$0xff]
      %v514 = vld [vmem:[%s2 + $0x538] sm:$0xff]
      %v515 = vld [vmem:[%s2 + $0x540] sm:$0xff]
      %v516 = vld [vmem:[%s2 + $0x548] sm:$0xff]
      %v517 = vld [vmem:[%s2 + $0x550] sm:$0xff]
      %v518 = vld [vmem:[%s2 + $0x558] sm:$0xff]
      %v519 = vld [vmem:[%s2 + $0x560] sm:$0xff]
      %v520 = vld [vmem:[%s2 + $0x568] sm:$0xff]
      %v521 = vld [vmem:[%s2 + $0x570] sm:$0xff]
      %v522 = vld [vmem:[%s2 + $0x578] sm:$0xff]
      %v523 = vld [vmem:[%s2 + $0x580] sm:$0xff]
      %v524 = vld [vmem:[%s2 + $0x588] sm:$0xff]
      %v525 = vld [vmem:[%s2 + $0x590] sm:$0xff]
      %v526 = vld [vmem:[%s2 + $0x598] sm:$0xff]
      %v527 = vld [vmem:[%s2 + $0x5a0] sm:$0xff]
      %v528 = vld [vmem:[%s2 + $0x5a8] sm:$0xff]
      %v529 = vld [vmem:[%s2 + $0x5b0] sm:$0xff]
      %v530 = vld [vmem:[%s2 + $0x5b8] sm:$0xff]
      %v531 = vld [vmem:[%s2 + $0x5c0] sm:$0xff]
      %v532 = vld [vmem:[%s2 + $0x5c8] sm:$0xff]
      %v533 = vld [vmem:[%s2 + $0x5d0] sm:$0xff]
      %v534 = vld [vmem:[%s2 + $0x5d8] sm:$0xff]
      %v535 = vld [vmem:[%s2 + $0x5e0] sm:$0xff]
      %v536 = vld [vmem:[%s2 + $0x5e8] sm:$0xff]
      %v537 = vld [vmem:[%s2 + $0x5f0] sm:$0xff]
      %v538 = vld [vmem:[%s2 + $0x5f8] sm:$0xff]
      %v539 = vld [vmem:[%s2 + $0x600] sm:$0xff]
      %v540 = vld [vmem:[%s2 + $0x608] sm:$0xff]
      %v541 = vld [vmem:[%s2 + $0x610] sm:$0xff]
      %v542 = vld [vmem:[%s2 + $0x618] sm:$0xff]
      %v543 = vld [vmem:[%s2 + $0x620] sm:$0xff]
      %v544 = vld [vmem:[%s2 + $0x628] sm:$0xff]
      %v545 = vld [vmem:[%s2 + $0x630] sm:$0xff]
      %v546 = vld [vmem:[%s2 + $0x638] sm:$0xff]
      %v547 = vld [vmem:[%s2 + $0x640] sm:$0xff]
      %v548 = vld [vmem:[%s2 + $0x648] sm:$0xff]
      %v549 = vld [vmem:[%s2 + $0x650] sm:$0xff]
      %v550 = vld [vmem:[%s2 + $0x658] sm:$0xff]
      %v551 = vld [vmem:[%s2 + $0x660] sm:$0xff]
      %v552 = vld [vmem:[%s2 + $0x668] sm:$0xff]
      %v553 = vld [vmem:[%s2 + $0x670] sm:$0xff]
      %v554 = vld [vmem:[%s2 + $0x678] sm:$0xff]
      %v555 = vld [vmem:[%s2 + $0x680] sm:$0xff]
      %v556 = vld [vmem:[%s2 + $0x688] sm:$0xff]
      %v557 = vld [vmem:[%s2 + $0x690] sm:$0xff]
      %v558 = vld [vmem:[%s2 + $0x698] sm:$0xff]
      %v559 = vld [vmem:[%s2 + $0x6a0] sm:$0xff]
      %v560 = vld [vmem:[%s2 + $0x6a8] sm:$0xff]
      %v561 = vld [vmem:[%s2 + $0x6b0] sm:$0xff]
      %v562 = vld [vmem:[%s2 + $0x6b8] sm:$0xff]
      %v563 = vld [vmem:[%s2 + $0x6c0] sm:$0xff]
      %v564 = vld [vmem:[%s2 + $0x6c8] sm:$0xff]
      %v565 = vld [vmem:[%s2 + $0x6d0] sm:$0xff]
      %v566 = vld [vmem:[%s2 + $0x6d8] sm:$0xff]
      %v567 = vld [vmem:[%s2 + $0x6e0] sm:$0xff]
      %v568 = vld [vmem:[%s2 + $0x6e8] sm:$0xff]
      %v569 = vld [vmem:[%s2 + $0x6f0] sm:$0xff]
      %v570 = vld [vmem:[%s2 + $0x6f8] sm:$0xff]
      %v571 = vld [vmem:[%s2 + $0x700] sm:$0xff]
      %v572 = vld [vmem:[%s2 + $0x708] sm:$0xff]
      %v573 = vld [vmem:[%s2 + $0x710] sm:$0xff]
      %v574 = vld [vmem:[%s2 + $0x718] sm:$0xff]
      %v575 = vld [vmem:[%s2 + $0x720] sm:$0xff]
      %v576 = vld [vmem:[%s2 + $0x728] sm:$0xff]
      %v577 = vld [vmem:[%s2 + $0x730] sm:$0xff]
      %v578 = vld [vmem:[%s2 + $0x738] sm:$0xff]
      %v579 = vld [vmem:[%s2 + $0x740] sm:$0xff]
      %v580 = vld [vmem:[%s2 + $0x748] sm:$0xff]
      %v581 = vld [vmem:[%s2 + $0x750] sm:$0xff]
      %v582 = vld [vmem:[%s2 + $0x758] sm:$0xff]
      %v583 = vld [vmem:[%s2 + $0x760] sm:$0xff]
      %v584 = vld [vmem:[%s2 + $0x768] sm:$0xff]
      %v585 = vld [vmem:[%s2 + $0x770] sm:$0xff]
      %v586 = vld [vmem:[%s2 + $0x778] sm:$0xff]
      %v587 = vld [vmem:[%s2 + $0x780] sm:$0xff]
      %v588 = vld [vmem:[%s2 + $0x788] sm:$0xff]
      %v589 = vld [vmem:[%s2 + $0x790] sm:$0xff]
      %v590 = vld [vmem:[%s2 + $0x798] sm:$0xff]
      %v591 = vld [vmem:[%s2 + $0x7a0] sm:$0xff]
      %v592 = vld [vmem:[%s2 + $0x7a8] sm:$0xff]
      %v593 = vld [vmem:[%s2 + $0x7b0] sm:$0xff]
      %v594 = vld [vmem:[%s2 + $0x7b8] sm:$0xff]
      %v595 = vld [vmem:[%s2 + $0x7c0] sm:$0xff]
      %v596 = vld [vmem:[%s2 + $0x7c8] sm:$0xff]
      %v597 = vld [vmem:[%s2 + $0x7d0] sm:$0xff]
      %v598 = vld [vmem:[%s2 + $0x7d8] sm:$0xff]
      %v599 = vld [vmem:[%s2 + $0x7e0] sm:$0xff]
      %v600 = vld [vmem:[%s2 + $0x7e8] sm:$0xff]
      %v601 = vld [vmem:[%s2 + $0x7f0] sm:$0xff]
      %v602 = vld [vmem:[%s2 + $0x7f8] sm:$0xff]
      %v611 = vunpack.c.l.b16 %v339
      %v612 = vunpack.c.h.b16 %v339
      %v613 = vunpack.c.l.b16 %v340
      %v614 = vunpack.c.h.b16 %v340
      %v615 = vunpack.c.l.b16 %v341
      %v616 = vunpack.c.h.b16 %v341
      %v617 = vunpack.c.l.b16 %v342
      %v618 = vunpack.c.h.b16 %v342
      %v619 = vunpack.c.l.b16 %v343
      %v620 = vunpack.c.h.b16 %v343
      %v621 = vunpack.c.l.b16 %v344
      %v622 = vunpack.c.h.b16 %v344
      %v623 = vunpack.c.l.b16 %v345
      %v624 = vunpack.c.h.b16 %v345
      %v625 = vunpack.c.l.b16 %v346
      %v626 = vunpack.c.h.b16 %v346
      %v627 = vpack.c.b16 %v619, %v611
      %v628 = vpack.c.b16 %v620, %v612
      %v629 = vpack.c.b16 %v621, %v613
      %v630 = vpack.c.b16 %v622, %v614
      %v631 = vpack.c.b16 %v623, %v615
      %v632 = vpack.c.b16 %v624, %v616
      %v633 = vpack.c.b16 %v625, %v617
      %v634 = vpack.c.b16 %v626, %v618
      %v899 = vunpack.c.l.b16 %v347
      %v900 = vunpack.c.h.b16 %v347
      %v901 = vunpack.c.l.b16 %v348
      %v902 = vunpack.c.h.b16 %v348
      %v903 = vunpack.c.l.b16 %v349
      %v904 = vunpack.c.h.b16 %v349
      %v905 = vunpack.c.l.b16 %v350
      %v906 = vunpack.c.h.b16 %v350
      %v907 = vunpack.c.l.b16 %v351
      %v908 = vunpack.c.h.b16 %v351
      %v909 = vunpack.c.l.b16 %v352
      %v910 = vunpack.c.h.b16 %v352
      %v911 = vunpack.c.l.b16 %v353
      %v912 = vunpack.c.h.b16 %v353
      %v913 = vunpack.c.l.b16 %v354
      %v914 = vunpack.c.h.b16 %v354
      %v915 = vunpack.c.l.b16 %v355
      %v916 = vunpack.c.h.b16 %v355
      %v917 = vunpack.c.l.b16 %v356
      %v918 = vunpack.c.h.b16 %v356
      %v919 = vunpack.c.l.b16 %v357
      %v920 = vunpack.c.h.b16 %v357
      %v921 = vunpack.c.l.b16 %v358
      %v922 = vunpack.c.h.b16 %v358
      %v923 = vunpack.c.l.b16 %v359
      %v924 = vunpack.c.h.b16 %v359
      %v925 = vunpack.c.l.b16 %v360
      %v926 = vunpack.c.h.b16 %v360
      %v927 = vunpack.c.l.b16 %v361
      %v928 = vunpack.c.h.b16 %v361
      %v929 = vunpack.c.l.b16 %v362
      %v930 = vunpack.c.h.b16 %v362
      %v931 = vunpack.c.l.b16 %v363
      %v932 = vunpack.c.h.b16 %v363
      %v933 = vunpack.c.l.b16 %v364
      %v934 = vunpack.c.h.b16 %v364
      %v935 = vunpack.c.l.b16 %v365
      %v936 = vunpack.c.h.b16 %v365
      %v937 = vunpack.c.l.b16 %v366
      %v938 = vunpack.c.h.b16 %v366
      %v939 = vunpack.c.l.b16 %v367
      %v940 = vunpack.c.h.b16 %v367
      %v941 = vunpack.c.l.b16 %v368
      %v942 = vunpack.c.h.b16 %v368
      %v943 = vunpack.c.l.b16 %v369
      %v944 = vunpack.c.h.b16 %v369
      %v945 = vunpack.c.l.b16 %v370
      %v946 = vunpack.c.h.b16 %v370
      %v947 = vunpack.c.l.b16 %v371
      %v948 = vunpack.c.h.b16 %v371
      %v949 = vunpack.c.l.b16 %v372
      %v950 = vunpack.c.h.b16 %v372
      %v951 = vunpack.c.l.b16 %v373
      %v952 = vunpack.c.h.b16 %v373
      %v953 = vunpack.c.l.b16 %v374
      %v954 = vunpack.c.h.b16 %v374
      %v955 = vunpack.c.l.b16 %v375
      %v956 = vunpack.c.h.b16 %v375
      %v957 = vunpack.c.l.b16 %v376
      %v958 = vunpack.c.h.b16 %v376
      %v959 = vunpack.c.l.b16 %v377
      %v960 = vunpack.c.h.b16 %v377
      %v961 = vunpack.c.l.b16 %v378
      %v962 = vunpack.c.h.b16 %v378
      %v963 = vunpack.c.l.b16 %v379
      %v964 = vunpack.c.h.b16 %v379
      %v965 = vunpack.c.l.b16 %v380
      %v966 = vunpack.c.h.b16 %v380
      %v967 = vunpack.c.l.b16 %v381
      %v968 = vunpack.c.h.b16 %v381
      %v969 = vunpack.c.l.b16 %v382
      %v970 = vunpack.c.h.b16 %v382
      %v971 = vunpack.c.l.b16 %v383
      %v972 = vunpack.c.h.b16 %v383
      %v973 = vunpack.c.l.b16 %v384
      %v974 = vunpack.c.h.b16 %v384
      %v975 = vunpack.c.l.b16 %v385
      %v976 = vunpack.c.h.b16 %v385
      %v977 = vunpack.c.l.b16 %v386
      %v978 = vunpack.c.h.b16 %v386
      %v979 = vunpack.c.l.b16 %v387
      %v980 = vunpack.c.h.b16 %v387
      %v981 = vunpack.c.l.b16 %v388
      %v982 = vunpack.c.h.b16 %v388
      %v983 = vunpack.c.l.b16 %v389
      %v984 = vunpack.c.h.b16 %v389
      %v985 = vunpack.c.l.b16 %v390
      %v986 = vunpack.c.h.b16 %v390
      %v987 = vunpack.c.l.b16 %v391
      %v988 = vunpack.c.h.b16 %v391
      %v989 = vunpack.c.l.b16 %v392
      %v990 = vunpack.c.h.b16 %v392
      %v991 = vunpack.c.l.b16 %v393
      %v992 = vunpack.c.h.b16 %v393
      %v993 = vunpack.c.l.b16 %v394
      %v994 = vunpack.c.h.b16 %v394
      %v995 = vunpack.c.l.b16 %v395
      %v996 = vunpack.c.h.b16 %v395
      %v997 = vunpack.c.l.b16 %v396
      %v998 = vunpack.c.h.b16 %v396
      %v999 = vunpack.c.l.b16 %v397
      %v1000 = vunpack.c.h.b16 %v397
      %v1001 = vunpack.c.l.b16 %v398
      %v1002 = vunpack.c.h.b16 %v398
      %v1003 = vunpack.c.l.b16 %v399
      %v1004 = vunpack.c.h.b16 %v399
      %v1005 = vunpack.c.l.b16 %v400
      %v1006 = vunpack.c.h.b16 %v400
      %v1007 = vunpack.c.l.b16 %v401
      %v1008 = vunpack.c.h.b16 %v401
      %v1009 = vunpack.c.l.b16 %v402
      %v1010 = vunpack.c.h.b16 %v402
      %v1011 = vunpack.c.l.b16 %v403
      %v1012 = vunpack.c.h.b16 %v403
      %v1013 = vunpack.c.l.b16 %v404
      %v1014 = vunpack.c.h.b16 %v404
      %v1015 = vunpack.c.l.b16 %v405
      %v1016 = vunpack.c.h.b16 %v405
      %v1017 = vunpack.c.l.b16 %v406
      %v1018 = vunpack.c.h.b16 %v406
      %v1019 = vunpack.c.l.b16 %v407
      %v1020 = vunpack.c.h.b16 %v407
      %v1021 = vunpack.c.l.b16 %v408
      %v1022 = vunpack.c.h.b16 %v408
      %v1023 = vunpack.c.l.b16 %v409
      %v1024 = vunpack.c.h.b16 %v409
      %v1025 = vunpack.c.l.b16 %v410
      %v1026 = vunpack.c.h.b16 %v410
      %v1027 = vunpack.c.l.b16 %v411
      %v1028 = vunpack.c.h.b16 %v411
      %v1029 = vunpack.c.l.b16 %v412
      %v1030 = vunpack.c.h.b16 %v412
      %v1031 = vunpack.c.l.b16 %v413
      %v1032 = vunpack.c.h.b16 %v413
      %v1033 = vunpack.c.l.b16 %v414
      %v1034 = vunpack.c.h.b16 %v414
      %v1035 = vunpack.c.l.b16 %v415
      %v1036 = vunpack.c.h.b16 %v415
      %v1037 = vunpack.c.l.b16 %v416
      %v1038 = vunpack.c.h.b16 %v416
      %v1039 = vunpack.c.l.b16 %v417
      %v1040 = vunpack.c.h.b16 %v417
      %v1041 = vunpack.c.l.b16 %v418
      %v1042 = vunpack.c.h.b16 %v418
      %v1043 = vunpack.c.l.b16 %v419
      %v1044 = vunpack.c.h.b16 %v419
      %v1045 = vunpack.c.l.b16 %v420
      %v1046 = vunpack.c.h.b16 %v420
      %v1047 = vunpack.c.l.b16 %v421
      %v1048 = vunpack.c.h.b16 %v421
      %v1049 = vunpack.c.l.b16 %v422
      %v1050 = vunpack.c.h.b16 %v422
      %v1051 = vunpack.c.l.b16 %v423
      %v1052 = vunpack.c.h.b16 %v423
      %v1053 = vunpack.c.l.b16 %v424
      %v1054 = vunpack.c.h.b16 %v424
      %v1055 = vunpack.c.l.b16 %v425
      %v1056 = vunpack.c.h.b16 %v425
      %v1057 = vunpack.c.l.b16 %v426
      %v1058 = vunpack.c.h.b16 %v426
      %v1059 = vunpack.c.l.b16 %v427
      %v1060 = vunpack.c.h.b16 %v427
      %v1061 = vunpack.c.l.b16 %v428
      %v1062 = vunpack.c.h.b16 %v428
      %v1063 = vunpack.c.l.b16 %v429
      %v1064 = vunpack.c.h.b16 %v429
      %v1065 = vunpack.c.l.b16 %v430
      %v1066 = vunpack.c.h.b16 %v430
      %v1067 = vunpack.c.l.b16 %v431
      %v1068 = vunpack.c.h.b16 %v431
      %v1069 = vunpack.c.l.b16 %v432
      %v1070 = vunpack.c.h.b16 %v432
      %v1071 = vunpack.c.l.b16 %v433
      %v1072 = vunpack.c.h.b16 %v433
      %v1073 = vunpack.c.l.b16 %v434
      %v1074 = vunpack.c.h.b16 %v434
      %v1075 = vunpack.c.l.b16 %v435
      %v1076 = vunpack.c.h.b16 %v435
      %v1077 = vunpack.c.l.b16 %v436
      %v1078 = vunpack.c.h.b16 %v436
      %v1079 = vunpack.c.l.b16 %v437
      %v1080 = vunpack.c.h.b16 %v437
      %v1081 = vunpack.c.l.b16 %v438
      %v1082 = vunpack.c.h.b16 %v438
      %v1083 = vunpack.c.l.b16 %v439
      %v1084 = vunpack.c.h.b16 %v439
      %v1085 = vunpack.c.l.b16 %v440
      %v1086 = vunpack.c.h.b16 %v440
      %v1087 = vunpack.c.l.b16 %v441
      %v1088 = vunpack.c.h.b16 %v441
      %v1089 = vunpack.c.l.b16 %v442
      %v1090 = vunpack.c.h.b16 %v442
      %v1091 = vunpack.c.l.b16 %v443
      %v1092 = vunpack.c.h.b16 %v443
      %v1093 = vunpack.c.l.b16 %v444
      %v1094 = vunpack.c.h.b16 %v444
      %v1095 = vunpack.c.l.b16 %v445
      %v1096 = vunpack.c.h.b16 %v445
      %v1097 = vunpack.c.l.b16 %v446
      %v1098 = vunpack.c.h.b16 %v446
      %v1099 = vunpack.c.l.b16 %v447
      %v1100 = vunpack.c.h.b16 %v447
      %v1101 = vunpack.c.l.b16 %v448
      %v1102 = vunpack.c.h.b16 %v448
      %v1103 = vunpack.c.l.b16 %v449
      %v1104 = vunpack.c.h.b16 %v449
      %v1105 = vunpack.c.l.b16 %v450
      %v1106 = vunpack.c.h.b16 %v450
      %v1107 = vunpack.c.l.b16 %v451
      %v1108 = vunpack.c.h.b16 %v451
      %v1109 = vunpack.c.l.b16 %v452
      %v1110 = vunpack.c.h.b16 %v452
      %v1111 = vunpack.c.l.b16 %v453
      %v1112 = vunpack.c.h.b16 %v453
      %v1113 = vunpack.c.l.b16 %v454
      %v1114 = vunpack.c.h.b16 %v454
      %v1115 = vunpack.c.l.b16 %v455
      %v1116 = vunpack.c.h.b16 %v455
      %v1117 = vunpack.c.l.b16 %v456
      %v1118 = vunpack.c.h.b16 %v456
      %v1119 = vunpack.c.l.b16 %v457
      %v1120 = vunpack.c.h.b16 %v457
      %v1121 = vunpack.c.l.b16 %v458
      %v1122 = vunpack.c.h.b16 %v458
      %v1123 = vunpack.c.l.b16 %v459
      %v1124 = vunpack.c.h.b16 %v459
      %v1125 = vunpack.c.l.b16 %v460
      %v1126 = vunpack.c.h.b16 %v460
      %v1127 = vunpack.c.l.b16 %v461
      %v1128 = vunpack.c.h.b16 %v461
      %v1129 = vunpack.c.l.b16 %v462
      %v1130 = vunpack.c.h.b16 %v462
      %v1131 = vunpack.c.l.b16 %v463
      %v1132 = vunpack.c.h.b16 %v463
      %v1133 = vunpack.c.l.b16 %v464
      %v1134 = vunpack.c.h.b16 %v464
      %v1135 = vunpack.c.l.b16 %v465
      %v1136 = vunpack.c.h.b16 %v465
      %v1137 = vunpack.c.l.b16 %v466
      %v1138 = vunpack.c.h.b16 %v466
      %v1139 = vunpack.c.l.b16 %v467
      %v1140 = vunpack.c.h.b16 %v467
      %v1141 = vunpack.c.l.b16 %v468
      %v1142 = vunpack.c.h.b16 %v468
      %v1143 = vunpack.c.l.b16 %v469
      %v1144 = vunpack.c.h.b16 %v469
      %v1145 = vunpack.c.l.b16 %v470
      %v1146 = vunpack.c.h.b16 %v470
      %v1147 = vunpack.c.l.b16 %v471
      %v1148 = vunpack.c.h.b16 %v471
      %v1149 = vunpack.c.l.b16 %v472
      %v1150 = vunpack.c.h.b16 %v472
      %v1151 = vunpack.c.l.b16 %v473
      %v1152 = vunpack.c.h.b16 %v473
      %v1153 = vunpack.c.l.b16 %v474
      %v1154 = vunpack.c.h.b16 %v474
      %v1155 = vunpack.c.l.b16 %v475
      %v1156 = vunpack.c.h.b16 %v475
      %v1157 = vunpack.c.l.b16 %v476
      %v1158 = vunpack.c.h.b16 %v476
      %v1159 = vunpack.c.l.b16 %v477
      %v1160 = vunpack.c.h.b16 %v477
      %v1161 = vunpack.c.l.b16 %v478
      %v1162 = vunpack.c.h.b16 %v478
      %v1163 = vunpack.c.l.b16 %v479
      %v1164 = vunpack.c.h.b16 %v479
      %v1165 = vunpack.c.l.b16 %v480
      %v1166 = vunpack.c.h.b16 %v480
      %v1167 = vunpack.c.l.b16 %v481
      %v1168 = vunpack.c.h.b16 %v481
      %v1169 = vunpack.c.l.b16 %v482
      %v1170 = vunpack.c.h.b16 %v482
      %v1171 = vunpack.c.l.b16 %v483
      %v1172 = vunpack.c.h.b16 %v483
      %v1173 = vunpack.c.l.b16 %v484
      %v1174 = vunpack.c.h.b16 %v484
      %v1175 = vunpack.c.l.b16 %v485
      %v1176 = vunpack.c.h.b16 %v485
      %v1177 = vunpack.c.l.b16 %v486
      %v1178 = vunpack.c.h.b16 %v486
      %v1179 = vunpack.c.l.b16 %v487
      %v1180 = vunpack.c.h.b16 %v487
      %v1181 = vunpack.c.l.b16 %v488
      %v1182 = vunpack.c.h.b16 %v488
      %v1183 = vunpack.c.l.b16 %v489
      %v1184 = vunpack.c.h.b16 %v489
      %v1185 = vunpack.c.l.b16 %v490
      %v1186 = vunpack.c.h.b16 %v490
      %v1187 = vunpack.c.l.b16 %v491
      %v1188 = vunpack.c.h.b16 %v491
      %v1189 = vunpack.c.l.b16 %v492
      %v1190 = vunpack.c.h.b16 %v492
      %v1191 = vunpack.c.l.b16 %v493
      %v1192 = vunpack.c.h.b16 %v493
      %v1193 = vunpack.c.l.b16 %v494
      %v1194 = vunpack.c.h.b16 %v494
      %v1195 = vunpack.c.l.b16 %v495
      %v1196 = vunpack.c.h.b16 %v495
      %v1197 = vunpack.c.l.b16 %v496
      %v1198 = vunpack.c.h.b16 %v496
      %v1199 = vunpack.c.l.b16 %v497
      %v1200 = vunpack.c.h.b16 %v497
      %v1201 = vunpack.c.l.b16 %v498
      %v1202 = vunpack.c.h.b16 %v498
      %v1203 = vunpack.c.l.b16 %v499
      %v1204 = vunpack.c.h.b16 %v499
      %v1205 = vunpack.c.l.b16 %v500
      %v1206 = vunpack.c.h.b16 %v500
      %v1207 = vunpack.c.l.b16 %v501
      %v1208 = vunpack.c.h.b16 %v501
      %v1209 = vunpack.c.l.b16 %v502
      %v1210 = vunpack.c.h.b16 %v502
      %v1211 = vunpack.c.l.b16 %v503
      %v1212 = vunpack.c.h.b16 %v503
      %v1213 = vunpack.c.l.b16 %v504
      %v1214 = vunpack.c.h.b16 %v504
      %v1215 = vunpack.c.l.b16 %v505
      %v1216 = vunpack.c.h.b16 %v505
      %v1217 = vunpack.c.l.b16 %v506
      %v1218 = vunpack.c.h.b16 %v506
      %v1219 = vunpack.c.l.b16 %v507
      %v1220 = vunpack.c.h.b16 %v507
      %v1221 = vunpack.c.l.b16 %v508
      %v1222 = vunpack.c.h.b16 %v508
      %v1223 = vunpack.c.l.b16 %v509
      %v1224 = vunpack.c.h.b16 %v509
      %v1225 = vunpack.c.l.b16 %v510
      %v1226 = vunpack.c.h.b16 %v510
      %v1227 = vunpack.c.l.b16 %v511
      %v1228 = vunpack.c.h.b16 %v511
      %v1229 = vunpack.c.l.b16 %v512
      %v1230 = vunpack.c.h.b16 %v512
      %v1231 = vunpack.c.l.b16 %v513
      %v1232 = vunpack.c.h.b16 %v513
      %v1233 = vunpack.c.l.b16 %v514
      %v1234 = vunpack.c.h.b16 %v514
      %v1235 = vunpack.c.l.b16 %v515
      %v1236 = vunpack.c.h.b16 %v515
      %v1237 = vunpack.c.l.b16 %v516
      %v1238 = vunpack.c.h.b16 %v516
      %v1239 = vunpack.c.l.b16 %v517
      %v1240 = vunpack.c.h.b16 %v517
      %v1241 = vunpack.c.l.b16 %v518
      %v1242 = vunpack.c.h.b16 %v518
      %v1243 = vunpack.c.l.b16 %v519
      %v1244 = vunpack.c.h.b16 %v519
      %v1245 = vunpack.c.l.b16 %v520
      %v1246 = vunpack.c.h.b16 %v520
      %v1247 = vunpack.c.l.b16 %v521
      %v1248 = vunpack.c.h.b16 %v521
      %v1249 = vunpack.c.l.b16 %v522
      %v1250 = vunpack.c.h.b16 %v522
      %v1251 = vunpack.c.l.b16 %v523
      %v1252 = vunpack.c.h.b16 %v523
      %v1253 = vunpack.c.l.b16 %v524
      %v1254 = vunpack.c.h.b16 %v524
      %v1255 = vunpack.c.l.b16 %v525
      %v1256 = vunpack.c.h.b16 %v525
      %v1257 = vunpack.c.l.b16 %v526
      %v1258 = vunpack.c.h.b16 %v526
      %v1259 = vunpack.c.l.b16 %v527
      %v1260 = vunpack.c.h.b16 %v527
      %v1261 = vunpack.c.l.b16 %v528
      %v1262 = vunpack.c.h.b16 %v528
      %v1263 = vunpack.c.l.b16 %v529
      %v1264 = vunpack.c.h.b16 %v529
      %v1265 = vunpack.c.l.b16 %v530
      %v1266 = vunpack.c.h.b16 %v530
      %v1267 = vunpack.c.l.b16 %v531
      %v1268 = vunpack.c.h.b16 %v531
      %v1269 = vunpack.c.l.b16 %v532
      %v1270 = vunpack.c.h.b16 %v532
      %v1271 = vunpack.c.l.b16 %v533
      %v1272 = vunpack.c.h.b16 %v533
      %v1273 = vunpack.c.l.b16 %v534
      %v1274 = vunpack.c.h.b16 %v534
      %v1275 = vunpack.c.l.b16 %v535
      %v1276 = vunpack.c.h.b16 %v535
      %v1277 = vunpack.c.l.b16 %v536
      %v1278 = vunpack.c.h.b16 %v536
      %v1279 = vunpack.c.l.b16 %v537
      %v1280 = vunpack.c.h.b16 %v537
      %v1281 = vunpack.c.l.b16 %v538
      %v1282 = vunpack.c.h.b16 %v538
      %v1283 = vunpack.c.l.b16 %v539
      %v1284 = vunpack.c.h.b16 %v539
      %v1285 = vunpack.c.l.b16 %v540
      %v1286 = vunpack.c.h.b16 %v540
      %v1287 = vunpack.c.l.b16 %v541
      %v1288 = vunpack.c.h.b16 %v541
      %v1289 = vunpack.c.l.b16 %v542
      %v1290 = vunpack.c.h.b16 %v542
      %v1291 = vunpack.c.l.b16 %v543
      %v1292 = vunpack.c.h.b16 %v543
      %v1293 = vunpack.c.l.b16 %v544
      %v1294 = vunpack.c.h.b16 %v544
      %v1295 = vunpack.c.l.b16 %v545
      %v1296 = vunpack.c.h.b16 %v545
      %v1297 = vunpack.c.l.b16 %v546
      %v1298 = vunpack.c.h.b16 %v546
      %v1299 = vunpack.c.l.b16 %v547
      %v1300 = vunpack.c.h.b16 %v547
      %v1301 = vunpack.c.l.b16 %v548
      %v1302 = vunpack.c.h.b16 %v548
      %v1303 = vunpack.c.l.b16 %v549
      %v1304 = vunpack.c.h.b16 %v549
      %v1305 = vunpack.c.l.b16 %v550
      %v1306 = vunpack.c.h.b16 %v550
      %v1307 = vunpack.c.l.b16 %v551
      %v1308 = vunpack.c.h.b16 %v551
      %v1309 = vunpack.c.l.b16 %v552
      %v1310 = vunpack.c.h.b16 %v552
      %v1311 = vunpack.c.l.b16 %v553
      %v1312 = vunpack.c.h.b16 %v553
      %v1313 = vunpack.c.l.b16 %v554
      %v1314 = vunpack.c.h.b16 %v554
      %v1315 = vunpack.c.l.b16 %v555
      %v1316 = vunpack.c.h.b16 %v555
      %v1317 = vunpack.c.l.b16 %v556
      %v1318 = vunpack.c.h.b16 %v556
      %v1319 = vunpack.c.l.b16 %v557
      %v1320 = vunpack.c.h.b16 %v557
      %v1321 = vunpack.c.l.b16 %v558
      %v1322 = vunpack.c.h.b16 %v558
      %v1323 = vunpack.c.l.b16 %v559
      %v1324 = vunpack.c.h.b16 %v559
      %v1325 = vunpack.c.l.b16 %v560
      %v1326 = vunpack.c.h.b16 %v560
      %v1327 = vunpack.c.l.b16 %v561
      %v1328 = vunpack.c.h.b16 %v561
      %v1329 = vunpack.c.l.b16 %v562
      %v1330 = vunpack.c.h.b16 %v562
      %v1331 = vunpack.c.l.b16 %v563
      %v1332 = vunpack.c.h.b16 %v563
      %v1333 = vunpack.c.l.b16 %v564
      %v1334 = vunpack.c.h.b16 %v564
      %v1335 = vunpack.c.l.b16 %v565
      %v1336 = vunpack.c.h.b16 %v565
      %v1337 = vunpack.c.l.b16 %v566
      %v1338 = vunpack.c.h.b16 %v566
      %v1339 = vunpack.c.l.b16 %v567
      %v1340 = vunpack.c.h.b16 %v567
      %v1341 = vunpack.c.l.b16 %v568
      %v1342 = vunpack.c.h.b16 %v568
      %v1343 = vunpack.c.l.b16 %v569
      %v1344 = vunpack.c.h.b16 %v569
      %v1345 = vunpack.c.l.b16 %v570
      %v1346 = vunpack.c.h.b16 %v570
      %v1347 = vunpack.c.l.b16 %v571
      %v1348 = vunpack.c.h.b16 %v571
      %v1349 = vunpack.c.l.b16 %v572
      %v1350 = vunpack.c.h.b16 %v572
      %v1351 = vunpack.c.l.b16 %v573
      %v1352 = vunpack.c.h.b16 %v573
      %v1353 = vunpack.c.l.b16 %v574
      %v1354 = vunpack.c.h.b16 %v574
      %v1355 = vunpack.c.l.b16 %v575
      %v1356 = vunpack.c.h.b16 %v575
      %v1357 = vunpack.c.l.b16 %v576
      %v1358 = vunpack.c.h.b16 %v576
      %v1359 = vunpack.c.l.b16 %v577
      %v1360 = vunpack.c.h.b16 %v577
      %v1361 = vunpack.c.l.b16 %v578
      %v1362 = vunpack.c.h.b16 %v578
      %v1363 = vunpack.c.l.b16 %v579
      %v1364 = vunpack.c.h.b16 %v579
      %v1365 = vunpack.c.l.b16 %v580
      %v1366 = vunpack.c.h.b16 %v580
      %v1367 = vunpack.c.l.b16 %v581
      %v1368 = vunpack.c.h.b16 %v581
      %v1369 = vunpack.c.l.b16 %v582
      %v1370 = vunpack.c.h.b16 %v582
      %v1371 = vunpack.c.l.b16 %v583
      %v1372 = vunpack.c.h.b16 %v583
      %v1373 = vunpack.c.l.b16 %v584
      %v1374 = vunpack.c.h.b16 %v584
      %v1375 = vunpack.c.l.b16 %v585
      %v1376 = vunpack.c.h.b16 %v585
      %v1377 = vunpack.c.l.b16 %v586
      %v1378 = vunpack.c.h.b16 %v586
      %v1379 = vunpack.c.l.b16 %v587
      %v1380 = vunpack.c.h.b16 %v587
      %v1381 = vunpack.c.l.b16 %v588
      %v1382 = vunpack.c.h.b16 %v588
      %v1383 = vunpack.c.l.b16 %v589
      %v1384 = vunpack.c.h.b16 %v589
      %v1385 = vunpack.c.l.b16 %v590
      %v1386 = vunpack.c.h.b16 %v590
      %v1387 = vunpack.c.l.b16 %v591
      %v1388 = vunpack.c.h.b16 %v591
      %v1389 = vunpack.c.l.b16 %v592
      %v1390 = vunpack.c.h.b16 %v592
      %v1391 = vunpack.c.l.b16 %v593
      %v1392 = vunpack.c.h.b16 %v593
      %v1393 = vunpack.c.l.b16 %v594
      %v1394 = vunpack.c.h.b16 %v594
      %v1395 = vunpack.c.l.b16 %v595
      %v1396 = vunpack.c.h.b16 %v595
      %v1397 = vunpack.c.l.b16 %v596
      %v1398 = vunpack.c.h.b16 %v596
      %v1399 = vunpack.c.l.b16 %v597
      %v1400 = vunpack.c.h.b16 %v597
      %v1401 = vunpack.c.l.b16 %v598
      %v1402 = vunpack.c.h.b16 %v598
      %v1403 = vunpack.c.l.b16 %v599
      %v1404 = vunpack.c.h.b16 %v599
      %v1405 = vunpack.c.l.b16 %v600
      %v1406 = vunpack.c.h.b16 %v600
      %v1407 = vunpack.c.l.b16 %v601
      %v1408 = vunpack.c.h.b16 %v601
      %v1409 = vunpack.c.l.b16 %v602
      %v1410 = vunpack.c.h.b16 %v602
      %v1411 = vpack.c.b16 %v903, %v899
      %v1412 = vpack.c.b16 %v904, %v900
      %v1413 = vpack.c.b16 %v905, %v901
      %v1414 = vpack.c.b16 %v906, %v902
      %v1415 = vpack.c.b16 %v911, %v907
      %v1416 = vpack.c.b16 %v912, %v908
      %v1417 = vpack.c.b16 %v913, %v909
      %v1418 = vpack.c.b16 %v914, %v910
      %v1419 = vpack.c.b16 %v919, %v915
      %v1420 = vpack.c.b16 %v920, %v916
      %v1421 = vpack.c.b16 %v921, %v917
      %v1422 = vpack.c.b16 %v922, %v918
      %v1423 = vpack.c.b16 %v927, %v923
      %v1424 = vpack.c.b16 %v928, %v924
      %v1425 = vpack.c.b16 %v929, %v925
      %v1426 = vpack.c.b16 %v930, %v926
      %v1427 = vpack.c.b16 %v935, %v931
      %v1428 = vpack.c.b16 %v936, %v932
      %v1429 = vpack.c.b16 %v937, %v933
      %v1430 = vpack.c.b16 %v938, %v934
      %v1431 = vpack.c.b16 %v943, %v939
      %v1432 = vpack.c.b16 %v944, %v940
      %v1433 = vpack.c.b16 %v945, %v941
      %v1434 = vpack.c.b16 %v946, %v942
      %v1435 = vpack.c.b16 %v951, %v947
      %v1436 = vpack.c.b16 %v952, %v948
      %v1437 = vpack.c.b16 %v953, %v949
      %v1438 = vpack.c.b16 %v954, %v950
      %v1439 = vpack.c.b16 %v959, %v955
      %v1440 = vpack.c.b16 %v960, %v956
      %v1441 = vpack.c.b16 %v961, %v957
      %v1442 = vpack.c.b16 %v962, %v958
      %v1443 = vpack.c.b16 %v967, %v963
      %v1444 = vpack.c.b16 %v968, %v964
      %v1445 = vpack.c.b16 %v969, %v965
      %v1446 = vpack.c.b16 %v970, %v966
      %v1447 = vpack.c.b16 %v975, %v971
      %v1448 = vpack.c.b16 %v976, %v972
      %v1449 = vpack.c.b16 %v977, %v973
      %v1450 = vpack.c.b16 %v978, %v974
      %v1451 = vpack.c.b16 %v983, %v979
      %v1452 = vpack.c.b16 %v984, %v980
      %v1453 = vpack.c.b16 %v985, %v981
      %v1454 = vpack.c.b16 %v986, %v982
      %v1455 = vpack.c.b16 %v991, %v987
      %v1456 = vpack.c.b16 %v992, %v988
      %v1457 = vpack.c.b16 %v993, %v989
      %v1458 = vpack.c.b16 %v994, %v990
      %v1459 = vpack.c.b16 %v999, %v995
      %v1460 = vpack.c.b16 %v1000, %v996
      %v1461 = vpack.c.b16 %v1001, %v997
      %v1462 = vpack.c.b16 %v1002, %v998
      %v1463 = vpack.c.b16 %v1007, %v1003
      %v1464 = vpack.c.b16 %v1008, %v1004
      %v1465 = vpack.c.b16 %v1009, %v1005
      %v1466 = vpack.c.b16 %v1010, %v1006
      %v1467 = vpack.c.b16 %v1015, %v1011
      %v1468 = vpack.c.b16 %v1016, %v1012
      %v1469 = vpack.c.b16 %v1017, %v1013
      %v1470 = vpack.c.b16 %v1018, %v1014
      %v1471 = vpack.c.b16 %v1023, %v1019
      %v1472 = vpack.c.b16 %v1024, %v1020
      %v1473 = vpack.c.b16 %v1025, %v1021
      %v1474 = vpack.c.b16 %v1026, %v1022
      %v1475 = vpack.c.b16 %v1031, %v1027
      %v1476 = vpack.c.b16 %v1032, %v1028
      %v1477 = vpack.c.b16 %v1033, %v1029
      %v1478 = vpack.c.b16 %v1034, %v1030
      %v1479 = vpack.c.b16 %v1039, %v1035
      %v1480 = vpack.c.b16 %v1040, %v1036
      %v1481 = vpack.c.b16 %v1041, %v1037
      %v1482 = vpack.c.b16 %v1042, %v1038
      %v1483 = vpack.c.b16 %v1047, %v1043
      %v1484 = vpack.c.b16 %v1048, %v1044
      %v1485 = vpack.c.b16 %v1049, %v1045
      %v1486 = vpack.c.b16 %v1050, %v1046
      %v1487 = vpack.c.b16 %v1055, %v1051
      %v1488 = vpack.c.b16 %v1056, %v1052
      %v1489 = vpack.c.b16 %v1057, %v1053
      %v1490 = vpack.c.b16 %v1058, %v1054
      %v1491 = vpack.c.b16 %v1063, %v1059
      %v1492 = vpack.c.b16 %v1064, %v1060
      %v1493 = vpack.c.b16 %v1065, %v1061
      %v1494 = vpack.c.b16 %v1066, %v1062
      %v1495 = vpack.c.b16 %v1071, %v1067
      %v1496 = vpack.c.b16 %v1072, %v1068
      %v1497 = vpack.c.b16 %v1073, %v1069
      %v1498 = vpack.c.b16 %v1074, %v1070
      %v1499 = vpack.c.b16 %v1079, %v1075
      %v1500 = vpack.c.b16 %v1080, %v1076
      %v1501 = vpack.c.b16 %v1081, %v1077
      %v1502 = vpack.c.b16 %v1082, %v1078
      %v1503 = vpack.c.b16 %v1087, %v1083
      %v1504 = vpack.c.b16 %v1088, %v1084
      %v1505 = vpack.c.b16 %v1089, %v1085
      %v1506 = vpack.c.b16 %v1090, %v1086
      %v1507 = vpack.c.b16 %v1095, %v1091
      %v1508 = vpack.c.b16 %v1096, %v1092
      %v1509 = vpack.c.b16 %v1097, %v1093
      %v1510 = vpack.c.b16 %v1098, %v1094
      %v1511 = vpack.c.b16 %v1103, %v1099
      %v1512 = vpack.c.b16 %v1104, %v1100
      %v1513 = vpack.c.b16 %v1105, %v1101
      %v1514 = vpack.c.b16 %v1106, %v1102
      %v1515 = vpack.c.b16 %v1111, %v1107
      %v1516 = vpack.c.b16 %v1112, %v1108
      %v1517 = vpack.c.b16 %v1113, %v1109
      %v1518 = vpack.c.b16 %v1114, %v1110
      %v1519 = vpack.c.b16 %v1119, %v1115
      %v1520 = vpack.c.b16 %v1120, %v1116
      %v1521 = vpack.c.b16 %v1121, %v1117
      %v1522 = vpack.c.b16 %v1122, %v1118
      %v1523 = vpack.c.b16 %v1127, %v1123
      %v1524 = vpack.c.b16 %v1128, %v1124
      %v1525 = vpack.c.b16 %v1129, %v1125
      %v1526 = vpack.c.b16 %v1130, %v1126
      %v1527 = vpack.c.b16 %v1135, %v1131
      %v1528 = vpack.c.b16 %v1136, %v1132
      %v1529 = vpack.c.b16 %v1137, %v1133
      %v1530 = vpack.c.b16 %v1138, %v1134
      %v1531 = vpack.c.b16 %v1143, %v1139
      %v1532 = vpack.c.b16 %v1144, %v1140
      %v1533 = vpack.c.b16 %v1145, %v1141
      %v1534 = vpack.c.b16 %v1146, %v1142
      %v1535 = vpack.c.b16 %v1151, %v1147
      %v1536 = vpack.c.b16 %v1152, %v1148
      %v1537 = vpack.c.b16 %v1153, %v1149
      %v1538 = vpack.c.b16 %v1154, %v1150
      %v1539 = vpack.c.b16 %v1159, %v1155
      %v1540 = vpack.c.b16 %v1160, %v1156
      %v1541 = vpack.c.b16 %v1161, %v1157
      %v1542 = vpack.c.b16 %v1162, %v1158
      %v1543 = vpack.c.b16 %v1167, %v1163
      %v1544 = vpack.c.b16 %v1168, %v1164
      %v1545 = vpack.c.b16 %v1169, %v1165
      %v1546 = vpack.c.b16 %v1170, %v1166
      %v1547 = vpack.c.b16 %v1175, %v1171
      %v1548 = vpack.c.b16 %v1176, %v1172
      %v1549 = vpack.c.b16 %v1177, %v1173
      %v1550 = vpack.c.b16 %v1178, %v1174
      %v1551 = vpack.c.b16 %v1183, %v1179
      %v1552 = vpack.c.b16 %v1184, %v1180
      %v1553 = vpack.c.b16 %v1185, %v1181
      %v1554 = vpack.c.b16 %v1186, %v1182
      %v1555 = vpack.c.b16 %v1191, %v1187
      %v1556 = vpack.c.b16 %v1192, %v1188
      %v1557 = vpack.c.b16 %v1193, %v1189
      %v1558 = vpack.c.b16 %v1194, %v1190
      %v1559 = vpack.c.b16 %v1199, %v1195
      %v1560 = vpack.c.b16 %v1200, %v1196
      %v1561 = vpack.c.b16 %v1201, %v1197
      %v1562 = vpack.c.b16 %v1202, %v1198
      %v1563 = vpack.c.b16 %v1207, %v1203
      %v1564 = vpack.c.b16 %v1208, %v1204
      %v1565 = vpack.c.b16 %v1209, %v1205
      %v1566 = vpack.c.b16 %v1210, %v1206
      %v1567 = vpack.c.b16 %v1215, %v1211
      %v1568 = vpack.c.b16 %v1216, %v1212
      %v1569 = vpack.c.b16 %v1217, %v1213
      %v1570 = vpack.c.b16 %v1218, %v1214
      %v1571 = vpack.c.b16 %v1223, %v1219
      %v1572 = vpack.c.b16 %v1224, %v1220
      %v1573 = vpack.c.b16 %v1225, %v1221
      %v1574 = vpack.c.b16 %v1226, %v1222
      %v1575 = vpack.c.b16 %v1231, %v1227
      %v1576 = vpack.c.b16 %v1232, %v1228
      %v1577 = vpack.c.b16 %v1233, %v1229
      %v1578 = vpack.c.b16 %v1234, %v1230
      %v1579 = vpack.c.b16 %v1239, %v1235
      %v1580 = vpack.c.b16 %v1240, %v1236
      %v1581 = vpack.c.b16 %v1241, %v1237
      %v1582 = vpack.c.b16 %v1242, %v1238
      %v1583 = vpack.c.b16 %v1247, %v1243
      %v1584 = vpack.c.b16 %v1248, %v1244
      %v1585 = vpack.c.b16 %v1249, %v1245
      %v1586 = vpack.c.b16 %v1250, %v1246
      %v1587 = vpack.c.b16 %v1255, %v1251
      %v1588 = vpack.c.b16 %v1256, %v1252
      %v1589 = vpack.c.b16 %v1257, %v1253
      %v1590 = vpack.c.b16 %v1258, %v1254
      %v1591 = vpack.c.b16 %v1263, %v1259
      %v1592 = vpack.c.b16 %v1264, %v1260
      %v1593 = vpack.c.b16 %v1265, %v1261
      %v1594 = vpack.c.b16 %v1266, %v1262
      %v1595 = vpack.c.b16 %v1271, %v1267
      %v1596 = vpack.c.b16 %v1272, %v1268
      %v1597 = vpack.c.b16 %v1273, %v1269
      %v1598 = vpack.c.b16 %v1274, %v1270
      %v1599 = vpack.c.b16 %v1279, %v1275
      %v1600 = vpack.c.b16 %v1280, %v1276
      %v1601 = vpack.c.b16 %v1281, %v1277
      %v1602 = vpack.c.b16 %v1282, %v1278
      %v1603 = vpack.c.b16 %v1287, %v1283
      %v1604 = vpack.c.b16 %v1288, %v1284
      %v1605 = vpack.c.b16 %v1289, %v1285
      %v1606 = vpack.c.b16 %v1290, %v1286
      %v1607 = vpack.c.b16 %v1295, %v1291
      %v1608 = vpack.c.b16 %v1296, %v1292
      %v1609 = vpack.c.b16 %v1297, %v1293
      %v1610 = vpack.c.b16 %v1298, %v1294
      %v1611 = vpack.c.b16 %v1303, %v1299
      %v1612 = vpack.c.b16 %v1304, %v1300
      %v1613 = vpack.c.b16 %v1305, %v1301
      %v1614 = vpack.c.b16 %v1306, %v1302
      %v1615 = vpack.c.b16 %v1311, %v1307
      %v1616 = vpack.c.b16 %v1312, %v1308
      %v1617 = vpack.c.b16 %v1313, %v1309
      %v1618 = vpack.c.b16 %v1314, %v1310
      %v1619 = vpack.c.b16 %v1319, %v1315
      %v1620 = vpack.c.b16 %v1320, %v1316
      %v1621 = vpack.c.b16 %v1321, %v1317
      %v1622 = vpack.c.b16 %v1322, %v1318
      %v1623 = vpack.c.b16 %v1327, %v1323
      %v1624 = vpack.c.b16 %v1328, %v1324
      %v1625 = vpack.c.b16 %v1329, %v1325
      %v1626 = vpack.c.b16 %v1330, %v1326
      %v1627 = vpack.c.b16 %v1335, %v1331
      %v1628 = vpack.c.b16 %v1336, %v1332
      %v1629 = vpack.c.b16 %v1337, %v1333
      %v1630 = vpack.c.b16 %v1338, %v1334
      %v1631 = vpack.c.b16 %v1343, %v1339
      %v1632 = vpack.c.b16 %v1344, %v1340
      %v1633 = vpack.c.b16 %v1345, %v1341
      %v1634 = vpack.c.b16 %v1346, %v1342
      %v1635 = vpack.c.b16 %v1351, %v1347
      %v1636 = vpack.c.b16 %v1352, %v1348
      %v1637 = vpack.c.b16 %v1353, %v1349
      %v1638 = vpack.c.b16 %v1354, %v1350
      %v1639 = vpack.c.b16 %v1359, %v1355
      %v1640 = vpack.c.b16 %v1360, %v1356
      %v1641 = vpack.c.b16 %v1361, %v1357
      %v1642 = vpack.c.b16 %v1362, %v1358
      %v1643 = vpack.c.b16 %v1367, %v1363
      %v1644 = vpack.c.b16 %v1368, %v1364
      %v1645 = vpack.c.b16 %v1369, %v1365
      %v1646 = vpack.c.b16 %v1370, %v1366
      %v1647 = vpack.c.b16 %v1375, %v1371
      %v1648 = vpack.c.b16 %v1376, %v1372
      %v1649 = vpack.c.b16 %v1377, %v1373
      %v1650 = vpack.c.b16 %v1378, %v1374
      %v1651 = vpack.c.b16 %v1383, %v1379
      %v1652 = vpack.c.b16 %v1384, %v1380
      %v1653 = vpack.c.b16 %v1385, %v1381
      %v1654 = vpack.c.b16 %v1386, %v1382
      %v1655 = vpack.c.b16 %v1391, %v1387
      %v1656 = vpack.c.b16 %v1392, %v1388
      %v1657 = vpack.c.b16 %v1393, %v1389
      %v1658 = vpack.c.b16 %v1394, %v1390
      %v1659 = vpack.c.b16 %v1399, %v1395
      %v1660 = vpack.c.b16 %v1400, %v1396
      %v1661 = vpack.c.b16 %v1401, %v1397
      %v1662 = vpack.c.b16 %v1402, %v1398
      %v1663 = vpack.c.b16 %v1407, %v1403
      %v1664 = vpack.c.b16 %v1408, %v1404
      %v1665 = vpack.c.b16 %v1409, %v1405
      %v1666 = vpack.c.b16 %v1410, %v1406
      %1923 = vmatprep.subr.bf16.mxu0 %v1412
      %1924 = vmatpush1.bf16.msra.mxu0 %v1411
      %1925 = vmatprep.subr.bf16.mxu0 %v1416
      %1926 = vmatpush1.bf16.msra.mxu0 %v1415
      %1927 = vmatprep.subr.bf16.mxu0 %v1420
      %1928 = vmatpush1.bf16.msra.mxu0 %v1419
      %1929 = vmatprep.subr.bf16.mxu0 %v1424
      %1930 = vmatpush1.bf16.msra.mxu0 %v1423
      %1931 = vmatprep.subr.bf16.mxu0 %v1428
      %1932 = vmatpush1.bf16.msra.mxu0 %v1427
      %1933 = vmatprep.subr.bf16.mxu0 %v1432
      %1934 = vmatpush1.bf16.msra.mxu0 %v1431
      %1935 = vmatprep.subr.bf16.mxu0 %v1436
      %1936 = vmatpush1.bf16.msra.mxu0 %v1435
      %1937 = vmatprep.subr.bf16.mxu0 %v1440
      %1938 = vmatpush1.bf16.msra.mxu0 %v1439
      %1939 = vmatprep.subr.bf16.mxu0 %v1444
      %1940 = vmatpush1.bf16.msra.mxu0 %v1443
      %1941 = vmatprep.subr.bf16.mxu0 %v1448
      %1942 = vmatpush1.bf16.msra.mxu0 %v1447
      %1943 = vmatprep.subr.bf16.mxu0 %v1452
      %1944 = vmatpush1.bf16.msra.mxu0 %v1451
      %1945 = vmatprep.subr.bf16.mxu0 %v1456
      %1946 = vmatpush1.bf16.msra.mxu0 %v1455
      %1947 = vmatprep.subr.bf16.mxu0 %v1460
      %1948 = vmatpush1.bf16.msra.mxu0 %v1459
      %1949 = vmatprep.subr.bf16.mxu0 %v1464
      %1950 = vmatpush1.bf16.msra.mxu0 %v1463
      %1951 = vmatprep.subr.bf16.mxu0 %v1468
      %1952 = vmatpush1.bf16.msra.mxu0 %v1467
      %1953 = vmatprep.subr.bf16.mxu0 %v1472
      %1954 = vmatpush1.bf16.msra.mxu0 %v1471
      %1955 = vmatprep.mubr.bf16.mxu0 %v628
      %1956 = vmatmul.mubr.bf16.gmra.mrb[0].mxu0 %v627
      %v1957 = vpop.f32.mrb[0].mxu0
      %v1958 = vadd.f32 0.0, %v1957
      %v1959 = vpop.f32.mrb[0].mxu0
      %v1960 = vadd.f32 0.0, %v1959
      %v1961 = vpop.f32.mrb[0].mxu0
      %v1962 = vadd.f32 0.0, %v1961
      %v1963 = vpop.f32.mrb[0].mxu0
      %v1964 = vadd.f32 0.0, %v1963
      %1965 = vdwg.mxu0
      %1966 = vmatprep.subr.bf16.mxu0 %v1476
      %1967 = vmatpush1.bf16.msra.mxu0 %v1475
      %1968 = vmatprep.subr.bf16.mxu0 %v1480
      %1969 = vmatpush1.bf16.msra.mxu0 %v1479
      %1970 = vmatprep.subr.bf16.mxu0 %v1484
      %1971 = vmatpush1.bf16.msra.mxu0 %v1483
      %1972 = vmatprep.subr.bf16.mxu0 %v1488
      %1973 = vmatpush1.bf16.msra.mxu0 %v1487
      %1974 = vmatprep.subr.bf16.mxu0 %v1492
      %1975 = vmatpush1.bf16.msra.mxu0 %v1491
      %1976 = vmatprep.subr.bf16.mxu0 %v1496
      %1977 = vmatpush1.bf16.msra.mxu0 %v1495
      %1978 = vmatprep.subr.bf16.mxu0 %v1500
      %1979 = vmatpush1.bf16.msra.mxu0 %v1499
      %1980 = vmatprep.subr.bf16.mxu0 %v1504
      %1981 = vmatpush1.bf16.msra.mxu0 %v1503
      %1982 = vmatprep.subr.bf16.mxu0 %v1508
      %1983 = vmatpush1.bf16.msra.mxu0 %v1507
      %1984 = vmatprep.subr.bf16.mxu0 %v1512
      %1985 = vmatpush1.bf16.msra.mxu0 %v1511
      %1986 = vmatprep.subr.bf16.mxu0 %v1516
      %1987 = vmatpush1.bf16.msra.mxu0 %v1515
      %1988 = vmatprep.subr.bf16.mxu0 %v1520
      %1989 = vmatpush1.bf16.msra.mxu0 %v1519
      %1990 = vmatprep.subr.bf16.mxu0 %v1524
      %1991 = vmatpush1.bf16.msra.mxu0 %v1523
      %1992 = vmatprep.subr.bf16.mxu0 %v1528
      %1993 = vmatpush1.bf16.msra.mxu0 %v1527
      %1994 = vmatprep.subr.bf16.mxu0 %v1532
      %1995 = vmatpush1.bf16.msra.mxu0 %v1531
      %1996 = vmatprep.subr.bf16.mxu0 %v1536
      %1997 = vmatpush1.bf16.msra.mxu0 %v1535
      %1998 = vmatprep.mubr.bf16.mxu0 %v630
      %1999 = vmatmul.mubr.bf16.gmra.mrb[0].mxu0 %v629
      %v2000 = vpop.f32.mrb[0].mxu0
      %v2001 = vadd.f32 %v1958, %v2000
      %v2002 = vpop.f32.mrb[0].mxu0
      %v2003 = vadd.f32 %v1960, %v2002
      %v2004 = vpop.f32.mrb[0].mxu0
      %v2005 = vadd.f32 %v1962, %v2004
      %v2006 = vpop.f32.mrb[0].mxu0
      %v2007 = vadd.f32 %v1964, %v2006
      %2008 = vdwg.mxu0
      %2009 = vmatprep.subr.bf16.mxu0 %v1540
      %2010 = vmatpush1.bf16.msra.mxu0 %v1539
      %2011 = vmatprep.subr.bf16.mxu0 %v1544
      %2012 = vmatpush1.bf16.msra.mxu0 %v1543
      %2013 = vmatprep.subr.bf16.mxu0 %v1548
      %2014 = vmatpush1.bf16.msra.mxu0 %v1547
      %2015 = vmatprep.subr.bf16.mxu0 %v1552
      %2016 = vmatpush1.bf16.msra.mxu0 %v1551
      %2017 = vmatprep.subr.bf16.mxu0 %v1556
      %2018 = vmatpush1.bf16.msra.mxu0 %v1555
      %2019 = vmatprep.subr.bf16.mxu0 %v1560
      %2020 = vmatpush1.bf16.msra.mxu0 %v1559
      %2021 = vmatprep.subr.bf16.mxu0 %v1564
      %2022 = vmatpush1.bf16.msra.mxu0 %v1563
      %2023 = vmatprep.subr.bf16.mxu0 %v1568
      %2024 = vmatpush1.bf16.msra.mxu0 %v1567
      %2025 = vmatprep.subr.bf16.mxu0 %v1572
      %2026 = vmatpush1.bf16.msra.mxu0 %v1571
      %2027 = vmatprep.subr.bf16.mxu0 %v1576
      %2028 = vmatpush1.bf16.msra.mxu0 %v1575
      %2029 = vmatprep.subr.bf16.mxu0 %v1580
      %2030 = vmatpush1.bf16.msra.mxu0 %v1579
      %2031 = vmatprep.subr.bf16.mxu0 %v1584
      %2032 = vmatpush1.bf16.msra.mxu0 %v1583
      %2033 = vmatprep.subr.bf16.mxu0 %v1588
      %2034 = vmatpush1.bf16.msra.mxu0 %v1587
      %2035 = vmatprep.subr.bf16.mxu0 %v1592
      %2036 = vmatpush1.bf16.msra.mxu0 %v1591
      %2037 = vmatprep.subr.bf16.mxu0 %v1596
      %2038 = vmatpush1.bf16.msra.mxu0 %v1595
      %2039 = vmatprep.subr.bf16.mxu0 %v1600
      %2040 = vmatpush1.bf16.msra.mxu0 %v1599
      %2041 = vmatprep.mubr.bf16.mxu0 %v632
      %2042 = vmatmul.mubr.bf16.gmra.mrb[0].mxu0 %v631
      %v2043 = vpop.f32.mrb[0].mxu0
      %v2044 = vadd.f32 %v2001, %v2043
      %v2045 = vpop.f32.mrb[0].mxu0
      %v2046 = vadd.f32 %v2003, %v2045
      %v2047 = vpop.f32.mrb[0].mxu0
      %v2048 = vadd.f32 %v2005, %v2047
      %v2049 = vpop.f32.mrb[0].mxu0
      %v2050 = vadd.f32 %v2007, %v2049
      %2051 = vdwg.mxu0
      %2052 = vmatprep.subr.bf16.mxu0 %v1604
      %2053 = vmatpush1.bf16.msra.mxu0 %v1603
      %2054 = vmatprep.subr.bf16.mxu0 %v1608
      %2055 = vmatpush1.bf16.msra.mxu0 %v1607
      %2056 = vmatprep.subr.bf16.mxu0 %v1612
      %2057 = vmatpush1.bf16.msra.mxu0 %v1611
      %2058 = vmatprep.subr.bf16.mxu0 %v1616
      %2059 = vmatpush1.bf16.msra.mxu0 %v1615
      %2060 = vmatprep.subr.bf16.mxu0 %v1620
      %2061 = vmatpush1.bf16.msra.mxu0 %v1619
      %2062 = vmatprep.subr.bf16.mxu0 %v1624
      %2063 = vmatpush1.bf16.msra.mxu0 %v1623
      %2064 = vmatprep.subr.bf16.mxu0 %v1628
      %2065 = vmatpush1.bf16.msra.mxu0 %v1627
      %2066 = vmatprep.subr.bf16.mxu0 %v1632
      %2067 = vmatpush1.bf16.msra.mxu0 %v1631
      %2068 = vmatprep.subr.bf16.mxu0 %v1636
      %2069 = vmatpush1.bf16.msra.mxu0 %v1635
      %2070 = vmatprep.subr.bf16.mxu0 %v1640
      %2071 = vmatpush1.bf16.msra.mxu0 %v1639
      %2072 = vmatprep.subr.bf16.mxu0 %v1644
      %2073 = vmatpush1.bf16.msra.mxu0 %v1643
      %2074 = vmatprep.subr.bf16.mxu0 %v1648
      %2075 = vmatpush1.bf16.msra.mxu0 %v1647
      %2076 = vmatprep.subr.bf16.mxu0 %v1652
      %2077 = vmatpush1.bf16.msra.mxu0 %v1651
      %2078 = vmatprep.subr.bf16.mxu0 %v1656
      %2079 = vmatpush1.bf16.msra.mxu0 %v1655
      %2080 = vmatprep.subr.bf16.mxu0 %v1660
      %2081 = vmatpush1.bf16.msra.mxu0 %v1659
      %2082 = vmatprep.subr.bf16.mxu0 %v1664
      %2083 = vmatpush1.bf16.msra.mxu0 %v1663
      %2084 = vmatprep.mubr.bf16.mxu0 %v634
      %2085 = vmatmul.mubr.bf16.gmra.mrb[0].mxu0 %v633
      %v2086 = vpop.f32.mrb[0].mxu0
      %v2087 = vadd.f32 %v2044, %v2086
      %v2088 = vpop.f32.mrb[0].mxu0
      %v2089 = vadd.f32 %v2046, %v2088
      %v2090 = vpop.f32.mrb[0].mxu0
      %v2091 = vadd.f32 %v2048, %v2090
      %v2092 = vpop.f32.mrb[0].mxu0
      %v2093 = vadd.f32 %v2050, %v2092
      %2094 = vdwg.mxu0
      %2095 = vmatprep.subr.bf16.mxu0 %v1414
      %2096 = vmatpush1.bf16.msra.mxu0 %v1413
      %2097 = vmatprep.subr.bf16.mxu0 %v1418
      %2098 = vmatpush1.bf16.msra.mxu0 %v1417
      %2099 = vmatprep.subr.bf16.mxu0 %v1422
      %2100 = vmatpush1.bf16.msra.mxu0 %v1421
      %2101 = vmatprep.subr.bf16.mxu0 %v1426
      %2102 = vmatpush1.bf16.msra.mxu0 %v1425
      %2103 = vmatprep.subr.bf16.mxu0 %v1430
      %2104 = vmatpush1.bf16.msra.mxu0 %v1429
      %2105 = vmatprep.subr.bf16.mxu0 %v1434
      %2106 = vmatpush1.bf16.msra.mxu0 %v1433
      %2107 = vmatprep.subr.bf16.mxu0 %v1438
      %2108 = vmatpush1.bf16.msra.mxu0 %v1437
      %2109 = vmatprep.subr.bf16.mxu0 %v1442
      %2110 = vmatpush1.bf16.msra.mxu0 %v1441
      %2111 = vmatprep.subr.bf16.mxu0 %v1446
      %2112 = vmatpush1.bf16.msra.mxu0 %v1445
      %2113 = vmatprep.subr.bf16.mxu0 %v1450
      %2114 = vmatpush1.bf16.msra.mxu0 %v1449
      %2115 = vmatprep.subr.bf16.mxu0 %v1454
      %2116 = vmatpush1.bf16.msra.mxu0 %v1453
      %2117 = vmatprep.subr.bf16.mxu0 %v1458
      %2118 = vmatpush1.bf16.msra.mxu0 %v1457
      %2119 = vmatprep.subr.bf16.mxu0 %v1462
      %2120 = vmatpush1.bf16.msra.mxu0 %v1461
      %2121 = vmatprep.subr.bf16.mxu0 %v1466
      %2122 = vmatpush1.bf16.msra.mxu0 %v1465
      %2123 = vmatprep.subr.bf16.mxu0 %v1470
      %2124 = vmatpush1.bf16.msra.mxu0 %v1469
      %2125 = vmatprep.subr.bf16.mxu0 %v1474
      %2126 = vmatpush1.bf16.msra.mxu0 %v1473
      %2127 = vmatprep.mubr.bf16.mxu0 %v628
      %2128 = vmatmul.mubr.bf16.gmra.mrb[0].mxu0 %v627
      %v2129 = vpop.f32.mrb[0].mxu0
      %v2130 = vadd.f32 0.0, %v2129
      %v2131 = vpop.f32.mrb[0].mxu0
      %v2132 = vadd.f32 0.0, %v2131
      %v2133 = vpop.f32.mrb[0].mxu0
      %v2134 = vadd.f32 0.0, %v2133
      %v2135 = vpop.f32.mrb[0].mxu0
      %v2136 = vadd.f32 0.0, %v2135
      %2137 = vdwg.mxu0
      %2138 = vmatprep.subr.bf16.mxu0 %v1478
      %2139 = vmatpush1.bf16.msra.mxu0 %v1477
      %2140 = vmatprep.subr.bf16.mxu0 %v1482
      %2141 = vmatpush1.bf16.msra.mxu0 %v1481
      %2142 = vmatprep.subr.bf16.mxu0 %v1486
      %2143 = vmatpush1.bf16.msra.mxu0 %v1485
      %2144 = vmatprep.subr.bf16.mxu0 %v1490
      %2145 = vmatpush1.bf16.msra.mxu0 %v1489
      %2146 = vmatprep.subr.bf16.mxu0 %v1494
      %2147 = vmatpush1.bf16.msra.mxu0 %v1493
      %2148 = vmatprep.subr.bf16.mxu0 %v1498
      %2149 = vmatpush1.bf16.msra.mxu0 %v1497
      %2150 = vmatprep.subr.bf16.mxu0 %v1502
      %2151 = vmatpush1.bf16.msra.mxu0 %v1501
      %2152 = vmatprep.subr.bf16.mxu0 %v1506
      %2153 = vmatpush1.bf16.msra.mxu0 %v1505
      %2154 = vmatprep.subr.bf16.mxu0 %v1510
      %2155 = vmatpush1.bf16.msra.mxu0 %v1509
      %2156 = vmatprep.subr.bf16.mxu0 %v1514
      %2157 = vmatpush1.bf16.msra.mxu0 %v1513
      %2158 = vmatprep.subr.bf16.mxu0 %v1518
      %2159 = vmatpush1.bf16.msra.mxu0 %v1517
      %2160 = vmatprep.subr.bf16.mxu0 %v1522
      %2161 = vmatpush1.bf16.msra.mxu0 %v1521
      %2162 = vmatprep.subr.bf16.mxu0 %v1526
      %2163 = vmatpush1.bf16.msra.mxu0 %v1525
      %2164 = vmatprep.subr.bf16.mxu0 %v1530
      %2165 = vmatpush1.bf16.msra.mxu0 %v1529
      %2166 = vmatprep.subr.bf16.mxu0 %v1534
      %2167 = vmatpush1.bf16.msra.mxu0 %v1533
      %2168 = vmatprep.subr.bf16.mxu0 %v1538
      %2169 = vmatpush1.bf16.msra.mxu0 %v1537
      %2170 = vmatprep.mubr.bf16.mxu0 %v630
      %2171 = vmatmul.mubr.bf16.gmra.mrb[0].mxu0 %v629
      %v2172 = vpop.f32.mrb[0].mxu0
      %v2173 = vadd.f32 %v2130, %v2172
      %v2174 = vpop.f32.mrb[0].mxu0
      %v2175 = vadd.f32 %v2132, %v2174
      %v2176 = vpop.f32.mrb[0].mxu0
      %v2177 = vadd.f32 %v2134, %v2176
      %v2178 = vpop.f32.mrb[0].mxu0
      %v2179 = vadd.f32 %v2136, %v2178
      %2180 = vdwg.mxu0
      %2181 = vmatprep.subr.bf16.mxu0 %v1542
      %2182 = vmatpush1.bf16.msra.mxu0 %v1541
      %2183 = vmatprep.subr.bf16.mxu0 %v1546
      %2184 = vmatpush1.bf16.msra.mxu0 %v1545
      %2185 = vmatprep.subr.bf16.mxu0 %v1550
      %2186 = vmatpush1.bf16.msra.mxu0 %v1549
      %2187 = vmatprep.subr.bf16.mxu0 %v1554
      %2188 = vmatpush1.bf16.msra.mxu0 %v1553
      %2189 = vmatprep.subr.bf16.mxu0 %v1558
      %2190 = vmatpush1.bf16.msra.mxu0 %v1557
      %2191 = vmatprep.subr.bf16.mxu0 %v1562
      %2192 = vmatpush1.bf16.msra.mxu0 %v1561
      %2193 = vmatprep.subr.bf16.mxu0 %v1566
      %2194 = vmatpush1.bf16.msra.mxu0 %v1565
      %2195 = vmatprep.subr.bf16.mxu0 %v1570
      %2196 = vmatpush1.bf16.msra.mxu0 %v1569
      %2197 = vmatprep.subr.bf16.mxu0 %v1574
      %2198 = vmatpush1.bf16.msra.mxu0 %v1573
      %2199 = vmatprep.subr.bf16.mxu0 %v1578
      %2200 = vmatpush1.bf16.msra.mxu0 %v1577
      %2201 = vmatprep.subr.bf16.mxu0 %v1582
      %2202 = vmatpush1.bf16.msra.mxu0 %v1581
      %2203 = vmatprep.subr.bf16.mxu0 %v1586
      %2204 = vmatpush1.bf16.msra.mxu0 %v1585
      %2205 = vmatprep.subr.bf16.mxu0 %v1590
      %2206 = vmatpush1.bf16.msra.mxu0 %v1589
      %2207 = vmatprep.subr.bf16.mxu0 %v1594
      %2208 = vmatpush1.bf16.msra.mxu0 %v1593
      %2209 = vmatprep.subr.bf16.mxu0 %v1598
      %2210 = vmatpush1.bf16.msra.mxu0 %v1597
      %2211 = vmatprep.subr.bf16.mxu0 %v1602
      %2212 = vmatpush1.bf16.msra.mxu0 %v1601
      %2213 = vmatprep.mubr.bf16.mxu0 %v632
      %2214 = vmatmul.mubr.bf16.gmra.mrb[0].mxu0 %v631
      %v2215 = vpop.f32.mrb[0].mxu0
      %v2216 = vadd.f32 %v2173, %v2215
      %v2217 = vpop.f32.mrb[0].mxu0
      %v2218 = vadd.f32 %v2175, %v2217
      %v2219 = vpop.f32.mrb[0].mxu0
      %v2220 = vadd.f32 %v2177, %v2219
      %v2221 = vpop.f32.mrb[0].mxu0
      %v2222 = vadd.f32 %v2179, %v2221
      %2223 = vdwg.mxu0
      %2224 = vmatprep.subr.bf16.mxu0 %v1606
      %2225 = vmatpush1.bf16.msra.mxu0 %v1605
      %2226 = vmatprep.subr.bf16.mxu0 %v1610
      %2227 = vmatpush1.bf16.msra.mxu0 %v1609
      %2228 = vmatprep.subr.bf16.mxu0 %v1614
      %2229 = vmatpush1.bf16.msra.mxu0 %v1613
      %2230 = vmatprep.subr.bf16.mxu0 %v1618
      %2231 = vmatpush1.bf16.msra.mxu0 %v1617
      %2232 = vmatprep.subr.bf16.mxu0 %v1622
      %2233 = vmatpush1.bf16.msra.mxu0 %v1621
      %2234 = vmatprep.subr.bf16.mxu0 %v1626
      %2235 = vmatpush1.bf16.msra.mxu0 %v1625
      %2236 = vmatprep.subr.bf16.mxu0 %v1630
      %2237 = vmatpush1.bf16.msra.mxu0 %v1629
      %2238 = vmatprep.subr.bf16.mxu0 %v1634
      %2239 = vmatpush1.bf16.msra.mxu0 %v1633
      %2240 = vmatprep.subr.bf16.mxu0 %v1638
      %2241 = vmatpush1.bf16.msra.mxu0 %v1637
      %2242 = vmatprep.subr.bf16.mxu0 %v1642
      %2243 = vmatpush1.bf16.msra.mxu0 %v1641
      %2244 = vmatprep.subr.bf16.mxu0 %v1646
      %2245 = vmatpush1.bf16.msra.mxu0 %v1645
      %2246 = vmatprep.subr.bf16.mxu0 %v1650
      %2247 = vmatpush1.bf16.msra.mxu0 %v1649
      %2248 = vmatprep.subr.bf16.mxu0 %v1654
      %2249 = vmatpush1.bf16.msra.mxu0 %v1653
      %2250 = vmatprep.subr.bf16.mxu0 %v1658
      %2251 = vmatpush1.bf16.msra.mxu0 %v1657
      %2252 = vmatprep.subr.bf16.mxu0 %v1662
      %2253 = vmatpush1.bf16.msra.mxu0 %v1661
      %2254 = vmatprep.subr.bf16.mxu0 %v1666
      %2255 = vmatpush1.bf16.msra.mxu0 %v1665
      %2256 = vmatprep.mubr.bf16.mxu0 %v634
      %2257 = vmatmul.mubr.bf16.gmra.mrb[0].mxu0 %v633
      %v2258 = vpop.f32.mrb[0].mxu0
      %v2259 = vadd.f32 %v2216, %v2258
      %v2260 = vpop.f32.mrb[0].mxu0
      %v2261 = vadd.f32 %v2218, %v2260
      %v2262 = vpop.f32.mrb[0].mxu0
      %v2263 = vadd.f32 %v2220, %v2262
      %v2264 = vpop.f32.mrb[0].mxu0
      %v2265 = vadd.f32 %v2222, %v2264
      %2266 = vdwg.mxu0
      %v2267 = vld [vmem:[%s3] sm:$0xf]
      %v2269 = vlaneseq
      %v2270 = vshrl.u32 %v2269, 7
      %v2271 = vsub.s32 0, %v2270
      %v2272 = vrot.slane %v2267, %v2271
      %v2273 = vlaneseq
      %v2274 = vshrl.u32 %v2273, 7
      %v2275 = vsub.s32 1, %v2274
      %v2276 = vrot.slane %v2267, %v2275
      %v2277 = vlaneseq
      %v2278 = vshrl.u32 %v2277, 7
      %v2279 = vsub.s32 2, %v2278
      %v2280 = vrot.slane %v2267, %v2279
      %v2281 = vlaneseq
      %v2282 = vshrl.u32 %v2281, 7
      %v2283 = vsub.s32 3, %v2282
      %v2284 = vrot.slane %v2267, %v2283
      %v2289 = vmul.f32 %v2087, %v2272
      %v2290 = vmul.f32 %v2089, %v2276
      %v2291 = vmul.f32 %v2259, %v2280
      %v2292 = vmul.f32 %v2261, %v2284
      %v2293 = vmul.f32 %v2091, %v2272
      %v2294 = vmul.f32 %v2093, %v2276
      %v2295 = vmul.f32 %v2263, %v2280
      %v2296 = vmul.f32 %v2265, %v2284
      %v2297 = vld [vmem:[%s327] sm:$0xf]
      %v2299 = vlaneseq
      %v2300 = vshrl.u32 %v2299, 7
      %v2301 = vsub.s32 0, %v2300
      %v2302 = vrot.slane %v2297, %v2301
      %v2303 = vlaneseq
      %v2304 = vshrl.u32 %v2303, 7
      %v2305 = vsub.s32 1, %v2304
      %v2306 = vrot.slane %v2297, %v2305
      %v2307 = vlaneseq
      %v2308 = vshrl.u32 %v2307, 7
      %v2309 = vsub.s32 2, %v2308
      %v2310 = vrot.slane %v2297, %v2309
      %v2311 = vlaneseq
      %v2312 = vshrl.u32 %v2311, 7
      %v2313 = vsub.s32 3, %v2312
      %v2314 = vrot.slane %v2297, %v2313
      %v2319 = vadd.f32 %v2289, %v2302
      %v2320 = vadd.f32 %v2290, %v2306
      %v2321 = vadd.f32 %v2291, %v2310
      %v2322 = vadd.f32 %v2292, %v2314
      %v2323 = vadd.f32 %v2293, %v2302
      %v2324 = vadd.f32 %v2294, %v2306
      %v2325 = vadd.f32 %v2295, %v2310
      %v2326 = vadd.f32 %v2296, %v2314
      %v2327 = vmax.f32 %v2319, 0.0
      %v2328 = vmax.f32 %v2320, 0.0
      %v2329 = vmax.f32 %v2321, 0.0
      %v2330 = vmax.f32 %v2322, 0.0
      %v2331 = vmax.f32 %v2323, 0.0
      %v2332 = vmax.f32 %v2324, 0.0
      %v2333 = vmax.f32 %v2325, 0.0
      %v2334 = vmax.f32 %v2326, 0.0
      %v2335 = vpack.c.bf16 %v2331, %v2327
      %v2336 = vpack.c.bf16 %v2332, %v2328
      %v2337 = vpack.c.bf16 %v2333, %v2329
      %v2338 = vpack.c.bf16 %v2334, %v2330
      %v2339 = vld [vmem:[%s4] sm:$0xf]
      %v2340 = vld [vmem:[%s4 + $0x4] sm:$0xf]
      %v2341 = vld [vmem:[%s4 + $0x8] sm:$0xf]
      %v2342 = vld [vmem:[%s4 + $0xc] sm:$0xf]
      %v2343 = vld [vmem:[%s4 + $0x10] sm:$0xf]
      %v2344 = vld [vmem:[%s4 + $0x14] sm:$0xf]
      %v2345 = vld [vmem:[%s4 + $0x18] sm:$0xf]
      %v2346 = vld [vmem:[%s4 + $0x1c] sm:$0xf]
      %v2347 = vld [vmem:[%s4 + $0x20] sm:$0xf]
      %v2348 = vld [vmem:[%s4 + $0x24] sm:$0xf]
      %v2349 = vld [vmem:[%s4 + $0x28] sm:$0xf]
      %v2350 = vld [vmem:[%s4 + $0x2c] sm:$0xf]
      %v2351 = vld [vmem:[%s4 + $0x30] sm:$0xf]
      %v2352 = vld [vmem:[%s4 + $0x34] sm:$0xf]
      %v2353 = vld [vmem:[%s4 + $0x38] sm:$0xf]
      %v2354 = vld [vmem:[%s4 + $0x3c] sm:$0xf]
      %v2355 = vld [vmem:[%s4 + $0x40] sm:$0xf]
      %v2356 = vld [vmem:[%s4 + $0x44] sm:$0xf]
      %v2357 = vld [vmem:[%s4 + $0x48] sm:$0xf]
      %v2358 = vld [vmem:[%s4 + $0x4c] sm:$0xf]
      %v2359 = vld [vmem:[%s4 + $0x50] sm:$0xf]
      %v2360 = vld [vmem:[%s4 + $0x54] sm:$0xf]
      %v2361 = vld [vmem:[%s4 + $0x58] sm:$0xf]
      %v2362 = vld [vmem:[%s4 + $0x5c] sm:$0xf]
      %v2363 = vld [vmem:[%s4 + $0x60] sm:$0xf]
      %v2364 = vld [vmem:[%s4 + $0x64] sm:$0xf]
      %v2365 = vld [vmem:[%s4 + $0x68] sm:$0xf]
      %v2366 = vld [vmem:[%s4 + $0x6c] sm:$0xf]
      %v2367 = vld [vmem:[%s4 + $0x70] sm:$0xf]
      %v2368 = vld [vmem:[%s4 + $0x74] sm:$0xf]
      %v2369 = vld [vmem:[%s4 + $0x78] sm:$0xf]
      %v2370 = vld [vmem:[%s4 + $0x7c] sm:$0xf]
      %v2371 = vld [vmem:[%s4 + $0x80] sm:$0xf]
      %v2372 = vld [vmem:[%s4 + $0x84] sm:$0xf]
      %v2373 = vld [vmem:[%s4 + $0x88] sm:$0xf]
      %v2374 = vld [vmem:[%s4 + $0x8c] sm:$0xf]
      %v2375 = vld [vmem:[%s4 + $0x90] sm:$0xf]
      %v2376 = vld [vmem:[%s4 + $0x94] sm:$0xf]
      %v2377 = vld [vmem:[%s4 + $0x98] sm:$0xf]
      %v2378 = vld [vmem:[%s4 + $0x9c] sm:$0xf]
      %v2379 = vld [vmem:[%s4 + $0xa0] sm:$0xf]
      %v2380 = vld [vmem:[%s4 + $0xa4] sm:$0xf]
      %v2381 = vld [vmem:[%s4 + $0xa8] sm:$0xf]
      %v2382 = vld [vmem:[%s4 + $0xac] sm:$0xf]
      %v2383 = vld [vmem:[%s4 + $0xb0] sm:$0xf]
      %v2384 = vld [vmem:[%s4 + $0xb4] sm:$0xf]
      %v2385 = vld [vmem:[%s4 + $0xb8] sm:$0xf]
      %v2386 = vld [vmem:[%s4 + $0xbc] sm:$0xf]
      %v2387 = vld [vmem:[%s4 + $0xc0] sm:$0xf]
      %v2388 = vld [vmem:[%s4 + $0xc4] sm:$0xf]
      %v2389 = vld [vmem:[%s4 + $0xc8] sm:$0xf]
      %v2390 = vld [vmem:[%s4 + $0xcc] sm:$0xf]
      %v2391 = vld [vmem:[%s4 + $0xd0] sm:$0xf]
      %v2392 = vld [vmem:[%s4 + $0xd4] sm:$0xf]
      %v2393 = vld [vmem:[%s4 + $0xd8] sm:$0xf]
      %v2394 = vld [vmem:[%s4 + $0xdc] sm:$0xf]
      %v2395 = vld [vmem:[%s4 + $0xe0] sm:$0xf]
      %v2396 = vld [vmem:[%s4 + $0xe4] sm:$0xf]
      %v2397 = vld [vmem:[%s4 + $0xe8] sm:$0xf]
      %v2398 = vld [vmem:[%s4 + $0xec] sm:$0xf]
      %v2399 = vld [vmem:[%s4 + $0xf0] sm:$0xf]
      %v2400 = vld [vmem:[%s4 + $0xf4] sm:$0xf]
      %v2401 = vld [vmem:[%s4 + $0xf8] sm:$0xf]
      %v2402 = vld [vmem:[%s4 + $0xfc] sm:$0xf]
      %v2467 = vunpack.c.l.b16 %v2339
      %v2468 = vunpack.c.l.b16 %v2340
      %v2469 = vunpack.c.l.b16 %v2341
      %v2470 = vunpack.c.l.b16 %v2342
      %v2471 = vunpack.c.l.b16 %v2343
      %v2472 = vunpack.c.l.b16 %v2344
      %v2473 = vunpack.c.l.b16 %v2345
      %v2474 = vunpack.c.l.b16 %v2346
      %v2475 = vunpack.c.l.b16 %v2347
      %v2476 = vunpack.c.l.b16 %v2348
      %v2477 = vunpack.c.l.b16 %v2349
      %v2478 = vunpack.c.l.b16 %v2350
      %v2479 = vunpack.c.l.b16 %v2351
      %v2480 = vunpack.c.l.b16 %v2352
      %v2481 = vunpack.c.l.b16 %v2353
      %v2482 = vunpack.c.l.b16 %v2354
      %v2483 = vunpack.c.l.b16 %v2355
      %v2484 = vunpack.c.l.b16 %v2356
      %v2485 = vunpack.c.l.b16 %v2357
      %v2486 = vunpack.c.l.b16 %v2358
      %v2487 = vunpack.c.l.b16 %v2359
      %v2488 = vunpack.c.l.b16 %v2360
      %v2489 = vunpack.c.l.b16 %v2361
      %v2490 = vunpack.c.l.b16 %v2362
      %v2491 = vunpack.c.l.b16 %v2363
      %v2492 = vunpack.c.l.b16 %v2364
      %v2493 = vunpack.c.l.b16 %v2365
      %v2494 = vunpack.c.l.b16 %v2366
      %v2495 = vunpack.c.l.b16 %v2367
      %v2496 = vunpack.c.l.b16 %v2368
      %v2497 = vunpack.c.l.b16 %v2369
      %v2498 = vunpack.c.l.b16 %v2370
      %v2499 = vunpack.c.l.b16 %v2371
      %v2500 = vunpack.c.l.b16 %v2372
      %v2501 = vunpack.c.l.b16 %v2373
      %v2502 = vunpack.c.l.b16 %v2374
      %v2503 = vunpack.c.l.b16 %v2375
      %v2504 = vunpack.c.l.b16 %v2376
      %v2505 = vunpack.c.l.b16 %v2377
      %v2506 = vunpack.c.l.b16 %v2378
      %v2507 = vunpack.c.l.b16 %v2379
      %v2508 = vunpack.c.l.b16 %v2380
      %v2509 = vunpack.c.l.b16 %v2381
      %v2510 = vunpack.c.l.b16 %v2382
      %v2511 = vunpack.c.l.b16 %v2383
      %v2512 = vunpack.c.l.b16 %v2384
      %v2513 = vunpack.c.l.b16 %v2385
      %v2514 = vunpack.c.l.b16 %v2386
      %v2515 = vunpack.c.l.b16 %v2387
      %v2516 = vunpack.c.l.b16 %v2388
      %v2517 = vunpack.c.l.b16 %v2389
      %v2518 = vunpack.c.l.b16 %v2390
      %v2519 = vunpack.c.l.b16 %v2391
      %v2520 = vunpack.c.l.b16 %v2392
      %v2521 = vunpack.c.l.b16 %v2393
      %v2522 = vunpack.c.l.b16 %v2394
      %v2523 = vunpack.c.l.b16 %v2395
      %v2524 = vunpack.c.l.b16 %v2396
      %v2525 = vunpack.c.l.b16 %v2397
      %v2526 = vunpack.c.l.b16 %v2398
      %v2527 = vunpack.c.l.b16 %v2399
      %v2528 = vunpack.c.l.b16 %v2400
      %v2529 = vunpack.c.l.b16 %v2401
      %v2530 = vunpack.c.l.b16 %v2402
      %v2531 = vpack.c.b16 %v2468, %v2467
      %v2532 = vpack.c.b16 %v2470, %v2469
      %v2533 = vpack.c.b16 %v2472, %v2471
      %v2534 = vpack.c.b16 %v2474, %v2473
      %v2535 = vpack.c.b16 %v2476, %v2475
      %v2536 = vpack.c.b16 %v2478, %v2477
      %v2537 = vpack.c.b16 %v2480, %v2479
      %v2538 = vpack.c.b16 %v2482, %v2481
      %v2539 = vpack.c.b16 %v2484, %v2483
      %v2540 = vpack.c.b16 %v2486, %v2485
      %v2541 = vpack.c.b16 %v2488, %v2487
      %v2542 = vpack.c.b16 %v2490, %v2489
      %v2543 = vpack.c.b16 %v2492, %v2491
      %v2544 = vpack.c.b16 %v2494, %v2493
      %v2545 = vpack.c.b16 %v2496, %v2495
      %v2546 = vpack.c.b16 %v2498, %v2497
      %v2547 = vpack.c.b16 %v2500, %v2499
      %v2548 = vpack.c.b16 %v2502, %v2501
      %v2549 = vpack.c.b16 %v2504, %v2503
      %v2550 = vpack.c.b16 %v2506, %v2505
      %v2551 = vpack.c.b16 %v2508, %v2507
      %v2552 = vpack.c.b16 %v2510, %v2509
      %v2553 = vpack.c.b16 %v2512, %v2511
      %v2554 = vpack.c.b16 %v2514, %v2513
      %v2555 = vpack.c.b16 %v2516, %v2515
      %v2556 = vpack.c.b16 %v2518, %v2517
      %v2557 = vpack.c.b16 %v2520, %v2519
      %v2558 = vpack.c.b16 %v2522, %v2521
      %v2559 = vpack.c.b16 %v2524, %v2523
      %v2560 = vpack.c.b16 %v2526, %v2525
      %v2561 = vpack.c.b16 %v2528, %v2527
      %v2562 = vpack.c.b16 %v2530, %v2529
      %2595 = vmatprep.subr.bf16.mxu0 0
      %2596 = vmatpush1.bf16.msra.mxu0 %v2531
      %2597 = vmatprep.subr.bf16.mxu0 0
      %2598 = vmatpush1.bf16.msra.mxu0 %v2532
      %2599 = vmatprep.subr.bf16.mxu0 0
      %2600 = vmatpush1.bf16.msra.mxu0 %v2533
      %2601 = vmatprep.subr.bf16.mxu0 0
      %2602 = vmatpush1.bf16.msra.mxu0 %v2534
      %2603 = vmatprep.subr.bf16.mxu0 0
      %2604 = vmatpush1.bf16.msra.mxu0 %v2535
      %2605 = vmatprep.subr.bf16.mxu0 0
      %2606 = vmatpush1.bf16.msra.mxu0 %v2536
      %2607 = vmatprep.subr.bf16.mxu0 0
      %2608 = vmatpush1.bf16.msra.mxu0 %v2537
      %2609 = vmatprep.subr.bf16.mxu0 0
      %2610 = vmatpush1.bf16.msra.mxu0 %v2538
      %2611 = vmatprep.subr.bf16.mxu0 0
      %2612 = vmatpush1.bf16.msra.mxu0 %v2539
      %2613 = vmatprep.subr.bf16.mxu0 0
      %2614 = vmatpush1.bf16.msra.mxu0 %v2540
      %2615 = vmatprep.subr.bf16.mxu0 0
      %2616 = vmatpush1.bf16.msra.mxu0 %v2541
      %2617 = vmatprep.subr.bf16.mxu0 0
      %2618 = vmatpush1.bf16.msra.mxu0 %v2542
      %2619 = vmatprep.subr.bf16.mxu0 0
      %2620 = vmatpush1.bf16.msra.mxu0 %v2543
      %2621 = vmatprep.subr.bf16.mxu0 0
      %2622 = vmatpush1.bf16.msra.mxu0 %v2544
      %2623 = vmatprep.subr.bf16.mxu0 0
      %2624 = vmatpush1.bf16.msra.mxu0 %v2545
      %2625 = vmatprep.subr.bf16.mxu0 0
      %2626 = vmatpush1.bf16.msra.mxu0 %v2546
      %2627 = vmatprep.mubr.bf16.mxu0 %v2336
      %2628 = vmatmul.mubr.bf16.gmra.mrb[0].mxu0 %v2335
      %v2629 = vpop.f32.mrb[0].mxu0
      %v2630 = vadd.f32 0.0, %v2629
      %v2631 = vpop.f32.mrb[0].mxu0
      %v2632 = vpop.f32.mrb[0].mxu0
      %v2633 = vadd.f32 0.0, %v2632
      %v2634 = vpop.f32.mrb[0].mxu0
      %2635 = vdwg.mxu0
      %2636 = vmatprep.subr.bf16.mxu0 0
      %2637 = vmatpush1.bf16.msra.mxu0 %v2547
      %2638 = vmatprep.subr.bf16.mxu0 0
      %2639 = vmatpush1.bf16.msra.mxu0 %v2548
      %2640 = vmatprep.subr.bf16.mxu0 0
      %2641 = vmatpush1.bf16.msra.mxu0 %v2549
      %2642 = vmatprep.subr.bf16.mxu0 0
      %2643 = vmatpush1.bf16.msra.mxu0 %v2550
      %2644 = vmatprep.subr.bf16.mxu0 0
      %2645 = vmatpush1.bf16.msra.mxu0 %v2551
      %2646 = vmatprep.subr.bf16.mxu0 0
      %2647 = vmatpush1.bf16.msra.mxu0 %v2552
      %2648 = vmatprep.subr.bf16.mxu0 0
      %2649 = vmatpush1.bf16.msra.mxu0 %v2553
      %2650 = vmatprep.subr.bf16.mxu0 0
      %2651 = vmatpush1.bf16.msra.mxu0 %v2554
      %2652 = vmatprep.subr.bf16.mxu0 0
      %2653 = vmatpush1.bf16.msra.mxu0 %v2555
      %2654 = vmatprep.subr.bf16.mxu0 0
      %2655 = vmatpush1.bf16.msra.mxu0 %v2556
      %2656 = vmatprep.subr.bf16.mxu0 0
      %2657 = vmatpush1.bf16.msra.mxu0 %v2557
      %2658 = vmatprep.subr.bf16.mxu0 0
      %2659 = vmatpush1.bf16.msra.mxu0 %v2558
      %2660 = vmatprep.subr.bf16.mxu0 0
      %2661 = vmatpush1.bf16.msra.mxu0 %v2559
      %2662 = vmatprep.subr.bf16.mxu0 0
      %2663 = vmatpush1.bf16.msra.mxu0 %v2560
      %2664 = vmatprep.subr.bf16.mxu0 0
      %2665 = vmatpush1.bf16.msra.mxu0 %v2561
      %2666 = vmatprep.subr.bf16.mxu0 0
      %2667 = vmatpush1.bf16.msra.mxu0 %v2562
      %2668 = vmatprep.mubr.bf16.mxu0 %v2338
      %2669 = vmatmul.mubr.bf16.gmra.mrb[0].mxu0 %v2337
      %v2670 = vpop.f32.mrb[0].mxu0
      %v2671 = vadd.f32 %v2630, %v2670
      %v2672 = vpop.f32.mrb[0].mxu0
      %v2673 = vpop.f32.mrb[0].mxu0
      %v2674 = vadd.f32 %v2633, %v2673
      %v2675 = vpop.f32.mrb[0].mxu0
      %2676 = vdwg.mxu0
      %v2677 = vld [vmem:[%s5] sm:$0x1]
      %v2679 = vlaneseq
      %v2680 = vshrl.u32 %v2679, 7
      %v2681 = vsub.s32 0, %v2680
      %v2682 = vrot.slane %v2677, %v2681
      %v2684 = vmul.f32 %v2671, %v2682
      %v2685 = vmul.f32 %v2674, %v2682
      %v2686 = vld [vmem:[%s6] sm:$0x1]
      %v2688 = vlaneseq
      %v2689 = vshrl.u32 %v2688, 7
      %v2690 = vsub.s32 0, %v2689
      %v2691 = vrot.slane %v2686, %v2690
      %v2693 = vadd.f32 %v2684, %v2691
      %v2694 = vadd.f32 %v2685, %v2691
      %v2695 = vmax.f32 %v2693, 0.0
      %v2696 = vmax.f32 %v2694, 0.0
      %v2697 = vpack.c.bf16 %v2696, %v2695
      %v2699 = vunpack.c.l.b16 %v2697
      %v2700 = vunpack.c.h.b16 %v2697
      %v2701 = vpack.c.b16 %v2699, %v2699
      %v2702 = vpack.c.b16 %v2700, %v2700
      %2705 = vst [vmem:[%s336] sm:$0xf] %v2701
      %2706 = vst [vmem:[%s336 + $0x4] sm:$0xf] %v2702
      %s2707 = smul.u32 2, %s23
      %p2708 = scmp.lt.s32.totalorder %s22, 1
      %s2709 = scalar_select %p2708, %s22, 1
      %p2710 = scmp.lt.s32.totalorder %s2707, 1
      %s2711 = scalar_select %p2710, %s2707, 1
      %s2712 = smul.addr %s2709, 2
      %s2713 = sadd.s32 %s2711, %s2712
      %s2714 = smul.addr %s2713, 4
      %s2715 = scalar_lea.vmem %s7, %s2714
      // Predicated region
      $region49: #{pct_forward.15} parent=47 // pred_check
        %p2716 = pneg %p209
      $region50: #{pct_forward.15} parent=47 // pred_check_branch
        %2718 = sbr.rel (%p2716) target = $region52
      $region51: #{pct_forward.15} parent=47 // pred_region
        %s2719 = smul.u32 2, %s23
      $region52: #{pct_forward.15} parent=47 // pred_fallthru
        _
    $region48: #{pct_forward.15} parent=5 // pred_fallthru
      _
    %p2720 = scmp.le.s32.totalorder 2, %s13
    // Predicated region
    $region53: #{pct_forward.15} parent=5 // pred_check
      %p2721 = pneg %p2720
    $region54: #{pct_forward.15} parent=5 // pred_check_branch
      %2723 = sbr.rel (%p2721) target = $region56
    $region55: #{pct_forward.15} parent=5 // pred_region
      %s2724 = ssub.s32 %s13, 2
      // Predicated region
      $region57: #{pct_forward.15} parent=55 // pred_check
        %p2725 = pneg %p215
      $region58: #{pct_forward.15} parent=55 // pred_check_branch
        %2727 = sbr.rel (%p2725) target = $region60
      $region59: #{pct_forward.15} parent=55 // pred_region
        %s2728 = smul.u32 2, %s25
        %p2729 = scmp.lt.s32.totalorder %s24, 1
        %s2730 = scalar_select %p2729, %s24, 1
        %p2731 = scmp.lt.s32.totalorder %s2728, 1
        %s2732 = scalar_select %p2731, %s2728, 1
        %s2733 = smul.addr %s2730, 2
        %s2734 = sadd.s32 %s2732, %s2733
        %s2735 = smul.addr %s2734, 4
        %s2736 = scalar_lea.vmem %s7, %s2735
      $region60: #{pct_forward.15} parent=55 // pred_fallthru
        _
    $region56: #{pct_forward.15} parent=5 // pred_fallthru
      _
  $region6: #{pct_forward.15} parent=0 // loop_footer
    %s17 = sadd.s32 1, %s13
  $region7: #{pct_forward.15} parent=0 // loop_footer_branch
    %12 = sbr.rel target = $region3
  $region8: #{pct_forward.15} parent=0 // loop_exit
    _

</llo_original>
